<compile_context>
chip_gen: v7x
topology: tpu7x:2x2x1
jax: 0.10.0
libtpu: 0.0.40
codegen_flags: <defaults>
</compile_context>

<pallas_src>
import functools

import jax
import jax.numpy as jnp
from jax.experimental import pallas as pl
from jax.experimental.pallas import tpu as pltpu


def _model_kernel(xp_ref, wconv_ref, bconv_ref, wfc_ref, bfc_ref, out_ref,
                  *, H_out, W_out, K, n_hidden):
    """One grid step == one batch tile.

    xp_ref    : (B, H+2p, W+2p) f32 VMEM   circularly padded input
    wconv_ref : (n_hidden*K*K,) f32 SMEM   conv weights (scalar-indexed)
    bconv_ref : (n_hidden,)     f32 SMEM   conv bias
    wfc_ref   : (n_hidden, n_out) f32 VMEM classifier weight (pre-transposed)
    bfc_ref   : (1, n_out)      f32 VMEM   classifier bias
    out_ref   : (B, n_out)      f32        logits
    """
    KK = K * K
    inv_hw = 1.0 / float(H_out * W_out)

    # Load the padded tile once; taps are in-register static slices of it.
    xp = xp_ref[...]                                             # (B, Hp, Wp)

    # ---- circular Conv2d as K*K shifted taps (VPU FMA loop; MXU skipped) ----
    accs = [None] * n_hidden
    for ki in range(K):
        for kj in range(K):
            t = ki * K + kj
            tap = xp[:, ki:ki + H_out, kj:kj + W_out]            # (B, H_out, W_out)
            for c in range(n_hidden):
                w_ct = wconv_ref[c * KK + t]                     # scalar from SMEM
                contrib = w_ct * tap
                accs[c] = contrib if accs[c] is None else accs[c] + contrib

    # ---- bias + ReLU + AdaptiveAvgPool2d(1) + Linear(n_hidden, n_out) -------
    logits = bfc_ref[...]                                        # (1, n_out)
    for c in range(n_hidden):
        h = jnp.maximum(accs[c] + bconv_ref[c], 0.0)             # (B, H_out, W_out)
        pooled_c = jnp.sum(jnp.sum(h, axis=2), axis=1, keepdims=True) * inv_hw  # (B, 1)
        logits = logits + pooled_c * wfc_ref[c:c + 1, :]         # (B, n_out)
    out_ref[...] = logits


def simple_conv_forward(x, conv_w, conv_b, fc_w, fc_b,
                        *, kernel_size, padding_size=-1, batch_tile=None):
    """x: (N, 1, H, W) or (N, H, W).  Weights in PyTorch layouts:
       conv_w (n_hidden, 1, K, K), conv_b (n_hidden,),
       fc_w (n_out, n_hidden), fc_b (n_out,)."""
    if padding_size == -1:
        padding_size = kernel_size // 2
    if x.ndim == 3:
        x = x[:, None, :, :]
    N, _, H, W = x.shape
    K, pad = kernel_size, padding_size
    H_out = H + 2 * pad - K + 1
    W_out = W + 2 * pad - K + 1
    Hp, Wp = H + 2 * pad, W + 2 * pad

    # Only wrapper-side data prep: circular padding (one cheap XLA pad, ~1.5x the
    # input — this replaces the former 25x im2col materialization in HBM).
    xp = jnp.pad(x[:, 0].astype(jnp.float32),
                 ((0, 0), (pad, pad), (pad, pad)), mode="wrap")

    n_hidden = conv_w.shape[0]
    n_out = fc_w.shape[0]

    wconv_flat = conv_w.astype(jnp.float32).reshape(n_hidden * K * K)   # -> SMEM
    bconv = conv_b.astype(jnp.float32).reshape(n_hidden)                # -> SMEM
    wfc = fc_w.astype(jnp.float32).T                                    # (n_hidden, n_out)
    bfc = fc_b.astype(jnp.float32).reshape(1, n_out)

    # Single grid step by default: at these sizes the fixed per-step pipeline
    # overhead dwarfs the compute.  (On v7x one may pass batch_tile=N//2 to put
    # half the batch on each TensorCore; "parallel" semantics already set.)
    if batch_tile is None:
        batch_tile = N
    assert N % batch_tile == 0
    grid = (N // batch_tile,)

    kernel = functools.partial(_model_kernel, H_out=H_out, W_out=W_out,
                               K=K, n_hidden=n_hidden)

    return pl.pallas_call(
        kernel,
        out_shape=jax.ShapeDtypeStruct((N, n_out), jnp.float32),
        grid=grid,
        in_specs=[
            pl.BlockSpec((batch_tile, Hp, Wp), lambda i: (i, 0, 0)),   # padded x (VMEM)
            pl.BlockSpec(memory_space=pltpu.MemorySpace.SMEM),         # conv weight scalars
            pl.BlockSpec(memory_space=pltpu.MemorySpace.SMEM),         # conv bias scalars
            pl.BlockSpec((n_hidden, n_out), lambda i: (0, 0)),         # fc weight (VMEM)
            pl.BlockSpec((1, n_out), lambda i: (0, 0)),                # fc bias (VMEM)
        ],
        out_specs=pl.BlockSpec((batch_tile, n_out), lambda i: (i, 0)),
        compiler_params=pltpu.CompilerParams(
            dimension_semantics=("parallel",)),
    )(xp, wconv_flat, bconv, wfc, bfc)


def _reference_forward(x, conv_w, conv_b, fc_w, fc_b, kernel_size, padding_size=-1):
    """Pure-jnp reference (im2col + einsum), used only to validate the kernel."""
    if padding_size == -1:
        padding_size = kernel_size // 2
    if x.ndim == 3:
        x = x[:, None, :, :]
    K, pad = kernel_size, padding_size
    N, _, H, W = x.shape
    H_out = H + 2 * pad - K + 1
    W_out = W + 2 * pad - K + 1
    xp = jnp.pad(x[:, 0], ((0, 0), (pad, pad), (pad, pad)), mode="wrap")
    taps = [xp[:, ki:ki + H_out, kj:kj + W_out]
            for ki in range(K) for kj in range(K)]
    patches = jnp.stack(taps, axis=-1)                         # (N, H_out, W_out, K*K)
    w = conv_w.reshape(conv_w.shape[0], -1)                    # (n_hidden, K*K)
    conv = jnp.einsum("nhwk,ck->nchw", patches, w) + conv_b[None, :, None, None]
    pooled = jnp.maximum(conv, 0.0).mean(axis=(2, 3))          # (N, n_hidden)
    return pooled @ fc_w.T + fc_b[None, :]


if __name__ == "__main__":
    # Small deterministic setup consistent with the module:
    #   n_hidden = 8, kernel_size = 5 (padding 2, circular), 10 classes, x (2,1,16,16)
    n_hidden, kernel_size, n_classes = 8, 5, 10
    N, H, W = 2, 16, 16

    key = jax.random.PRNGKey(0)
    kx, kw1, kb1, kw2, kb2 = jax.random.split(key, 5)
    x = jax.random.normal(kx, (N, 1, H, W), dtype=jnp.float32)
    conv_w = 0.1 * jax.random.normal(kw1, (n_hidden, 1, kernel_size, kernel_size),
                                     jnp.float32)
    conv_b = 0.1 * jax.random.normal(kb1, (n_hidden,), jnp.float32)
    fc_w = 0.1 * jax.random.normal(kw2, (n_classes, n_hidden), jnp.float32)
    fc_b = 0.1 * jax.random.normal(kb2, (n_classes,), jnp.float32)

    fwd = jax.jit(functools.partial(simple_conv_forward, kernel_size=kernel_size))
    out = jax.block_until_ready(fwd(x, conv_w, conv_b, fc_w, fc_b))
    assert out.shape == (N, n_classes) and out.dtype == jnp.float32

    ref = _reference_forward(x, conv_w, conv_b, fc_w, fc_b, kernel_size)
    assert jnp.allclose(out, ref, atol=1e-4, rtol=1e-4)
    print("KERNEL_OK")
</pallas_src>

<mosaic_0001>
module attributes {stable_mosaic.version = 11 : i64} {
  func.func @_model_kernel(%arg0: i32, %arg1: memref<2x20x20xf32, #tpu.memory_space<vmem>>, %arg2: memref<200xf32, #tpu.memory_space<smem>>, %arg3: memref<8xf32, #tpu.memory_space<smem>>, %arg4: memref<8x10xf32, #tpu.memory_space<vmem>>, %arg5: memref<1x10xf32, #tpu.memory_space<vmem>>, %arg6: memref<2x10xf32, #tpu.memory_space<vmem>>) attributes {dimension_semantics = [#tpu.dimension_semantics<parallel>], iteration_bounds = array<i64: 1>, scalar_prefetch = 0 : i64, scratch_operands = 0 : i64, tpu.core_type = #tpu.core_type<tc>, window_params = [{transform_indices = @transform_0, window_bounds = array<i64: 2, 20, 20>}, {transform_indices = @transform_1, window_bounds = array<i64: 200>}, {transform_indices = @transform_2, window_bounds = array<i64: 8>}, {pipeline_mode = #tpu.pipeline_mode<synchronous>, transform_indices = @transform_3, window_bounds = array<i64: 8, 10>}, {pipeline_mode = #tpu.pipeline_mode<synchronous>, transform_indices = @transform_4, window_bounds = array<i64: 1, 10>}, {transform_indices = @transform_5, window_bounds = array<i64: 2, 10>}]} {
    %c0 = arith.constant 0 : index
    %c0_0 = arith.constant 0 : index
    %c0_1 = arith.constant 0 : index
    %0 = vector.load %arg1[%c0, %c0_0, %c0_1] : memref<2x20x20xf32, #tpu.memory_space<vmem>>, vector<2x20x20xf32>
    %1 = vector.extract_strided_slice %0 {offsets = [0, 0, 0], sizes = [2, 16, 16], strides = [1, 1, 1]} : vector<2x20x20xf32> to vector<2x16x16xf32>
    %c0_2 = arith.constant 0 : index
    %2 = memref.load %arg2[%c0_2] : memref<200xf32, #tpu.memory_space<smem>>
    %3 = vector.broadcast %2 : f32 to vector<2x16x16xf32>
    %4 = arith.mulf %3, %1 : vector<2x16x16xf32>
    %c25 = arith.constant 25 : index
    %5 = memref.load %arg2[%c25] : memref<200xf32, #tpu.memory_space<smem>>
    %6 = vector.broadcast %5 : f32 to vector<2x16x16xf32>
    %7 = arith.mulf %6, %1 : vector<2x16x16xf32>
    %c50 = arith.constant 50 : index
    %8 = memref.load %arg2[%c50] : memref<200xf32, #tpu.memory_space<smem>>
    %9 = vector.broadcast %8 : f32 to vector<2x16x16xf32>
    %10 = arith.mulf %9, %1 : vector<2x16x16xf32>
    %c75 = arith.constant 75 : index
    %11 = memref.load %arg2[%c75] : memref<200xf32, #tpu.memory_space<smem>>
    %12 = vector.broadcast %11 : f32 to vector<2x16x16xf32>
    %13 = arith.mulf %12, %1 : vector<2x16x16xf32>
    %c100 = arith.constant 100 : index
    %14 = memref.load %arg2[%c100] : memref<200xf32, #tpu.memory_space<smem>>
    %15 = vector.broadcast %14 : f32 to vector<2x16x16xf32>
    %16 = arith.mulf %15, %1 : vector<2x16x16xf32>
    %c125 = arith.constant 125 : index
    %17 = memref.load %arg2[%c125] : memref<200xf32, #tpu.memory_space<smem>>
    %18 = vector.broadcast %17 : f32 to vector<2x16x16xf32>
    %19 = arith.mulf %18, %1 : vector<2x16x16xf32>
    %c150 = arith.constant 150 : index
    %20 = memref.load %arg2[%c150] : memref<200xf32, #tpu.memory_space<smem>>
    %21 = vector.broadcast %20 : f32 to vector<2x16x16xf32>
    %22 = arith.mulf %21, %1 : vector<2x16x16xf32>
    %c175 = arith.constant 175 : index
    %23 = memref.load %arg2[%c175] : memref<200xf32, #tpu.memory_space<smem>>
    %24 = vector.broadcast %23 : f32 to vector<2x16x16xf32>
    %25 = arith.mulf %24, %1 : vector<2x16x16xf32>
    %26 = vector.extract_strided_slice %0 {offsets = [0, 0, 1], sizes = [2, 16, 16], strides = [1, 1, 1]} : vector<2x20x20xf32> to vector<2x16x16xf32>
    %c1 = arith.constant 1 : index
    %27 = memref.load %arg2[%c1] : memref<200xf32, #tpu.memory_space<smem>>
    %28 = vector.broadcast %27 : f32 to vector<2x16x16xf32>
    %29 = arith.mulf %28, %26 : vector<2x16x16xf32>
    %30 = arith.addf %4, %29 : vector<2x16x16xf32>
    %c26 = arith.constant 26 : index
    %31 = memref.load %arg2[%c26] : memref<200xf32, #tpu.memory_space<smem>>
    %32 = vector.broadcast %31 : f32 to vector<2x16x16xf32>
    %33 = arith.mulf %32, %26 : vector<2x16x16xf32>
    %34 = arith.addf %7, %33 : vector<2x16x16xf32>
    %c51 = arith.constant 51 : index
    %35 = memref.load %arg2[%c51] : memref<200xf32, #tpu.memory_space<smem>>
    %36 = vector.broadcast %35 : f32 to vector<2x16x16xf32>
    %37 = arith.mulf %36, %26 : vector<2x16x16xf32>
    %38 = arith.addf %10, %37 : vector<2x16x16xf32>
    %c76 = arith.constant 76 : index
    %39 = memref.load %arg2[%c76] : memref<200xf32, #tpu.memory_space<smem>>
    %40 = vector.broadcast %39 : f32 to vector<2x16x16xf32>
    %41 = arith.mulf %40, %26 : vector<2x16x16xf32>
    %42 = arith.addf %13, %41 : vector<2x16x16xf32>
    %c101 = arith.constant 101 : index
    %43 = memref.load %arg2[%c101] : memref<200xf32, #tpu.memory_space<smem>>
    %44 = vector.broadcast %43 : f32 to vector<2x16x16xf32>
    %45 = arith.mulf %44, %26 : vector<2x16x16xf32>
    %46 = arith.addf %16, %45 : vector<2x16x16xf32>
    %c126 = arith.constant 126 : index
    %47 = memref.load %arg2[%c126] : memref<200xf32, #tpu.memory_space<smem>>
    %48 = vector.broadcast %47 : f32 to vector<2x16x16xf32>
    %49 = arith.mulf %48, %26 : vector<2x16x16xf32>
    %50 = arith.addf %19, %49 : vector<2x16x16xf32>
    %c151 = arith.constant 151 : index
    %51 = memref.load %arg2[%c151] : memref<200xf32, #tpu.memory_space<smem>>
    %52 = vector.broadcast %51 : f32 to vector<2x16x16xf32>
    %53 = arith.mulf %52, %26 : vector<2x16x16xf32>
    %54 = arith.addf %22, %53 : vector<2x16x16xf32>
    %c176 = arith.constant 176 : index
    %55 = memref.load %arg2[%c176] : memref<200xf32, #tpu.memory_space<smem>>
    %56 = vector.broadcast %55 : f32 to vector<2x16x16xf32>
    %57 = arith.mulf %56, %26 : vector<2x16x16xf32>
    %58 = arith.addf %25, %57 : vector<2x16x16xf32>
    %59 = vector.extract_strided_slice %0 {offsets = [0, 0, 2], sizes = [2, 16, 16], strides = [1, 1, 1]} : vector<2x20x20xf32> to vector<2x16x16xf32>
    %c2 = arith.constant 2 : index
    %60 = memref.load %arg2[%c2] : memref<200xf32, #tpu.memory_space<smem>>
    %61 = vector.broadcast %60 : f32 to vector<2x16x16xf32>
    %62 = arith.mulf %61, %59 : vector<2x16x16xf32>
    %63 = arith.addf %30, %62 : vector<2x16x16xf32>
    %c27 = arith.constant 27 : index
    %64 = memref.load %arg2[%c27] : memref<200xf32, #tpu.memory_space<smem>>
    %65 = vector.broadcast %64 : f32 to vector<2x16x16xf32>
    %66 = arith.mulf %65, %59 : vector<2x16x16xf32>
    %67 = arith.addf %34, %66 : vector<2x16x16xf32>
    %c52 = arith.constant 52 : index
    %68 = memref.load %arg2[%c52] : memref<200xf32, #tpu.memory_space<smem>>
    %69 = vector.broadcast %68 : f32 to vector<2x16x16xf32>
    %70 = arith.mulf %69, %59 : vector<2x16x16xf32>
    %71 = arith.addf %38, %70 : vector<2x16x16xf32>
    %c77 = arith.constant 77 : index
    %72 = memref.load %arg2[%c77] : memref<200xf32, #tpu.memory_space<smem>>
    %73 = vector.broadcast %72 : f32 to vector<2x16x16xf32>
    %74 = arith.mulf %73, %59 : vector<2x16x16xf32>
    %75 = arith.addf %42, %74 : vector<2x16x16xf32>
    %c102 = arith.constant 102 : index
    %76 = memref.load %arg2[%c102] : memref<200xf32, #tpu.memory_space<smem>>
    %77 = vector.broadcast %76 : f32 to vector<2x16x16xf32>
    %78 = arith.mulf %77, %59 : vector<2x16x16xf32>
    %79 = arith.addf %46, %78 : vector<2x16x16xf32>
    %c127 = arith.constant 127 : index
    %80 = memref.load %arg2[%c127] : memref<200xf32, #tpu.memory_space<smem>>
    %81 = vector.broadcast %80 : f32 to vector<2x16x16xf32>
    %82 = arith.mulf %81, %59 : vector<2x16x16xf32>
    %83 = arith.addf %50, %82 : vector<2x16x16xf32>
    %c152 = arith.constant 152 : index
    %84 = memref.load %arg2[%c152] : memref<200xf32, #tpu.memory_space<smem>>
    %85 = vector.broadcast %84 : f32 to vector<2x16x16xf32>
    %86 = arith.mulf %85, %59 : vector<2x16x16xf32>
    %87 = arith.addf %54, %86 : vector<2x16x16xf32>
    %c177 = arith.constant 177 : index
    %88 = memref.load %arg2[%c177] : memref<200xf32, #tpu.memory_space<smem>>
    %89 = vector.broadcast %88 : f32 to vector<2x16x16xf32>
    %90 = arith.mulf %89, %59 : vector<2x16x16xf32>
    %91 = arith.addf %58, %90 : vector<2x16x16xf32>
    %92 = vector.extract_strided_slice %0 {offsets = [0, 0, 3], sizes = [2, 16, 16], strides = [1, 1, 1]} : vector<2x20x20xf32> to vector<2x16x16xf32>
    %c3 = arith.constant 3 : index
    %93 = memref.load %arg2[%c3] : memref<200xf32, #tpu.memory_space<smem>>
    %94 = vector.broadcast %93 : f32 to vector<2x16x16xf32>
    %95 = arith.mulf %94, %92 : vector<2x16x16xf32>
    %96 = arith.addf %63, %95 : vector<2x16x16xf32>
    %c28 = arith.constant 28 : index
    %97 = memref.load %arg2[%c28] : memref<200xf32, #tpu.memory_space<smem>>
    %98 = vector.broadcast %97 : f32 to vector<2x16x16xf32>
    %99 = arith.mulf %98, %92 : vector<2x16x16xf32>
    %100 = arith.addf %67, %99 : vector<2x16x16xf32>
    %c53 = arith.constant 53 : index
    %101 = memref.load %arg2[%c53] : memref<200xf32, #tpu.memory_space<smem>>
    %102 = vector.broadcast %101 : f32 to vector<2x16x16xf32>
    %103 = arith.mulf %102, %92 : vector<2x16x16xf32>
    %104 = arith.addf %71, %103 : vector<2x16x16xf32>
    %c78 = arith.constant 78 : index
    %105 = memref.load %arg2[%c78] : memref<200xf32, #tpu.memory_space<smem>>
    %106 = vector.broadcast %105 : f32 to vector<2x16x16xf32>
    %107 = arith.mulf %106, %92 : vector<2x16x16xf32>
    %108 = arith.addf %75, %107 : vector<2x16x16xf32>
    %c103 = arith.constant 103 : index
    %109 = memref.load %arg2[%c103] : memref<200xf32, #tpu.memory_space<smem>>
    %110 = vector.broadcast %109 : f32 to vector<2x16x16xf32>
    %111 = arith.mulf %110, %92 : vector<2x16x16xf32>
    %112 = arith.addf %79, %111 : vector<2x16x16xf32>
    %c128 = arith.constant 128 : index
    %113 = memref.load %arg2[%c128] : memref<200xf32, #tpu.memory_space<smem>>
    %114 = vector.broadcast %113 : f32 to vector<2x16x16xf32>
    %115 = arith.mulf %114, %92 : vector<2x16x16xf32>
    %116 = arith.addf %83, %115 : vector<2x16x16xf32>
    %c153 = arith.constant 153 : index
    %117 = memref.load %arg2[%c153] : memref<200xf32, #tpu.memory_space<smem>>
    %118 = vector.broadcast %117 : f32 to vector<2x16x16xf32>
    %119 = arith.mulf %118, %92 : vector<2x16x16xf32>
    %120 = arith.addf %87, %119 : vector<2x16x16xf32>
    %c178 = arith.constant 178 : index
    %121 = memref.load %arg2[%c178] : memref<200xf32, #tpu.memory_space<smem>>
    %122 = vector.broadcast %121 : f32 to vector<2x16x16xf32>
    %123 = arith.mulf %122, %92 : vector<2x16x16xf32>
    %124 = arith.addf %91, %123 : vector<2x16x16xf32>
    %125 = vector.extract_strided_slice %0 {offsets = [0, 0, 4], sizes = [2, 16, 16], strides = [1, 1, 1]} : vector<2x20x20xf32> to vector<2x16x16xf32>
    %c4 = arith.constant 4 : index
    %126 = memref.load %arg2[%c4] : memref<200xf32, #tpu.memory_space<smem>>
    %127 = vector.broadcast %126 : f32 to vector<2x16x16xf32>
    %128 = arith.mulf %127, %125 : vector<2x16x16xf32>
    %129 = arith.addf %96, %128 : vector<2x16x16xf32>
    %c29 = arith.constant 29 : index
    %130 = memref.load %arg2[%c29] : memref<200xf32, #tpu.memory_space<smem>>
    %131 = vector.broadcast %130 : f32 to vector<2x16x16xf32>
    %132 = arith.mulf %131, %125 : vector<2x16x16xf32>
    %133 = arith.addf %100, %132 : vector<2x16x16xf32>
    %c54 = arith.constant 54 : index
    %134 = memref.load %arg2[%c54] : memref<200xf32, #tpu.memory_space<smem>>
    %135 = vector.broadcast %134 : f32 to vector<2x16x16xf32>
    %136 = arith.mulf %135, %125 : vector<2x16x16xf32>
    %137 = arith.addf %104, %136 : vector<2x16x16xf32>
    %c79 = arith.constant 79 : index
    %138 = memref.load %arg2[%c79] : memref<200xf32, #tpu.memory_space<smem>>
    %139 = vector.broadcast %138 : f32 to vector<2x16x16xf32>
    %140 = arith.mulf %139, %125 : vector<2x16x16xf32>
    %141 = arith.addf %108, %140 : vector<2x16x16xf32>
    %c104 = arith.constant 104 : index
    %142 = memref.load %arg2[%c104] : memref<200xf32, #tpu.memory_space<smem>>
    %143 = vector.broadcast %142 : f32 to vector<2x16x16xf32>
    %144 = arith.mulf %143, %125 : vector<2x16x16xf32>
    %145 = arith.addf %112, %144 : vector<2x16x16xf32>
    %c129 = arith.constant 129 : index
    %146 = memref.load %arg2[%c129] : memref<200xf32, #tpu.memory_space<smem>>
    %147 = vector.broadcast %146 : f32 to vector<2x16x16xf32>
    %148 = arith.mulf %147, %125 : vector<2x16x16xf32>
    %149 = arith.addf %116, %148 : vector<2x16x16xf32>
    %c154 = arith.constant 154 : index
    %150 = memref.load %arg2[%c154] : memref<200xf32, #tpu.memory_space<smem>>
    %151 = vector.broadcast %150 : f32 to vector<2x16x16xf32>
    %152 = arith.mulf %151, %125 : vector<2x16x16xf32>
    %153 = arith.addf %120, %152 : vector<2x16x16xf32>
    %c179 = arith.constant 179 : index
    %154 = memref.load %arg2[%c179] : memref<200xf32, #tpu.memory_space<smem>>
    %155 = vector.broadcast %154 : f32 to vector<2x16x16xf32>
    %156 = arith.mulf %155, %125 : vector<2x16x16xf32>
    %157 = arith.addf %124, %156 : vector<2x16x16xf32>
    %158 = vector.extract_strided_slice %0 {offsets = [0, 1, 0], sizes = [2, 16, 16], strides = [1, 1, 1]} : vector<2x20x20xf32> to vector<2x16x16xf32>
    %c5 = arith.constant 5 : index
    %159 = memref.load %arg2[%c5] : memref<200xf32, #tpu.memory_space<smem>>
    %160 = vector.broadcast %159 : f32 to vector<2x16x16xf32>
    %161 = arith.mulf %160, %158 : vector<2x16x16xf32>
    %162 = arith.addf %129, %161 : vector<2x16x16xf32>
    %c30 = arith.constant 30 : index
    %163 = memref.load %arg2[%c30] : memref<200xf32, #tpu.memory_space<smem>>
    %164 = vector.broadcast %163 : f32 to vector<2x16x16xf32>
    %165 = arith.mulf %164, %158 : vector<2x16x16xf32>
    %166 = arith.addf %133, %165 : vector<2x16x16xf32>
    %c55 = arith.constant 55 : index
    %167 = memref.load %arg2[%c55] : memref<200xf32, #tpu.memory_space<smem>>
    %168 = vector.broadcast %167 : f32 to vector<2x16x16xf32>
    %169 = arith.mulf %168, %158 : vector<2x16x16xf32>
    %170 = arith.addf %137, %169 : vector<2x16x16xf32>
    %c80 = arith.constant 80 : index
    %171 = memref.load %arg2[%c80] : memref<200xf32, #tpu.memory_space<smem>>
    %172 = vector.broadcast %171 : f32 to vector<2x16x16xf32>
    %173 = arith.mulf %172, %158 : vector<2x16x16xf32>
    %174 = arith.addf %141, %173 : vector<2x16x16xf32>
    %c105 = arith.constant 105 : index
    %175 = memref.load %arg2[%c105] : memref<200xf32, #tpu.memory_space<smem>>
    %176 = vector.broadcast %175 : f32 to vector<2x16x16xf32>
    %177 = arith.mulf %176, %158 : vector<2x16x16xf32>
    %178 = arith.addf %145, %177 : vector<2x16x16xf32>
    %c130 = arith.constant 130 : index
    %179 = memref.load %arg2[%c130] : memref<200xf32, #tpu.memory_space<smem>>
    %180 = vector.broadcast %179 : f32 to vector<2x16x16xf32>
    %181 = arith.mulf %180, %158 : vector<2x16x16xf32>
    %182 = arith.addf %149, %181 : vector<2x16x16xf32>
    %c155 = arith.constant 155 : index
    %183 = memref.load %arg2[%c155] : memref<200xf32, #tpu.memory_space<smem>>
    %184 = vector.broadcast %183 : f32 to vector<2x16x16xf32>
    %185 = arith.mulf %184, %158 : vector<2x16x16xf32>
    %186 = arith.addf %153, %185 : vector<2x16x16xf32>
    %c180 = arith.constant 180 : index
    %187 = memref.load %arg2[%c180] : memref<200xf32, #tpu.memory_space<smem>>
    %188 = vector.broadcast %187 : f32 to vector<2x16x16xf32>
    %189 = arith.mulf %188, %158 : vector<2x16x16xf32>
    %190 = arith.addf %157, %189 : vector<2x16x16xf32>
    %191 = vector.extract_strided_slice %0 {offsets = [0, 1, 1], sizes = [2, 16, 16], strides = [1, 1, 1]} : vector<2x20x20xf32> to vector<2x16x16xf32>
    %c6 = arith.constant 6 : index
    %192 = memref.load %arg2[%c6] : memref<200xf32, #tpu.memory_space<smem>>
    %193 = vector.broadcast %192 : f32 to vector<2x16x16xf32>
    %194 = arith.mulf %193, %191 : vector<2x16x16xf32>
    %195 = arith.addf %162, %194 : vector<2x16x16xf32>
    %c31 = arith.constant 31 : index
    %196 = memref.load %arg2[%c31] : memref<200xf32, #tpu.memory_space<smem>>
    %197 = vector.broadcast %196 : f32 to vector<2x16x16xf32>
    %198 = arith.mulf %197, %191 : vector<2x16x16xf32>
    %199 = arith.addf %166, %198 : vector<2x16x16xf32>
    %c56 = arith.constant 56 : index
    %200 = memref.load %arg2[%c56] : memref<200xf32, #tpu.memory_space<smem>>
    %201 = vector.broadcast %200 : f32 to vector<2x16x16xf32>
    %202 = arith.mulf %201, %191 : vector<2x16x16xf32>
    %203 = arith.addf %170, %202 : vector<2x16x16xf32>
    %c81 = arith.constant 81 : index
    %204 = memref.load %arg2[%c81] : memref<200xf32, #tpu.memory_space<smem>>
    %205 = vector.broadcast %204 : f32 to vector<2x16x16xf32>
    %206 = arith.mulf %205, %191 : vector<2x16x16xf32>
    %207 = arith.addf %174, %206 : vector<2x16x16xf32>
    %c106 = arith.constant 106 : index
    %208 = memref.load %arg2[%c106] : memref<200xf32, #tpu.memory_space<smem>>
    %209 = vector.broadcast %208 : f32 to vector<2x16x16xf32>
    %210 = arith.mulf %209, %191 : vector<2x16x16xf32>
    %211 = arith.addf %178, %210 : vector<2x16x16xf32>
    %c131 = arith.constant 131 : index
    %212 = memref.load %arg2[%c131] : memref<200xf32, #tpu.memory_space<smem>>
    %213 = vector.broadcast %212 : f32 to vector<2x16x16xf32>
    %214 = arith.mulf %213, %191 : vector<2x16x16xf32>
    %215 = arith.addf %182, %214 : vector<2x16x16xf32>
    %c156 = arith.constant 156 : index
    %216 = memref.load %arg2[%c156] : memref<200xf32, #tpu.memory_space<smem>>
    %217 = vector.broadcast %216 : f32 to vector<2x16x16xf32>
    %218 = arith.mulf %217, %191 : vector<2x16x16xf32>
    %219 = arith.addf %186, %218 : vector<2x16x16xf32>
    %c181 = arith.constant 181 : index
    %220 = memref.load %arg2[%c181] : memref<200xf32, #tpu.memory_space<smem>>
    %221 = vector.broadcast %220 : f32 to vector<2x16x16xf32>
    %222 = arith.mulf %221, %191 : vector<2x16x16xf32>
    %223 = arith.addf %190, %222 : vector<2x16x16xf32>
    %224 = vector.extract_strided_slice %0 {offsets = [0, 1, 2], sizes = [2, 16, 16], strides = [1, 1, 1]} : vector<2x20x20xf32> to vector<2x16x16xf32>
    %c7 = arith.constant 7 : index
    %225 = memref.load %arg2[%c7] : memref<200xf32, #tpu.memory_space<smem>>
    %226 = vector.broadcast %225 : f32 to vector<2x16x16xf32>
    %227 = arith.mulf %226, %224 : vector<2x16x16xf32>
    %228 = arith.addf %195, %227 : vector<2x16x16xf32>
    %c32 = arith.constant 32 : index
    %229 = memref.load %arg2[%c32] : memref<200xf32, #tpu.memory_space<smem>>
    %230 = vector.broadcast %229 : f32 to vector<2x16x16xf32>
    %231 = arith.mulf %230, %224 : vector<2x16x16xf32>
    %232 = arith.addf %199, %231 : vector<2x16x16xf32>
    %c57 = arith.constant 57 : index
    %233 = memref.load %arg2[%c57] : memref<200xf32, #tpu.memory_space<smem>>
    %234 = vector.broadcast %233 : f32 to vector<2x16x16xf32>
    %235 = arith.mulf %234, %224 : vector<2x16x16xf32>
    %236 = arith.addf %203, %235 : vector<2x16x16xf32>
    %c82 = arith.constant 82 : index
    %237 = memref.load %arg2[%c82] : memref<200xf32, #tpu.memory_space<smem>>
    %238 = vector.broadcast %237 : f32 to vector<2x16x16xf32>
    %239 = arith.mulf %238, %224 : vector<2x16x16xf32>
    %240 = arith.addf %207, %239 : vector<2x16x16xf32>
    %c107 = arith.constant 107 : index
    %241 = memref.load %arg2[%c107] : memref<200xf32, #tpu.memory_space<smem>>
    %242 = vector.broadcast %241 : f32 to vector<2x16x16xf32>
    %243 = arith.mulf %242, %224 : vector<2x16x16xf32>
    %244 = arith.addf %211, %243 : vector<2x16x16xf32>
    %c132 = arith.constant 132 : index
    %245 = memref.load %arg2[%c132] : memref<200xf32, #tpu.memory_space<smem>>
    %246 = vector.broadcast %245 : f32 to vector<2x16x16xf32>
    %247 = arith.mulf %246, %224 : vector<2x16x16xf32>
    %248 = arith.addf %215, %247 : vector<2x16x16xf32>
    %c157 = arith.constant 157 : index
    %249 = memref.load %arg2[%c157] : memref<200xf32, #tpu.memory_space<smem>>
    %250 = vector.broadcast %249 : f32 to vector<2x16x16xf32>
    %251 = arith.mulf %250, %224 : vector<2x16x16xf32>
    %252 = arith.addf %219, %251 : vector<2x16x16xf32>
    %c182 = arith.constant 182 : index
    %253 = memref.load %arg2[%c182] : memref<200xf32, #tpu.memory_space<smem>>
    %254 = vector.broadcast %253 : f32 to vector<2x16x16xf32>
    %255 = arith.mulf %254, %224 : vector<2x16x16xf32>
    %256 = arith.addf %223, %255 : vector<2x16x16xf32>
    %257 = vector.extract_strided_slice %0 {offsets = [0, 1, 3], sizes = [2, 16, 16], strides = [1, 1, 1]} : vector<2x20x20xf32> to vector<2x16x16xf32>
    %c8 = arith.constant 8 : index
    %258 = memref.load %arg2[%c8] : memref<200xf32, #tpu.memory_space<smem>>
    %259 = vector.broadcast %258 : f32 to vector<2x16x16xf32>
    %260 = arith.mulf %259, %257 : vector<2x16x16xf32>
    %261 = arith.addf %228, %260 : vector<2x16x16xf32>
    %c33 = arith.constant 33 : index
    %262 = memref.load %arg2[%c33] : memref<200xf32, #tpu.memory_space<smem>>
    %263 = vector.broadcast %262 : f32 to vector<2x16x16xf32>
    %264 = arith.mulf %263, %257 : vector<2x16x16xf32>
    %265 = arith.addf %232, %264 : vector<2x16x16xf32>
    %c58 = arith.constant 58 : index
    %266 = memref.load %arg2[%c58] : memref<200xf32, #tpu.memory_space<smem>>
    %267 = vector.broadcast %266 : f32 to vector<2x16x16xf32>
    %268 = arith.mulf %267, %257 : vector<2x16x16xf32>
    %269 = arith.addf %236, %268 : vector<2x16x16xf32>
    %c83 = arith.constant 83 : index
    %270 = memref.load %arg2[%c83] : memref<200xf32, #tpu.memory_space<smem>>
    %271 = vector.broadcast %270 : f32 to vector<2x16x16xf32>
    %272 = arith.mulf %271, %257 : vector<2x16x16xf32>
    %273 = arith.addf %240, %272 : vector<2x16x16xf32>
    %c108 = arith.constant 108 : index
    %274 = memref.load %arg2[%c108] : memref<200xf32, #tpu.memory_space<smem>>
    %275 = vector.broadcast %274 : f32 to vector<2x16x16xf32>
    %276 = arith.mulf %275, %257 : vector<2x16x16xf32>
    %277 = arith.addf %244, %276 : vector<2x16x16xf32>
    %c133 = arith.constant 133 : index
    %278 = memref.load %arg2[%c133] : memref<200xf32, #tpu.memory_space<smem>>
    %279 = vector.broadcast %278 : f32 to vector<2x16x16xf32>
    %280 = arith.mulf %279, %257 : vector<2x16x16xf32>
    %281 = arith.addf %248, %280 : vector<2x16x16xf32>
    %c158 = arith.constant 158 : index
    %282 = memref.load %arg2[%c158] : memref<200xf32, #tpu.memory_space<smem>>
    %283 = vector.broadcast %282 : f32 to vector<2x16x16xf32>
    %284 = arith.mulf %283, %257 : vector<2x16x16xf32>
    %285 = arith.addf %252, %284 : vector<2x16x16xf32>
    %c183 = arith.constant 183 : index
    %286 = memref.load %arg2[%c183] : memref<200xf32, #tpu.memory_space<smem>>
    %287 = vector.broadcast %286 : f32 to vector<2x16x16xf32>
    %288 = arith.mulf %287, %257 : vector<2x16x16xf32>
    %289 = arith.addf %256, %288 : vector<2x16x16xf32>
    %290 = vector.extract_strided_slice %0 {offsets = [0, 1, 4], sizes = [2, 16, 16], strides = [1, 1, 1]} : vector<2x20x20xf32> to vector<2x16x16xf32>
    %c9 = arith.constant 9 : index
    %291 = memref.load %arg2[%c9] : memref<200xf32, #tpu.memory_space<smem>>
    %292 = vector.broadcast %291 : f32 to vector<2x16x16xf32>
    %293 = arith.mulf %292, %290 : vector<2x16x16xf32>
    %294 = arith.addf %261, %293 : vector<2x16x16xf32>
    %c34 = arith.constant 34 : index
    %295 = memref.load %arg2[%c34] : memref<200xf32, #tpu.memory_space<smem>>
    %296 = vector.broadcast %295 : f32 to vector<2x16x16xf32>
    %297 = arith.mulf %296, %290 : vector<2x16x16xf32>
    %298 = arith.addf %265, %297 : vector<2x16x16xf32>
    %c59 = arith.constant 59 : index
    %299 = memref.load %arg2[%c59] : memref<200xf32, #tpu.memory_space<smem>>
    %300 = vector.broadcast %299 : f32 to vector<2x16x16xf32>
    %301 = arith.mulf %300, %290 : vector<2x16x16xf32>
    %302 = arith.addf %269, %301 : vector<2x16x16xf32>
    %c84 = arith.constant 84 : index
    %303 = memref.load %arg2[%c84] : memref<200xf32, #tpu.memory_space<smem>>
    %304 = vector.broadcast %303 : f32 to vector<2x16x16xf32>
    %305 = arith.mulf %304, %290 : vector<2x16x16xf32>
    %306 = arith.addf %273, %305 : vector<2x16x16xf32>
    %c109 = arith.constant 109 : index
    %307 = memref.load %arg2[%c109] : memref<200xf32, #tpu.memory_space<smem>>
    %308 = vector.broadcast %307 : f32 to vector<2x16x16xf32>
    %309 = arith.mulf %308, %290 : vector<2x16x16xf32>
    %310 = arith.addf %277, %309 : vector<2x16x16xf32>
    %c134 = arith.constant 134 : index
    %311 = memref.load %arg2[%c134] : memref<200xf32, #tpu.memory_space<smem>>
    %312 = vector.broadcast %311 : f32 to vector<2x16x16xf32>
    %313 = arith.mulf %312, %290 : vector<2x16x16xf32>
    %314 = arith.addf %281, %313 : vector<2x16x16xf32>
    %c159 = arith.constant 159 : index
    %315 = memref.load %arg2[%c159] : memref<200xf32, #tpu.memory_space<smem>>
    %316 = vector.broadcast %315 : f32 to vector<2x16x16xf32>
    %317 = arith.mulf %316, %290 : vector<2x16x16xf32>
    %318 = arith.addf %285, %317 : vector<2x16x16xf32>
    %c184 = arith.constant 184 : index
    %319 = memref.load %arg2[%c184] : memref<200xf32, #tpu.memory_space<smem>>
    %320 = vector.broadcast %319 : f32 to vector<2x16x16xf32>
    %321 = arith.mulf %320, %290 : vector<2x16x16xf32>
    %322 = arith.addf %289, %321 : vector<2x16x16xf32>
    %323 = vector.extract_strided_slice %0 {offsets = [0, 2, 0], sizes = [2, 16, 16], strides = [1, 1, 1]} : vector<2x20x20xf32> to vector<2x16x16xf32>
    %c10 = arith.constant 10 : index
    %324 = memref.load %arg2[%c10] : memref<200xf32, #tpu.memory_space<smem>>
    %325 = vector.broadcast %324 : f32 to vector<2x16x16xf32>
    %326 = arith.mulf %325, %323 : vector<2x16x16xf32>
    %327 = arith.addf %294, %326 : vector<2x16x16xf32>
    %c35 = arith.constant 35 : index
    %328 = memref.load %arg2[%c35] : memref<200xf32, #tpu.memory_space<smem>>
    %329 = vector.broadcast %328 : f32 to vector<2x16x16xf32>
    %330 = arith.mulf %329, %323 : vector<2x16x16xf32>
    %331 = arith.addf %298, %330 : vector<2x16x16xf32>
    %c60 = arith.constant 60 : index
    %332 = memref.load %arg2[%c60] : memref<200xf32, #tpu.memory_space<smem>>
    %333 = vector.broadcast %332 : f32 to vector<2x16x16xf32>
    %334 = arith.mulf %333, %323 : vector<2x16x16xf32>
    %335 = arith.addf %302, %334 : vector<2x16x16xf32>
    %c85 = arith.constant 85 : index
    %336 = memref.load %arg2[%c85] : memref<200xf32, #tpu.memory_space<smem>>
    %337 = vector.broadcast %336 : f32 to vector<2x16x16xf32>
    %338 = arith.mulf %337, %323 : vector<2x16x16xf32>
    %339 = arith.addf %306, %338 : vector<2x16x16xf32>
    %c110 = arith.constant 110 : index
    %340 = memref.load %arg2[%c110] : memref<200xf32, #tpu.memory_space<smem>>
    %341 = vector.broadcast %340 : f32 to vector<2x16x16xf32>
    %342 = arith.mulf %341, %323 : vector<2x16x16xf32>
    %343 = arith.addf %310, %342 : vector<2x16x16xf32>
    %c135 = arith.constant 135 : index
    %344 = memref.load %arg2[%c135] : memref<200xf32, #tpu.memory_space<smem>>
    %345 = vector.broadcast %344 : f32 to vector<2x16x16xf32>
    %346 = arith.mulf %345, %323 : vector<2x16x16xf32>
    %347 = arith.addf %314, %346 : vector<2x16x16xf32>
    %c160 = arith.constant 160 : index
    %348 = memref.load %arg2[%c160] : memref<200xf32, #tpu.memory_space<smem>>
    %349 = vector.broadcast %348 : f32 to vector<2x16x16xf32>
    %350 = arith.mulf %349, %323 : vector<2x16x16xf32>
    %351 = arith.addf %318, %350 : vector<2x16x16xf32>
    %c185 = arith.constant 185 : index
    %352 = memref.load %arg2[%c185] : memref<200xf32, #tpu.memory_space<smem>>
    %353 = vector.broadcast %352 : f32 to vector<2x16x16xf32>
    %354 = arith.mulf %353, %323 : vector<2x16x16xf32>
    %355 = arith.addf %322, %354 : vector<2x16x16xf32>
    %356 = vector.extract_strided_slice %0 {offsets = [0, 2, 1], sizes = [2, 16, 16], strides = [1, 1, 1]} : vector<2x20x20xf32> to vector<2x16x16xf32>
    %c11 = arith.constant 11 : index
    %357 = memref.load %arg2[%c11] : memref<200xf32, #tpu.memory_space<smem>>
    %358 = vector.broadcast %357 : f32 to vector<2x16x16xf32>
    %359 = arith.mulf %358, %356 : vector<2x16x16xf32>
    %360 = arith.addf %327, %359 : vector<2x16x16xf32>
    %c36 = arith.constant 36 : index
    %361 = memref.load %arg2[%c36] : memref<200xf32, #tpu.memory_space<smem>>
    %362 = vector.broadcast %361 : f32 to vector<2x16x16xf32>
    %363 = arith.mulf %362, %356 : vector<2x16x16xf32>
    %364 = arith.addf %331, %363 : vector<2x16x16xf32>
    %c61 = arith.constant 61 : index
    %365 = memref.load %arg2[%c61] : memref<200xf32, #tpu.memory_space<smem>>
    %366 = vector.broadcast %365 : f32 to vector<2x16x16xf32>
    %367 = arith.mulf %366, %356 : vector<2x16x16xf32>
    %368 = arith.addf %335, %367 : vector<2x16x16xf32>
    %c86 = arith.constant 86 : index
    %369 = memref.load %arg2[%c86] : memref<200xf32, #tpu.memory_space<smem>>
    %370 = vector.broadcast %369 : f32 to vector<2x16x16xf32>
    %371 = arith.mulf %370, %356 : vector<2x16x16xf32>
    %372 = arith.addf %339, %371 : vector<2x16x16xf32>
    %c111 = arith.constant 111 : index
    %373 = memref.load %arg2[%c111] : memref<200xf32, #tpu.memory_space<smem>>
    %374 = vector.broadcast %373 : f32 to vector<2x16x16xf32>
    %375 = arith.mulf %374, %356 : vector<2x16x16xf32>
    %376 = arith.addf %343, %375 : vector<2x16x16xf32>
    %c136 = arith.constant 136 : index
    %377 = memref.load %arg2[%c136] : memref<200xf32, #tpu.memory_space<smem>>
    %378 = vector.broadcast %377 : f32 to vector<2x16x16xf32>
    %379 = arith.mulf %378, %356 : vector<2x16x16xf32>
    %380 = arith.addf %347, %379 : vector<2x16x16xf32>
    %c161 = arith.constant 161 : index
    %381 = memref.load %arg2[%c161] : memref<200xf32, #tpu.memory_space<smem>>
    %382 = vector.broadcast %381 : f32 to vector<2x16x16xf32>
    %383 = arith.mulf %382, %356 : vector<2x16x16xf32>
    %384 = arith.addf %351, %383 : vector<2x16x16xf32>
    %c186 = arith.constant 186 : index
    %385 = memref.load %arg2[%c186] : memref<200xf32, #tpu.memory_space<smem>>
    %386 = vector.broadcast %385 : f32 to vector<2x16x16xf32>
    %387 = arith.mulf %386, %356 : vector<2x16x16xf32>
    %388 = arith.addf %355, %387 : vector<2x16x16xf32>
    %389 = vector.extract_strided_slice %0 {offsets = [0, 2, 2], sizes = [2, 16, 16], strides = [1, 1, 1]} : vector<2x20x20xf32> to vector<2x16x16xf32>
    %c12 = arith.constant 12 : index
    %390 = memref.load %arg2[%c12] : memref<200xf32, #tpu.memory_space<smem>>
    %391 = vector.broadcast %390 : f32 to vector<2x16x16xf32>
    %392 = arith.mulf %391, %389 : vector<2x16x16xf32>
    %393 = arith.addf %360, %392 : vector<2x16x16xf32>
    %c37 = arith.constant 37 : index
    %394 = memref.load %arg2[%c37] : memref<200xf32, #tpu.memory_space<smem>>
    %395 = vector.broadcast %394 : f32 to vector<2x16x16xf32>
    %396 = arith.mulf %395, %389 : vector<2x16x16xf32>
    %397 = arith.addf %364, %396 : vector<2x16x16xf32>
    %c62 = arith.constant 62 : index
    %398 = memref.load %arg2[%c62] : memref<200xf32, #tpu.memory_space<smem>>
    %399 = vector.broadcast %398 : f32 to vector<2x16x16xf32>
    %400 = arith.mulf %399, %389 : vector<2x16x16xf32>
    %401 = arith.addf %368, %400 : vector<2x16x16xf32>
    %c87 = arith.constant 87 : index
    %402 = memref.load %arg2[%c87] : memref<200xf32, #tpu.memory_space<smem>>
    %403 = vector.broadcast %402 : f32 to vector<2x16x16xf32>
    %404 = arith.mulf %403, %389 : vector<2x16x16xf32>
    %405 = arith.addf %372, %404 : vector<2x16x16xf32>
    %c112 = arith.constant 112 : index
    %406 = memref.load %arg2[%c112] : memref<200xf32, #tpu.memory_space<smem>>
    %407 = vector.broadcast %406 : f32 to vector<2x16x16xf32>
    %408 = arith.mulf %407, %389 : vector<2x16x16xf32>
    %409 = arith.addf %376, %408 : vector<2x16x16xf32>
    %c137 = arith.constant 137 : index
    %410 = memref.load %arg2[%c137] : memref<200xf32, #tpu.memory_space<smem>>
    %411 = vector.broadcast %410 : f32 to vector<2x16x16xf32>
    %412 = arith.mulf %411, %389 : vector<2x16x16xf32>
    %413 = arith.addf %380, %412 : vector<2x16x16xf32>
    %c162 = arith.constant 162 : index
    %414 = memref.load %arg2[%c162] : memref<200xf32, #tpu.memory_space<smem>>
    %415 = vector.broadcast %414 : f32 to vector<2x16x16xf32>
    %416 = arith.mulf %415, %389 : vector<2x16x16xf32>
    %417 = arith.addf %384, %416 : vector<2x16x16xf32>
    %c187 = arith.constant 187 : index
    %418 = memref.load %arg2[%c187] : memref<200xf32, #tpu.memory_space<smem>>
    %419 = vector.broadcast %418 : f32 to vector<2x16x16xf32>
    %420 = arith.mulf %419, %389 : vector<2x16x16xf32>
    %421 = arith.addf %388, %420 : vector<2x16x16xf32>
    %422 = vector.extract_strided_slice %0 {offsets = [0, 2, 3], sizes = [2, 16, 16], strides = [1, 1, 1]} : vector<2x20x20xf32> to vector<2x16x16xf32>
    %c13 = arith.constant 13 : index
    %423 = memref.load %arg2[%c13] : memref<200xf32, #tpu.memory_space<smem>>
    %424 = vector.broadcast %423 : f32 to vector<2x16x16xf32>
    %425 = arith.mulf %424, %422 : vector<2x16x16xf32>
    %426 = arith.addf %393, %425 : vector<2x16x16xf32>
    %c38 = arith.constant 38 : index
    %427 = memref.load %arg2[%c38] : memref<200xf32, #tpu.memory_space<smem>>
    %428 = vector.broadcast %427 : f32 to vector<2x16x16xf32>
    %429 = arith.mulf %428, %422 : vector<2x16x16xf32>
    %430 = arith.addf %397, %429 : vector<2x16x16xf32>
    %c63 = arith.constant 63 : index
    %431 = memref.load %arg2[%c63] : memref<200xf32, #tpu.memory_space<smem>>
    %432 = vector.broadcast %431 : f32 to vector<2x16x16xf32>
    %433 = arith.mulf %432, %422 : vector<2x16x16xf32>
    %434 = arith.addf %401, %433 : vector<2x16x16xf32>
    %c88 = arith.constant 88 : index
    %435 = memref.load %arg2[%c88] : memref<200xf32, #tpu.memory_space<smem>>
    %436 = vector.broadcast %435 : f32 to vector<2x16x16xf32>
    %437 = arith.mulf %436, %422 : vector<2x16x16xf32>
    %438 = arith.addf %405, %437 : vector<2x16x16xf32>
    %c113 = arith.constant 113 : index
    %439 = memref.load %arg2[%c113] : memref<200xf32, #tpu.memory_space<smem>>
    %440 = vector.broadcast %439 : f32 to vector<2x16x16xf32>
    %441 = arith.mulf %440, %422 : vector<2x16x16xf32>
    %442 = arith.addf %409, %441 : vector<2x16x16xf32>
    %c138 = arith.constant 138 : index
    %443 = memref.load %arg2[%c138] : memref<200xf32, #tpu.memory_space<smem>>
    %444 = vector.broadcast %443 : f32 to vector<2x16x16xf32>
    %445 = arith.mulf %444, %422 : vector<2x16x16xf32>
    %446 = arith.addf %413, %445 : vector<2x16x16xf32>
    %c163 = arith.constant 163 : index
    %447 = memref.load %arg2[%c163] : memref<200xf32, #tpu.memory_space<smem>>
    %448 = vector.broadcast %447 : f32 to vector<2x16x16xf32>
    %449 = arith.mulf %448, %422 : vector<2x16x16xf32>
    %450 = arith.addf %417, %449 : vector<2x16x16xf32>
    %c188 = arith.constant 188 : index
    %451 = memref.load %arg2[%c188] : memref<200xf32, #tpu.memory_space<smem>>
    %452 = vector.broadcast %451 : f32 to vector<2x16x16xf32>
    %453 = arith.mulf %452, %422 : vector<2x16x16xf32>
    %454 = arith.addf %421, %453 : vector<2x16x16xf32>
    %455 = vector.extract_strided_slice %0 {offsets = [0, 2, 4], sizes = [2, 16, 16], strides = [1, 1, 1]} : vector<2x20x20xf32> to vector<2x16x16xf32>
    %c14 = arith.constant 14 : index
    %456 = memref.load %arg2[%c14] : memref<200xf32, #tpu.memory_space<smem>>
    %457 = vector.broadcast %456 : f32 to vector<2x16x16xf32>
    %458 = arith.mulf %457, %455 : vector<2x16x16xf32>
    %459 = arith.addf %426, %458 : vector<2x16x16xf32>
    %c39 = arith.constant 39 : index
    %460 = memref.load %arg2[%c39] : memref<200xf32, #tpu.memory_space<smem>>
    %461 = vector.broadcast %460 : f32 to vector<2x16x16xf32>
    %462 = arith.mulf %461, %455 : vector<2x16x16xf32>
    %463 = arith.addf %430, %462 : vector<2x16x16xf32>
    %c64 = arith.constant 64 : index
    %464 = memref.load %arg2[%c64] : memref<200xf32, #tpu.memory_space<smem>>
    %465 = vector.broadcast %464 : f32 to vector<2x16x16xf32>
    %466 = arith.mulf %465, %455 : vector<2x16x16xf32>
    %467 = arith.addf %434, %466 : vector<2x16x16xf32>
    %c89 = arith.constant 89 : index
    %468 = memref.load %arg2[%c89] : memref<200xf32, #tpu.memory_space<smem>>
    %469 = vector.broadcast %468 : f32 to vector<2x16x16xf32>
    %470 = arith.mulf %469, %455 : vector<2x16x16xf32>
    %471 = arith.addf %438, %470 : vector<2x16x16xf32>
    %c114 = arith.constant 114 : index
    %472 = memref.load %arg2[%c114] : memref<200xf32, #tpu.memory_space<smem>>
    %473 = vector.broadcast %472 : f32 to vector<2x16x16xf32>
    %474 = arith.mulf %473, %455 : vector<2x16x16xf32>
    %475 = arith.addf %442, %474 : vector<2x16x16xf32>
    %c139 = arith.constant 139 : index
    %476 = memref.load %arg2[%c139] : memref<200xf32, #tpu.memory_space<smem>>
    %477 = vector.broadcast %476 : f32 to vector<2x16x16xf32>
    %478 = arith.mulf %477, %455 : vector<2x16x16xf32>
    %479 = arith.addf %446, %478 : vector<2x16x16xf32>
    %c164 = arith.constant 164 : index
    %480 = memref.load %arg2[%c164] : memref<200xf32, #tpu.memory_space<smem>>
    %481 = vector.broadcast %480 : f32 to vector<2x16x16xf32>
    %482 = arith.mulf %481, %455 : vector<2x16x16xf32>
    %483 = arith.addf %450, %482 : vector<2x16x16xf32>
    %c189 = arith.constant 189 : index
    %484 = memref.load %arg2[%c189] : memref<200xf32, #tpu.memory_space<smem>>
    %485 = vector.broadcast %484 : f32 to vector<2x16x16xf32>
    %486 = arith.mulf %485, %455 : vector<2x16x16xf32>
    %487 = arith.addf %454, %486 : vector<2x16x16xf32>
    %488 = vector.extract_strided_slice %0 {offsets = [0, 3, 0], sizes = [2, 16, 16], strides = [1, 1, 1]} : vector<2x20x20xf32> to vector<2x16x16xf32>
    %c15 = arith.constant 15 : index
    %489 = memref.load %arg2[%c15] : memref<200xf32, #tpu.memory_space<smem>>
    %490 = vector.broadcast %489 : f32 to vector<2x16x16xf32>
    %491 = arith.mulf %490, %488 : vector<2x16x16xf32>
    %492 = arith.addf %459, %491 : vector<2x16x16xf32>
    %c40 = arith.constant 40 : index
    %493 = memref.load %arg2[%c40] : memref<200xf32, #tpu.memory_space<smem>>
    %494 = vector.broadcast %493 : f32 to vector<2x16x16xf32>
    %495 = arith.mulf %494, %488 : vector<2x16x16xf32>
    %496 = arith.addf %463, %495 : vector<2x16x16xf32>
    %c65 = arith.constant 65 : index
    %497 = memref.load %arg2[%c65] : memref<200xf32, #tpu.memory_space<smem>>
    %498 = vector.broadcast %497 : f32 to vector<2x16x16xf32>
    %499 = arith.mulf %498, %488 : vector<2x16x16xf32>
    %500 = arith.addf %467, %499 : vector<2x16x16xf32>
    %c90 = arith.constant 90 : index
    %501 = memref.load %arg2[%c90] : memref<200xf32, #tpu.memory_space<smem>>
    %502 = vector.broadcast %501 : f32 to vector<2x16x16xf32>
    %503 = arith.mulf %502, %488 : vector<2x16x16xf32>
    %504 = arith.addf %471, %503 : vector<2x16x16xf32>
    %c115 = arith.constant 115 : index
    %505 = memref.load %arg2[%c115] : memref<200xf32, #tpu.memory_space<smem>>
    %506 = vector.broadcast %505 : f32 to vector<2x16x16xf32>
    %507 = arith.mulf %506, %488 : vector<2x16x16xf32>
    %508 = arith.addf %475, %507 : vector<2x16x16xf32>
    %c140 = arith.constant 140 : index
    %509 = memref.load %arg2[%c140] : memref<200xf32, #tpu.memory_space<smem>>
    %510 = vector.broadcast %509 : f32 to vector<2x16x16xf32>
    %511 = arith.mulf %510, %488 : vector<2x16x16xf32>
    %512 = arith.addf %479, %511 : vector<2x16x16xf32>
    %c165 = arith.constant 165 : index
    %513 = memref.load %arg2[%c165] : memref<200xf32, #tpu.memory_space<smem>>
    %514 = vector.broadcast %513 : f32 to vector<2x16x16xf32>
    %515 = arith.mulf %514, %488 : vector<2x16x16xf32>
    %516 = arith.addf %483, %515 : vector<2x16x16xf32>
    %c190 = arith.constant 190 : index
    %517 = memref.load %arg2[%c190] : memref<200xf32, #tpu.memory_space<smem>>
    %518 = vector.broadcast %517 : f32 to vector<2x16x16xf32>
    %519 = arith.mulf %518, %488 : vector<2x16x16xf32>
    %520 = arith.addf %487, %519 : vector<2x16x16xf32>
    %521 = vector.extract_strided_slice %0 {offsets = [0, 3, 1], sizes = [2, 16, 16], strides = [1, 1, 1]} : vector<2x20x20xf32> to vector<2x16x16xf32>
    %c16 = arith.constant 16 : index
    %522 = memref.load %arg2[%c16] : memref<200xf32, #tpu.memory_space<smem>>
    %523 = vector.broadcast %522 : f32 to vector<2x16x16xf32>
    %524 = arith.mulf %523, %521 : vector<2x16x16xf32>
    %525 = arith.addf %492, %524 : vector<2x16x16xf32>
    %c41 = arith.constant 41 : index
    %526 = memref.load %arg2[%c41] : memref<200xf32, #tpu.memory_space<smem>>
    %527 = vector.broadcast %526 : f32 to vector<2x16x16xf32>
    %528 = arith.mulf %527, %521 : vector<2x16x16xf32>
    %529 = arith.addf %496, %528 : vector<2x16x16xf32>
    %c66 = arith.constant 66 : index
    %530 = memref.load %arg2[%c66] : memref<200xf32, #tpu.memory_space<smem>>
    %531 = vector.broadcast %530 : f32 to vector<2x16x16xf32>
    %532 = arith.mulf %531, %521 : vector<2x16x16xf32>
    %533 = arith.addf %500, %532 : vector<2x16x16xf32>
    %c91 = arith.constant 91 : index
    %534 = memref.load %arg2[%c91] : memref<200xf32, #tpu.memory_space<smem>>
    %535 = vector.broadcast %534 : f32 to vector<2x16x16xf32>
    %536 = arith.mulf %535, %521 : vector<2x16x16xf32>
    %537 = arith.addf %504, %536 : vector<2x16x16xf32>
    %c116 = arith.constant 116 : index
    %538 = memref.load %arg2[%c116] : memref<200xf32, #tpu.memory_space<smem>>
    %539 = vector.broadcast %538 : f32 to vector<2x16x16xf32>
    %540 = arith.mulf %539, %521 : vector<2x16x16xf32>
    %541 = arith.addf %508, %540 : vector<2x16x16xf32>
    %c141 = arith.constant 141 : index
    %542 = memref.load %arg2[%c141] : memref<200xf32, #tpu.memory_space<smem>>
    %543 = vector.broadcast %542 : f32 to vector<2x16x16xf32>
    %544 = arith.mulf %543, %521 : vector<2x16x16xf32>
    %545 = arith.addf %512, %544 : vector<2x16x16xf32>
    %c166 = arith.constant 166 : index
    %546 = memref.load %arg2[%c166] : memref<200xf32, #tpu.memory_space<smem>>
    %547 = vector.broadcast %546 : f32 to vector<2x16x16xf32>
    %548 = arith.mulf %547, %521 : vector<2x16x16xf32>
    %549 = arith.addf %516, %548 : vector<2x16x16xf32>
    %c191 = arith.constant 191 : index
    %550 = memref.load %arg2[%c191] : memref<200xf32, #tpu.memory_space<smem>>
    %551 = vector.broadcast %550 : f32 to vector<2x16x16xf32>
    %552 = arith.mulf %551, %521 : vector<2x16x16xf32>
    %553 = arith.addf %520, %552 : vector<2x16x16xf32>
    %554 = vector.extract_strided_slice %0 {offsets = [0, 3, 2], sizes = [2, 16, 16], strides = [1, 1, 1]} : vector<2x20x20xf32> to vector<2x16x16xf32>
    %c17 = arith.constant 17 : index
    %555 = memref.load %arg2[%c17] : memref<200xf32, #tpu.memory_space<smem>>
    %556 = vector.broadcast %555 : f32 to vector<2x16x16xf32>
    %557 = arith.mulf %556, %554 : vector<2x16x16xf32>
    %558 = arith.addf %525, %557 : vector<2x16x16xf32>
    %c42 = arith.constant 42 : index
    %559 = memref.load %arg2[%c42] : memref<200xf32, #tpu.memory_space<smem>>
    %560 = vector.broadcast %559 : f32 to vector<2x16x16xf32>
    %561 = arith.mulf %560, %554 : vector<2x16x16xf32>
    %562 = arith.addf %529, %561 : vector<2x16x16xf32>
    %c67 = arith.constant 67 : index
    %563 = memref.load %arg2[%c67] : memref<200xf32, #tpu.memory_space<smem>>
    %564 = vector.broadcast %563 : f32 to vector<2x16x16xf32>
    %565 = arith.mulf %564, %554 : vector<2x16x16xf32>
    %566 = arith.addf %533, %565 : vector<2x16x16xf32>
    %c92 = arith.constant 92 : index
    %567 = memref.load %arg2[%c92] : memref<200xf32, #tpu.memory_space<smem>>
    %568 = vector.broadcast %567 : f32 to vector<2x16x16xf32>
    %569 = arith.mulf %568, %554 : vector<2x16x16xf32>
    %570 = arith.addf %537, %569 : vector<2x16x16xf32>
    %c117 = arith.constant 117 : index
    %571 = memref.load %arg2[%c117] : memref<200xf32, #tpu.memory_space<smem>>
    %572 = vector.broadcast %571 : f32 to vector<2x16x16xf32>
    %573 = arith.mulf %572, %554 : vector<2x16x16xf32>
    %574 = arith.addf %541, %573 : vector<2x16x16xf32>
    %c142 = arith.constant 142 : index
    %575 = memref.load %arg2[%c142] : memref<200xf32, #tpu.memory_space<smem>>
    %576 = vector.broadcast %575 : f32 to vector<2x16x16xf32>
    %577 = arith.mulf %576, %554 : vector<2x16x16xf32>
    %578 = arith.addf %545, %577 : vector<2x16x16xf32>
    %c167 = arith.constant 167 : index
    %579 = memref.load %arg2[%c167] : memref<200xf32, #tpu.memory_space<smem>>
    %580 = vector.broadcast %579 : f32 to vector<2x16x16xf32>
    %581 = arith.mulf %580, %554 : vector<2x16x16xf32>
    %582 = arith.addf %549, %581 : vector<2x16x16xf32>
    %c192 = arith.constant 192 : index
    %583 = memref.load %arg2[%c192] : memref<200xf32, #tpu.memory_space<smem>>
    %584 = vector.broadcast %583 : f32 to vector<2x16x16xf32>
    %585 = arith.mulf %584, %554 : vector<2x16x16xf32>
    %586 = arith.addf %553, %585 : vector<2x16x16xf32>
    %587 = vector.extract_strided_slice %0 {offsets = [0, 3, 3], sizes = [2, 16, 16], strides = [1, 1, 1]} : vector<2x20x20xf32> to vector<2x16x16xf32>
    %c18 = arith.constant 18 : index
    %588 = memref.load %arg2[%c18] : memref<200xf32, #tpu.memory_space<smem>>
    %589 = vector.broadcast %588 : f32 to vector<2x16x16xf32>
    %590 = arith.mulf %589, %587 : vector<2x16x16xf32>
    %591 = arith.addf %558, %590 : vector<2x16x16xf32>
    %c43 = arith.constant 43 : index
    %592 = memref.load %arg2[%c43] : memref<200xf32, #tpu.memory_space<smem>>
    %593 = vector.broadcast %592 : f32 to vector<2x16x16xf32>
    %594 = arith.mulf %593, %587 : vector<2x16x16xf32>
    %595 = arith.addf %562, %594 : vector<2x16x16xf32>
    %c68 = arith.constant 68 : index
    %596 = memref.load %arg2[%c68] : memref<200xf32, #tpu.memory_space<smem>>
    %597 = vector.broadcast %596 : f32 to vector<2x16x16xf32>
    %598 = arith.mulf %597, %587 : vector<2x16x16xf32>
    %599 = arith.addf %566, %598 : vector<2x16x16xf32>
    %c93 = arith.constant 93 : index
    %600 = memref.load %arg2[%c93] : memref<200xf32, #tpu.memory_space<smem>>
    %601 = vector.broadcast %600 : f32 to vector<2x16x16xf32>
    %602 = arith.mulf %601, %587 : vector<2x16x16xf32>
    %603 = arith.addf %570, %602 : vector<2x16x16xf32>
    %c118 = arith.constant 118 : index
    %604 = memref.load %arg2[%c118] : memref<200xf32, #tpu.memory_space<smem>>
    %605 = vector.broadcast %604 : f32 to vector<2x16x16xf32>
    %606 = arith.mulf %605, %587 : vector<2x16x16xf32>
    %607 = arith.addf %574, %606 : vector<2x16x16xf32>
    %c143 = arith.constant 143 : index
    %608 = memref.load %arg2[%c143] : memref<200xf32, #tpu.memory_space<smem>>
    %609 = vector.broadcast %608 : f32 to vector<2x16x16xf32>
    %610 = arith.mulf %609, %587 : vector<2x16x16xf32>
    %611 = arith.addf %578, %610 : vector<2x16x16xf32>
    %c168 = arith.constant 168 : index
    %612 = memref.load %arg2[%c168] : memref<200xf32, #tpu.memory_space<smem>>
    %613 = vector.broadcast %612 : f32 to vector<2x16x16xf32>
    %614 = arith.mulf %613, %587 : vector<2x16x16xf32>
    %615 = arith.addf %582, %614 : vector<2x16x16xf32>
    %c193 = arith.constant 193 : index
    %616 = memref.load %arg2[%c193] : memref<200xf32, #tpu.memory_space<smem>>
    %617 = vector.broadcast %616 : f32 to vector<2x16x16xf32>
    %618 = arith.mulf %617, %587 : vector<2x16x16xf32>
    %619 = arith.addf %586, %618 : vector<2x16x16xf32>
    %620 = vector.extract_strided_slice %0 {offsets = [0, 3, 4], sizes = [2, 16, 16], strides = [1, 1, 1]} : vector<2x20x20xf32> to vector<2x16x16xf32>
    %c19 = arith.constant 19 : index
    %621 = memref.load %arg2[%c19] : memref<200xf32, #tpu.memory_space<smem>>
    %622 = vector.broadcast %621 : f32 to vector<2x16x16xf32>
    %623 = arith.mulf %622, %620 : vector<2x16x16xf32>
    %624 = arith.addf %591, %623 : vector<2x16x16xf32>
    %c44 = arith.constant 44 : index
    %625 = memref.load %arg2[%c44] : memref<200xf32, #tpu.memory_space<smem>>
    %626 = vector.broadcast %625 : f32 to vector<2x16x16xf32>
    %627 = arith.mulf %626, %620 : vector<2x16x16xf32>
    %628 = arith.addf %595, %627 : vector<2x16x16xf32>
    %c69 = arith.constant 69 : index
    %629 = memref.load %arg2[%c69] : memref<200xf32, #tpu.memory_space<smem>>
    %630 = vector.broadcast %629 : f32 to vector<2x16x16xf32>
    %631 = arith.mulf %630, %620 : vector<2x16x16xf32>
    %632 = arith.addf %599, %631 : vector<2x16x16xf32>
    %c94 = arith.constant 94 : index
    %633 = memref.load %arg2[%c94] : memref<200xf32, #tpu.memory_space<smem>>
    %634 = vector.broadcast %633 : f32 to vector<2x16x16xf32>
    %635 = arith.mulf %634, %620 : vector<2x16x16xf32>
    %636 = arith.addf %603, %635 : vector<2x16x16xf32>
    %c119 = arith.constant 119 : index
    %637 = memref.load %arg2[%c119] : memref<200xf32, #tpu.memory_space<smem>>
    %638 = vector.broadcast %637 : f32 to vector<2x16x16xf32>
    %639 = arith.mulf %638, %620 : vector<2x16x16xf32>
    %640 = arith.addf %607, %639 : vector<2x16x16xf32>
    %c144 = arith.constant 144 : index
    %641 = memref.load %arg2[%c144] : memref<200xf32, #tpu.memory_space<smem>>
    %642 = vector.broadcast %641 : f32 to vector<2x16x16xf32>
    %643 = arith.mulf %642, %620 : vector<2x16x16xf32>
    %644 = arith.addf %611, %643 : vector<2x16x16xf32>
    %c169 = arith.constant 169 : index
    %645 = memref.load %arg2[%c169] : memref<200xf32, #tpu.memory_space<smem>>
    %646 = vector.broadcast %645 : f32 to vector<2x16x16xf32>
    %647 = arith.mulf %646, %620 : vector<2x16x16xf32>
    %648 = arith.addf %615, %647 : vector<2x16x16xf32>
    %c194 = arith.constant 194 : index
    %649 = memref.load %arg2[%c194] : memref<200xf32, #tpu.memory_space<smem>>
    %650 = vector.broadcast %649 : f32 to vector<2x16x16xf32>
    %651 = arith.mulf %650, %620 : vector<2x16x16xf32>
    %652 = arith.addf %619, %651 : vector<2x16x16xf32>
    %653 = vector.extract_strided_slice %0 {offsets = [0, 4, 0], sizes = [2, 16, 16], strides = [1, 1, 1]} : vector<2x20x20xf32> to vector<2x16x16xf32>
    %c20 = arith.constant 20 : index
    %654 = memref.load %arg2[%c20] : memref<200xf32, #tpu.memory_space<smem>>
    %655 = vector.broadcast %654 : f32 to vector<2x16x16xf32>
    %656 = arith.mulf %655, %653 : vector<2x16x16xf32>
    %657 = arith.addf %624, %656 : vector<2x16x16xf32>
    %c45 = arith.constant 45 : index
    %658 = memref.load %arg2[%c45] : memref<200xf32, #tpu.memory_space<smem>>
    %659 = vector.broadcast %658 : f32 to vector<2x16x16xf32>
    %660 = arith.mulf %659, %653 : vector<2x16x16xf32>
    %661 = arith.addf %628, %660 : vector<2x16x16xf32>
    %c70 = arith.constant 70 : index
    %662 = memref.load %arg2[%c70] : memref<200xf32, #tpu.memory_space<smem>>
    %663 = vector.broadcast %662 : f32 to vector<2x16x16xf32>
    %664 = arith.mulf %663, %653 : vector<2x16x16xf32>
    %665 = arith.addf %632, %664 : vector<2x16x16xf32>
    %c95 = arith.constant 95 : index
    %666 = memref.load %arg2[%c95] : memref<200xf32, #tpu.memory_space<smem>>
    %667 = vector.broadcast %666 : f32 to vector<2x16x16xf32>
    %668 = arith.mulf %667, %653 : vector<2x16x16xf32>
    %669 = arith.addf %636, %668 : vector<2x16x16xf32>
    %c120 = arith.constant 120 : index
    %670 = memref.load %arg2[%c120] : memref<200xf32, #tpu.memory_space<smem>>
    %671 = vector.broadcast %670 : f32 to vector<2x16x16xf32>
    %672 = arith.mulf %671, %653 : vector<2x16x16xf32>
    %673 = arith.addf %640, %672 : vector<2x16x16xf32>
    %c145 = arith.constant 145 : index
    %674 = memref.load %arg2[%c145] : memref<200xf32, #tpu.memory_space<smem>>
    %675 = vector.broadcast %674 : f32 to vector<2x16x16xf32>
    %676 = arith.mulf %675, %653 : vector<2x16x16xf32>
    %677 = arith.addf %644, %676 : vector<2x16x16xf32>
    %c170 = arith.constant 170 : index
    %678 = memref.load %arg2[%c170] : memref<200xf32, #tpu.memory_space<smem>>
    %679 = vector.broadcast %678 : f32 to vector<2x16x16xf32>
    %680 = arith.mulf %679, %653 : vector<2x16x16xf32>
    %681 = arith.addf %648, %680 : vector<2x16x16xf32>
    %c195 = arith.constant 195 : index
    %682 = memref.load %arg2[%c195] : memref<200xf32, #tpu.memory_space<smem>>
    %683 = vector.broadcast %682 : f32 to vector<2x16x16xf32>
    %684 = arith.mulf %683, %653 : vector<2x16x16xf32>
    %685 = arith.addf %652, %684 : vector<2x16x16xf32>
    %686 = vector.extract_strided_slice %0 {offsets = [0, 4, 1], sizes = [2, 16, 16], strides = [1, 1, 1]} : vector<2x20x20xf32> to vector<2x16x16xf32>
    %c21 = arith.constant 21 : index
    %687 = memref.load %arg2[%c21] : memref<200xf32, #tpu.memory_space<smem>>
    %688 = vector.broadcast %687 : f32 to vector<2x16x16xf32>
    %689 = arith.mulf %688, %686 : vector<2x16x16xf32>
    %690 = arith.addf %657, %689 : vector<2x16x16xf32>
    %c46 = arith.constant 46 : index
    %691 = memref.load %arg2[%c46] : memref<200xf32, #tpu.memory_space<smem>>
    %692 = vector.broadcast %691 : f32 to vector<2x16x16xf32>
    %693 = arith.mulf %692, %686 : vector<2x16x16xf32>
    %694 = arith.addf %661, %693 : vector<2x16x16xf32>
    %c71 = arith.constant 71 : index
    %695 = memref.load %arg2[%c71] : memref<200xf32, #tpu.memory_space<smem>>
    %696 = vector.broadcast %695 : f32 to vector<2x16x16xf32>
    %697 = arith.mulf %696, %686 : vector<2x16x16xf32>
    %698 = arith.addf %665, %697 : vector<2x16x16xf32>
    %c96 = arith.constant 96 : index
    %699 = memref.load %arg2[%c96] : memref<200xf32, #tpu.memory_space<smem>>
    %700 = vector.broadcast %699 : f32 to vector<2x16x16xf32>
    %701 = arith.mulf %700, %686 : vector<2x16x16xf32>
    %702 = arith.addf %669, %701 : vector<2x16x16xf32>
    %c121 = arith.constant 121 : index
    %703 = memref.load %arg2[%c121] : memref<200xf32, #tpu.memory_space<smem>>
    %704 = vector.broadcast %703 : f32 to vector<2x16x16xf32>
    %705 = arith.mulf %704, %686 : vector<2x16x16xf32>
    %706 = arith.addf %673, %705 : vector<2x16x16xf32>
    %c146 = arith.constant 146 : index
    %707 = memref.load %arg2[%c146] : memref<200xf32, #tpu.memory_space<smem>>
    %708 = vector.broadcast %707 : f32 to vector<2x16x16xf32>
    %709 = arith.mulf %708, %686 : vector<2x16x16xf32>
    %710 = arith.addf %677, %709 : vector<2x16x16xf32>
    %c171 = arith.constant 171 : index
    %711 = memref.load %arg2[%c171] : memref<200xf32, #tpu.memory_space<smem>>
    %712 = vector.broadcast %711 : f32 to vector<2x16x16xf32>
    %713 = arith.mulf %712, %686 : vector<2x16x16xf32>
    %714 = arith.addf %681, %713 : vector<2x16x16xf32>
    %c196 = arith.constant 196 : index
    %715 = memref.load %arg2[%c196] : memref<200xf32, #tpu.memory_space<smem>>
    %716 = vector.broadcast %715 : f32 to vector<2x16x16xf32>
    %717 = arith.mulf %716, %686 : vector<2x16x16xf32>
    %718 = arith.addf %685, %717 : vector<2x16x16xf32>
    %719 = vector.extract_strided_slice %0 {offsets = [0, 4, 2], sizes = [2, 16, 16], strides = [1, 1, 1]} : vector<2x20x20xf32> to vector<2x16x16xf32>
    %c22 = arith.constant 22 : index
    %720 = memref.load %arg2[%c22] : memref<200xf32, #tpu.memory_space<smem>>
    %721 = vector.broadcast %720 : f32 to vector<2x16x16xf32>
    %722 = arith.mulf %721, %719 : vector<2x16x16xf32>
    %723 = arith.addf %690, %722 : vector<2x16x16xf32>
    %c47 = arith.constant 47 : index
    %724 = memref.load %arg2[%c47] : memref<200xf32, #tpu.memory_space<smem>>
    %725 = vector.broadcast %724 : f32 to vector<2x16x16xf32>
    %726 = arith.mulf %725, %719 : vector<2x16x16xf32>
    %727 = arith.addf %694, %726 : vector<2x16x16xf32>
    %c72 = arith.constant 72 : index
    %728 = memref.load %arg2[%c72] : memref<200xf32, #tpu.memory_space<smem>>
    %729 = vector.broadcast %728 : f32 to vector<2x16x16xf32>
    %730 = arith.mulf %729, %719 : vector<2x16x16xf32>
    %731 = arith.addf %698, %730 : vector<2x16x16xf32>
    %c97 = arith.constant 97 : index
    %732 = memref.load %arg2[%c97] : memref<200xf32, #tpu.memory_space<smem>>
    %733 = vector.broadcast %732 : f32 to vector<2x16x16xf32>
    %734 = arith.mulf %733, %719 : vector<2x16x16xf32>
    %735 = arith.addf %702, %734 : vector<2x16x16xf32>
    %c122 = arith.constant 122 : index
    %736 = memref.load %arg2[%c122] : memref<200xf32, #tpu.memory_space<smem>>
    %737 = vector.broadcast %736 : f32 to vector<2x16x16xf32>
    %738 = arith.mulf %737, %719 : vector<2x16x16xf32>
    %739 = arith.addf %706, %738 : vector<2x16x16xf32>
    %c147 = arith.constant 147 : index
    %740 = memref.load %arg2[%c147] : memref<200xf32, #tpu.memory_space<smem>>
    %741 = vector.broadcast %740 : f32 to vector<2x16x16xf32>
    %742 = arith.mulf %741, %719 : vector<2x16x16xf32>
    %743 = arith.addf %710, %742 : vector<2x16x16xf32>
    %c172 = arith.constant 172 : index
    %744 = memref.load %arg2[%c172] : memref<200xf32, #tpu.memory_space<smem>>
    %745 = vector.broadcast %744 : f32 to vector<2x16x16xf32>
    %746 = arith.mulf %745, %719 : vector<2x16x16xf32>
    %747 = arith.addf %714, %746 : vector<2x16x16xf32>
    %c197 = arith.constant 197 : index
    %748 = memref.load %arg2[%c197] : memref<200xf32, #tpu.memory_space<smem>>
    %749 = vector.broadcast %748 : f32 to vector<2x16x16xf32>
    %750 = arith.mulf %749, %719 : vector<2x16x16xf32>
    %751 = arith.addf %718, %750 : vector<2x16x16xf32>
    %752 = vector.extract_strided_slice %0 {offsets = [0, 4, 3], sizes = [2, 16, 16], strides = [1, 1, 1]} : vector<2x20x20xf32> to vector<2x16x16xf32>
    %c23 = arith.constant 23 : index
    %753 = memref.load %arg2[%c23] : memref<200xf32, #tpu.memory_space<smem>>
    %754 = vector.broadcast %753 : f32 to vector<2x16x16xf32>
    %755 = arith.mulf %754, %752 : vector<2x16x16xf32>
    %756 = arith.addf %723, %755 : vector<2x16x16xf32>
    %c48 = arith.constant 48 : index
    %757 = memref.load %arg2[%c48] : memref<200xf32, #tpu.memory_space<smem>>
    %758 = vector.broadcast %757 : f32 to vector<2x16x16xf32>
    %759 = arith.mulf %758, %752 : vector<2x16x16xf32>
    %760 = arith.addf %727, %759 : vector<2x16x16xf32>
    %c73 = arith.constant 73 : index
    %761 = memref.load %arg2[%c73] : memref<200xf32, #tpu.memory_space<smem>>
    %762 = vector.broadcast %761 : f32 to vector<2x16x16xf32>
    %763 = arith.mulf %762, %752 : vector<2x16x16xf32>
    %764 = arith.addf %731, %763 : vector<2x16x16xf32>
    %c98 = arith.constant 98 : index
    %765 = memref.load %arg2[%c98] : memref<200xf32, #tpu.memory_space<smem>>
    %766 = vector.broadcast %765 : f32 to vector<2x16x16xf32>
    %767 = arith.mulf %766, %752 : vector<2x16x16xf32>
    %768 = arith.addf %735, %767 : vector<2x16x16xf32>
    %c123 = arith.constant 123 : index
    %769 = memref.load %arg2[%c123] : memref<200xf32, #tpu.memory_space<smem>>
    %770 = vector.broadcast %769 : f32 to vector<2x16x16xf32>
    %771 = arith.mulf %770, %752 : vector<2x16x16xf32>
    %772 = arith.addf %739, %771 : vector<2x16x16xf32>
    %c148 = arith.constant 148 : index
    %773 = memref.load %arg2[%c148] : memref<200xf32, #tpu.memory_space<smem>>
    %774 = vector.broadcast %773 : f32 to vector<2x16x16xf32>
    %775 = arith.mulf %774, %752 : vector<2x16x16xf32>
    %776 = arith.addf %743, %775 : vector<2x16x16xf32>
    %c173 = arith.constant 173 : index
    %777 = memref.load %arg2[%c173] : memref<200xf32, #tpu.memory_space<smem>>
    %778 = vector.broadcast %777 : f32 to vector<2x16x16xf32>
    %779 = arith.mulf %778, %752 : vector<2x16x16xf32>
    %780 = arith.addf %747, %779 : vector<2x16x16xf32>
    %c198 = arith.constant 198 : index
    %781 = memref.load %arg2[%c198] : memref<200xf32, #tpu.memory_space<smem>>
    %782 = vector.broadcast %781 : f32 to vector<2x16x16xf32>
    %783 = arith.mulf %782, %752 : vector<2x16x16xf32>
    %784 = arith.addf %751, %783 : vector<2x16x16xf32>
    %785 = vector.extract_strided_slice %0 {offsets = [0, 4, 4], sizes = [2, 16, 16], strides = [1, 1, 1]} : vector<2x20x20xf32> to vector<2x16x16xf32>
    %c24 = arith.constant 24 : index
    %786 = memref.load %arg2[%c24] : memref<200xf32, #tpu.memory_space<smem>>
    %787 = vector.broadcast %786 : f32 to vector<2x16x16xf32>
    %788 = arith.mulf %787, %785 : vector<2x16x16xf32>
    %789 = arith.addf %756, %788 : vector<2x16x16xf32>
    %c49 = arith.constant 49 : index
    %790 = memref.load %arg2[%c49] : memref<200xf32, #tpu.memory_space<smem>>
    %791 = vector.broadcast %790 : f32 to vector<2x16x16xf32>
    %792 = arith.mulf %791, %785 : vector<2x16x16xf32>
    %793 = arith.addf %760, %792 : vector<2x16x16xf32>
    %c74 = arith.constant 74 : index
    %794 = memref.load %arg2[%c74] : memref<200xf32, #tpu.memory_space<smem>>
    %795 = vector.broadcast %794 : f32 to vector<2x16x16xf32>
    %796 = arith.mulf %795, %785 : vector<2x16x16xf32>
    %797 = arith.addf %764, %796 : vector<2x16x16xf32>
    %c99 = arith.constant 99 : index
    %798 = memref.load %arg2[%c99] : memref<200xf32, #tpu.memory_space<smem>>
    %799 = vector.broadcast %798 : f32 to vector<2x16x16xf32>
    %800 = arith.mulf %799, %785 : vector<2x16x16xf32>
    %801 = arith.addf %768, %800 : vector<2x16x16xf32>
    %c124 = arith.constant 124 : index
    %802 = memref.load %arg2[%c124] : memref<200xf32, #tpu.memory_space<smem>>
    %803 = vector.broadcast %802 : f32 to vector<2x16x16xf32>
    %804 = arith.mulf %803, %785 : vector<2x16x16xf32>
    %805 = arith.addf %772, %804 : vector<2x16x16xf32>
    %c149 = arith.constant 149 : index
    %806 = memref.load %arg2[%c149] : memref<200xf32, #tpu.memory_space<smem>>
    %807 = vector.broadcast %806 : f32 to vector<2x16x16xf32>
    %808 = arith.mulf %807, %785 : vector<2x16x16xf32>
    %809 = arith.addf %776, %808 : vector<2x16x16xf32>
    %c174 = arith.constant 174 : index
    %810 = memref.load %arg2[%c174] : memref<200xf32, #tpu.memory_space<smem>>
    %811 = vector.broadcast %810 : f32 to vector<2x16x16xf32>
    %812 = arith.mulf %811, %785 : vector<2x16x16xf32>
    %813 = arith.addf %780, %812 : vector<2x16x16xf32>
    %c199 = arith.constant 199 : index
    %814 = memref.load %arg2[%c199] : memref<200xf32, #tpu.memory_space<smem>>
    %815 = vector.broadcast %814 : f32 to vector<2x16x16xf32>
    %816 = arith.mulf %815, %785 : vector<2x16x16xf32>
    %817 = arith.addf %784, %816 : vector<2x16x16xf32>
    %c0_3 = arith.constant 0 : index
    %c0_4 = arith.constant 0 : index
    %818 = vector.load %arg5[%c0_3, %c0_4] : memref<1x10xf32, #tpu.memory_space<vmem>>, vector<1x10xf32>
    %c0_5 = arith.constant 0 : index
    %819 = memref.load %arg3[%c0_5] : memref<8xf32, #tpu.memory_space<smem>>
    %820 = vector.broadcast %819 : f32 to vector<2x16x16xf32>
    %821 = arith.addf %789, %820 : vector<2x16x16xf32>
    %cst = arith.constant 0.000000e+00 : f32
    %822 = vector.broadcast %cst : f32 to vector<2x16x16xf32>
    %823 = arith.maximumf %821, %822 : vector<2x16x16xf32>
    %cst_6 = arith.constant dense<0.000000e+00> : vector<2x16xf32>
    %824 = vector.multi_reduction <add>, %823, %cst_6 [2] : vector<2x16x16xf32> to vector<2x16xf32>
    %cst_7 = arith.constant dense<0.000000e+00> : vector<2xf32>
    %825 = vector.multi_reduction <add>, %824, %cst_7 [1] : vector<2x16xf32> to vector<2xf32>
    %826 = vector.shape_cast %825 : vector<2xf32> to vector<2x1xf32>
    %cst_8 = arith.constant 3.906250e-03 : f32
    %827 = vector.broadcast %cst_8 : f32 to vector<2x1xf32>
    %828 = arith.mulf %826, %827 : vector<2x1xf32>
    %c0_9 = arith.constant 0 : index
    %c0_10 = arith.constant 0 : index
    %829 = vector.load %arg4[%c0_9, %c0_10] : memref<8x10xf32, #tpu.memory_space<vmem>>, vector<1x10xf32>
    %830 = vector.broadcast %828 : vector<2x1xf32> to vector<2x10xf32>
    %831 = vector.broadcast %829 : vector<1x10xf32> to vector<2x10xf32>
    %832 = arith.mulf %830, %831 : vector<2x10xf32>
    %833 = vector.broadcast %818 : vector<1x10xf32> to vector<2x10xf32>
    %834 = arith.addf %833, %832 : vector<2x10xf32>
    %c1_11 = arith.constant 1 : index
    %835 = memref.load %arg3[%c1_11] : memref<8xf32, #tpu.memory_space<smem>>
    %836 = vector.broadcast %835 : f32 to vector<2x16x16xf32>
    %837 = arith.addf %793, %836 : vector<2x16x16xf32>
    %cst_12 = arith.constant 0.000000e+00 : f32
    %838 = vector.broadcast %cst_12 : f32 to vector<2x16x16xf32>
    %839 = arith.maximumf %837, %838 : vector<2x16x16xf32>
    %cst_13 = arith.constant dense<0.000000e+00> : vector<2x16xf32>
    %840 = vector.multi_reduction <add>, %839, %cst_13 [2] : vector<2x16x16xf32> to vector<2x16xf32>
    %cst_14 = arith.constant dense<0.000000e+00> : vector<2xf32>
    %841 = vector.multi_reduction <add>, %840, %cst_14 [1] : vector<2x16xf32> to vector<2xf32>
    %842 = vector.shape_cast %841 : vector<2xf32> to vector<2x1xf32>
    %cst_15 = arith.constant 3.906250e-03 : f32
    %843 = vector.broadcast %cst_15 : f32 to vector<2x1xf32>
    %844 = arith.mulf %842, %843 : vector<2x1xf32>
    %c1_16 = arith.constant 1 : index
    %c0_17 = arith.constant 0 : index
    %845 = vector.load %arg4[%c1_16, %c0_17] : memref<8x10xf32, #tpu.memory_space<vmem>>, vector<1x10xf32>
    %846 = vector.broadcast %844 : vector<2x1xf32> to vector<2x10xf32>
    %847 = vector.broadcast %845 : vector<1x10xf32> to vector<2x10xf32>
    %848 = arith.mulf %846, %847 : vector<2x10xf32>
    %849 = arith.addf %834, %848 : vector<2x10xf32>
    %c2_18 = arith.constant 2 : index
    %850 = memref.load %arg3[%c2_18] : memref<8xf32, #tpu.memory_space<smem>>
    %851 = vector.broadcast %850 : f32 to vector<2x16x16xf32>
    %852 = arith.addf %797, %851 : vector<2x16x16xf32>
    %cst_19 = arith.constant 0.000000e+00 : f32
    %853 = vector.broadcast %cst_19 : f32 to vector<2x16x16xf32>
    %854 = arith.maximumf %852, %853 : vector<2x16x16xf32>
    %cst_20 = arith.constant dense<0.000000e+00> : vector<2x16xf32>
    %855 = vector.multi_reduction <add>, %854, %cst_20 [2] : vector<2x16x16xf32> to vector<2x16xf32>
    %cst_21 = arith.constant dense<0.000000e+00> : vector<2xf32>
    %856 = vector.multi_reduction <add>, %855, %cst_21 [1] : vector<2x16xf32> to vector<2xf32>
    %857 = vector.shape_cast %856 : vector<2xf32> to vector<2x1xf32>
    %cst_22 = arith.constant 3.906250e-03 : f32
    %858 = vector.broadcast %cst_22 : f32 to vector<2x1xf32>
    %859 = arith.mulf %857, %858 : vector<2x1xf32>
    %c2_23 = arith.constant 2 : index
    %c0_24 = arith.constant 0 : index
    %860 = vector.load %arg4[%c2_23, %c0_24] : memref<8x10xf32, #tpu.memory_space<vmem>>, vector<1x10xf32>
    %861 = vector.broadcast %859 : vector<2x1xf32> to vector<2x10xf32>
    %862 = vector.broadcast %860 : vector<1x10xf32> to vector<2x10xf32>
    %863 = arith.mulf %861, %862 : vector<2x10xf32>
    %864 = arith.addf %849, %863 : vector<2x10xf32>
    %c3_25 = arith.constant 3 : index
    %865 = memref.load %arg3[%c3_25] : memref<8xf32, #tpu.memory_space<smem>>
    %866 = vector.broadcast %865 : f32 to vector<2x16x16xf32>
    %867 = arith.addf %801, %866 : vector<2x16x16xf32>
    %cst_26 = arith.constant 0.000000e+00 : f32
    %868 = vector.broadcast %cst_26 : f32 to vector<2x16x16xf32>
    %869 = arith.maximumf %867, %868 : vector<2x16x16xf32>
    %cst_27 = arith.constant dense<0.000000e+00> : vector<2x16xf32>
    %870 = vector.multi_reduction <add>, %869, %cst_27 [2] : vector<2x16x16xf32> to vector<2x16xf32>
    %cst_28 = arith.constant dense<0.000000e+00> : vector<2xf32>
    %871 = vector.multi_reduction <add>, %870, %cst_28 [1] : vector<2x16xf32> to vector<2xf32>
    %872 = vector.shape_cast %871 : vector<2xf32> to vector<2x1xf32>
    %cst_29 = arith.constant 3.906250e-03 : f32
    %873 = vector.broadcast %cst_29 : f32 to vector<2x1xf32>
    %874 = arith.mulf %872, %873 : vector<2x1xf32>
    %c3_30 = arith.constant 3 : index
    %c0_31 = arith.constant 0 : index
    %875 = vector.load %arg4[%c3_30, %c0_31] : memref<8x10xf32, #tpu.memory_space<vmem>>, vector<1x10xf32>
    %876 = vector.broadcast %874 : vector<2x1xf32> to vector<2x10xf32>
    %877 = vector.broadcast %875 : vector<1x10xf32> to vector<2x10xf32>
    %878 = arith.mulf %876, %877 : vector<2x10xf32>
    %879 = arith.addf %864, %878 : vector<2x10xf32>
    %c4_32 = arith.constant 4 : index
    %880 = memref.load %arg3[%c4_32] : memref<8xf32, #tpu.memory_space<smem>>
    %881 = vector.broadcast %880 : f32 to vector<2x16x16xf32>
    %882 = arith.addf %805, %881 : vector<2x16x16xf32>
    %cst_33 = arith.constant 0.000000e+00 : f32
    %883 = vector.broadcast %cst_33 : f32 to vector<2x16x16xf32>
    %884 = arith.maximumf %882, %883 : vector<2x16x16xf32>
    %cst_34 = arith.constant dense<0.000000e+00> : vector<2x16xf32>
    %885 = vector.multi_reduction <add>, %884, %cst_34 [2] : vector<2x16x16xf32> to vector<2x16xf32>
    %cst_35 = arith.constant dense<0.000000e+00> : vector<2xf32>
    %886 = vector.multi_reduction <add>, %885, %cst_35 [1] : vector<2x16xf32> to vector<2xf32>
    %887 = vector.shape_cast %886 : vector<2xf32> to vector<2x1xf32>
    %cst_36 = arith.constant 3.906250e-03 : f32
    %888 = vector.broadcast %cst_36 : f32 to vector<2x1xf32>
    %889 = arith.mulf %887, %888 : vector<2x1xf32>
    %c4_37 = arith.constant 4 : index
    %c0_38 = arith.constant 0 : index
    %890 = vector.load %arg4[%c4_37, %c0_38] : memref<8x10xf32, #tpu.memory_space<vmem>>, vector<1x10xf32>
    %891 = vector.broadcast %889 : vector<2x1xf32> to vector<2x10xf32>
    %892 = vector.broadcast %890 : vector<1x10xf32> to vector<2x10xf32>
    %893 = arith.mulf %891, %892 : vector<2x10xf32>
    %894 = arith.addf %879, %893 : vector<2x10xf32>
    %c5_39 = arith.constant 5 : index
    %895 = memref.load %arg3[%c5_39] : memref<8xf32, #tpu.memory_space<smem>>
    %896 = vector.broadcast %895 : f32 to vector<2x16x16xf32>
    %897 = arith.addf %809, %896 : vector<2x16x16xf32>
    %cst_40 = arith.constant 0.000000e+00 : f32
    %898 = vector.broadcast %cst_40 : f32 to vector<2x16x16xf32>
    %899 = arith.maximumf %897, %898 : vector<2x16x16xf32>
    %cst_41 = arith.constant dense<0.000000e+00> : vector<2x16xf32>
    %900 = vector.multi_reduction <add>, %899, %cst_41 [2] : vector<2x16x16xf32> to vector<2x16xf32>
    %cst_42 = arith.constant dense<0.000000e+00> : vector<2xf32>
    %901 = vector.multi_reduction <add>, %900, %cst_42 [1] : vector<2x16xf32> to vector<2xf32>
    %902 = vector.shape_cast %901 : vector<2xf32> to vector<2x1xf32>
    %cst_43 = arith.constant 3.906250e-03 : f32
    %903 = vector.broadcast %cst_43 : f32 to vector<2x1xf32>
    %904 = arith.mulf %902, %903 : vector<2x1xf32>
    %c5_44 = arith.constant 5 : index
    %c0_45 = arith.constant 0 : index
    %905 = vector.load %arg4[%c5_44, %c0_45] : memref<8x10xf32, #tpu.memory_space<vmem>>, vector<1x10xf32>
    %906 = vector.broadcast %904 : vector<2x1xf32> to vector<2x10xf32>
    %907 = vector.broadcast %905 : vector<1x10xf32> to vector<2x10xf32>
    %908 = arith.mulf %906, %907 : vector<2x10xf32>
    %909 = arith.addf %894, %908 : vector<2x10xf32>
    %c6_46 = arith.constant 6 : index
    %910 = memref.load %arg3[%c6_46] : memref<8xf32, #tpu.memory_space<smem>>
    %911 = vector.broadcast %910 : f32 to vector<2x16x16xf32>
    %912 = arith.addf %813, %911 : vector<2x16x16xf32>
    %cst_47 = arith.constant 0.000000e+00 : f32
    %913 = vector.broadcast %cst_47 : f32 to vector<2x16x16xf32>
    %914 = arith.maximumf %912, %913 : vector<2x16x16xf32>
    %cst_48 = arith.constant dense<0.000000e+00> : vector<2x16xf32>
    %915 = vector.multi_reduction <add>, %914, %cst_48 [2] : vector<2x16x16xf32> to vector<2x16xf32>
    %cst_49 = arith.constant dense<0.000000e+00> : vector<2xf32>
    %916 = vector.multi_reduction <add>, %915, %cst_49 [1] : vector<2x16xf32> to vector<2xf32>
    %917 = vector.shape_cast %916 : vector<2xf32> to vector<2x1xf32>
    %cst_50 = arith.constant 3.906250e-03 : f32
    %918 = vector.broadcast %cst_50 : f32 to vector<2x1xf32>
    %919 = arith.mulf %917, %918 : vector<2x1xf32>
    %c6_51 = arith.constant 6 : index
    %c0_52 = arith.constant 0 : index
    %920 = vector.load %arg4[%c6_51, %c0_52] : memref<8x10xf32, #tpu.memory_space<vmem>>, vector<1x10xf32>
    %921 = vector.broadcast %919 : vector<2x1xf32> to vector<2x10xf32>
    %922 = vector.broadcast %920 : vector<1x10xf32> to vector<2x10xf32>
    %923 = arith.mulf %921, %922 : vector<2x10xf32>
    %924 = arith.addf %909, %923 : vector<2x10xf32>
    %c7_53 = arith.constant 7 : index
    %925 = memref.load %arg3[%c7_53] : memref<8xf32, #tpu.memory_space<smem>>
    %926 = vector.broadcast %925 : f32 to vector<2x16x16xf32>
    %927 = arith.addf %817, %926 : vector<2x16x16xf32>
    %cst_54 = arith.constant 0.000000e+00 : f32
    %928 = vector.broadcast %cst_54 : f32 to vector<2x16x16xf32>
    %929 = arith.maximumf %927, %928 : vector<2x16x16xf32>
    %cst_55 = arith.constant dense<0.000000e+00> : vector<2x16xf32>
    %930 = vector.multi_reduction <add>, %929, %cst_55 [2] : vector<2x16x16xf32> to vector<2x16xf32>
    %cst_56 = arith.constant dense<0.000000e+00> : vector<2xf32>
    %931 = vector.multi_reduction <add>, %930, %cst_56 [1] : vector<2x16xf32> to vector<2xf32>
    %932 = vector.shape_cast %931 : vector<2xf32> to vector<2x1xf32>
    %cst_57 = arith.constant 3.906250e-03 : f32
    %933 = vector.broadcast %cst_57 : f32 to vector<2x1xf32>
    %934 = arith.mulf %932, %933 : vector<2x1xf32>
    %c7_58 = arith.constant 7 : index
    %c0_59 = arith.constant 0 : index
    %935 = vector.load %arg4[%c7_58, %c0_59] : memref<8x10xf32, #tpu.memory_space<vmem>>, vector<1x10xf32>
    %936 = vector.broadcast %934 : vector<2x1xf32> to vector<2x10xf32>
    %937 = vector.broadcast %935 : vector<1x10xf32> to vector<2x10xf32>
    %938 = arith.mulf %936, %937 : vector<2x10xf32>
    %939 = arith.addf %924, %938 : vector<2x10xf32>
    %c0_60 = arith.constant 0 : index
    %c0_61 = arith.constant 0 : index
    %940 = vector.load %arg6[%c0_60, %c0_61] : memref<2x10xf32, #tpu.memory_space<vmem>>, vector<2x10xf32>
    tpu.vector_store %arg6[%c0_60, %c0_61], %939 {strides = array<i32>} : memref<2x10xf32, #tpu.memory_space<vmem>>, vector<2x10xf32>,
    return
  }
  func.func @transform_0(%arg0: i32) -> (i32, i32, i32) {
    %c0_i32 = arith.constant 0 : i32
    %c0_i32_0 = arith.constant 0 : i32
    %c0_i32_1 = arith.constant 0 : i32
    return %arg0, %c0_i32, %c0_i32_0 : i32, i32, i32
  }
  func.func @transform_1(%arg0: i32) -> i32 {
    %c0_i32 = arith.constant 0 : i32
    %c0_i32_0 = arith.constant 0 : i32
    return %c0_i32 : i32
  }
  func.func @transform_2(%arg0: i32) -> i32 {
    %c0_i32 = arith.constant 0 : i32
    %c0_i32_0 = arith.constant 0 : i32
    return %c0_i32 : i32
  }
  func.func @transform_3(%arg0: i32) -> (i32, i32) {
    %c0_i32 = arith.constant 0 : i32
    %c0_i32_0 = arith.constant 0 : i32
    %c0_i32_1 = arith.constant 0 : i32
    return %c0_i32, %c0_i32_0 : i32, i32
  }
  func.func @transform_4(%arg0: i32) -> (i32, i32) {
    %c0_i32 = arith.constant 0 : i32
    %c0_i32_0 = arith.constant 0 : i32
    %c0_i32_1 = arith.constant 0 : i32
    return %c0_i32, %c0_i32_0 : i32, i32
  }
  func.func @transform_5(%arg0: i32) -> (i32, i32) {
    %c0_i32 = arith.constant 0 : i32
    %c0_i32_0 = arith.constant 0 : i32
    return %arg0, %c0_i32 : i32, i32
  }
}

</mosaic_0001>

<llo_original>
// kernel: simple_conv_forward.1
$region0: #{simple_conv_forward.1}
  #allocation0 [shape = 'u32[]', space=smem, size = 0x4, offset = 0x4, fixed_abs, tag = 'smem constant byte address 0x4 - core index']
  #allocation1 [shape = 'u32[144,128]{1,0:T(1,128)}', space=vmem, size = 0x12000, scoped, tag = 'internal scratch']
  %s0 = inlined_call_operand.vmem [shape: f32[2,20,20], index: 0, kind: input, shape index: {}]
  %s1 = inlined_call_operand.vmem [shape: f32[200], index: 1, kind: input, shape index: {}]
  %s2 = inlined_call_operand.vmem [shape: f32[8], index: 2, kind: input, shape index: {}]
  %s3 = inlined_call_operand.vmem [shape: f32[8,10], index: 3, kind: input, shape index: {}]
  %s4 = inlined_call_operand.vmem [shape: f32[1,10], index: 4, kind: input, shape index: {}]
  %s5 = inlined_call_operand.hbm [shape: f32[2,10], index: 5, kind: output, shape index: {}]
  %s6 = sld [smem:[#allocation0]]
  $region38: #{simple_conv_forward.1} parent=0
    _
  %s8 = ssub.s32 1, %s6
  %s9 = scalar_select 0, %s8, %s6
  $region1: #{simple_conv_forward.1} parent=0
    #allocation2 [shape = 'u8[1024]{0}', space=smem, size = 0x400, scoped, tag = 'input window, operand 1, single buffered']
    #allocation3 [shape = 's32[1]{0}', space=sflag, size = 0x4, scoped, tag = 'scoped memory for simple_conv_forward.1']
    #allocation4 [shape = 's32[1]{0}', space=sflag, size = 0x4, scoped, tag = 'scoped memory for simple_conv_forward.1']
    #allocation5 [shape = 'u8[512]{0}', space=smem, size = 0x200, scoped, tag = 'input window, operand 2, single buffered']
    #allocation6 [shape = 's32[1]{0}', space=sflag, size = 0x4, scoped, tag = 'scoped memory for simple_conv_forward.1']
    #allocation7 [shape = 'u8[1024]{0}', space=vmem, size = 0x400, scoped, tag = 'output window, operand 0, single buffered']
    %10 = vsyncpa [#allocation4], 0
    %11 = vsyncpa [#allocation6], 0
    %12 = vsyncpa [#allocation3], 0
    // Predicated region
    $region2: #{simple_conv_forward.1} parent=1 // pred_check
      _
    $region3: #{simple_conv_forward.1} parent=1 // pred_check_branch
      %14 = sbr.rel (0) target = $region5
    $region4: #{simple_conv_forward.1} parent=1 // pred_region
      _
    $region5: #{simple_conv_forward.1} parent=1 // pred_fallthru
      _
    // Predicated region
    $region6: #{simple_conv_forward.1} parent=1 // pred_check
      _
    $region7: #{simple_conv_forward.1} parent=1 // pred_check_branch
      %16 = sbr.rel (0) target = $region9
    $region8: #{simple_conv_forward.1} parent=1 // pred_region
      %s18 = ssub.s32 32, 32
      %19 = vsyncadd [#allocation4], %s18
      %s21 = sshll.u32 %s1, 4
      %s22 = int_to_ptr.vmem [resolvable:$true] %s21
      %24 = dma.vmem_to_smem %s22, 32, [#allocation2], [#allocation4]
    $region9: #{simple_conv_forward.1} parent=1 // pred_fallthru
      _
    // Predicated region
    $region10: #{simple_conv_forward.1} parent=1 // pred_check
      _
    $region11: #{simple_conv_forward.1} parent=1 // pred_check_branch
      %26 = sbr.rel (0) target = $region13
    $region12: #{simple_conv_forward.1} parent=1 // pred_region
      %s28 = ssub.s32 16, 16
      %29 = vsyncadd [#allocation6], %s28
      %s31 = sshll.u32 %s2, 4
      %s32 = int_to_ptr.vmem [resolvable:$true] %s31
      %34 = dma.vmem_to_smem %s32, 16, [#allocation5], [#allocation6]
    $region13: #{simple_conv_forward.1} parent=1 // pred_fallthru
      _
    // Predicated region
    $region14: #{simple_conv_forward.1} parent=1 // pred_check
      _
    $region15: #{simple_conv_forward.1} parent=1 // pred_check_branch
      %36 = sbr.rel (0) target = $region17
    $region16: #{simple_conv_forward.1} parent=1 // pred_region
      _
    $region17: #{simple_conv_forward.1} parent=1 // pred_fallthru
      _
    // Predicated region
    $region18: #{simple_conv_forward.1} parent=1 // pred_check
      _
    $region19: #{simple_conv_forward.1} parent=1 // pred_check_branch
      %38 = sbr.rel (0) target = $region21
    $region20: #{simple_conv_forward.1} parent=1 // pred_region
      _
    $region21: #{simple_conv_forward.1} parent=1 // pred_fallthru
      _
    // Predicated region
    $region22: #{simple_conv_forward.1} parent=1 // pred_check
      _
    $region23: #{simple_conv_forward.1} parent=1 // pred_check_branch
      %40 = sbr.rel (0) target = $region25
    $region24: #{simple_conv_forward.1} parent=1 // pred_region
      %41 = dma.done [#allocation4], 32
    $region25: #{simple_conv_forward.1} parent=1 // pred_fallthru
      _
    // Predicated region
    $region26: #{simple_conv_forward.1} parent=1 // pred_check
      _
    $region27: #{simple_conv_forward.1} parent=1 // pred_check_branch
      %43 = sbr.rel (0) target = $region29
    $region28: #{simple_conv_forward.1} parent=1 // pred_region
      %44 = dma.done [#allocation6], 16
    $region29: #{simple_conv_forward.1} parent=1 // pred_fallthru
      _
    %45 = sfence
    %v46 = vld [vmem:[%s0] sm:$0xff]
    %v47 = vld [vmem:[%s0 + $0x8] sm:$0xff]
    %v48 = vld [vmem:[%s0 + $0x10] sm:$0xf]
    %v49 = vld [vmem:[%s0 + $0x18] sm:$0xff]
    %v50 = vld [vmem:[%s0 + $0x20] sm:$0xff]
    %v51 = vld [vmem:[%s0 + $0x28] sm:$0xf]
    %s52 = sld [smem:[#allocation2]]
    %v53 = vstv %s52
    %v54 = vmul.f32 %v53, %v46
    %v55 = vmul.f32 %v53, %v47
    %v56 = vmul.f32 %v53, %v49
    %v57 = vmul.f32 %v53, %v50
    %s58 = sld [smem:[#allocation2 + $0x19]]
    %v59 = vstv %s58
    %v60 = vmul.f32 %v59, %v46
    %v61 = vmul.f32 %v59, %v47
    %v62 = vmul.f32 %v59, %v49
    %v63 = vmul.f32 %v59, %v50
    %s64 = sld [smem:[#allocation2 + $0x32]]
    %v65 = vstv %s64
    %v66 = vmul.f32 %v65, %v46
    %v67 = vmul.f32 %v65, %v47
    %v68 = vmul.f32 %v65, %v49
    %v69 = vmul.f32 %v65, %v50
    %s70 = sld [smem:[#allocation2 + $0x4b]]
    %v71 = vstv %s70
    %v72 = vmul.f32 %v71, %v46
    %v73 = vmul.f32 %v71, %v47
    %v74 = vmul.f32 %v71, %v49
    %v75 = vmul.f32 %v71, %v50
    %s76 = sld [smem:[#allocation2 + $0x64]]
    %v77 = vstv %s76
    %v78 = vmul.f32 %v77, %v46
    %v79 = vmul.f32 %v77, %v47
    %v80 = vmul.f32 %v77, %v49
    %v81 = vmul.f32 %v77, %v50
    %s82 = sld [smem:[#allocation2 + $0x7d]]
    %v83 = vstv %s82
    %v84 = vmul.f32 %v83, %v46
    %v85 = vmul.f32 %v83, %v47
    %v86 = vmul.f32 %v83, %v49
    %v87 = vmul.f32 %v83, %v50
    %s88 = sld [smem:[#allocation2 + $0x96]]
    %v89 = vstv %s88
    %v90 = vmul.f32 %v89, %v46
    %v91 = vmul.f32 %v89, %v47
    %v92 = vmul.f32 %v89, %v49
    %v93 = vmul.f32 %v89, %v50
    %s94 = sld [smem:[#allocation2 + $0xaf]]
    %v95 = vstv %s94
    %v96 = vmul.f32 %v95, %v46
    %v97 = vmul.f32 %v95, %v47
    %v98 = vmul.f32 %v95, %v49
    %v99 = vmul.f32 %v95, %v50
    %s100 = sld [smem:[#allocation2 + $0x1]]
    %v101 = vstv %s100
    %v102 = vmul.f32 %v101, %v46
    %v103 = vmul.f32 %v101, %v47
    %v104 = vmul.f32 %v101, %v49
    %v105 = vmul.f32 %v101, %v50
    %110 = vrot.lane.b32.xlu0 %v102, 127
    %v111 = vpop.permute.xlu0 %110
    %112 = vrot.lane.b32.xlu0 %v103, 127
    %v113 = vpop.permute.xlu0 %112
    %114 = vrot.lane.b32.xlu0 %v104, 127
    %v115 = vpop.permute.xlu0 %114
    %116 = vrot.lane.b32.xlu0 %v105, 127
    %v117 = vpop.permute.xlu0 %116
    %v122 = vadd.f32 %v54, %v111
    %v123 = vadd.f32 %v55, %v113
    %v124 = vadd.f32 %v56, %v115
    %v125 = vadd.f32 %v57, %v117
    %s126 = sld [smem:[#allocation2 + $0x1a]]
    %v127 = vstv %s126
    %v128 = vmul.f32 %v127, %v46
    %v129 = vmul.f32 %v127, %v47
    %v130 = vmul.f32 %v127, %v49
    %v131 = vmul.f32 %v127, %v50
    %136 = vrot.lane.b32.xlu0 %v128, 127
    %v137 = vpop.permute.xlu0 %136
    %138 = vrot.lane.b32.xlu0 %v129, 127
    %v139 = vpop.permute.xlu0 %138
    %140 = vrot.lane.b32.xlu0 %v130, 127
    %v141 = vpop.permute.xlu0 %140
    %142 = vrot.lane.b32.xlu0 %v131, 127
    %v143 = vpop.permute.xlu0 %142
    %v148 = vadd.f32 %v60, %v137
    %v149 = vadd.f32 %v61, %v139
    %v150 = vadd.f32 %v62, %v141
    %v151 = vadd.f32 %v63, %v143
    %s152 = sld [smem:[#allocation2 + $0x33]]
    %v153 = vstv %s152
    %v154 = vmul.f32 %v153, %v46
    %v155 = vmul.f32 %v153, %v47
    %v156 = vmul.f32 %v153, %v49
    %v157 = vmul.f32 %v153, %v50
    %162 = vrot.lane.b32.xlu0 %v154, 127
    %v163 = vpop.permute.xlu0 %162
    %164 = vrot.lane.b32.xlu0 %v155, 127
    %v165 = vpop.permute.xlu0 %164
    %166 = vrot.lane.b32.xlu0 %v156, 127
    %v167 = vpop.permute.xlu0 %166
    %168 = vrot.lane.b32.xlu0 %v157, 127
    %v169 = vpop.permute.xlu0 %168
    %v174 = vadd.f32 %v66, %v163
    %v175 = vadd.f32 %v67, %v165
    %v176 = vadd.f32 %v68, %v167
    %v177 = vadd.f32 %v69, %v169
    %s178 = sld [smem:[#allocation2 + $0x4c]]
    %v179 = vstv %s178
    %v180 = vmul.f32 %v179, %v46
    %v181 = vmul.f32 %v179, %v47
    %v182 = vmul.f32 %v179, %v49
    %v183 = vmul.f32 %v179, %v50
    %188 = vrot.lane.b32.xlu0 %v180, 127
    %v189 = vpop.permute.xlu0 %188
    %190 = vrot.lane.b32.xlu0 %v181, 127
    %v191 = vpop.permute.xlu0 %190
    %192 = vrot.lane.b32.xlu0 %v182, 127
    %v193 = vpop.permute.xlu0 %192
    %194 = vrot.lane.b32.xlu0 %v183, 127
    %v195 = vpop.permute.xlu0 %194
    %v200 = vadd.f32 %v72, %v189
    %v201 = vadd.f32 %v73, %v191
    %v202 = vadd.f32 %v74, %v193
    %v203 = vadd.f32 %v75, %v195
    %s204 = sld [smem:[#allocation2 + $0x65]]
    %v205 = vstv %s204
    %v206 = vmul.f32 %v205, %v46
    %v207 = vmul.f32 %v205, %v47
    %v208 = vmul.f32 %v205, %v49
    %v209 = vmul.f32 %v205, %v50
    %214 = vrot.lane.b32.xlu0 %v206, 127
    %v215 = vpop.permute.xlu0 %214
    %216 = vrot.lane.b32.xlu0 %v207, 127
    %v217 = vpop.permute.xlu0 %216
    %218 = vrot.lane.b32.xlu0 %v208, 127
    %v219 = vpop.permute.xlu0 %218
    %220 = vrot.lane.b32.xlu0 %v209, 127
    %v221 = vpop.permute.xlu0 %220
    %v226 = vadd.f32 %v78, %v215
    %v227 = vadd.f32 %v79, %v217
    %v228 = vadd.f32 %v80, %v219
    %v229 = vadd.f32 %v81, %v221
    %s230 = sld [smem:[#allocation2 + $0x7e]]
    %v231 = vstv %s230
    %v232 = vmul.f32 %v231, %v46
    %v233 = vmul.f32 %v231, %v47
    %v234 = vmul.f32 %v231, %v49
    %v235 = vmul.f32 %v231, %v50
    %240 = vrot.lane.b32.xlu0 %v232, 127
    %v241 = vpop.permute.xlu0 %240
    %242 = vrot.lane.b32.xlu0 %v233, 127
    %v243 = vpop.permute.xlu0 %242
    %244 = vrot.lane.b32.xlu0 %v234, 127
    %v245 = vpop.permute.xlu0 %244
    %246 = vrot.lane.b32.xlu0 %v235, 127
    %v247 = vpop.permute.xlu0 %246
    %v252 = vadd.f32 %v84, %v241
    %v253 = vadd.f32 %v85, %v243
    %v254 = vadd.f32 %v86, %v245
    %v255 = vadd.f32 %v87, %v247
    %s256 = sld [smem:[#allocation2 + $0x97]]
    %v257 = vstv %s256
    %v258 = vmul.f32 %v257, %v46
    %v259 = vmul.f32 %v257, %v47
    %v260 = vmul.f32 %v257, %v49
    %v261 = vmul.f32 %v257, %v50
    %266 = vrot.lane.b32.xlu0 %v258, 127
    %v267 = vpop.permute.xlu0 %266
    %268 = vrot.lane.b32.xlu0 %v259, 127
    %v269 = vpop.permute.xlu0 %268
    %270 = vrot.lane.b32.xlu0 %v260, 127
    %v271 = vpop.permute.xlu0 %270
    %272 = vrot.lane.b32.xlu0 %v261, 127
    %v273 = vpop.permute.xlu0 %272
    %v278 = vadd.f32 %v90, %v267
    %v279 = vadd.f32 %v91, %v269
    %v280 = vadd.f32 %v92, %v271
    %v281 = vadd.f32 %v93, %v273
    %s282 = sld [smem:[#allocation2 + $0xb0]]
    %v283 = vstv %s282
    %v284 = vmul.f32 %v283, %v46
    %v285 = vmul.f32 %v283, %v47
    %v286 = vmul.f32 %v283, %v49
    %v287 = vmul.f32 %v283, %v50
    %292 = vrot.lane.b32.xlu0 %v284, 127
    %v293 = vpop.permute.xlu0 %292
    %294 = vrot.lane.b32.xlu0 %v285, 127
    %v295 = vpop.permute.xlu0 %294
    %296 = vrot.lane.b32.xlu0 %v286, 127
    %v297 = vpop.permute.xlu0 %296
    %298 = vrot.lane.b32.xlu0 %v287, 127
    %v299 = vpop.permute.xlu0 %298
    %v304 = vadd.f32 %v96, %v293
    %v305 = vadd.f32 %v97, %v295
    %v306 = vadd.f32 %v98, %v297
    %v307 = vadd.f32 %v99, %v299
    %s308 = sld [smem:[#allocation2 + $0x2]]
    %v309 = vstv %s308
    %v310 = vmul.f32 %v309, %v46
    %v311 = vmul.f32 %v309, %v47
    %v312 = vmul.f32 %v309, %v49
    %v313 = vmul.f32 %v309, %v50
    %318 = vrot.lane.b32.xlu0 %v310, 126
    %v319 = vpop.permute.xlu0 %318
    %320 = vrot.lane.b32.xlu0 %v311, 126
    %v321 = vpop.permute.xlu0 %320
    %322 = vrot.lane.b32.xlu0 %v312, 126
    %v323 = vpop.permute.xlu0 %322
    %324 = vrot.lane.b32.xlu0 %v313, 126
    %v325 = vpop.permute.xlu0 %324
    %v330 = vadd.f32 %v122, %v319
    %v331 = vadd.f32 %v123, %v321
    %v332 = vadd.f32 %v124, %v323
    %v333 = vadd.f32 %v125, %v325
    %s334 = sld [smem:[#allocation2 + $0x1b]]
    %v335 = vstv %s334
    %v336 = vmul.f32 %v335, %v46
    %v337 = vmul.f32 %v335, %v47
    %v338 = vmul.f32 %v335, %v49
    %v339 = vmul.f32 %v335, %v50
    %344 = vrot.lane.b32.xlu0 %v336, 126
    %v345 = vpop.permute.xlu0 %344
    %346 = vrot.lane.b32.xlu0 %v337, 126
    %v347 = vpop.permute.xlu0 %346
    %348 = vrot.lane.b32.xlu0 %v338, 126
    %v349 = vpop.permute.xlu0 %348
    %350 = vrot.lane.b32.xlu0 %v339, 126
    %v351 = vpop.permute.xlu0 %350
    %v356 = vadd.f32 %v148, %v345
    %v357 = vadd.f32 %v149, %v347
    %v358 = vadd.f32 %v150, %v349
    %v359 = vadd.f32 %v151, %v351
    %s360 = sld [smem:[#allocation2 + $0x34]]
    %v361 = vstv %s360
    %v362 = vmul.f32 %v361, %v46
    %v363 = vmul.f32 %v361, %v47
    %v364 = vmul.f32 %v361, %v49
    %v365 = vmul.f32 %v361, %v50
    %370 = vrot.lane.b32.xlu0 %v362, 126
    %v371 = vpop.permute.xlu0 %370
    %372 = vrot.lane.b32.xlu0 %v363, 126
    %v373 = vpop.permute.xlu0 %372
    %374 = vrot.lane.b32.xlu0 %v364, 126
    %v375 = vpop.permute.xlu0 %374
    %376 = vrot.lane.b32.xlu0 %v365, 126
    %v377 = vpop.permute.xlu0 %376
    %v382 = vadd.f32 %v174, %v371
    %v383 = vadd.f32 %v175, %v373
    %v384 = vadd.f32 %v176, %v375
    %v385 = vadd.f32 %v177, %v377
    %s386 = sld [smem:[#allocation2 + $0x4d]]
    %v387 = vstv %s386
    %v388 = vmul.f32 %v387, %v46
    %v389 = vmul.f32 %v387, %v47
    %v390 = vmul.f32 %v387, %v49
    %v391 = vmul.f32 %v387, %v50
    %396 = vrot.lane.b32.xlu0 %v388, 126
    %v397 = vpop.permute.xlu0 %396
    %398 = vrot.lane.b32.xlu0 %v389, 126
    %v399 = vpop.permute.xlu0 %398
    %400 = vrot.lane.b32.xlu0 %v390, 126
    %v401 = vpop.permute.xlu0 %400
    %402 = vrot.lane.b32.xlu0 %v391, 126
    %v403 = vpop.permute.xlu0 %402
    %v408 = vadd.f32 %v200, %v397
    %v409 = vadd.f32 %v201, %v399
    %v410 = vadd.f32 %v202, %v401
    %v411 = vadd.f32 %v203, %v403
    %s412 = sld [smem:[#allocation2 + $0x66]]
    %v413 = vstv %s412
    %v414 = vmul.f32 %v413, %v46
    %v415 = vmul.f32 %v413, %v47
    %v416 = vmul.f32 %v413, %v49
    %v417 = vmul.f32 %v413, %v50
    %422 = vrot.lane.b32.xlu0 %v414, 126
    %v423 = vpop.permute.xlu0 %422
    %424 = vrot.lane.b32.xlu0 %v415, 126
    %v425 = vpop.permute.xlu0 %424
    %426 = vrot.lane.b32.xlu0 %v416, 126
    %v427 = vpop.permute.xlu0 %426
    %428 = vrot.lane.b32.xlu0 %v417, 126
    %v429 = vpop.permute.xlu0 %428
    %v434 = vadd.f32 %v226, %v423
    %v435 = vadd.f32 %v227, %v425
    %v436 = vadd.f32 %v228, %v427
    %v437 = vadd.f32 %v229, %v429
    %s438 = sld [smem:[#allocation2 + $0x7f]]
    %v439 = vstv %s438
    %v440 = vmul.f32 %v439, %v46
    %v441 = vmul.f32 %v439, %v47
    %v442 = vmul.f32 %v439, %v49
    %v443 = vmul.f32 %v439, %v50
    %448 = vrot.lane.b32.xlu0 %v440, 126
    %v449 = vpop.permute.xlu0 %448
    %450 = vrot.lane.b32.xlu0 %v441, 126
    %v451 = vpop.permute.xlu0 %450
    %452 = vrot.lane.b32.xlu0 %v442, 126
    %v453 = vpop.permute.xlu0 %452
    %454 = vrot.lane.b32.xlu0 %v443, 126
    %v455 = vpop.permute.xlu0 %454
    %v460 = vadd.f32 %v252, %v449
    %v461 = vadd.f32 %v253, %v451
    %v462 = vadd.f32 %v254, %v453
    %v463 = vadd.f32 %v255, %v455
    %s464 = sld [smem:[#allocation2 + $0x98]]
    %v465 = vstv %s464
    %v466 = vmul.f32 %v465, %v46
    %v467 = vmul.f32 %v465, %v47
    %v468 = vmul.f32 %v465, %v49
    %v469 = vmul.f32 %v465, %v50
    %474 = vrot.lane.b32.xlu0 %v466, 126
    %v475 = vpop.permute.xlu0 %474
    %476 = vrot.lane.b32.xlu0 %v467, 126
    %v477 = vpop.permute.xlu0 %476
    %478 = vrot.lane.b32.xlu0 %v468, 126
    %v479 = vpop.permute.xlu0 %478
    %480 = vrot.lane.b32.xlu0 %v469, 126
    %v481 = vpop.permute.xlu0 %480
    %v486 = vadd.f32 %v278, %v475
    %v487 = vadd.f32 %v279, %v477
    %v488 = vadd.f32 %v280, %v479
    %v489 = vadd.f32 %v281, %v481
    %s490 = sld [smem:[#allocation2 + $0xb1]]
    %v491 = vstv %s490
    %v492 = vmul.f32 %v491, %v46
    %v493 = vmul.f32 %v491, %v47
    %v494 = vmul.f32 %v491, %v49
    %v495 = vmul.f32 %v491, %v50
    %500 = vrot.lane.b32.xlu0 %v492, 126
    %v501 = vpop.permute.xlu0 %500
    %502 = vrot.lane.b32.xlu0 %v493, 126
    %v503 = vpop.permute.xlu0 %502
    %504 = vrot.lane.b32.xlu0 %v494, 126
    %v505 = vpop.permute.xlu0 %504
    %506 = vrot.lane.b32.xlu0 %v495, 126
    %v507 = vpop.permute.xlu0 %506
    %v512 = vadd.f32 %v304, %v501
    %v513 = vadd.f32 %v305, %v503
    %v514 = vadd.f32 %v306, %v505
    %v515 = vadd.f32 %v307, %v507
    %s516 = sld [smem:[#allocation2 + $0x3]]
    %v517 = vstv %s516
    %v518 = vmul.f32 %v517, %v46
    %v519 = vmul.f32 %v517, %v47
    %v520 = vmul.f32 %v517, %v49
    %v521 = vmul.f32 %v517, %v50
    %526 = vrot.lane.b32.xlu0 %v518, 125
    %v527 = vpop.permute.xlu0 %526
    %528 = vrot.lane.b32.xlu0 %v519, 125
    %v529 = vpop.permute.xlu0 %528
    %530 = vrot.lane.b32.xlu0 %v520, 125
    %v531 = vpop.permute.xlu0 %530
    %532 = vrot.lane.b32.xlu0 %v521, 125
    %v533 = vpop.permute.xlu0 %532
    %v538 = vadd.f32 %v330, %v527
    %v539 = vadd.f32 %v331, %v529
    %v540 = vadd.f32 %v332, %v531
    %v541 = vadd.f32 %v333, %v533
    %s542 = sld [smem:[#allocation2 + $0x1c]]
    %v543 = vstv %s542
    %v544 = vmul.f32 %v543, %v46
    %v545 = vmul.f32 %v543, %v47
    %v546 = vmul.f32 %v543, %v49
    %v547 = vmul.f32 %v543, %v50
    %552 = vrot.lane.b32.xlu0 %v544, 125
    %v553 = vpop.permute.xlu0 %552
    %554 = vrot.lane.b32.xlu0 %v545, 125
    %v555 = vpop.permute.xlu0 %554
    %556 = vrot.lane.b32.xlu0 %v546, 125
    %v557 = vpop.permute.xlu0 %556
    %558 = vrot.lane.b32.xlu0 %v547, 125
    %v559 = vpop.permute.xlu0 %558
    %v564 = vadd.f32 %v356, %v553
    %v565 = vadd.f32 %v357, %v555
    %v566 = vadd.f32 %v358, %v557
    %v567 = vadd.f32 %v359, %v559
    %s568 = sld [smem:[#allocation2 + $0x35]]
    %v569 = vstv %s568
    %v570 = vmul.f32 %v569, %v46
    %v571 = vmul.f32 %v569, %v47
    %v572 = vmul.f32 %v569, %v49
    %v573 = vmul.f32 %v569, %v50
    %578 = vrot.lane.b32.xlu0 %v570, 125
    %v579 = vpop.permute.xlu0 %578
    %580 = vrot.lane.b32.xlu0 %v571, 125
    %v581 = vpop.permute.xlu0 %580
    %582 = vrot.lane.b32.xlu0 %v572, 125
    %v583 = vpop.permute.xlu0 %582
    %584 = vrot.lane.b32.xlu0 %v573, 125
    %v585 = vpop.permute.xlu0 %584
    %v590 = vadd.f32 %v382, %v579
    %v591 = vadd.f32 %v383, %v581
    %v592 = vadd.f32 %v384, %v583
    %v593 = vadd.f32 %v385, %v585
    %s594 = sld [smem:[#allocation2 + $0x4e]]
    %v595 = vstv %s594
    %v596 = vmul.f32 %v595, %v46
    %v597 = vmul.f32 %v595, %v47
    %v598 = vmul.f32 %v595, %v49
    %v599 = vmul.f32 %v595, %v50
    %604 = vrot.lane.b32.xlu0 %v596, 125
    %v605 = vpop.permute.xlu0 %604
    %606 = vrot.lane.b32.xlu0 %v597, 125
    %v607 = vpop.permute.xlu0 %606
    %608 = vrot.lane.b32.xlu0 %v598, 125
    %v609 = vpop.permute.xlu0 %608
    %610 = vrot.lane.b32.xlu0 %v599, 125
    %v611 = vpop.permute.xlu0 %610
    %v616 = vadd.f32 %v408, %v605
    %v617 = vadd.f32 %v409, %v607
    %v618 = vadd.f32 %v410, %v609
    %v619 = vadd.f32 %v411, %v611
    %s620 = sld [smem:[#allocation2 + $0x67]]
    %v621 = vstv %s620
    %v622 = vmul.f32 %v621, %v46
    %v623 = vmul.f32 %v621, %v47
    %v624 = vmul.f32 %v621, %v49
    %v625 = vmul.f32 %v621, %v50
    %630 = vrot.lane.b32.xlu0 %v622, 125
    %v631 = vpop.permute.xlu0 %630
    %632 = vrot.lane.b32.xlu0 %v623, 125
    %v633 = vpop.permute.xlu0 %632
    %634 = vrot.lane.b32.xlu0 %v624, 125
    %v635 = vpop.permute.xlu0 %634
    %636 = vrot.lane.b32.xlu0 %v625, 125
    %v637 = vpop.permute.xlu0 %636
    %v642 = vadd.f32 %v434, %v631
    %v643 = vadd.f32 %v435, %v633
    %v644 = vadd.f32 %v436, %v635
    %v645 = vadd.f32 %v437, %v637
    %s646 = sld [smem:[#allocation2 + $0x80]]
    %v647 = vstv %s646
    %v648 = vmul.f32 %v647, %v46
    %v649 = vmul.f32 %v647, %v47
    %v650 = vmul.f32 %v647, %v49
    %v651 = vmul.f32 %v647, %v50
    %656 = vrot.lane.b32.xlu0 %v648, 125
    %v657 = vpop.permute.xlu0 %656
    %658 = vrot.lane.b32.xlu0 %v649, 125
    %v659 = vpop.permute.xlu0 %658
    %660 = vrot.lane.b32.xlu0 %v650, 125
    %v661 = vpop.permute.xlu0 %660
    %662 = vrot.lane.b32.xlu0 %v651, 125
    %v663 = vpop.permute.xlu0 %662
    %v668 = vadd.f32 %v460, %v657
    %v669 = vadd.f32 %v461, %v659
    %v670 = vadd.f32 %v462, %v661
    %v671 = vadd.f32 %v463, %v663
    %s672 = sld [smem:[#allocation2 + $0x99]]
    %v673 = vstv %s672
    %v674 = vmul.f32 %v673, %v46
    %v675 = vmul.f32 %v673, %v47
    %v676 = vmul.f32 %v673, %v49
    %v677 = vmul.f32 %v673, %v50
    %682 = vrot.lane.b32.xlu0 %v674, 125
    %v683 = vpop.permute.xlu0 %682
    %684 = vrot.lane.b32.xlu0 %v675, 125
    %v685 = vpop.permute.xlu0 %684
    %686 = vrot.lane.b32.xlu0 %v676, 125
    %v687 = vpop.permute.xlu0 %686
    %688 = vrot.lane.b32.xlu0 %v677, 125
    %v689 = vpop.permute.xlu0 %688
    %v694 = vadd.f32 %v486, %v683
    %v695 = vadd.f32 %v487, %v685
    %v696 = vadd.f32 %v488, %v687
    %v697 = vadd.f32 %v489, %v689
    %s698 = sld [smem:[#allocation2 + $0xb2]]
    %v699 = vstv %s698
    %v700 = vmul.f32 %v699, %v46
    %v701 = vmul.f32 %v699, %v47
    %v702 = vmul.f32 %v699, %v49
    %v703 = vmul.f32 %v699, %v50
    %708 = vrot.lane.b32.xlu0 %v700, 125
    %v709 = vpop.permute.xlu0 %708
    %710 = vrot.lane.b32.xlu0 %v701, 125
    %v711 = vpop.permute.xlu0 %710
    %712 = vrot.lane.b32.xlu0 %v702, 125
    %v713 = vpop.permute.xlu0 %712
    %714 = vrot.lane.b32.xlu0 %v703, 125
    %v715 = vpop.permute.xlu0 %714
    %v720 = vadd.f32 %v512, %v709
    %v721 = vadd.f32 %v513, %v711
    %v722 = vadd.f32 %v514, %v713
    %v723 = vadd.f32 %v515, %v715
    %s724 = sld [smem:[#allocation2 + $0x4]]
    %v725 = vstv %s724
    %v726 = vmul.f32 %v725, %v46
    %v727 = vmul.f32 %v725, %v47
    %v728 = vmul.f32 %v725, %v49
    %v729 = vmul.f32 %v725, %v50
    %734 = vrot.lane.b32.xlu0 %v726, 124
    %v735 = vpop.permute.xlu0 %734
    %736 = vrot.lane.b32.xlu0 %v727, 124
    %v737 = vpop.permute.xlu0 %736
    %738 = vrot.lane.b32.xlu0 %v728, 124
    %v739 = vpop.permute.xlu0 %738
    %740 = vrot.lane.b32.xlu0 %v729, 124
    %v741 = vpop.permute.xlu0 %740
    %v746 = vadd.f32 %v538, %v735
    %v747 = vadd.f32 %v539, %v737
    %v748 = vadd.f32 %v540, %v739
    %v749 = vadd.f32 %v541, %v741
    %s750 = sld [smem:[#allocation2 + $0x1d]]
    %v751 = vstv %s750
    %v752 = vmul.f32 %v751, %v46
    %v753 = vmul.f32 %v751, %v47
    %v754 = vmul.f32 %v751, %v49
    %v755 = vmul.f32 %v751, %v50
    %760 = vrot.lane.b32.xlu0 %v752, 124
    %v761 = vpop.permute.xlu0 %760
    %762 = vrot.lane.b32.xlu0 %v753, 124
    %v763 = vpop.permute.xlu0 %762
    %764 = vrot.lane.b32.xlu0 %v754, 124
    %v765 = vpop.permute.xlu0 %764
    %766 = vrot.lane.b32.xlu0 %v755, 124
    %v767 = vpop.permute.xlu0 %766
    %v772 = vadd.f32 %v564, %v761
    %v773 = vadd.f32 %v565, %v763
    %v774 = vadd.f32 %v566, %v765
    %v775 = vadd.f32 %v567, %v767
    %s776 = sld [smem:[#allocation2 + $0x36]]
    %v777 = vstv %s776
    %v778 = vmul.f32 %v777, %v46
    %v779 = vmul.f32 %v777, %v47
    %v780 = vmul.f32 %v777, %v49
    %v781 = vmul.f32 %v777, %v50
    %786 = vrot.lane.b32.xlu0 %v778, 124
    %v787 = vpop.permute.xlu0 %786
    %788 = vrot.lane.b32.xlu0 %v779, 124
    %v789 = vpop.permute.xlu0 %788
    %790 = vrot.lane.b32.xlu0 %v780, 124
    %v791 = vpop.permute.xlu0 %790
    %792 = vrot.lane.b32.xlu0 %v781, 124
    %v793 = vpop.permute.xlu0 %792
    %v798 = vadd.f32 %v590, %v787
    %v799 = vadd.f32 %v591, %v789
    %v800 = vadd.f32 %v592, %v791
    %v801 = vadd.f32 %v593, %v793
    %s802 = sld [smem:[#allocation2 + $0x4f]]
    %v803 = vstv %s802
    %v804 = vmul.f32 %v803, %v46
    %v805 = vmul.f32 %v803, %v47
    %v806 = vmul.f32 %v803, %v49
    %v807 = vmul.f32 %v803, %v50
    %812 = vrot.lane.b32.xlu0 %v804, 124
    %v813 = vpop.permute.xlu0 %812
    %814 = vrot.lane.b32.xlu0 %v805, 124
    %v815 = vpop.permute.xlu0 %814
    %816 = vrot.lane.b32.xlu0 %v806, 124
    %v817 = vpop.permute.xlu0 %816
    %818 = vrot.lane.b32.xlu0 %v807, 124
    %v819 = vpop.permute.xlu0 %818
    %v824 = vadd.f32 %v616, %v813
    %v825 = vadd.f32 %v617, %v815
    %v826 = vadd.f32 %v618, %v817
    %v827 = vadd.f32 %v619, %v819
    %s828 = sld [smem:[#allocation2 + $0x68]]
    %v829 = vstv %s828
    %v830 = vmul.f32 %v829, %v46
    %v831 = vmul.f32 %v829, %v47
    %v832 = vmul.f32 %v829, %v49
    %v833 = vmul.f32 %v829, %v50
    %838 = vrot.lane.b32.xlu0 %v830, 124
    %v839 = vpop.permute.xlu0 %838
    %840 = vrot.lane.b32.xlu0 %v831, 124
    %v841 = vpop.permute.xlu0 %840
    %842 = vrot.lane.b32.xlu0 %v832, 124
    %v843 = vpop.permute.xlu0 %842
    %844 = vrot.lane.b32.xlu0 %v833, 124
    %v845 = vpop.permute.xlu0 %844
    %v850 = vadd.f32 %v642, %v839
    %v851 = vadd.f32 %v643, %v841
    %v852 = vadd.f32 %v644, %v843
    %v853 = vadd.f32 %v645, %v845
    %s854 = sld [smem:[#allocation2 + $0x81]]
    %v855 = vstv %s854
    %v856 = vmul.f32 %v855, %v46
    %v857 = vmul.f32 %v855, %v47
    %v858 = vmul.f32 %v855, %v49
    %v859 = vmul.f32 %v855, %v50
    %864 = vrot.lane.b32.xlu0 %v856, 124
    %v865 = vpop.permute.xlu0 %864
    %866 = vrot.lane.b32.xlu0 %v857, 124
    %v867 = vpop.permute.xlu0 %866
    %868 = vrot.lane.b32.xlu0 %v858, 124
    %v869 = vpop.permute.xlu0 %868
    %870 = vrot.lane.b32.xlu0 %v859, 124
    %v871 = vpop.permute.xlu0 %870
    %v876 = vadd.f32 %v668, %v865
    %v877 = vadd.f32 %v669, %v867
    %v878 = vadd.f32 %v670, %v869
    %v879 = vadd.f32 %v671, %v871
    %s880 = sld [smem:[#allocation2 + $0x9a]]
    %v881 = vstv %s880
    %v882 = vmul.f32 %v881, %v46
    %v883 = vmul.f32 %v881, %v47
    %v884 = vmul.f32 %v881, %v49
    %v885 = vmul.f32 %v881, %v50
    %890 = vrot.lane.b32.xlu0 %v882, 124
    %v891 = vpop.permute.xlu0 %890
    %892 = vrot.lane.b32.xlu0 %v883, 124
    %v893 = vpop.permute.xlu0 %892
    %894 = vrot.lane.b32.xlu0 %v884, 124
    %v895 = vpop.permute.xlu0 %894
    %896 = vrot.lane.b32.xlu0 %v885, 124
    %v897 = vpop.permute.xlu0 %896
    %v902 = vadd.f32 %v694, %v891
    %v903 = vadd.f32 %v695, %v893
    %v904 = vadd.f32 %v696, %v895
    %v905 = vadd.f32 %v697, %v897
    %s906 = sld [smem:[#allocation2 + $0xb3]]
    %v907 = vstv %s906
    %v908 = vmul.f32 %v907, %v46
    %v909 = vmul.f32 %v907, %v47
    %v910 = vmul.f32 %v907, %v49
    %v911 = vmul.f32 %v907, %v50
    %916 = vrot.lane.b32.xlu0 %v908, 124
    %v917 = vpop.permute.xlu0 %916
    %918 = vrot.lane.b32.xlu0 %v909, 124
    %v919 = vpop.permute.xlu0 %918
    %920 = vrot.lane.b32.xlu0 %v910, 124
    %v921 = vpop.permute.xlu0 %920
    %922 = vrot.lane.b32.xlu0 %v911, 124
    %v923 = vpop.permute.xlu0 %922
    %v928 = vadd.f32 %v720, %v917
    %v929 = vadd.f32 %v721, %v919
    %v930 = vadd.f32 %v722, %v921
    %v931 = vadd.f32 %v723, %v923
    %s932 = sld [smem:[#allocation2 + $0x5]]
    %v933 = vstv %s932
    %v934 = vmul.f32 %v933, %v46
    %v935 = vmul.f32 %v933, %v47
    %v936 = vmul.f32 %v933, %v48
    %v937 = vmul.f32 %v933, %v49
    %v938 = vmul.f32 %v933, %v50
    %v939 = vmul.f32 %v933, %v51
    %vm946 = vcmask 1046528
    %v947 = vrot.slane %v934, 1
    %v948 = vrot.slane %v935, 1
    %v949 = vsel %vm946, %v947, %v948
    %v950 = vrot.slane %v936, 1
    %v951 = vsel %vm946, %v948, %v950
    %v952 = vrot.slane %v937, 1
    %v953 = vrot.slane %v938, 1
    %v954 = vsel %vm946, %v952, %v953
    %v955 = vrot.slane %v939, 1
    %v956 = vsel %vm946, %v953, %v955
    %v961 = vadd.f32 %v746, %v949
    %v962 = vadd.f32 %v747, %v951
    %v963 = vadd.f32 %v748, %v954
    %v964 = vadd.f32 %v749, %v956
    %s965 = sld [smem:[#allocation2 + $0x1e]]
    %v966 = vstv %s965
    %v967 = vmul.f32 %v966, %v46
    %v968 = vmul.f32 %v966, %v47
    %v969 = vmul.f32 %v966, %v48
    %v970 = vmul.f32 %v966, %v49
    %v971 = vmul.f32 %v966, %v50
    %v972 = vmul.f32 %v966, %v51
    %v979 = vrot.slane %v967, 1
    %v980 = vrot.slane %v968, 1
    %v981 = vsel %vm946, %v979, %v980
    %v982 = vrot.slane %v969, 1
    %v983 = vsel %vm946, %v980, %v982
    %v984 = vrot.slane %v970, 1
    %v985 = vrot.slane %v971, 1
    %v986 = vsel %vm946, %v984, %v985
    %v987 = vrot.slane %v972, 1
    %v988 = vsel %vm946, %v985, %v987
    %v993 = vadd.f32 %v772, %v981
    %v994 = vadd.f32 %v773, %v983
    %v995 = vadd.f32 %v774, %v986
    %v996 = vadd.f32 %v775, %v988
    %s997 = sld [smem:[#allocation2 + $0x37]]
    %v998 = vstv %s997
    %v999 = vmul.f32 %v998, %v46
    %v1000 = vmul.f32 %v998, %v47
    %v1001 = vmul.f32 %v998, %v48
    %v1002 = vmul.f32 %v998, %v49
    %v1003 = vmul.f32 %v998, %v50
    %v1004 = vmul.f32 %v998, %v51
    %v1011 = vrot.slane %v999, 1
    %v1012 = vrot.slane %v1000, 1
    %v1013 = vsel %vm946, %v1011, %v1012
    %v1014 = vrot.slane %v1001, 1
    %v1015 = vsel %vm946, %v1012, %v1014
    %v1016 = vrot.slane %v1002, 1
    %v1017 = vrot.slane %v1003, 1
    %v1018 = vsel %vm946, %v1016, %v1017
    %v1019 = vrot.slane %v1004, 1
    %v1020 = vsel %vm946, %v1017, %v1019
    %v1025 = vadd.f32 %v798, %v1013
    %v1026 = vadd.f32 %v799, %v1015
    %v1027 = vadd.f32 %v800, %v1018
    %v1028 = vadd.f32 %v801, %v1020
    %s1029 = sld [smem:[#allocation2 + $0x50]]
    %v1030 = vstv %s1029
    %v1031 = vmul.f32 %v1030, %v46
    %v1032 = vmul.f32 %v1030, %v47
    %v1033 = vmul.f32 %v1030, %v48
    %v1034 = vmul.f32 %v1030, %v49
    %v1035 = vmul.f32 %v1030, %v50
    %v1036 = vmul.f32 %v1030, %v51
    %v1043 = vrot.slane %v1031, 1
    %v1044 = vrot.slane %v1032, 1
    %v1045 = vsel %vm946, %v1043, %v1044
    %v1046 = vrot.slane %v1033, 1
    %v1047 = vsel %vm946, %v1044, %v1046
    %v1048 = vrot.slane %v1034, 1
    %v1049 = vrot.slane %v1035, 1
    %v1050 = vsel %vm946, %v1048, %v1049
    %v1051 = vrot.slane %v1036, 1
    %v1052 = vsel %vm946, %v1049, %v1051
    %v1057 = vadd.f32 %v824, %v1045
    %v1058 = vadd.f32 %v825, %v1047
    %v1059 = vadd.f32 %v826, %v1050
    %v1060 = vadd.f32 %v827, %v1052
    %s1061 = sld [smem:[#allocation2 + $0x69]]
    %v1062 = vstv %s1061
    %v1063 = vmul.f32 %v1062, %v46
    %v1064 = vmul.f32 %v1062, %v47
    %v1065 = vmul.f32 %v1062, %v48
    %v1066 = vmul.f32 %v1062, %v49
    %v1067 = vmul.f32 %v1062, %v50
    %v1068 = vmul.f32 %v1062, %v51
    %v1075 = vrot.slane %v1063, 1
    %v1076 = vrot.slane %v1064, 1
    %v1077 = vsel %vm946, %v1075, %v1076
    %v1078 = vrot.slane %v1065, 1
    %v1079 = vsel %vm946, %v1076, %v1078
    %v1080 = vrot.slane %v1066, 1
    %v1081 = vrot.slane %v1067, 1
    %v1082 = vsel %vm946, %v1080, %v1081
    %v1083 = vrot.slane %v1068, 1
    %v1084 = vsel %vm946, %v1081, %v1083
    %v1089 = vadd.f32 %v850, %v1077
    %v1090 = vadd.f32 %v851, %v1079
    %v1091 = vadd.f32 %v852, %v1082
    %v1092 = vadd.f32 %v853, %v1084
    %s1093 = sld [smem:[#allocation2 + $0x82]]
    %v1094 = vstv %s1093
    %v1095 = vmul.f32 %v1094, %v46
    %v1096 = vmul.f32 %v1094, %v47
    %v1097 = vmul.f32 %v1094, %v48
    %v1098 = vmul.f32 %v1094, %v49
    %v1099 = vmul.f32 %v1094, %v50
    %v1100 = vmul.f32 %v1094, %v51
    %v1107 = vrot.slane %v1095, 1
    %v1108 = vrot.slane %v1096, 1
    %v1109 = vsel %vm946, %v1107, %v1108
    %v1110 = vrot.slane %v1097, 1
    %v1111 = vsel %vm946, %v1108, %v1110
    %v1112 = vrot.slane %v1098, 1
    %v1113 = vrot.slane %v1099, 1
    %v1114 = vsel %vm946, %v1112, %v1113
    %v1115 = vrot.slane %v1100, 1
    %v1116 = vsel %vm946, %v1113, %v1115
    %v1121 = vadd.f32 %v876, %v1109
    %v1122 = vadd.f32 %v877, %v1111
    %v1123 = vadd.f32 %v878, %v1114
    %v1124 = vadd.f32 %v879, %v1116
    %s1125 = sld [smem:[#allocation2 + $0x9b]]
    %v1126 = vstv %s1125
    %v1127 = vmul.f32 %v1126, %v46
    %v1128 = vmul.f32 %v1126, %v47
    %v1129 = vmul.f32 %v1126, %v48
    %v1130 = vmul.f32 %v1126, %v49
    %v1131 = vmul.f32 %v1126, %v50
    %v1132 = vmul.f32 %v1126, %v51
    %v1139 = vrot.slane %v1127, 1
    %v1140 = vrot.slane %v1128, 1
    %v1141 = vsel %vm946, %v1139, %v1140
    %v1142 = vrot.slane %v1129, 1
    %v1143 = vsel %vm946, %v1140, %v1142
    %v1144 = vrot.slane %v1130, 1
    %v1145 = vrot.slane %v1131, 1
    %v1146 = vsel %vm946, %v1144, %v1145
    %v1147 = vrot.slane %v1132, 1
    %v1148 = vsel %vm946, %v1145, %v1147
    %v1153 = vadd.f32 %v902, %v1141
    %v1154 = vadd.f32 %v903, %v1143
    %v1155 = vadd.f32 %v904, %v1146
    %v1156 = vadd.f32 %v905, %v1148
    %s1157 = sld [smem:[#allocation2 + $0xb4]]
    %v1158 = vstv %s1157
    %v1159 = vmul.f32 %v1158, %v46
    %v1160 = vmul.f32 %v1158, %v47
    %v1161 = vmul.f32 %v1158, %v48
    %v1162 = vmul.f32 %v1158, %v49
    %v1163 = vmul.f32 %v1158, %v50
    %v1164 = vmul.f32 %v1158, %v51
    %v1171 = vrot.slane %v1159, 1
    %v1172 = vrot.slane %v1160, 1
    %v1173 = vsel %vm946, %v1171, %v1172
    %v1174 = vrot.slane %v1161, 1
    %v1175 = vsel %vm946, %v1172, %v1174
    %v1176 = vrot.slane %v1162, 1
    %v1177 = vrot.slane %v1163, 1
    %v1178 = vsel %vm946, %v1176, %v1177
    %v1179 = vrot.slane %v1164, 1
    %v1180 = vsel %vm946, %v1177, %v1179
    %v1185 = vadd.f32 %v928, %v1173
    %v1186 = vadd.f32 %v929, %v1175
    %v1187 = vadd.f32 %v930, %v1178
    %v1188 = vadd.f32 %v931, %v1180
    %s1189 = sld [smem:[#allocation2 + $0x6]]
    %v1190 = vstv %s1189
    %v1191 = vmul.f32 %v1190, %v46
    %v1192 = vmul.f32 %v1190, %v47
    %v1193 = vmul.f32 %v1190, %v48
    %v1194 = vmul.f32 %v1190, %v49
    %v1195 = vmul.f32 %v1190, %v50
    %v1196 = vmul.f32 %v1190, %v51
    %v1203 = vrot.slane %v1191, 1
    %v1204 = vrot.slane %v1192, 1
    %v1205 = vsel %vm946, %v1203, %v1204
    %v1206 = vrot.slane %v1193, 1
    %v1207 = vsel %vm946, %v1204, %v1206
    %v1208 = vrot.slane %v1194, 1
    %v1209 = vrot.slane %v1195, 1
    %v1210 = vsel %vm946, %v1208, %v1209
    %v1211 = vrot.slane %v1196, 1
    %v1212 = vsel %vm946, %v1209, %v1211
    %1213 = vrot.lane.b32.xlu0 %v1205, 127
    %v1214 = vpop.permute.xlu0 %1213
    %1215 = vrot.lane.b32.xlu0 %v1207, 127
    %v1216 = vpop.permute.xlu0 %1215
    %1217 = vrot.lane.b32.xlu0 %v1210, 127
    %v1218 = vpop.permute.xlu0 %1217
    %1219 = vrot.lane.b32.xlu0 %v1212, 127
    %v1220 = vpop.permute.xlu0 %1219
    %v1225 = vadd.f32 %v961, %v1214
    %v1226 = vadd.f32 %v962, %v1216
    %v1227 = vadd.f32 %v963, %v1218
    %v1228 = vadd.f32 %v964, %v1220
    %s1229 = sld [smem:[#allocation2 + $0x1f]]
    %v1230 = vstv %s1229
    %v1231 = vmul.f32 %v1230, %v46
    %v1232 = vmul.f32 %v1230, %v47
    %v1233 = vmul.f32 %v1230, %v48
    %v1234 = vmul.f32 %v1230, %v49
    %v1235 = vmul.f32 %v1230, %v50
    %v1236 = vmul.f32 %v1230, %v51
    %v1243 = vrot.slane %v1231, 1
    %v1244 = vrot.slane %v1232, 1
    %v1245 = vsel %vm946, %v1243, %v1244
    %v1246 = vrot.slane %v1233, 1
    %v1247 = vsel %vm946, %v1244, %v1246
    %v1248 = vrot.slane %v1234, 1
    %v1249 = vrot.slane %v1235, 1
    %v1250 = vsel %vm946, %v1248, %v1249
    %v1251 = vrot.slane %v1236, 1
    %v1252 = vsel %vm946, %v1249, %v1251
    %1253 = vrot.lane.b32.xlu0 %v1245, 127
    %v1254 = vpop.permute.xlu0 %1253
    %1255 = vrot.lane.b32.xlu0 %v1247, 127
    %v1256 = vpop.permute.xlu0 %1255
    %1257 = vrot.lane.b32.xlu0 %v1250, 127
    %v1258 = vpop.permute.xlu0 %1257
    %1259 = vrot.lane.b32.xlu0 %v1252, 127
    %v1260 = vpop.permute.xlu0 %1259
    %v1265 = vadd.f32 %v993, %v1254
    %v1266 = vadd.f32 %v994, %v1256
    %v1267 = vadd.f32 %v995, %v1258
    %v1268 = vadd.f32 %v996, %v1260
    %s1269 = sld [smem:[#allocation2 + $0x38]]
    %v1270 = vstv %s1269
    %v1271 = vmul.f32 %v1270, %v46
    %v1272 = vmul.f32 %v1270, %v47
    %v1273 = vmul.f32 %v1270, %v48
    %v1274 = vmul.f32 %v1270, %v49
    %v1275 = vmul.f32 %v1270, %v50
    %v1276 = vmul.f32 %v1270, %v51
    %v1283 = vrot.slane %v1271, 1
    %v1284 = vrot.slane %v1272, 1
    %v1285 = vsel %vm946, %v1283, %v1284
    %v1286 = vrot.slane %v1273, 1
    %v1287 = vsel %vm946, %v1284, %v1286
    %v1288 = vrot.slane %v1274, 1
    %v1289 = vrot.slane %v1275, 1
    %v1290 = vsel %vm946, %v1288, %v1289
    %v1291 = vrot.slane %v1276, 1
    %v1292 = vsel %vm946, %v1289, %v1291
    %1293 = vrot.lane.b32.xlu0 %v1285, 127
    %v1294 = vpop.permute.xlu0 %1293
    %1295 = vrot.lane.b32.xlu0 %v1287, 127
    %v1296 = vpop.permute.xlu0 %1295
    %1297 = vrot.lane.b32.xlu0 %v1290, 127
    %v1298 = vpop.permute.xlu0 %1297
    %1299 = vrot.lane.b32.xlu0 %v1292, 127
    %v1300 = vpop.permute.xlu0 %1299
    %v1305 = vadd.f32 %v1025, %v1294
    %v1306 = vadd.f32 %v1026, %v1296
    %v1307 = vadd.f32 %v1027, %v1298
    %v1308 = vadd.f32 %v1028, %v1300
    %s1309 = sld [smem:[#allocation2 + $0x51]]
    %v1310 = vstv %s1309
    %v1311 = vmul.f32 %v1310, %v46
    %v1312 = vmul.f32 %v1310, %v47
    %v1313 = vmul.f32 %v1310, %v48
    %v1314 = vmul.f32 %v1310, %v49
    %v1315 = vmul.f32 %v1310, %v50
    %v1316 = vmul.f32 %v1310, %v51
    %v1323 = vrot.slane %v1311, 1
    %v1324 = vrot.slane %v1312, 1
    %v1325 = vsel %vm946, %v1323, %v1324
    %v1326 = vrot.slane %v1313, 1
    %v1327 = vsel %vm946, %v1324, %v1326
    %v1328 = vrot.slane %v1314, 1
    %v1329 = vrot.slane %v1315, 1
    %v1330 = vsel %vm946, %v1328, %v1329
    %v1331 = vrot.slane %v1316, 1
    %v1332 = vsel %vm946, %v1329, %v1331
    %1333 = vrot.lane.b32.xlu0 %v1325, 127
    %v1334 = vpop.permute.xlu0 %1333
    %1335 = vrot.lane.b32.xlu0 %v1327, 127
    %v1336 = vpop.permute.xlu0 %1335
    %1337 = vrot.lane.b32.xlu0 %v1330, 127
    %v1338 = vpop.permute.xlu0 %1337
    %1339 = vrot.lane.b32.xlu0 %v1332, 127
    %v1340 = vpop.permute.xlu0 %1339
    %v1345 = vadd.f32 %v1057, %v1334
    %v1346 = vadd.f32 %v1058, %v1336
    %v1347 = vadd.f32 %v1059, %v1338
    %v1348 = vadd.f32 %v1060, %v1340
    %s1349 = sld [smem:[#allocation2 + $0x6a]]
    %v1350 = vstv %s1349
    %v1351 = vmul.f32 %v1350, %v46
    %v1352 = vmul.f32 %v1350, %v47
    %v1353 = vmul.f32 %v1350, %v48
    %v1354 = vmul.f32 %v1350, %v49
    %v1355 = vmul.f32 %v1350, %v50
    %v1356 = vmul.f32 %v1350, %v51
    %v1363 = vrot.slane %v1351, 1
    %v1364 = vrot.slane %v1352, 1
    %v1365 = vsel %vm946, %v1363, %v1364
    %v1366 = vrot.slane %v1353, 1
    %v1367 = vsel %vm946, %v1364, %v1366
    %v1368 = vrot.slane %v1354, 1
    %v1369 = vrot.slane %v1355, 1
    %v1370 = vsel %vm946, %v1368, %v1369
    %v1371 = vrot.slane %v1356, 1
    %v1372 = vsel %vm946, %v1369, %v1371
    %1373 = vrot.lane.b32.xlu0 %v1365, 127
    %v1374 = vpop.permute.xlu0 %1373
    %1375 = vrot.lane.b32.xlu0 %v1367, 127
    %v1376 = vpop.permute.xlu0 %1375
    %1377 = vrot.lane.b32.xlu0 %v1370, 127
    %v1378 = vpop.permute.xlu0 %1377
    %1379 = vrot.lane.b32.xlu0 %v1372, 127
    %v1380 = vpop.permute.xlu0 %1379
    %v1385 = vadd.f32 %v1089, %v1374
    %v1386 = vadd.f32 %v1090, %v1376
    %v1387 = vadd.f32 %v1091, %v1378
    %v1388 = vadd.f32 %v1092, %v1380
    %s1389 = sld [smem:[#allocation2 + $0x83]]
    %v1390 = vstv %s1389
    %v1391 = vmul.f32 %v1390, %v46
    %v1392 = vmul.f32 %v1390, %v47
    %v1393 = vmul.f32 %v1390, %v48
    %v1394 = vmul.f32 %v1390, %v49
    %v1395 = vmul.f32 %v1390, %v50
    %v1396 = vmul.f32 %v1390, %v51
    %v1403 = vrot.slane %v1391, 1
    %v1404 = vrot.slane %v1392, 1
    %v1405 = vsel %vm946, %v1403, %v1404
    %v1406 = vrot.slane %v1393, 1
    %v1407 = vsel %vm946, %v1404, %v1406
    %v1408 = vrot.slane %v1394, 1
    %v1409 = vrot.slane %v1395, 1
    %v1410 = vsel %vm946, %v1408, %v1409
    %v1411 = vrot.slane %v1396, 1
    %v1412 = vsel %vm946, %v1409, %v1411
    %1413 = vrot.lane.b32.xlu0 %v1405, 127
    %v1414 = vpop.permute.xlu0 %1413
    %1415 = vrot.lane.b32.xlu0 %v1407, 127
    %v1416 = vpop.permute.xlu0 %1415
    %1417 = vrot.lane.b32.xlu0 %v1410, 127
    %v1418 = vpop.permute.xlu0 %1417
    %1419 = vrot.lane.b32.xlu0 %v1412, 127
    %v1420 = vpop.permute.xlu0 %1419
    %v1425 = vadd.f32 %v1121, %v1414
    %v1426 = vadd.f32 %v1122, %v1416
    %v1427 = vadd.f32 %v1123, %v1418
    %v1428 = vadd.f32 %v1124, %v1420
    %s1429 = sld [smem:[#allocation2 + $0x9c]]
    %v1430 = vstv %s1429
    %v1431 = vmul.f32 %v1430, %v46
    %v1432 = vmul.f32 %v1430, %v47
    %v1433 = vmul.f32 %v1430, %v48
    %v1434 = vmul.f32 %v1430, %v49
    %v1435 = vmul.f32 %v1430, %v50
    %v1436 = vmul.f32 %v1430, %v51
    %v1443 = vrot.slane %v1431, 1
    %v1444 = vrot.slane %v1432, 1
    %v1445 = vsel %vm946, %v1443, %v1444
    %v1446 = vrot.slane %v1433, 1
    %v1447 = vsel %vm946, %v1444, %v1446
    %v1448 = vrot.slane %v1434, 1
    %v1449 = vrot.slane %v1435, 1
    %v1450 = vsel %vm946, %v1448, %v1449
    %v1451 = vrot.slane %v1436, 1
    %v1452 = vsel %vm946, %v1449, %v1451
    %1453 = vrot.lane.b32.xlu0 %v1445, 127
    %v1454 = vpop.permute.xlu0 %1453
    %1455 = vrot.lane.b32.xlu0 %v1447, 127
    %v1456 = vpop.permute.xlu0 %1455
    %1457 = vrot.lane.b32.xlu0 %v1450, 127
    %v1458 = vpop.permute.xlu0 %1457
    %1459 = vrot.lane.b32.xlu0 %v1452, 127
    %v1460 = vpop.permute.xlu0 %1459
    %v1465 = vadd.f32 %v1153, %v1454
    %v1466 = vadd.f32 %v1154, %v1456
    %v1467 = vadd.f32 %v1155, %v1458
    %v1468 = vadd.f32 %v1156, %v1460
    %s1469 = sld [smem:[#allocation2 + $0xb5]]
    %v1470 = vstv %s1469
    %v1471 = vmul.f32 %v1470, %v46
    %v1472 = vmul.f32 %v1470, %v47
    %v1473 = vmul.f32 %v1470, %v48
    %v1474 = vmul.f32 %v1470, %v49
    %v1475 = vmul.f32 %v1470, %v50
    %v1476 = vmul.f32 %v1470, %v51
    %v1483 = vrot.slane %v1471, 1
    %v1484 = vrot.slane %v1472, 1
    %v1485 = vsel %vm946, %v1483, %v1484
    %v1486 = vrot.slane %v1473, 1
    %v1487 = vsel %vm946, %v1484, %v1486
    %v1488 = vrot.slane %v1474, 1
    %v1489 = vrot.slane %v1475, 1
    %v1490 = vsel %vm946, %v1488, %v1489
    %v1491 = vrot.slane %v1476, 1
    %v1492 = vsel %vm946, %v1489, %v1491
    %1493 = vrot.lane.b32.xlu0 %v1485, 127
    %v1494 = vpop.permute.xlu0 %1493
    %1495 = vrot.lane.b32.xlu0 %v1487, 127
    %v1496 = vpop.permute.xlu0 %1495
    %1497 = vrot.lane.b32.xlu0 %v1490, 127
    %v1498 = vpop.permute.xlu0 %1497
    %1499 = vrot.lane.b32.xlu0 %v1492, 127
    %v1500 = vpop.permute.xlu0 %1499
    %v1505 = vadd.f32 %v1185, %v1494
    %v1506 = vadd.f32 %v1186, %v1496
    %v1507 = vadd.f32 %v1187, %v1498
    %v1508 = vadd.f32 %v1188, %v1500
    %s1509 = sld [smem:[#allocation2 + $0x7]]
    %v1510 = vstv %s1509
    %v1511 = vmul.f32 %v1510, %v46
    %v1512 = vmul.f32 %v1510, %v47
    %v1513 = vmul.f32 %v1510, %v48
    %v1514 = vmul.f32 %v1510, %v49
    %v1515 = vmul.f32 %v1510, %v50
    %v1516 = vmul.f32 %v1510, %v51
    %v1523 = vrot.slane %v1511, 1
    %v1524 = vrot.slane %v1512, 1
    %v1525 = vsel %vm946, %v1523, %v1524
    %v1526 = vrot.slane %v1513, 1
    %v1527 = vsel %vm946, %v1524, %v1526
    %v1528 = vrot.slane %v1514, 1
    %v1529 = vrot.slane %v1515, 1
    %v1530 = vsel %vm946, %v1528, %v1529
    %v1531 = vrot.slane %v1516, 1
    %v1532 = vsel %vm946, %v1529, %v1531
    %1533 = vrot.lane.b32.xlu0 %v1525, 126
    %v1534 = vpop.permute.xlu0 %1533
    %1535 = vrot.lane.b32.xlu0 %v1527, 126
    %v1536 = vpop.permute.xlu0 %1535
    %1537 = vrot.lane.b32.xlu0 %v1530, 126
    %v1538 = vpop.permute.xlu0 %1537
    %1539 = vrot.lane.b32.xlu0 %v1532, 126
    %v1540 = vpop.permute.xlu0 %1539
    %v1545 = vadd.f32 %v1225, %v1534
    %v1546 = vadd.f32 %v1226, %v1536
    %v1547 = vadd.f32 %v1227, %v1538
    %v1548 = vadd.f32 %v1228, %v1540
    %s1549 = sld [smem:[#allocation2 + $0x20]]
    %v1550 = vstv %s1549
    %v1551 = vmul.f32 %v1550, %v46
    %v1552 = vmul.f32 %v1550, %v47
    %v1553 = vmul.f32 %v1550, %v48
    %v1554 = vmul.f32 %v1550, %v49
    %v1555 = vmul.f32 %v1550, %v50
    %v1556 = vmul.f32 %v1550, %v51
    %v1563 = vrot.slane %v1551, 1
    %v1564 = vrot.slane %v1552, 1
    %v1565 = vsel %vm946, %v1563, %v1564
    %v1566 = vrot.slane %v1553, 1
    %v1567 = vsel %vm946, %v1564, %v1566
    %v1568 = vrot.slane %v1554, 1
    %v1569 = vrot.slane %v1555, 1
    %v1570 = vsel %vm946, %v1568, %v1569
    %v1571 = vrot.slane %v1556, 1
    %v1572 = vsel %vm946, %v1569, %v1571
    %1573 = vrot.lane.b32.xlu0 %v1565, 126
    %v1574 = vpop.permute.xlu0 %1573
    %1575 = vrot.lane.b32.xlu0 %v1567, 126
    %v1576 = vpop.permute.xlu0 %1575
    %1577 = vrot.lane.b32.xlu0 %v1570, 126
    %v1578 = vpop.permute.xlu0 %1577
    %1579 = vrot.lane.b32.xlu0 %v1572, 126
    %v1580 = vpop.permute.xlu0 %1579
    %v1585 = vadd.f32 %v1265, %v1574
    %v1586 = vadd.f32 %v1266, %v1576
    %v1587 = vadd.f32 %v1267, %v1578
    %v1588 = vadd.f32 %v1268, %v1580
    %s1589 = sld [smem:[#allocation2 + $0x39]]
    %v1590 = vstv %s1589
    %v1591 = vmul.f32 %v1590, %v46
    %v1592 = vmul.f32 %v1590, %v47
    %v1593 = vmul.f32 %v1590, %v48
    %v1594 = vmul.f32 %v1590, %v49
    %v1595 = vmul.f32 %v1590, %v50
    %v1596 = vmul.f32 %v1590, %v51
    %v1603 = vrot.slane %v1591, 1
    %v1604 = vrot.slane %v1592, 1
    %v1605 = vsel %vm946, %v1603, %v1604
    %v1606 = vrot.slane %v1593, 1
    %v1607 = vsel %vm946, %v1604, %v1606
    %v1608 = vrot.slane %v1594, 1
    %v1609 = vrot.slane %v1595, 1
    %v1610 = vsel %vm946, %v1608, %v1609
    %v1611 = vrot.slane %v1596, 1
    %v1612 = vsel %vm946, %v1609, %v1611
    %1613 = vrot.lane.b32.xlu0 %v1605, 126
    %v1614 = vpop.permute.xlu0 %1613
    %1615 = vrot.lane.b32.xlu0 %v1607, 126
    %v1616 = vpop.permute.xlu0 %1615
    %1617 = vrot.lane.b32.xlu0 %v1610, 126
    %v1618 = vpop.permute.xlu0 %1617
    %1619 = vrot.lane.b32.xlu0 %v1612, 126
    %v1620 = vpop.permute.xlu0 %1619
    %v1625 = vadd.f32 %v1305, %v1614
    %v1626 = vadd.f32 %v1306, %v1616
    %v1627 = vadd.f32 %v1307, %v1618
    %v1628 = vadd.f32 %v1308, %v1620
    %s1629 = sld [smem:[#allocation2 + $0x52]]
    %v1630 = vstv %s1629
    %v1631 = vmul.f32 %v1630, %v46
    %v1632 = vmul.f32 %v1630, %v47
    %v1633 = vmul.f32 %v1630, %v48
    %v1634 = vmul.f32 %v1630, %v49
    %v1635 = vmul.f32 %v1630, %v50
    %v1636 = vmul.f32 %v1630, %v51
    %v1643 = vrot.slane %v1631, 1
    %v1644 = vrot.slane %v1632, 1
    %v1645 = vsel %vm946, %v1643, %v1644
    %v1646 = vrot.slane %v1633, 1
    %v1647 = vsel %vm946, %v1644, %v1646
    %v1648 = vrot.slane %v1634, 1
    %v1649 = vrot.slane %v1635, 1
    %v1650 = vsel %vm946, %v1648, %v1649
    %v1651 = vrot.slane %v1636, 1
    %v1652 = vsel %vm946, %v1649, %v1651
    %1653 = vrot.lane.b32.xlu0 %v1645, 126
    %v1654 = vpop.permute.xlu0 %1653
    %1655 = vrot.lane.b32.xlu0 %v1647, 126
    %v1656 = vpop.permute.xlu0 %1655
    %1657 = vrot.lane.b32.xlu0 %v1650, 126
    %v1658 = vpop.permute.xlu0 %1657
    %1659 = vrot.lane.b32.xlu0 %v1652, 126
    %v1660 = vpop.permute.xlu0 %1659
    %v1665 = vadd.f32 %v1345, %v1654
    %v1666 = vadd.f32 %v1346, %v1656
    %v1667 = vadd.f32 %v1347, %v1658
    %v1668 = vadd.f32 %v1348, %v1660
    %s1669 = sld [smem:[#allocation2 + $0x6b]]
    %v1670 = vstv %s1669
    %v1671 = vmul.f32 %v1670, %v46
    %v1672 = vmul.f32 %v1670, %v47
    %v1673 = vmul.f32 %v1670, %v48
    %v1674 = vmul.f32 %v1670, %v49
    %v1675 = vmul.f32 %v1670, %v50
    %v1676 = vmul.f32 %v1670, %v51
    %v1683 = vrot.slane %v1671, 1
    %v1684 = vrot.slane %v1672, 1
    %v1685 = vsel %vm946, %v1683, %v1684
    %v1686 = vrot.slane %v1673, 1
    %v1687 = vsel %vm946, %v1684, %v1686
    %v1688 = vrot.slane %v1674, 1
    %v1689 = vrot.slane %v1675, 1
    %v1690 = vsel %vm946, %v1688, %v1689
    %v1691 = vrot.slane %v1676, 1
    %v1692 = vsel %vm946, %v1689, %v1691
    %1693 = vrot.lane.b32.xlu0 %v1685, 126
    %v1694 = vpop.permute.xlu0 %1693
    %1695 = vrot.lane.b32.xlu0 %v1687, 126
    %v1696 = vpop.permute.xlu0 %1695
    %1697 = vrot.lane.b32.xlu0 %v1690, 126
    %v1698 = vpop.permute.xlu0 %1697
    %1699 = vrot.lane.b32.xlu0 %v1692, 126
    %v1700 = vpop.permute.xlu0 %1699
    %v1705 = vadd.f32 %v1385, %v1694
    %v1706 = vadd.f32 %v1386, %v1696
    %v1707 = vadd.f32 %v1387, %v1698
    %v1708 = vadd.f32 %v1388, %v1700
    %s1709 = sld [smem:[#allocation2 + $0x84]]
    %v1710 = vstv %s1709
    %v1711 = vmul.f32 %v1710, %v46
    %v1712 = vmul.f32 %v1710, %v47
    %v1713 = vmul.f32 %v1710, %v48
    %v1714 = vmul.f32 %v1710, %v49
    %v1715 = vmul.f32 %v1710, %v50
    %v1716 = vmul.f32 %v1710, %v51
    %v1723 = vrot.slane %v1711, 1
    %v1724 = vrot.slane %v1712, 1
    %v1725 = vsel %vm946, %v1723, %v1724
    %v1726 = vrot.slane %v1713, 1
    %v1727 = vsel %vm946, %v1724, %v1726
    %v1728 = vrot.slane %v1714, 1
    %v1729 = vrot.slane %v1715, 1
    %v1730 = vsel %vm946, %v1728, %v1729
    %v1731 = vrot.slane %v1716, 1
    %v1732 = vsel %vm946, %v1729, %v1731
    %1733 = vrot.lane.b32.xlu0 %v1725, 126
    %v1734 = vpop.permute.xlu0 %1733
    %1735 = vrot.lane.b32.xlu0 %v1727, 126
    %v1736 = vpop.permute.xlu0 %1735
    %1737 = vrot.lane.b32.xlu0 %v1730, 126
    %v1738 = vpop.permute.xlu0 %1737
    %1739 = vrot.lane.b32.xlu0 %v1732, 126
    %v1740 = vpop.permute.xlu0 %1739
    %v1745 = vadd.f32 %v1425, %v1734
    %v1746 = vadd.f32 %v1426, %v1736
    %v1747 = vadd.f32 %v1427, %v1738
    %v1748 = vadd.f32 %v1428, %v1740
    %s1749 = sld [smem:[#allocation2 + $0x9d]]
    %v1750 = vstv %s1749
    %v1751 = vmul.f32 %v1750, %v46
    %v1752 = vmul.f32 %v1750, %v47
    %v1753 = vmul.f32 %v1750, %v48
    %v1754 = vmul.f32 %v1750, %v49
    %v1755 = vmul.f32 %v1750, %v50
    %v1756 = vmul.f32 %v1750, %v51
    %v1763 = vrot.slane %v1751, 1
    %v1764 = vrot.slane %v1752, 1
    %v1765 = vsel %vm946, %v1763, %v1764
    %v1766 = vrot.slane %v1753, 1
    %v1767 = vsel %vm946, %v1764, %v1766
    %v1768 = vrot.slane %v1754, 1
    %v1769 = vrot.slane %v1755, 1
    %v1770 = vsel %vm946, %v1768, %v1769
    %v1771 = vrot.slane %v1756, 1
    %v1772 = vsel %vm946, %v1769, %v1771
    %1773 = vrot.lane.b32.xlu0 %v1765, 126
    %v1774 = vpop.permute.xlu0 %1773
    %1775 = vrot.lane.b32.xlu0 %v1767, 126
    %v1776 = vpop.permute.xlu0 %1775
    %1777 = vrot.lane.b32.xlu0 %v1770, 126
    %v1778 = vpop.permute.xlu0 %1777
    %1779 = vrot.lane.b32.xlu0 %v1772, 126
    %v1780 = vpop.permute.xlu0 %1779
    %v1785 = vadd.f32 %v1465, %v1774
    %v1786 = vadd.f32 %v1466, %v1776
    %v1787 = vadd.f32 %v1467, %v1778
    %v1788 = vadd.f32 %v1468, %v1780
    %s1789 = sld [smem:[#allocation2 + $0xb6]]
    %v1790 = vstv %s1789
    %v1791 = vmul.f32 %v1790, %v46
    %v1792 = vmul.f32 %v1790, %v47
    %v1793 = vmul.f32 %v1790, %v48
    %v1794 = vmul.f32 %v1790, %v49
    %v1795 = vmul.f32 %v1790, %v50
    %v1796 = vmul.f32 %v1790, %v51
    %v1803 = vrot.slane %v1791, 1
    %v1804 = vrot.slane %v1792, 1
    %v1805 = vsel %vm946, %v1803, %v1804
    %v1806 = vrot.slane %v1793, 1
    %v1807 = vsel %vm946, %v1804, %v1806
    %v1808 = vrot.slane %v1794, 1
    %v1809 = vrot.slane %v1795, 1
    %v1810 = vsel %vm946, %v1808, %v1809
    %v1811 = vrot.slane %v1796, 1
    %v1812 = vsel %vm946, %v1809, %v1811
    %1813 = vrot.lane.b32.xlu0 %v1805, 126
    %v1814 = vpop.permute.xlu0 %1813
    %1815 = vrot.lane.b32.xlu0 %v1807, 126
    %v1816 = vpop.permute.xlu0 %1815
    %1817 = vrot.lane.b32.xlu0 %v1810, 126
    %v1818 = vpop.permute.xlu0 %1817
    %1819 = vrot.lane.b32.xlu0 %v1812, 126
    %v1820 = vpop.permute.xlu0 %1819
    %v1825 = vadd.f32 %v1505, %v1814
    %v1826 = vadd.f32 %v1506, %v1816
    %v1827 = vadd.f32 %v1507, %v1818
    %v1828 = vadd.f32 %v1508, %v1820
    %s1829 = sld [smem:[#allocation2 + $0x8]]
    %v1830 = vstv %s1829
    %v1831 = vmul.f32 %v1830, %v46
    %v1832 = vmul.f32 %v1830, %v47
    %v1833 = vmul.f32 %v1830, %v48
    %v1834 = vmul.f32 %v1830, %v49
    %v1835 = vmul.f32 %v1830, %v50
    %v1836 = vmul.f32 %v1830, %v51
    %v1843 = vrot.slane %v1831, 1
    %v1844 = vrot.slane %v1832, 1
    %v1845 = vsel %vm946, %v1843, %v1844
    %v1846 = vrot.slane %v1833, 1
    %v1847 = vsel %vm946, %v1844, %v1846
    %v1848 = vrot.slane %v1834, 1
    %v1849 = vrot.slane %v1835, 1
    %v1850 = vsel %vm946, %v1848, %v1849
    %v1851 = vrot.slane %v1836, 1
    %v1852 = vsel %vm946, %v1849, %v1851
    %1853 = vrot.lane.b32.xlu0 %v1845, 125
    %v1854 = vpop.permute.xlu0 %1853
    %1855 = vrot.lane.b32.xlu0 %v1847, 125
    %v1856 = vpop.permute.xlu0 %1855
    %1857 = vrot.lane.b32.xlu0 %v1850, 125
    %v1858 = vpop.permute.xlu0 %1857
    %1859 = vrot.lane.b32.xlu0 %v1852, 125
    %v1860 = vpop.permute.xlu0 %1859
    %v1865 = vadd.f32 %v1545, %v1854
    %v1866 = vadd.f32 %v1546, %v1856
    %v1867 = vadd.f32 %v1547, %v1858
    %v1868 = vadd.f32 %v1548, %v1860
    %s1869 = sld [smem:[#allocation2 + $0x21]]
    %v1870 = vstv %s1869
    %v1871 = vmul.f32 %v1870, %v46
    %v1872 = vmul.f32 %v1870, %v47
    %v1873 = vmul.f32 %v1870, %v48
    %v1874 = vmul.f32 %v1870, %v49
    %v1875 = vmul.f32 %v1870, %v50
    %v1876 = vmul.f32 %v1870, %v51
    %v1883 = vrot.slane %v1871, 1
    %v1884 = vrot.slane %v1872, 1
    %v1885 = vsel %vm946, %v1883, %v1884
    %v1886 = vrot.slane %v1873, 1
    %v1887 = vsel %vm946, %v1884, %v1886
    %v1888 = vrot.slane %v1874, 1
    %v1889 = vrot.slane %v1875, 1
    %v1890 = vsel %vm946, %v1888, %v1889
    %v1891 = vrot.slane %v1876, 1
    %v1892 = vsel %vm946, %v1889, %v1891
    %1893 = vrot.lane.b32.xlu0 %v1885, 125
    %v1894 = vpop.permute.xlu0 %1893
    %1895 = vrot.lane.b32.xlu0 %v1887, 125
    %v1896 = vpop.permute.xlu0 %1895
    %1897 = vrot.lane.b32.xlu0 %v1890, 125
    %v1898 = vpop.permute.xlu0 %1897
    %1899 = vrot.lane.b32.xlu0 %v1892, 125
    %v1900 = vpop.permute.xlu0 %1899
    %v1905 = vadd.f32 %v1585, %v1894
    %v1906 = vadd.f32 %v1586, %v1896
    %v1907 = vadd.f32 %v1587, %v1898
    %v1908 = vadd.f32 %v1588, %v1900
    %s1909 = sld [smem:[#allocation2 + $0x3a]]
    %v1910 = vstv %s1909
    %v1911 = vmul.f32 %v1910, %v46
    %v1912 = vmul.f32 %v1910, %v47
    %v1913 = vmul.f32 %v1910, %v48
    %v1914 = vmul.f32 %v1910, %v49
    %v1915 = vmul.f32 %v1910, %v50
    %v1916 = vmul.f32 %v1910, %v51
    %v1923 = vrot.slane %v1911, 1
    %v1924 = vrot.slane %v1912, 1
    %v1925 = vsel %vm946, %v1923, %v1924
    %v1926 = vrot.slane %v1913, 1
    %v1927 = vsel %vm946, %v1924, %v1926
    %v1928 = vrot.slane %v1914, 1
    %v1929 = vrot.slane %v1915, 1
    %v1930 = vsel %vm946, %v1928, %v1929
    %v1931 = vrot.slane %v1916, 1
    %v1932 = vsel %vm946, %v1929, %v1931
    %1933 = vrot.lane.b32.xlu0 %v1925, 125
    %v1934 = vpop.permute.xlu0 %1933
    %1935 = vrot.lane.b32.xlu0 %v1927, 125
    %v1936 = vpop.permute.xlu0 %1935
    %1937 = vrot.lane.b32.xlu0 %v1930, 125
    %v1938 = vpop.permute.xlu0 %1937
    %1939 = vrot.lane.b32.xlu0 %v1932, 125
    %v1940 = vpop.permute.xlu0 %1939
    %v1945 = vadd.f32 %v1625, %v1934
    %v1946 = vadd.f32 %v1626, %v1936
    %v1947 = vadd.f32 %v1627, %v1938
    %v1948 = vadd.f32 %v1628, %v1940
    %s1949 = sld [smem:[#allocation2 + $0x53]]
    %v1950 = vstv %s1949
    %v1951 = vmul.f32 %v1950, %v46
    %v1952 = vmul.f32 %v1950, %v47
    %v1953 = vmul.f32 %v1950, %v48
    %v1954 = vmul.f32 %v1950, %v49
    %v1955 = vmul.f32 %v1950, %v50
    %v1956 = vmul.f32 %v1950, %v51
    %v1963 = vrot.slane %v1951, 1
    %v1964 = vrot.slane %v1952, 1
    %v1965 = vsel %vm946, %v1963, %v1964
    %v1966 = vrot.slane %v1953, 1
    %v1967 = vsel %vm946, %v1964, %v1966
    %v1968 = vrot.slane %v1954, 1
    %v1969 = vrot.slane %v1955, 1
    %v1970 = vsel %vm946, %v1968, %v1969
    %v1971 = vrot.slane %v1956, 1
    %v1972 = vsel %vm946, %v1969, %v1971
    %1973 = vrot.lane.b32.xlu0 %v1965, 125
    %v1974 = vpop.permute.xlu0 %1973
    %1975 = vrot.lane.b32.xlu0 %v1967, 125
    %v1976 = vpop.permute.xlu0 %1975
    %1977 = vrot.lane.b32.xlu0 %v1970, 125
    %v1978 = vpop.permute.xlu0 %1977
    %1979 = vrot.lane.b32.xlu0 %v1972, 125
    %v1980 = vpop.permute.xlu0 %1979
    %v1985 = vadd.f32 %v1665, %v1974
    %v1986 = vadd.f32 %v1666, %v1976
    %v1987 = vadd.f32 %v1667, %v1978
    %v1988 = vadd.f32 %v1668, %v1980
    %s1989 = sld [smem:[#allocation2 + $0x6c]]
    %v1990 = vstv %s1989
    %v1991 = vmul.f32 %v1990, %v46
    %v1992 = vmul.f32 %v1990, %v47
    %v1993 = vmul.f32 %v1990, %v48
    %v1994 = vmul.f32 %v1990, %v49
    %v1995 = vmul.f32 %v1990, %v50
    %v1996 = vmul.f32 %v1990, %v51
    %v2003 = vrot.slane %v1991, 1
    %v2004 = vrot.slane %v1992, 1
    %v2005 = vsel %vm946, %v2003, %v2004
    %v2006 = vrot.slane %v1993, 1
    %v2007 = vsel %vm946, %v2004, %v2006
    %v2008 = vrot.slane %v1994, 1
    %v2009 = vrot.slane %v1995, 1
    %v2010 = vsel %vm946, %v2008, %v2009
    %v2011 = vrot.slane %v1996, 1
    %v2012 = vsel %vm946, %v2009, %v2011
    %2013 = vrot.lane.b32.xlu0 %v2005, 125
    %v2014 = vpop.permute.xlu0 %2013
    %2015 = vrot.lane.b32.xlu0 %v2007, 125
    %v2016 = vpop.permute.xlu0 %2015
    %2017 = vrot.lane.b32.xlu0 %v2010, 125
    %v2018 = vpop.permute.xlu0 %2017
    %2019 = vrot.lane.b32.xlu0 %v2012, 125
    %v2020 = vpop.permute.xlu0 %2019
    %v2025 = vadd.f32 %v1705, %v2014
    %v2026 = vadd.f32 %v1706, %v2016
    %v2027 = vadd.f32 %v1707, %v2018
    %v2028 = vadd.f32 %v1708, %v2020
    %s2029 = sld [smem:[#allocation2 + $0x85]]
    %v2030 = vstv %s2029
    %v2031 = vmul.f32 %v2030, %v46
    %v2032 = vmul.f32 %v2030, %v47
    %v2033 = vmul.f32 %v2030, %v48
    %v2034 = vmul.f32 %v2030, %v49
    %v2035 = vmul.f32 %v2030, %v50
    %v2036 = vmul.f32 %v2030, %v51
    %v2043 = vrot.slane %v2031, 1
    %v2044 = vrot.slane %v2032, 1
    %v2045 = vsel %vm946, %v2043, %v2044
    %v2046 = vrot.slane %v2033, 1
    %v2047 = vsel %vm946, %v2044, %v2046
    %v2048 = vrot.slane %v2034, 1
    %v2049 = vrot.slane %v2035, 1
    %v2050 = vsel %vm946, %v2048, %v2049
    %v2051 = vrot.slane %v2036, 1
    %v2052 = vsel %vm946, %v2049, %v2051
    %2053 = vrot.lane.b32.xlu0 %v2045, 125
    %v2054 = vpop.permute.xlu0 %2053
    %2055 = vrot.lane.b32.xlu0 %v2047, 125
    %v2056 = vpop.permute.xlu0 %2055
    %2057 = vrot.lane.b32.xlu0 %v2050, 125
    %v2058 = vpop.permute.xlu0 %2057
    %2059 = vrot.lane.b32.xlu0 %v2052, 125
    %v2060 = vpop.permute.xlu0 %2059
    %v2065 = vadd.f32 %v1745, %v2054
    %v2066 = vadd.f32 %v1746, %v2056
    %v2067 = vadd.f32 %v1747, %v2058
    %v2068 = vadd.f32 %v1748, %v2060
    %s2069 = sld [smem:[#allocation2 + $0x9e]]
    %v2070 = vstv %s2069
    %v2071 = vmul.f32 %v2070, %v46
    %v2072 = vmul.f32 %v2070, %v47
    %v2073 = vmul.f32 %v2070, %v48
    %v2074 = vmul.f32 %v2070, %v49
    %v2075 = vmul.f32 %v2070, %v50
    %v2076 = vmul.f32 %v2070, %v51
    %v2083 = vrot.slane %v2071, 1
    %v2084 = vrot.slane %v2072, 1
    %v2085 = vsel %vm946, %v2083, %v2084
    %v2086 = vrot.slane %v2073, 1
    %v2087 = vsel %vm946, %v2084, %v2086
    %v2088 = vrot.slane %v2074, 1
    %v2089 = vrot.slane %v2075, 1
    %v2090 = vsel %vm946, %v2088, %v2089
    %v2091 = vrot.slane %v2076, 1
    %v2092 = vsel %vm946, %v2089, %v2091
    %2093 = vrot.lane.b32.xlu0 %v2085, 125
    %v2094 = vpop.permute.xlu0 %2093
    %2095 = vrot.lane.b32.xlu0 %v2087, 125
    %v2096 = vpop.permute.xlu0 %2095
    %2097 = vrot.lane.b32.xlu0 %v2090, 125
    %v2098 = vpop.permute.xlu0 %2097
    %2099 = vrot.lane.b32.xlu0 %v2092, 125
    %v2100 = vpop.permute.xlu0 %2099
    %v2105 = vadd.f32 %v1785, %v2094
    %v2106 = vadd.f32 %v1786, %v2096
    %v2107 = vadd.f32 %v1787, %v2098
    %v2108 = vadd.f32 %v1788, %v2100
    %s2109 = sld [smem:[#allocation2 + $0xb7]]
    %v2110 = vstv %s2109
    %v2111 = vmul.f32 %v2110, %v46
    %v2112 = vmul.f32 %v2110, %v47
    %v2113 = vmul.f32 %v2110, %v48
    %v2114 = vmul.f32 %v2110, %v49
    %v2115 = vmul.f32 %v2110, %v50
    %v2116 = vmul.f32 %v2110, %v51
    %v2123 = vrot.slane %v2111, 1
    %v2124 = vrot.slane %v2112, 1
    %v2125 = vsel %vm946, %v2123, %v2124
    %v2126 = vrot.slane %v2113, 1
    %v2127 = vsel %vm946, %v2124, %v2126
    %v2128 = vrot.slane %v2114, 1
    %v2129 = vrot.slane %v2115, 1
    %v2130 = vsel %vm946, %v2128, %v2129
    %v2131 = vrot.slane %v2116, 1
    %v2132 = vsel %vm946, %v2129, %v2131
    %2133 = vrot.lane.b32.xlu0 %v2125, 125
    %v2134 = vpop.permute.xlu0 %2133
    %2135 = vrot.lane.b32.xlu0 %v2127, 125
    %v2136 = vpop.permute.xlu0 %2135
    %2137 = vrot.lane.b32.xlu0 %v2130, 125
    %v2138 = vpop.permute.xlu0 %2137
    %2139 = vrot.lane.b32.xlu0 %v2132, 125
    %v2140 = vpop.permute.xlu0 %2139
    %v2145 = vadd.f32 %v1825, %v2134
    %v2146 = vadd.f32 %v1826, %v2136
    %v2147 = vadd.f32 %v1827, %v2138
    %v2148 = vadd.f32 %v1828, %v2140
    %s2149 = sld [smem:[#allocation2 + $0x9]]
    %v2150 = vstv %s2149
    %v2151 = vmul.f32 %v2150, %v46
    %v2152 = vmul.f32 %v2150, %v47
    %v2153 = vmul.f32 %v2150, %v48
    %v2154 = vmul.f32 %v2150, %v49
    %v2155 = vmul.f32 %v2150, %v50
    %v2156 = vmul.f32 %v2150, %v51
    %v2163 = vrot.slane %v2151, 1
    %v2164 = vrot.slane %v2152, 1
    %v2165 = vsel %vm946, %v2163, %v2164
    %v2166 = vrot.slane %v2153, 1
    %v2167 = vsel %vm946, %v2164, %v2166
    %v2168 = vrot.slane %v2154, 1
    %v2169 = vrot.slane %v2155, 1
    %v2170 = vsel %vm946, %v2168, %v2169
    %v2171 = vrot.slane %v2156, 1
    %v2172 = vsel %vm946, %v2169, %v2171
    %2173 = vrot.lane.b32.xlu0 %v2165, 124
    %v2174 = vpop.permute.xlu0 %2173
    %2175 = vrot.lane.b32.xlu0 %v2167, 124
    %v2176 = vpop.permute.xlu0 %2175
    %2177 = vrot.lane.b32.xlu0 %v2170, 124
    %v2178 = vpop.permute.xlu0 %2177
    %2179 = vrot.lane.b32.xlu0 %v2172, 124
    %v2180 = vpop.permute.xlu0 %2179
    %v2185 = vadd.f32 %v1865, %v2174
    %v2186 = vadd.f32 %v1866, %v2176
    %v2187 = vadd.f32 %v1867, %v2178
    %v2188 = vadd.f32 %v1868, %v2180
    %s2189 = sld [smem:[#allocation2 + $0x22]]
    %v2190 = vstv %s2189
    %v2191 = vmul.f32 %v2190, %v46
    %v2192 = vmul.f32 %v2190, %v47
    %v2193 = vmul.f32 %v2190, %v48
    %v2194 = vmul.f32 %v2190, %v49
    %v2195 = vmul.f32 %v2190, %v50
    %v2196 = vmul.f32 %v2190, %v51
    %v2203 = vrot.slane %v2191, 1
    %v2204 = vrot.slane %v2192, 1
    %v2205 = vsel %vm946, %v2203, %v2204
    %v2206 = vrot.slane %v2193, 1
    %v2207 = vsel %vm946, %v2204, %v2206
    %v2208 = vrot.slane %v2194, 1
    %v2209 = vrot.slane %v2195, 1
    %v2210 = vsel %vm946, %v2208, %v2209
    %v2211 = vrot.slane %v2196, 1
    %v2212 = vsel %vm946, %v2209, %v2211
    %2213 = vrot.lane.b32.xlu0 %v2205, 124
    %v2214 = vpop.permute.xlu0 %2213
    %2215 = vrot.lane.b32.xlu0 %v2207, 124
    %v2216 = vpop.permute.xlu0 %2215
    %2217 = vrot.lane.b32.xlu0 %v2210, 124
    %v2218 = vpop.permute.xlu0 %2217
    %2219 = vrot.lane.b32.xlu0 %v2212, 124
    %v2220 = vpop.permute.xlu0 %2219
    %v2225 = vadd.f32 %v1905, %v2214
    %v2226 = vadd.f32 %v1906, %v2216
    %v2227 = vadd.f32 %v1907, %v2218
    %v2228 = vadd.f32 %v1908, %v2220
    %s2229 = sld [smem:[#allocation2 + $0x3b]]
    %v2230 = vstv %s2229
    %v2231 = vmul.f32 %v2230, %v46
    %v2232 = vmul.f32 %v2230, %v47
    %v2233 = vmul.f32 %v2230, %v48
    %v2234 = vmul.f32 %v2230, %v49
    %v2235 = vmul.f32 %v2230, %v50
    %v2236 = vmul.f32 %v2230, %v51
    %v2243 = vrot.slane %v2231, 1
    %v2244 = vrot.slane %v2232, 1
    %v2245 = vsel %vm946, %v2243, %v2244
    %v2246 = vrot.slane %v2233, 1
    %v2247 = vsel %vm946, %v2244, %v2246
    %v2248 = vrot.slane %v2234, 1
    %v2249 = vrot.slane %v2235, 1
    %v2250 = vsel %vm946, %v2248, %v2249
    %v2251 = vrot.slane %v2236, 1
    %v2252 = vsel %vm946, %v2249, %v2251
    %2253 = vrot.lane.b32.xlu0 %v2245, 124
    %v2254 = vpop.permute.xlu0 %2253
    %2255 = vrot.lane.b32.xlu0 %v2247, 124
    %v2256 = vpop.permute.xlu0 %2255
    %2257 = vrot.lane.b32.xlu0 %v2250, 124
    %v2258 = vpop.permute.xlu0 %2257
    %2259 = vrot.lane.b32.xlu0 %v2252, 124
    %v2260 = vpop.permute.xlu0 %2259
    %v2265 = vadd.f32 %v1945, %v2254
    %v2266 = vadd.f32 %v1946, %v2256
    %v2267 = vadd.f32 %v1947, %v2258
    %v2268 = vadd.f32 %v1948, %v2260
    %s2269 = sld [smem:[#allocation2 + $0x54]]
    %v2270 = vstv %s2269
    %v2271 = vmul.f32 %v2270, %v46
    %v2272 = vmul.f32 %v2270, %v47
    %v2273 = vmul.f32 %v2270, %v48
    %v2274 = vmul.f32 %v2270, %v49
    %v2275 = vmul.f32 %v2270, %v50
    %v2276 = vmul.f32 %v2270, %v51
    %v2283 = vrot.slane %v2271, 1
    %v2284 = vrot.slane %v2272, 1
    %v2285 = vsel %vm946, %v2283, %v2284
    %v2286 = vrot.slane %v2273, 1
    %v2287 = vsel %vm946, %v2284, %v2286
    %v2288 = vrot.slane %v2274, 1
    %v2289 = vrot.slane %v2275, 1
    %v2290 = vsel %vm946, %v2288, %v2289
    %v2291 = vrot.slane %v2276, 1
    %v2292 = vsel %vm946, %v2289, %v2291
    %2293 = vrot.lane.b32.xlu0 %v2285, 124
    %v2294 = vpop.permute.xlu0 %2293
    %2295 = vrot.lane.b32.xlu0 %v2287, 124
    %v2296 = vpop.permute.xlu0 %2295
    %2297 = vrot.lane.b32.xlu0 %v2290, 124
    %v2298 = vpop.permute.xlu0 %2297
    %2299 = vrot.lane.b32.xlu0 %v2292, 124
    %v2300 = vpop.permute.xlu0 %2299
    %v2305 = vadd.f32 %v1985, %v2294
    %v2306 = vadd.f32 %v1986, %v2296
    %v2307 = vadd.f32 %v1987, %v2298
    %v2308 = vadd.f32 %v1988, %v2300
    %s2309 = sld [smem:[#allocation2 + $0x6d]]
    %v2310 = vstv %s2309
    %v2311 = vmul.f32 %v2310, %v46
    %v2312 = vmul.f32 %v2310, %v47
    %v2313 = vmul.f32 %v2310, %v48
    %v2314 = vmul.f32 %v2310, %v49
    %v2315 = vmul.f32 %v2310, %v50
    %v2316 = vmul.f32 %v2310, %v51
    %v2323 = vrot.slane %v2311, 1
    %v2324 = vrot.slane %v2312, 1
    %v2325 = vsel %vm946, %v2323, %v2324
    %v2326 = vrot.slane %v2313, 1
    %v2327 = vsel %vm946, %v2324, %v2326
    %v2328 = vrot.slane %v2314, 1
    %v2329 = vrot.slane %v2315, 1
    %v2330 = vsel %vm946, %v2328, %v2329
    %v2331 = vrot.slane %v2316, 1
    %v2332 = vsel %vm946, %v2329, %v2331
    %2333 = vrot.lane.b32.xlu0 %v2325, 124
    %v2334 = vpop.permute.xlu0 %2333
    %2335 = vrot.lane.b32.xlu0 %v2327, 124
    %v2336 = vpop.permute.xlu0 %2335
    %2337 = vrot.lane.b32.xlu0 %v2330, 124
    %v2338 = vpop.permute.xlu0 %2337
    %2339 = vrot.lane.b32.xlu0 %v2332, 124
    %v2340 = vpop.permute.xlu0 %2339
    %v2345 = vadd.f32 %v2025, %v2334
    %v2346 = vadd.f32 %v2026, %v2336
    %v2347 = vadd.f32 %v2027, %v2338
    %v2348 = vadd.f32 %v2028, %v2340
    %s2349 = sld [smem:[#allocation2 + $0x86]]
    %v2350 = vstv %s2349
    %v2351 = vmul.f32 %v2350, %v46
    %v2352 = vmul.f32 %v2350, %v47
    %v2353 = vmul.f32 %v2350, %v48
    %v2354 = vmul.f32 %v2350, %v49
    %v2355 = vmul.f32 %v2350, %v50
    %v2356 = vmul.f32 %v2350, %v51
    %v2363 = vrot.slane %v2351, 1
    %v2364 = vrot.slane %v2352, 1
    %v2365 = vsel %vm946, %v2363, %v2364
    %v2366 = vrot.slane %v2353, 1
    %v2367 = vsel %vm946, %v2364, %v2366
    %v2368 = vrot.slane %v2354, 1
    %v2369 = vrot.slane %v2355, 1
    %v2370 = vsel %vm946, %v2368, %v2369
    %v2371 = vrot.slane %v2356, 1
    %v2372 = vsel %vm946, %v2369, %v2371
    %2373 = vrot.lane.b32.xlu0 %v2365, 124
    %v2374 = vpop.permute.xlu0 %2373
    %2375 = vrot.lane.b32.xlu0 %v2367, 124
    %v2376 = vpop.permute.xlu0 %2375
    %2377 = vrot.lane.b32.xlu0 %v2370, 124
    %v2378 = vpop.permute.xlu0 %2377
    %2379 = vrot.lane.b32.xlu0 %v2372, 124
    %v2380 = vpop.permute.xlu0 %2379
    %v2385 = vadd.f32 %v2065, %v2374
    %v2386 = vadd.f32 %v2066, %v2376
    %v2387 = vadd.f32 %v2067, %v2378
    %v2388 = vadd.f32 %v2068, %v2380
    %s2389 = sld [smem:[#allocation2 + $0x9f]]
    %v2390 = vstv %s2389
    %v2391 = vmul.f32 %v2390, %v46
    %v2392 = vmul.f32 %v2390, %v47
    %v2393 = vmul.f32 %v2390, %v48
    %v2394 = vmul.f32 %v2390, %v49
    %v2395 = vmul.f32 %v2390, %v50
    %v2396 = vmul.f32 %v2390, %v51
    %v2403 = vrot.slane %v2391, 1
    %v2404 = vrot.slane %v2392, 1
    %v2405 = vsel %vm946, %v2403, %v2404
    %v2406 = vrot.slane %v2393, 1
    %v2407 = vsel %vm946, %v2404, %v2406
    %v2408 = vrot.slane %v2394, 1
    %v2409 = vrot.slane %v2395, 1
    %v2410 = vsel %vm946, %v2408, %v2409
    %v2411 = vrot.slane %v2396, 1
    %v2412 = vsel %vm946, %v2409, %v2411
    %2413 = vrot.lane.b32.xlu0 %v2405, 124
    %v2414 = vpop.permute.xlu0 %2413
    %2415 = vrot.lane.b32.xlu0 %v2407, 124
    %v2416 = vpop.permute.xlu0 %2415
    %2417 = vrot.lane.b32.xlu0 %v2410, 124
    %v2418 = vpop.permute.xlu0 %2417
    %2419 = vrot.lane.b32.xlu0 %v2412, 124
    %v2420 = vpop.permute.xlu0 %2419
    %v2425 = vadd.f32 %v2105, %v2414
    %v2426 = vadd.f32 %v2106, %v2416
    %v2427 = vadd.f32 %v2107, %v2418
    %v2428 = vadd.f32 %v2108, %v2420
    %s2429 = sld [smem:[#allocation2 + $0xb8]]
    %v2430 = vstv %s2429
    %v2431 = vmul.f32 %v2430, %v46
    %v2432 = vmul.f32 %v2430, %v47
    %v2433 = vmul.f32 %v2430, %v48
    %v2434 = vmul.f32 %v2430, %v49
    %v2435 = vmul.f32 %v2430, %v50
    %v2436 = vmul.f32 %v2430, %v51
    %v2443 = vrot.slane %v2431, 1
    %v2444 = vrot.slane %v2432, 1
    %v2445 = vsel %vm946, %v2443, %v2444
    %v2446 = vrot.slane %v2433, 1
    %v2447 = vsel %vm946, %v2444, %v2446
    %v2448 = vrot.slane %v2434, 1
    %v2449 = vrot.slane %v2435, 1
    %v2450 = vsel %vm946, %v2448, %v2449
    %v2451 = vrot.slane %v2436, 1
    %v2452 = vsel %vm946, %v2449, %v2451
    %2453 = vrot.lane.b32.xlu0 %v2445, 124
    %v2454 = vpop.permute.xlu0 %2453
    %2455 = vrot.lane.b32.xlu0 %v2447, 124
    %v2456 = vpop.permute.xlu0 %2455
    %2457 = vrot.lane.b32.xlu0 %v2450, 124
    %v2458 = vpop.permute.xlu0 %2457
    %2459 = vrot.lane.b32.xlu0 %v2452, 124
    %v2460 = vpop.permute.xlu0 %2459
    %v2465 = vadd.f32 %v2145, %v2454
    %v2466 = vadd.f32 %v2146, %v2456
    %v2467 = vadd.f32 %v2147, %v2458
    %v2468 = vadd.f32 %v2148, %v2460
    %s2469 = sld [smem:[#allocation2 + $0xa]]
    %v2470 = vstv %s2469
    %v2471 = vmul.f32 %v2470, %v46
    %v2472 = vmul.f32 %v2470, %v47
    %v2473 = vmul.f32 %v2470, %v48
    %v2474 = vmul.f32 %v2470, %v49
    %v2475 = vmul.f32 %v2470, %v50
    %v2476 = vmul.f32 %v2470, %v51
    %vm2483 = vcmask 1045504
    %v2484 = vrot.slane %v2471, 2
    %v2485 = vrot.slane %v2472, 2
    %v2486 = vsel %vm2483, %v2484, %v2485
    %v2487 = vrot.slane %v2473, 2
    %v2488 = vsel %vm2483, %v2485, %v2487
    %v2489 = vrot.slane %v2474, 2
    %v2490 = vrot.slane %v2475, 2
    %v2491 = vsel %vm2483, %v2489, %v2490
    %v2492 = vrot.slane %v2476, 2
    %v2493 = vsel %vm2483, %v2490, %v2492
    %v2498 = vadd.f32 %v2185, %v2486
    %v2499 = vadd.f32 %v2186, %v2488
    %v2500 = vadd.f32 %v2187, %v2491
    %v2501 = vadd.f32 %v2188, %v2493
    %s2502 = sld [smem:[#allocation2 + $0x23]]
    %v2503 = vstv %s2502
    %v2504 = vmul.f32 %v2503, %v46
    %v2505 = vmul.f32 %v2503, %v47
    %v2506 = vmul.f32 %v2503, %v48
    %v2507 = vmul.f32 %v2503, %v49
    %v2508 = vmul.f32 %v2503, %v50
    %v2509 = vmul.f32 %v2503, %v51
    %v2516 = vrot.slane %v2504, 2
    %v2517 = vrot.slane %v2505, 2
    %v2518 = vsel %vm2483, %v2516, %v2517
    %v2519 = vrot.slane %v2506, 2
    %v2520 = vsel %vm2483, %v2517, %v2519
    %v2521 = vrot.slane %v2507, 2
    %v2522 = vrot.slane %v2508, 2
    %v2523 = vsel %vm2483, %v2521, %v2522
    %v2524 = vrot.slane %v2509, 2
    %v2525 = vsel %vm2483, %v2522, %v2524
    %v2530 = vadd.f32 %v2225, %v2518
    %v2531 = vadd.f32 %v2226, %v2520
    %v2532 = vadd.f32 %v2227, %v2523
    %v2533 = vadd.f32 %v2228, %v2525
    %s2534 = sld [smem:[#allocation2 + $0x3c]]
    %v2535 = vstv %s2534
    %v2536 = vmul.f32 %v2535, %v46
    %v2537 = vmul.f32 %v2535, %v47
    %v2538 = vmul.f32 %v2535, %v48
    %v2539 = vmul.f32 %v2535, %v49
    %v2540 = vmul.f32 %v2535, %v50
    %v2541 = vmul.f32 %v2535, %v51
    %v2548 = vrot.slane %v2536, 2
    %v2549 = vrot.slane %v2537, 2
    %v2550 = vsel %vm2483, %v2548, %v2549
    %v2551 = vrot.slane %v2538, 2
    %v2552 = vsel %vm2483, %v2549, %v2551
    %v2553 = vrot.slane %v2539, 2
    %v2554 = vrot.slane %v2540, 2
    %v2555 = vsel %vm2483, %v2553, %v2554
    %v2556 = vrot.slane %v2541, 2
    %v2557 = vsel %vm2483, %v2554, %v2556
    %v2562 = vadd.f32 %v2265, %v2550
    %v2563 = vadd.f32 %v2266, %v2552
    %v2564 = vadd.f32 %v2267, %v2555
    %v2565 = vadd.f32 %v2268, %v2557
    %s2566 = sld [smem:[#allocation2 + $0x55]]
    %v2567 = vstv %s2566
    %v2568 = vmul.f32 %v2567, %v46
    %v2569 = vmul.f32 %v2567, %v47
    %v2570 = vmul.f32 %v2567, %v48
    %v2571 = vmul.f32 %v2567, %v49
    %v2572 = vmul.f32 %v2567, %v50
    %v2573 = vmul.f32 %v2567, %v51
    %v2580 = vrot.slane %v2568, 2
    %v2581 = vrot.slane %v2569, 2
    %v2582 = vsel %vm2483, %v2580, %v2581
    %v2583 = vrot.slane %v2570, 2
    %v2584 = vsel %vm2483, %v2581, %v2583
    %v2585 = vrot.slane %v2571, 2
    %v2586 = vrot.slane %v2572, 2
    %v2587 = vsel %vm2483, %v2585, %v2586
    %v2588 = vrot.slane %v2573, 2
    %v2589 = vsel %vm2483, %v2586, %v2588
    %v2594 = vadd.f32 %v2305, %v2582
    %v2595 = vadd.f32 %v2306, %v2584
    %v2596 = vadd.f32 %v2307, %v2587
    %v2597 = vadd.f32 %v2308, %v2589
    %s2598 = sld [smem:[#allocation2 + $0x6e]]
    %v2599 = vstv %s2598
    %v2600 = vmul.f32 %v2599, %v46
    %v2601 = vmul.f32 %v2599, %v47
    %v2602 = vmul.f32 %v2599, %v48
    %v2603 = vmul.f32 %v2599, %v49
    %v2604 = vmul.f32 %v2599, %v50
    %v2605 = vmul.f32 %v2599, %v51
    %v2612 = vrot.slane %v2600, 2
    %v2613 = vrot.slane %v2601, 2
    %v2614 = vsel %vm2483, %v2612, %v2613
    %v2615 = vrot.slane %v2602, 2
    %v2616 = vsel %vm2483, %v2613, %v2615
    %v2617 = vrot.slane %v2603, 2
    %v2618 = vrot.slane %v2604, 2
    %v2619 = vsel %vm2483, %v2617, %v2618
    %v2620 = vrot.slane %v2605, 2
    %v2621 = vsel %vm2483, %v2618, %v2620
    %v2626 = vadd.f32 %v2345, %v2614
    %v2627 = vadd.f32 %v2346, %v2616
    %v2628 = vadd.f32 %v2347, %v2619
    %v2629 = vadd.f32 %v2348, %v2621
    %s2630 = sld [smem:[#allocation2 + $0x87]]
    %v2631 = vstv %s2630
    %v2632 = vmul.f32 %v2631, %v46
    %v2633 = vmul.f32 %v2631, %v47
    %v2634 = vmul.f32 %v2631, %v48
    %v2635 = vmul.f32 %v2631, %v49
    %v2636 = vmul.f32 %v2631, %v50
    %v2637 = vmul.f32 %v2631, %v51
    %v2644 = vrot.slane %v2632, 2
    %v2645 = vrot.slane %v2633, 2
    %v2646 = vsel %vm2483, %v2644, %v2645
    %v2647 = vrot.slane %v2634, 2
    %v2648 = vsel %vm2483, %v2645, %v2647
    %v2649 = vrot.slane %v2635, 2
    %v2650 = vrot.slane %v2636, 2
    %v2651 = vsel %vm2483, %v2649, %v2650
    %v2652 = vrot.slane %v2637, 2
    %v2653 = vsel %vm2483, %v2650, %v2652
    %v2658 = vadd.f32 %v2385, %v2646
    %v2659 = vadd.f32 %v2386, %v2648
    %v2660 = vadd.f32 %v2387, %v2651
    %v2661 = vadd.f32 %v2388, %v2653
    %s2662 = sld [smem:[#allocation2 + $0xa0]]
    %v2663 = vstv %s2662
    %v2664 = vmul.f32 %v2663, %v46
    %v2665 = vmul.f32 %v2663, %v47
    %v2666 = vmul.f32 %v2663, %v48
    %v2667 = vmul.f32 %v2663, %v49
    %v2668 = vmul.f32 %v2663, %v50
    %v2669 = vmul.f32 %v2663, %v51
    %v2676 = vrot.slane %v2664, 2
    %v2677 = vrot.slane %v2665, 2
    %v2678 = vsel %vm2483, %v2676, %v2677
    %v2679 = vrot.slane %v2666, 2
    %v2680 = vsel %vm2483, %v2677, %v2679
    %v2681 = vrot.slane %v2667, 2
    %v2682 = vrot.slane %v2668, 2
    %v2683 = vsel %vm2483, %v2681, %v2682
    %v2684 = vrot.slane %v2669, 2
    %v2685 = vsel %vm2483, %v2682, %v2684
    %v2690 = vadd.f32 %v2425, %v2678
    %v2691 = vadd.f32 %v2426, %v2680
    %v2692 = vadd.f32 %v2427, %v2683
    %v2693 = vadd.f32 %v2428, %v2685
    %s2694 = sld [smem:[#allocation2 + $0xb9]]
    %v2695 = vstv %s2694
    %v2696 = vmul.f32 %v2695, %v46
    %v2697 = vmul.f32 %v2695, %v47
    %v2698 = vmul.f32 %v2695, %v48
    %v2699 = vmul.f32 %v2695, %v49
    %v2700 = vmul.f32 %v2695, %v50
    %v2701 = vmul.f32 %v2695, %v51
    %v2708 = vrot.slane %v2696, 2
    %v2709 = vrot.slane %v2697, 2
    %v2710 = vsel %vm2483, %v2708, %v2709
    %v2711 = vrot.slane %v2698, 2
    %v2712 = vsel %vm2483, %v2709, %v2711
    %v2713 = vrot.slane %v2699, 2
    %v2714 = vrot.slane %v2700, 2
    %v2715 = vsel %vm2483, %v2713, %v2714
    %v2716 = vrot.slane %v2701, 2
    %v2717 = vsel %vm2483, %v2714, %v2716
    %v2722 = vadd.f32 %v2465, %v2710
    %v2723 = vadd.f32 %v2466, %v2712
    %v2724 = vadd.f32 %v2467, %v2715
    %v2725 = vadd.f32 %v2468, %v2717
    %s2726 = sld [smem:[#allocation2 + $0xb]]
    %v2727 = vstv %s2726
    %v2728 = vmul.f32 %v2727, %v46
    %v2729 = vmul.f32 %v2727, %v47
    %v2730 = vmul.f32 %v2727, %v48
    %v2731 = vmul.f32 %v2727, %v49
    %v2732 = vmul.f32 %v2727, %v50
    %v2733 = vmul.f32 %v2727, %v51
    %v2740 = vrot.slane %v2728, 2
    %v2741 = vrot.slane %v2729, 2
    %v2742 = vsel %vm2483, %v2740, %v2741
    %v2743 = vrot.slane %v2730, 2
    %v2744 = vsel %vm2483, %v2741, %v2743
    %v2745 = vrot.slane %v2731, 2
    %v2746 = vrot.slane %v2732, 2
    %v2747 = vsel %vm2483, %v2745, %v2746
    %v2748 = vrot.slane %v2733, 2
    %v2749 = vsel %vm2483, %v2746, %v2748
    %2750 = vrot.lane.b32.xlu0 %v2742, 127
    %v2751 = vpop.permute.xlu0 %2750
    %2752 = vrot.lane.b32.xlu0 %v2744, 127
    %v2753 = vpop.permute.xlu0 %2752
    %2754 = vrot.lane.b32.xlu0 %v2747, 127
    %v2755 = vpop.permute.xlu0 %2754
    %2756 = vrot.lane.b32.xlu0 %v2749, 127
    %v2757 = vpop.permute.xlu0 %2756
    %v2762 = vadd.f32 %v2498, %v2751
    %v2763 = vadd.f32 %v2499, %v2753
    %v2764 = vadd.f32 %v2500, %v2755
    %v2765 = vadd.f32 %v2501, %v2757
    %s2766 = sld [smem:[#allocation2 + $0x24]]
    %v2767 = vstv %s2766
    %v2768 = vmul.f32 %v2767, %v46
    %v2769 = vmul.f32 %v2767, %v47
    %v2770 = vmul.f32 %v2767, %v48
    %v2771 = vmul.f32 %v2767, %v49
    %v2772 = vmul.f32 %v2767, %v50
    %v2773 = vmul.f32 %v2767, %v51
    %v2780 = vrot.slane %v2768, 2
    %v2781 = vrot.slane %v2769, 2
    %v2782 = vsel %vm2483, %v2780, %v2781
    %v2783 = vrot.slane %v2770, 2
    %v2784 = vsel %vm2483, %v2781, %v2783
    %v2785 = vrot.slane %v2771, 2
    %v2786 = vrot.slane %v2772, 2
    %v2787 = vsel %vm2483, %v2785, %v2786
    %v2788 = vrot.slane %v2773, 2
    %v2789 = vsel %vm2483, %v2786, %v2788
    %2790 = vrot.lane.b32.xlu0 %v2782, 127
    %v2791 = vpop.permute.xlu0 %2790
    %2792 = vrot.lane.b32.xlu0 %v2784, 127
    %v2793 = vpop.permute.xlu0 %2792
    %2794 = vrot.lane.b32.xlu0 %v2787, 127
    %v2795 = vpop.permute.xlu0 %2794
    %2796 = vrot.lane.b32.xlu0 %v2789, 127
    %v2797 = vpop.permute.xlu0 %2796
    %v2802 = vadd.f32 %v2530, %v2791
    %v2803 = vadd.f32 %v2531, %v2793
    %v2804 = vadd.f32 %v2532, %v2795
    %v2805 = vadd.f32 %v2533, %v2797
    %s2806 = sld [smem:[#allocation2 + $0x3d]]
    %v2807 = vstv %s2806
    %v2808 = vmul.f32 %v2807, %v46
    %v2809 = vmul.f32 %v2807, %v47
    %v2810 = vmul.f32 %v2807, %v48
    %v2811 = vmul.f32 %v2807, %v49
    %v2812 = vmul.f32 %v2807, %v50
    %v2813 = vmul.f32 %v2807, %v51
    %v2820 = vrot.slane %v2808, 2
    %v2821 = vrot.slane %v2809, 2
    %v2822 = vsel %vm2483, %v2820, %v2821
    %v2823 = vrot.slane %v2810, 2
    %v2824 = vsel %vm2483, %v2821, %v2823
    %v2825 = vrot.slane %v2811, 2
    %v2826 = vrot.slane %v2812, 2
    %v2827 = vsel %vm2483, %v2825, %v2826
    %v2828 = vrot.slane %v2813, 2
    %v2829 = vsel %vm2483, %v2826, %v2828
    %2830 = vrot.lane.b32.xlu0 %v2822, 127
    %v2831 = vpop.permute.xlu0 %2830
    %2832 = vrot.lane.b32.xlu0 %v2824, 127
    %v2833 = vpop.permute.xlu0 %2832
    %2834 = vrot.lane.b32.xlu0 %v2827, 127
    %v2835 = vpop.permute.xlu0 %2834
    %2836 = vrot.lane.b32.xlu0 %v2829, 127
    %v2837 = vpop.permute.xlu0 %2836
    %v2842 = vadd.f32 %v2562, %v2831
    %v2843 = vadd.f32 %v2563, %v2833
    %v2844 = vadd.f32 %v2564, %v2835
    %v2845 = vadd.f32 %v2565, %v2837
    %s2846 = sld [smem:[#allocation2 + $0x56]]
    %v2847 = vstv %s2846
    %v2848 = vmul.f32 %v2847, %v46
    %v2849 = vmul.f32 %v2847, %v47
    %v2850 = vmul.f32 %v2847, %v48
    %v2851 = vmul.f32 %v2847, %v49
    %v2852 = vmul.f32 %v2847, %v50
    %v2853 = vmul.f32 %v2847, %v51
    %v2860 = vrot.slane %v2848, 2
    %v2861 = vrot.slane %v2849, 2
    %v2862 = vsel %vm2483, %v2860, %v2861
    %v2863 = vrot.slane %v2850, 2
    %v2864 = vsel %vm2483, %v2861, %v2863
    %v2865 = vrot.slane %v2851, 2
    %v2866 = vrot.slane %v2852, 2
    %v2867 = vsel %vm2483, %v2865, %v2866
    %v2868 = vrot.slane %v2853, 2
    %v2869 = vsel %vm2483, %v2866, %v2868
    %2870 = vrot.lane.b32.xlu0 %v2862, 127
    %v2871 = vpop.permute.xlu0 %2870
    %2872 = vrot.lane.b32.xlu0 %v2864, 127
    %v2873 = vpop.permute.xlu0 %2872
    %2874 = vrot.lane.b32.xlu0 %v2867, 127
    %v2875 = vpop.permute.xlu0 %2874
    %2876 = vrot.lane.b32.xlu0 %v2869, 127
    %v2877 = vpop.permute.xlu0 %2876
    %v2882 = vadd.f32 %v2594, %v2871
    %v2883 = vadd.f32 %v2595, %v2873
    %v2884 = vadd.f32 %v2596, %v2875
    %v2885 = vadd.f32 %v2597, %v2877
    %s2886 = sld [smem:[#allocation2 + $0x6f]]
    %v2887 = vstv %s2886
    %v2888 = vmul.f32 %v2887, %v46
    %v2889 = vmul.f32 %v2887, %v47
    %v2890 = vmul.f32 %v2887, %v48
    %v2891 = vmul.f32 %v2887, %v49
    %v2892 = vmul.f32 %v2887, %v50
    %v2893 = vmul.f32 %v2887, %v51
    %v2900 = vrot.slane %v2888, 2
    %v2901 = vrot.slane %v2889, 2
    %v2902 = vsel %vm2483, %v2900, %v2901
    %v2903 = vrot.slane %v2890, 2
    %v2904 = vsel %vm2483, %v2901, %v2903
    %v2905 = vrot.slane %v2891, 2
    %v2906 = vrot.slane %v2892, 2
    %v2907 = vsel %vm2483, %v2905, %v2906
    %v2908 = vrot.slane %v2893, 2
    %v2909 = vsel %vm2483, %v2906, %v2908
    %2910 = vrot.lane.b32.xlu0 %v2902, 127
    %v2911 = vpop.permute.xlu0 %2910
    %2912 = vrot.lane.b32.xlu0 %v2904, 127
    %v2913 = vpop.permute.xlu0 %2912
    %2914 = vrot.lane.b32.xlu0 %v2907, 127
    %v2915 = vpop.permute.xlu0 %2914
    %2916 = vrot.lane.b32.xlu0 %v2909, 127
    %v2917 = vpop.permute.xlu0 %2916
    %v2922 = vadd.f32 %v2626, %v2911
    %v2923 = vadd.f32 %v2627, %v2913
    %v2924 = vadd.f32 %v2628, %v2915
    %v2925 = vadd.f32 %v2629, %v2917
    %s2926 = sld [smem:[#allocation2 + $0x88]]
    %v2927 = vstv %s2926
    %v2928 = vmul.f32 %v2927, %v46
    %v2929 = vmul.f32 %v2927, %v47
    %v2930 = vmul.f32 %v2927, %v48
    %v2931 = vmul.f32 %v2927, %v49
    %v2932 = vmul.f32 %v2927, %v50
    %v2933 = vmul.f32 %v2927, %v51
    %v2940 = vrot.slane %v2928, 2
    %v2941 = vrot.slane %v2929, 2
    %v2942 = vsel %vm2483, %v2940, %v2941
    %v2943 = vrot.slane %v2930, 2
    %v2944 = vsel %vm2483, %v2941, %v2943
    %v2945 = vrot.slane %v2931, 2
    %v2946 = vrot.slane %v2932, 2
    %v2947 = vsel %vm2483, %v2945, %v2946
    %v2948 = vrot.slane %v2933, 2
    %v2949 = vsel %vm2483, %v2946, %v2948
    %2950 = vrot.lane.b32.xlu0 %v2942, 127
    %v2951 = vpop.permute.xlu0 %2950
    %2952 = vrot.lane.b32.xlu0 %v2944, 127
    %v2953 = vpop.permute.xlu0 %2952
    %2954 = vrot.lane.b32.xlu0 %v2947, 127
    %v2955 = vpop.permute.xlu0 %2954
    %2956 = vrot.lane.b32.xlu0 %v2949, 127
    %v2957 = vpop.permute.xlu0 %2956
    %v2962 = vadd.f32 %v2658, %v2951
    %v2963 = vadd.f32 %v2659, %v2953
    %v2964 = vadd.f32 %v2660, %v2955
    %v2965 = vadd.f32 %v2661, %v2957
    %s2966 = sld [smem:[#allocation2 + $0xa1]]
    %v2967 = vstv %s2966
    %v2968 = vmul.f32 %v2967, %v46
    %v2969 = vmul.f32 %v2967, %v47
    %v2970 = vmul.f32 %v2967, %v48
    %v2971 = vmul.f32 %v2967, %v49
    %v2972 = vmul.f32 %v2967, %v50
    %v2973 = vmul.f32 %v2967, %v51
    %v2980 = vrot.slane %v2968, 2
    %v2981 = vrot.slane %v2969, 2
    %v2982 = vsel %vm2483, %v2980, %v2981
    %v2983 = vrot.slane %v2970, 2
    %v2984 = vsel %vm2483, %v2981, %v2983
    %v2985 = vrot.slane %v2971, 2
    %v2986 = vrot.slane %v2972, 2
    %v2987 = vsel %vm2483, %v2985, %v2986
    %v2988 = vrot.slane %v2973, 2
    %v2989 = vsel %vm2483, %v2986, %v2988
    %2990 = vrot.lane.b32.xlu0 %v2982, 127
    %v2991 = vpop.permute.xlu0 %2990
    %2992 = vrot.lane.b32.xlu0 %v2984, 127
    %v2993 = vpop.permute.xlu0 %2992
    %2994 = vrot.lane.b32.xlu0 %v2987, 127
    %v2995 = vpop.permute.xlu0 %2994
    %2996 = vrot.lane.b32.xlu0 %v2989, 127
    %v2997 = vpop.permute.xlu0 %2996
    %v3002 = vadd.f32 %v2690, %v2991
    %v3003 = vadd.f32 %v2691, %v2993
    %v3004 = vadd.f32 %v2692, %v2995
    %v3005 = vadd.f32 %v2693, %v2997
    %s3006 = sld [smem:[#allocation2 + $0xba]]
    %v3007 = vstv %s3006
    %v3008 = vmul.f32 %v3007, %v46
    %v3009 = vmul.f32 %v3007, %v47
    %v3010 = vmul.f32 %v3007, %v48
    %v3011 = vmul.f32 %v3007, %v49
    %v3012 = vmul.f32 %v3007, %v50
    %v3013 = vmul.f32 %v3007, %v51
    %v3020 = vrot.slane %v3008, 2
    %v3021 = vrot.slane %v3009, 2
    %v3022 = vsel %vm2483, %v3020, %v3021
    %v3023 = vrot.slane %v3010, 2
    %v3024 = vsel %vm2483, %v3021, %v3023
    %v3025 = vrot.slane %v3011, 2
    %v3026 = vrot.slane %v3012, 2
    %v3027 = vsel %vm2483, %v3025, %v3026
    %v3028 = vrot.slane %v3013, 2
    %v3029 = vsel %vm2483, %v3026, %v3028
    %3030 = vrot.lane.b32.xlu0 %v3022, 127
    %v3031 = vpop.permute.xlu0 %3030
    %3032 = vrot.lane.b32.xlu0 %v3024, 127
    %v3033 = vpop.permute.xlu0 %3032
    %3034 = vrot.lane.b32.xlu0 %v3027, 127
    %v3035 = vpop.permute.xlu0 %3034
    %3036 = vrot.lane.b32.xlu0 %v3029, 127
    %v3037 = vpop.permute.xlu0 %3036
    %v3042 = vadd.f32 %v2722, %v3031
    %v3043 = vadd.f32 %v2723, %v3033
    %v3044 = vadd.f32 %v2724, %v3035
    %v3045 = vadd.f32 %v2725, %v3037
    %s3046 = sld [smem:[#allocation2 + $0xc]]
    %v3047 = vstv %s3046
    %v3048 = vmul.f32 %v3047, %v46
    %v3049 = vmul.f32 %v3047, %v47
    %v3050 = vmul.f32 %v3047, %v48
    %v3051 = vmul.f32 %v3047, %v49
    %v3052 = vmul.f32 %v3047, %v50
    %v3053 = vmul.f32 %v3047, %v51
    %v3060 = vrot.slane %v3048, 2
    %v3061 = vrot.slane %v3049, 2
    %v3062 = vsel %vm2483, %v3060, %v3061
    %v3063 = vrot.slane %v3050, 2
    %v3064 = vsel %vm2483, %v3061, %v3063
    %v3065 = vrot.slane %v3051, 2
    %v3066 = vrot.slane %v3052, 2
    %v3067 = vsel %vm2483, %v3065, %v3066
    %v3068 = vrot.slane %v3053, 2
    %v3069 = vsel %vm2483, %v3066, %v3068
    %3070 = vrot.lane.b32.xlu0 %v3062, 126
    %v3071 = vpop.permute.xlu0 %3070
    %3072 = vrot.lane.b32.xlu0 %v3064, 126
    %v3073 = vpop.permute.xlu0 %3072
    %3074 = vrot.lane.b32.xlu0 %v3067, 126
    %v3075 = vpop.permute.xlu0 %3074
    %3076 = vrot.lane.b32.xlu0 %v3069, 126
    %v3077 = vpop.permute.xlu0 %3076
    %v3082 = vadd.f32 %v2762, %v3071
    %v3083 = vadd.f32 %v2763, %v3073
    %v3084 = vadd.f32 %v2764, %v3075
    %v3085 = vadd.f32 %v2765, %v3077
    %s3086 = sld [smem:[#allocation2 + $0x25]]
    %v3087 = vstv %s3086
    %v3088 = vmul.f32 %v3087, %v46
    %v3089 = vmul.f32 %v3087, %v47
    %v3090 = vmul.f32 %v3087, %v48
    %v3091 = vmul.f32 %v3087, %v49
    %v3092 = vmul.f32 %v3087, %v50
    %v3093 = vmul.f32 %v3087, %v51
    %v3100 = vrot.slane %v3088, 2
    %v3101 = vrot.slane %v3089, 2
    %v3102 = vsel %vm2483, %v3100, %v3101
    %v3103 = vrot.slane %v3090, 2
    %v3104 = vsel %vm2483, %v3101, %v3103
    %v3105 = vrot.slane %v3091, 2
    %v3106 = vrot.slane %v3092, 2
    %v3107 = vsel %vm2483, %v3105, %v3106
    %v3108 = vrot.slane %v3093, 2
    %v3109 = vsel %vm2483, %v3106, %v3108
    %3110 = vrot.lane.b32.xlu0 %v3102, 126
    %v3111 = vpop.permute.xlu0 %3110
    %3112 = vrot.lane.b32.xlu0 %v3104, 126
    %v3113 = vpop.permute.xlu0 %3112
    %3114 = vrot.lane.b32.xlu0 %v3107, 126
    %v3115 = vpop.permute.xlu0 %3114
    %3116 = vrot.lane.b32.xlu0 %v3109, 126
    %v3117 = vpop.permute.xlu0 %3116
    %v3122 = vadd.f32 %v2802, %v3111
    %v3123 = vadd.f32 %v2803, %v3113
    %v3124 = vadd.f32 %v2804, %v3115
    %v3125 = vadd.f32 %v2805, %v3117
    %s3126 = sld [smem:[#allocation2 + $0x3e]]
    %v3127 = vstv %s3126
    %v3128 = vmul.f32 %v3127, %v46
    %v3129 = vmul.f32 %v3127, %v47
    %v3130 = vmul.f32 %v3127, %v48
    %v3131 = vmul.f32 %v3127, %v49
    %v3132 = vmul.f32 %v3127, %v50
    %v3133 = vmul.f32 %v3127, %v51
    %v3140 = vrot.slane %v3128, 2
    %v3141 = vrot.slane %v3129, 2
    %v3142 = vsel %vm2483, %v3140, %v3141
    %v3143 = vrot.slane %v3130, 2
    %v3144 = vsel %vm2483, %v3141, %v3143
    %v3145 = vrot.slane %v3131, 2
    %v3146 = vrot.slane %v3132, 2
    %v3147 = vsel %vm2483, %v3145, %v3146
    %v3148 = vrot.slane %v3133, 2
    %v3149 = vsel %vm2483, %v3146, %v3148
    %3150 = vrot.lane.b32.xlu0 %v3142, 126
    %v3151 = vpop.permute.xlu0 %3150
    %3152 = vrot.lane.b32.xlu0 %v3144, 126
    %v3153 = vpop.permute.xlu0 %3152
    %3154 = vrot.lane.b32.xlu0 %v3147, 126
    %v3155 = vpop.permute.xlu0 %3154
    %3156 = vrot.lane.b32.xlu0 %v3149, 126
    %v3157 = vpop.permute.xlu0 %3156
    %v3162 = vadd.f32 %v2842, %v3151
    %v3163 = vadd.f32 %v2843, %v3153
    %v3164 = vadd.f32 %v2844, %v3155
    %v3165 = vadd.f32 %v2845, %v3157
    %s3166 = sld [smem:[#allocation2 + $0x57]]
    %v3167 = vstv %s3166
    %v3168 = vmul.f32 %v3167, %v46
    %v3169 = vmul.f32 %v3167, %v47
    %v3170 = vmul.f32 %v3167, %v48
    %v3171 = vmul.f32 %v3167, %v49
    %v3172 = vmul.f32 %v3167, %v50
    %v3173 = vmul.f32 %v3167, %v51
    %v3180 = vrot.slane %v3168, 2
    %v3181 = vrot.slane %v3169, 2
    %v3182 = vsel %vm2483, %v3180, %v3181
    %v3183 = vrot.slane %v3170, 2
    %v3184 = vsel %vm2483, %v3181, %v3183
    %v3185 = vrot.slane %v3171, 2
    %v3186 = vrot.slane %v3172, 2
    %v3187 = vsel %vm2483, %v3185, %v3186
    %v3188 = vrot.slane %v3173, 2
    %v3189 = vsel %vm2483, %v3186, %v3188
    %3190 = vrot.lane.b32.xlu0 %v3182, 126
    %v3191 = vpop.permute.xlu0 %3190
    %3192 = vrot.lane.b32.xlu0 %v3184, 126
    %v3193 = vpop.permute.xlu0 %3192
    %3194 = vrot.lane.b32.xlu0 %v3187, 126
    %v3195 = vpop.permute.xlu0 %3194
    %3196 = vrot.lane.b32.xlu0 %v3189, 126
    %v3197 = vpop.permute.xlu0 %3196
    %v3202 = vadd.f32 %v2882, %v3191
    %v3203 = vadd.f32 %v2883, %v3193
    %v3204 = vadd.f32 %v2884, %v3195
    %v3205 = vadd.f32 %v2885, %v3197
    %s3206 = sld [smem:[#allocation2 + $0x70]]
    %v3207 = vstv %s3206
    %v3208 = vmul.f32 %v3207, %v46
    %v3209 = vmul.f32 %v3207, %v47
    %v3210 = vmul.f32 %v3207, %v48
    %v3211 = vmul.f32 %v3207, %v49
    %v3212 = vmul.f32 %v3207, %v50
    %v3213 = vmul.f32 %v3207, %v51
    %v3220 = vrot.slane %v3208, 2
    %v3221 = vrot.slane %v3209, 2
    %v3222 = vsel %vm2483, %v3220, %v3221
    %v3223 = vrot.slane %v3210, 2
    %v3224 = vsel %vm2483, %v3221, %v3223
    %v3225 = vrot.slane %v3211, 2
    %v3226 = vrot.slane %v3212, 2
    %v3227 = vsel %vm2483, %v3225, %v3226
    %v3228 = vrot.slane %v3213, 2
    %v3229 = vsel %vm2483, %v3226, %v3228
    %3230 = vrot.lane.b32.xlu0 %v3222, 126
    %v3231 = vpop.permute.xlu0 %3230
    %3232 = vrot.lane.b32.xlu0 %v3224, 126
    %v3233 = vpop.permute.xlu0 %3232
    %3234 = vrot.lane.b32.xlu0 %v3227, 126
    %v3235 = vpop.permute.xlu0 %3234
    %3236 = vrot.lane.b32.xlu0 %v3229, 126
    %v3237 = vpop.permute.xlu0 %3236
    %v3242 = vadd.f32 %v2922, %v3231
    %v3243 = vadd.f32 %v2923, %v3233
    %v3244 = vadd.f32 %v2924, %v3235
    %v3245 = vadd.f32 %v2925, %v3237
    %s3246 = sld [smem:[#allocation2 + $0x89]]
    %v3247 = vstv %s3246
    %v3248 = vmul.f32 %v3247, %v46
    %v3249 = vmul.f32 %v3247, %v47
    %v3250 = vmul.f32 %v3247, %v48
    %v3251 = vmul.f32 %v3247, %v49
    %v3252 = vmul.f32 %v3247, %v50
    %v3253 = vmul.f32 %v3247, %v51
    %v3260 = vrot.slane %v3248, 2
    %v3261 = vrot.slane %v3249, 2
    %v3262 = vsel %vm2483, %v3260, %v3261
    %v3263 = vrot.slane %v3250, 2
    %v3264 = vsel %vm2483, %v3261, %v3263
    %v3265 = vrot.slane %v3251, 2
    %v3266 = vrot.slane %v3252, 2
    %v3267 = vsel %vm2483, %v3265, %v3266
    %v3268 = vrot.slane %v3253, 2
    %v3269 = vsel %vm2483, %v3266, %v3268
    %3270 = vrot.lane.b32.xlu0 %v3262, 126
    %v3271 = vpop.permute.xlu0 %3270
    %3272 = vrot.lane.b32.xlu0 %v3264, 126
    %v3273 = vpop.permute.xlu0 %3272
    %3274 = vrot.lane.b32.xlu0 %v3267, 126
    %v3275 = vpop.permute.xlu0 %3274
    %3276 = vrot.lane.b32.xlu0 %v3269, 126
    %v3277 = vpop.permute.xlu0 %3276
    %v3282 = vadd.f32 %v2962, %v3271
    %v3283 = vadd.f32 %v2963, %v3273
    %v3284 = vadd.f32 %v2964, %v3275
    %v3285 = vadd.f32 %v2965, %v3277
    %s3286 = sld [smem:[#allocation2 + $0xa2]]
    %v3287 = vstv %s3286
    %v3288 = vmul.f32 %v3287, %v46
    %v3289 = vmul.f32 %v3287, %v47
    %v3290 = vmul.f32 %v3287, %v48
    %v3291 = vmul.f32 %v3287, %v49
    %v3292 = vmul.f32 %v3287, %v50
    %v3293 = vmul.f32 %v3287, %v51
    %v3300 = vrot.slane %v3288, 2
    %v3301 = vrot.slane %v3289, 2
    %v3302 = vsel %vm2483, %v3300, %v3301
    %v3303 = vrot.slane %v3290, 2
    %v3304 = vsel %vm2483, %v3301, %v3303
    %v3305 = vrot.slane %v3291, 2
    %v3306 = vrot.slane %v3292, 2
    %v3307 = vsel %vm2483, %v3305, %v3306
    %v3308 = vrot.slane %v3293, 2
    %v3309 = vsel %vm2483, %v3306, %v3308
    %3310 = vrot.lane.b32.xlu0 %v3302, 126
    %v3311 = vpop.permute.xlu0 %3310
    %3312 = vrot.lane.b32.xlu0 %v3304, 126
    %v3313 = vpop.permute.xlu0 %3312
    %3314 = vrot.lane.b32.xlu0 %v3307, 126
    %v3315 = vpop.permute.xlu0 %3314
    %3316 = vrot.lane.b32.xlu0 %v3309, 126
    %v3317 = vpop.permute.xlu0 %3316
    %v3322 = vadd.f32 %v3002, %v3311
    %v3323 = vadd.f32 %v3003, %v3313
    %v3324 = vadd.f32 %v3004, %v3315
    %v3325 = vadd.f32 %v3005, %v3317
    %s3326 = sld [smem:[#allocation2 + $0xbb]]
    %v3327 = vstv %s3326
    %v3328 = vmul.f32 %v3327, %v46
    %v3329 = vmul.f32 %v3327, %v47
    %v3330 = vmul.f32 %v3327, %v48
    %v3331 = vmul.f32 %v3327, %v49
    %v3332 = vmul.f32 %v3327, %v50
    %v3333 = vmul.f32 %v3327, %v51
    %v3340 = vrot.slane %v3328, 2
    %v3341 = vrot.slane %v3329, 2
    %v3342 = vsel %vm2483, %v3340, %v3341
    %v3343 = vrot.slane %v3330, 2
    %v3344 = vsel %vm2483, %v3341, %v3343
    %v3345 = vrot.slane %v3331, 2
    %v3346 = vrot.slane %v3332, 2
    %v3347 = vsel %vm2483, %v3345, %v3346
    %v3348 = vrot.slane %v3333, 2
    %v3349 = vsel %vm2483, %v3346, %v3348
    %3350 = vrot.lane.b32.xlu0 %v3342, 126
    %v3351 = vpop.permute.xlu0 %3350
    %3352 = vrot.lane.b32.xlu0 %v3344, 126
    %v3353 = vpop.permute.xlu0 %3352
    %3354 = vrot.lane.b32.xlu0 %v3347, 126
    %v3355 = vpop.permute.xlu0 %3354
    %3356 = vrot.lane.b32.xlu0 %v3349, 126
    %v3357 = vpop.permute.xlu0 %3356
    %v3362 = vadd.f32 %v3042, %v3351
    %v3363 = vadd.f32 %v3043, %v3353
    %v3364 = vadd.f32 %v3044, %v3355
    %v3365 = vadd.f32 %v3045, %v3357
    %s3366 = sld [smem:[#allocation2 + $0xd]]
    %v3367 = vstv %s3366
    %v3368 = vmul.f32 %v3367, %v46
    %v3369 = vmul.f32 %v3367, %v47
    %v3370 = vmul.f32 %v3367, %v48
    %v3371 = vmul.f32 %v3367, %v49
    %v3372 = vmul.f32 %v3367, %v50
    %v3373 = vmul.f32 %v3367, %v51
    %v3380 = vrot.slane %v3368, 2
    %v3381 = vrot.slane %v3369, 2
    %v3382 = vsel %vm2483, %v3380, %v3381
    %v3383 = vrot.slane %v3370, 2
    %v3384 = vsel %vm2483, %v3381, %v3383
    %v3385 = vrot.slane %v3371, 2
    %v3386 = vrot.slane %v3372, 2
    %v3387 = vsel %vm2483, %v3385, %v3386
    %v3388 = vrot.slane %v3373, 2
    %v3389 = vsel %vm2483, %v3386, %v3388
    %3390 = vrot.lane.b32.xlu0 %v3382, 125
    %v3391 = vpop.permute.xlu0 %3390
    %3392 = vrot.lane.b32.xlu0 %v3384, 125
    %v3393 = vpop.permute.xlu0 %3392
    %3394 = vrot.lane.b32.xlu0 %v3387, 125
    %v3395 = vpop.permute.xlu0 %3394
    %3396 = vrot.lane.b32.xlu0 %v3389, 125
    %v3397 = vpop.permute.xlu0 %3396
    %v3402 = vadd.f32 %v3082, %v3391
    %v3403 = vadd.f32 %v3083, %v3393
    %v3404 = vadd.f32 %v3084, %v3395
    %v3405 = vadd.f32 %v3085, %v3397
    %s3406 = sld [smem:[#allocation2 + $0x26]]
    %v3407 = vstv %s3406
    %v3408 = vmul.f32 %v3407, %v46
    %v3409 = vmul.f32 %v3407, %v47
    %v3410 = vmul.f32 %v3407, %v48
    %v3411 = vmul.f32 %v3407, %v49
    %v3412 = vmul.f32 %v3407, %v50
    %v3413 = vmul.f32 %v3407, %v51
    %v3420 = vrot.slane %v3408, 2
    %v3421 = vrot.slane %v3409, 2
    %v3422 = vsel %vm2483, %v3420, %v3421
    %v3423 = vrot.slane %v3410, 2
    %v3424 = vsel %vm2483, %v3421, %v3423
    %v3425 = vrot.slane %v3411, 2
    %v3426 = vrot.slane %v3412, 2
    %v3427 = vsel %vm2483, %v3425, %v3426
    %v3428 = vrot.slane %v3413, 2
    %v3429 = vsel %vm2483, %v3426, %v3428
    %3430 = vrot.lane.b32.xlu0 %v3422, 125
    %v3431 = vpop.permute.xlu0 %3430
    %3432 = vrot.lane.b32.xlu0 %v3424, 125
    %v3433 = vpop.permute.xlu0 %3432
    %3434 = vrot.lane.b32.xlu0 %v3427, 125
    %v3435 = vpop.permute.xlu0 %3434
    %3436 = vrot.lane.b32.xlu0 %v3429, 125
    %v3437 = vpop.permute.xlu0 %3436
    %v3442 = vadd.f32 %v3122, %v3431
    %v3443 = vadd.f32 %v3123, %v3433
    %v3444 = vadd.f32 %v3124, %v3435
    %v3445 = vadd.f32 %v3125, %v3437
    %s3446 = sld [smem:[#allocation2 + $0x3f]]
    %v3447 = vstv %s3446
    %v3448 = vmul.f32 %v3447, %v46
    %v3449 = vmul.f32 %v3447, %v47
    %v3450 = vmul.f32 %v3447, %v48
    %v3451 = vmul.f32 %v3447, %v49
    %v3452 = vmul.f32 %v3447, %v50
    %v3453 = vmul.f32 %v3447, %v51
    %v3460 = vrot.slane %v3448, 2
    %v3461 = vrot.slane %v3449, 2
    %v3462 = vsel %vm2483, %v3460, %v3461
    %v3463 = vrot.slane %v3450, 2
    %v3464 = vsel %vm2483, %v3461, %v3463
    %v3465 = vrot.slane %v3451, 2
    %v3466 = vrot.slane %v3452, 2
    %v3467 = vsel %vm2483, %v3465, %v3466
    %v3468 = vrot.slane %v3453, 2
    %v3469 = vsel %vm2483, %v3466, %v3468
    %3470 = vrot.lane.b32.xlu0 %v3462, 125
    %v3471 = vpop.permute.xlu0 %3470
    %3472 = vrot.lane.b32.xlu0 %v3464, 125
    %v3473 = vpop.permute.xlu0 %3472
    %3474 = vrot.lane.b32.xlu0 %v3467, 125
    %v3475 = vpop.permute.xlu0 %3474
    %3476 = vrot.lane.b32.xlu0 %v3469, 125
    %v3477 = vpop.permute.xlu0 %3476
    %v3482 = vadd.f32 %v3162, %v3471
    %v3483 = vadd.f32 %v3163, %v3473
    %v3484 = vadd.f32 %v3164, %v3475
    %v3485 = vadd.f32 %v3165, %v3477
    %s3486 = sld [smem:[#allocation2 + $0x58]]
    %v3487 = vstv %s3486
    %v3488 = vmul.f32 %v3487, %v46
    %v3489 = vmul.f32 %v3487, %v47
    %v3490 = vmul.f32 %v3487, %v48
    %v3491 = vmul.f32 %v3487, %v49
    %v3492 = vmul.f32 %v3487, %v50
    %v3493 = vmul.f32 %v3487, %v51
    %v3500 = vrot.slane %v3488, 2
    %v3501 = vrot.slane %v3489, 2
    %v3502 = vsel %vm2483, %v3500, %v3501
    %v3503 = vrot.slane %v3490, 2
    %v3504 = vsel %vm2483, %v3501, %v3503
    %v3505 = vrot.slane %v3491, 2
    %v3506 = vrot.slane %v3492, 2
    %v3507 = vsel %vm2483, %v3505, %v3506
    %v3508 = vrot.slane %v3493, 2
    %v3509 = vsel %vm2483, %v3506, %v3508
    %3510 = vrot.lane.b32.xlu0 %v3502, 125
    %v3511 = vpop.permute.xlu0 %3510
    %3512 = vrot.lane.b32.xlu0 %v3504, 125
    %v3513 = vpop.permute.xlu0 %3512
    %3514 = vrot.lane.b32.xlu0 %v3507, 125
    %v3515 = vpop.permute.xlu0 %3514
    %3516 = vrot.lane.b32.xlu0 %v3509, 125
    %v3517 = vpop.permute.xlu0 %3516
    %v3522 = vadd.f32 %v3202, %v3511
    %v3523 = vadd.f32 %v3203, %v3513
    %v3524 = vadd.f32 %v3204, %v3515
    %v3525 = vadd.f32 %v3205, %v3517
    %s3526 = sld [smem:[#allocation2 + $0x71]]
    %v3527 = vstv %s3526
    %v3528 = vmul.f32 %v3527, %v46
    %v3529 = vmul.f32 %v3527, %v47
    %v3530 = vmul.f32 %v3527, %v48
    %v3531 = vmul.f32 %v3527, %v49
    %v3532 = vmul.f32 %v3527, %v50
    %v3533 = vmul.f32 %v3527, %v51
    %v3540 = vrot.slane %v3528, 2
    %v3541 = vrot.slane %v3529, 2
    %v3542 = vsel %vm2483, %v3540, %v3541
    %v3543 = vrot.slane %v3530, 2
    %v3544 = vsel %vm2483, %v3541, %v3543
    %v3545 = vrot.slane %v3531, 2
    %v3546 = vrot.slane %v3532, 2
    %v3547 = vsel %vm2483, %v3545, %v3546
    %v3548 = vrot.slane %v3533, 2
    %v3549 = vsel %vm2483, %v3546, %v3548
    %3550 = vrot.lane.b32.xlu0 %v3542, 125
    %v3551 = vpop.permute.xlu0 %3550
    %3552 = vrot.lane.b32.xlu0 %v3544, 125
    %v3553 = vpop.permute.xlu0 %3552
    %3554 = vrot.lane.b32.xlu0 %v3547, 125
    %v3555 = vpop.permute.xlu0 %3554
    %3556 = vrot.lane.b32.xlu0 %v3549, 125
    %v3557 = vpop.permute.xlu0 %3556
    %v3562 = vadd.f32 %v3242, %v3551
    %v3563 = vadd.f32 %v3243, %v3553
    %v3564 = vadd.f32 %v3244, %v3555
    %v3565 = vadd.f32 %v3245, %v3557
    %s3566 = sld [smem:[#allocation2 + $0x8a]]
    %v3567 = vstv %s3566
    %v3568 = vmul.f32 %v3567, %v46
    %v3569 = vmul.f32 %v3567, %v47
    %v3570 = vmul.f32 %v3567, %v48
    %v3571 = vmul.f32 %v3567, %v49
    %v3572 = vmul.f32 %v3567, %v50
    %v3573 = vmul.f32 %v3567, %v51
    %v3580 = vrot.slane %v3568, 2
    %v3581 = vrot.slane %v3569, 2
    %v3582 = vsel %vm2483, %v3580, %v3581
    %v3583 = vrot.slane %v3570, 2
    %v3584 = vsel %vm2483, %v3581, %v3583
    %v3585 = vrot.slane %v3571, 2
    %v3586 = vrot.slane %v3572, 2
    %v3587 = vsel %vm2483, %v3585, %v3586
    %v3588 = vrot.slane %v3573, 2
    %v3589 = vsel %vm2483, %v3586, %v3588
    %3590 = vrot.lane.b32.xlu0 %v3582, 125
    %v3591 = vpop.permute.xlu0 %3590
    %3592 = vrot.lane.b32.xlu0 %v3584, 125
    %v3593 = vpop.permute.xlu0 %3592
    %3594 = vrot.lane.b32.xlu0 %v3587, 125
    %v3595 = vpop.permute.xlu0 %3594
    %3596 = vrot.lane.b32.xlu0 %v3589, 125
    %v3597 = vpop.permute.xlu0 %3596
    %v3602 = vadd.f32 %v3282, %v3591
    %v3603 = vadd.f32 %v3283, %v3593
    %v3604 = vadd.f32 %v3284, %v3595
    %v3605 = vadd.f32 %v3285, %v3597
    %s3606 = sld [smem:[#allocation2 + $0xa3]]
    %v3607 = vstv %s3606
    %v3608 = vmul.f32 %v3607, %v46
    %v3609 = vmul.f32 %v3607, %v47
    %v3610 = vmul.f32 %v3607, %v48
    %v3611 = vmul.f32 %v3607, %v49
    %v3612 = vmul.f32 %v3607, %v50
    %v3613 = vmul.f32 %v3607, %v51
    %v3620 = vrot.slane %v3608, 2
    %v3621 = vrot.slane %v3609, 2
    %v3622 = vsel %vm2483, %v3620, %v3621
    %v3623 = vrot.slane %v3610, 2
    %v3624 = vsel %vm2483, %v3621, %v3623
    %v3625 = vrot.slane %v3611, 2
    %v3626 = vrot.slane %v3612, 2
    %v3627 = vsel %vm2483, %v3625, %v3626
    %v3628 = vrot.slane %v3613, 2
    %v3629 = vsel %vm2483, %v3626, %v3628
    %3630 = vrot.lane.b32.xlu0 %v3622, 125
    %v3631 = vpop.permute.xlu0 %3630
    %3632 = vrot.lane.b32.xlu0 %v3624, 125
    %v3633 = vpop.permute.xlu0 %3632
    %3634 = vrot.lane.b32.xlu0 %v3627, 125
    %v3635 = vpop.permute.xlu0 %3634
    %3636 = vrot.lane.b32.xlu0 %v3629, 125
    %v3637 = vpop.permute.xlu0 %3636
    %v3642 = vadd.f32 %v3322, %v3631
    %v3643 = vadd.f32 %v3323, %v3633
    %v3644 = vadd.f32 %v3324, %v3635
    %v3645 = vadd.f32 %v3325, %v3637
    %s3646 = sld [smem:[#allocation2 + $0xbc]]
    %v3647 = vstv %s3646
    %v3648 = vmul.f32 %v3647, %v46
    %v3649 = vmul.f32 %v3647, %v47
    %v3650 = vmul.f32 %v3647, %v48
    %v3651 = vmul.f32 %v3647, %v49
    %v3652 = vmul.f32 %v3647, %v50
    %v3653 = vmul.f32 %v3647, %v51
    %v3660 = vrot.slane %v3648, 2
    %v3661 = vrot.slane %v3649, 2
    %v3662 = vsel %vm2483, %v3660, %v3661
    %v3663 = vrot.slane %v3650, 2
    %v3664 = vsel %vm2483, %v3661, %v3663
    %v3665 = vrot.slane %v3651, 2
    %v3666 = vrot.slane %v3652, 2
    %v3667 = vsel %vm2483, %v3665, %v3666
    %v3668 = vrot.slane %v3653, 2
    %v3669 = vsel %vm2483, %v3666, %v3668
    %3670 = vrot.lane.b32.xlu0 %v3662, 125
    %v3671 = vpop.permute.xlu0 %3670
    %3672 = vrot.lane.b32.xlu0 %v3664, 125
    %v3673 = vpop.permute.xlu0 %3672
    %3674 = vrot.lane.b32.xlu0 %v3667, 125
    %v3675 = vpop.permute.xlu0 %3674
    %3676 = vrot.lane.b32.xlu0 %v3669, 125
    %v3677 = vpop.permute.xlu0 %3676
    %v3682 = vadd.f32 %v3362, %v3671
    %v3683 = vadd.f32 %v3363, %v3673
    %v3684 = vadd.f32 %v3364, %v3675
    %v3685 = vadd.f32 %v3365, %v3677
    %s3686 = sld [smem:[#allocation2 + $0xe]]
    %v3687 = vstv %s3686
    %v3688 = vmul.f32 %v3687, %v46
    %v3689 = vmul.f32 %v3687, %v47
    %v3690 = vmul.f32 %v3687, %v48
    %v3691 = vmul.f32 %v3687, %v49
    %v3692 = vmul.f32 %v3687, %v50
    %v3693 = vmul.f32 %v3687, %v51
    %v3700 = vrot.slane %v3688, 2
    %v3701 = vrot.slane %v3689, 2
    %v3702 = vsel %vm2483, %v3700, %v3701
    %v3703 = vrot.slane %v3690, 2
    %v3704 = vsel %vm2483, %v3701, %v3703
    %v3705 = vrot.slane %v3691, 2
    %v3706 = vrot.slane %v3692, 2
    %v3707 = vsel %vm2483, %v3705, %v3706
    %v3708 = vrot.slane %v3693, 2
    %v3709 = vsel %vm2483, %v3706, %v3708
    %3710 = vrot.lane.b32.xlu0 %v3702, 124
    %v3711 = vpop.permute.xlu0 %3710
    %3712 = vrot.lane.b32.xlu0 %v3704, 124
    %v3713 = vpop.permute.xlu0 %3712
    %3714 = vrot.lane.b32.xlu0 %v3707, 124
    %v3715 = vpop.permute.xlu0 %3714
    %3716 = vrot.lane.b32.xlu0 %v3709, 124
    %v3717 = vpop.permute.xlu0 %3716
    %v3722 = vadd.f32 %v3402, %v3711
    %v3723 = vadd.f32 %v3403, %v3713
    %v3724 = vadd.f32 %v3404, %v3715
    %v3725 = vadd.f32 %v3405, %v3717
    %s3726 = sld [smem:[#allocation2 + $0x27]]
    %v3727 = vstv %s3726
    %v3728 = vmul.f32 %v3727, %v46
    %v3729 = vmul.f32 %v3727, %v47
    %v3730 = vmul.f32 %v3727, %v48
    %v3731 = vmul.f32 %v3727, %v49
    %v3732 = vmul.f32 %v3727, %v50
    %v3733 = vmul.f32 %v3727, %v51
    %v3740 = vrot.slane %v3728, 2
    %v3741 = vrot.slane %v3729, 2
    %v3742 = vsel %vm2483, %v3740, %v3741
    %v3743 = vrot.slane %v3730, 2
    %v3744 = vsel %vm2483, %v3741, %v3743
    %v3745 = vrot.slane %v3731, 2
    %v3746 = vrot.slane %v3732, 2
    %v3747 = vsel %vm2483, %v3745, %v3746
    %v3748 = vrot.slane %v3733, 2
    %v3749 = vsel %vm2483, %v3746, %v3748
    %3750 = vrot.lane.b32.xlu0 %v3742, 124
    %v3751 = vpop.permute.xlu0 %3750
    %3752 = vrot.lane.b32.xlu0 %v3744, 124
    %v3753 = vpop.permute.xlu0 %3752
    %3754 = vrot.lane.b32.xlu0 %v3747, 124
    %v3755 = vpop.permute.xlu0 %3754
    %3756 = vrot.lane.b32.xlu0 %v3749, 124
    %v3757 = vpop.permute.xlu0 %3756
    %v3762 = vadd.f32 %v3442, %v3751
    %v3763 = vadd.f32 %v3443, %v3753
    %v3764 = vadd.f32 %v3444, %v3755
    %v3765 = vadd.f32 %v3445, %v3757
    %s3766 = sld [smem:[#allocation2 + $0x40]]
    %v3767 = vstv %s3766
    %v3768 = vmul.f32 %v3767, %v46
    %v3769 = vmul.f32 %v3767, %v47
    %v3770 = vmul.f32 %v3767, %v48
    %v3771 = vmul.f32 %v3767, %v49
    %v3772 = vmul.f32 %v3767, %v50
    %v3773 = vmul.f32 %v3767, %v51
    %v3780 = vrot.slane %v3768, 2
    %v3781 = vrot.slane %v3769, 2
    %v3782 = vsel %vm2483, %v3780, %v3781
    %v3783 = vrot.slane %v3770, 2
    %v3784 = vsel %vm2483, %v3781, %v3783
    %v3785 = vrot.slane %v3771, 2
    %v3786 = vrot.slane %v3772, 2
    %v3787 = vsel %vm2483, %v3785, %v3786
    %v3788 = vrot.slane %v3773, 2
    %v3789 = vsel %vm2483, %v3786, %v3788
    %3790 = vrot.lane.b32.xlu0 %v3782, 124
    %v3791 = vpop.permute.xlu0 %3790
    %3792 = vrot.lane.b32.xlu0 %v3784, 124
    %v3793 = vpop.permute.xlu0 %3792
    %3794 = vrot.lane.b32.xlu0 %v3787, 124
    %v3795 = vpop.permute.xlu0 %3794
    %3796 = vrot.lane.b32.xlu0 %v3789, 124
    %v3797 = vpop.permute.xlu0 %3796
    %v3802 = vadd.f32 %v3482, %v3791
    %v3803 = vadd.f32 %v3483, %v3793
    %v3804 = vadd.f32 %v3484, %v3795
    %v3805 = vadd.f32 %v3485, %v3797
    %s3806 = sld [smem:[#allocation2 + $0x59]]
    %v3807 = vstv %s3806
    %v3808 = vmul.f32 %v3807, %v46
    %v3809 = vmul.f32 %v3807, %v47
    %v3810 = vmul.f32 %v3807, %v48
    %v3811 = vmul.f32 %v3807, %v49
    %v3812 = vmul.f32 %v3807, %v50
    %v3813 = vmul.f32 %v3807, %v51
    %v3820 = vrot.slane %v3808, 2
    %v3821 = vrot.slane %v3809, 2
    %v3822 = vsel %vm2483, %v3820, %v3821
    %v3823 = vrot.slane %v3810, 2
    %v3824 = vsel %vm2483, %v3821, %v3823
    %v3825 = vrot.slane %v3811, 2
    %v3826 = vrot.slane %v3812, 2
    %v3827 = vsel %vm2483, %v3825, %v3826
    %v3828 = vrot.slane %v3813, 2
    %v3829 = vsel %vm2483, %v3826, %v3828
    %3830 = vrot.lane.b32.xlu0 %v3822, 124
    %v3831 = vpop.permute.xlu0 %3830
    %3832 = vrot.lane.b32.xlu0 %v3824, 124
    %v3833 = vpop.permute.xlu0 %3832
    %3834 = vrot.lane.b32.xlu0 %v3827, 124
    %v3835 = vpop.permute.xlu0 %3834
    %3836 = vrot.lane.b32.xlu0 %v3829, 124
    %v3837 = vpop.permute.xlu0 %3836
    %v3842 = vadd.f32 %v3522, %v3831
    %v3843 = vadd.f32 %v3523, %v3833
    %v3844 = vadd.f32 %v3524, %v3835
    %v3845 = vadd.f32 %v3525, %v3837
    %s3846 = sld [smem:[#allocation2 + $0x72]]
    %v3847 = vstv %s3846
    %v3848 = vmul.f32 %v3847, %v46
    %v3849 = vmul.f32 %v3847, %v47
    %v3850 = vmul.f32 %v3847, %v48
    %v3851 = vmul.f32 %v3847, %v49
    %v3852 = vmul.f32 %v3847, %v50
    %v3853 = vmul.f32 %v3847, %v51
    %v3860 = vrot.slane %v3848, 2
    %v3861 = vrot.slane %v3849, 2
    %v3862 = vsel %vm2483, %v3860, %v3861
    %v3863 = vrot.slane %v3850, 2
    %v3864 = vsel %vm2483, %v3861, %v3863
    %v3865 = vrot.slane %v3851, 2
    %v3866 = vrot.slane %v3852, 2
    %v3867 = vsel %vm2483, %v3865, %v3866
    %v3868 = vrot.slane %v3853, 2
    %v3869 = vsel %vm2483, %v3866, %v3868
    %3870 = vrot.lane.b32.xlu0 %v3862, 124
    %v3871 = vpop.permute.xlu0 %3870
    %3872 = vrot.lane.b32.xlu0 %v3864, 124
    %v3873 = vpop.permute.xlu0 %3872
    %3874 = vrot.lane.b32.xlu0 %v3867, 124
    %v3875 = vpop.permute.xlu0 %3874
    %3876 = vrot.lane.b32.xlu0 %v3869, 124
    %v3877 = vpop.permute.xlu0 %3876
    %v3882 = vadd.f32 %v3562, %v3871
    %v3883 = vadd.f32 %v3563, %v3873
    %v3884 = vadd.f32 %v3564, %v3875
    %v3885 = vadd.f32 %v3565, %v3877
    %s3886 = sld [smem:[#allocation2 + $0x8b]]
    %v3887 = vstv %s3886
    %v3888 = vmul.f32 %v3887, %v46
    %v3889 = vmul.f32 %v3887, %v47
    %v3890 = vmul.f32 %v3887, %v48
    %v3891 = vmul.f32 %v3887, %v49
    %v3892 = vmul.f32 %v3887, %v50
    %v3893 = vmul.f32 %v3887, %v51
    %v3900 = vrot.slane %v3888, 2
    %v3901 = vrot.slane %v3889, 2
    %v3902 = vsel %vm2483, %v3900, %v3901
    %v3903 = vrot.slane %v3890, 2
    %v3904 = vsel %vm2483, %v3901, %v3903
    %v3905 = vrot.slane %v3891, 2
    %v3906 = vrot.slane %v3892, 2
    %v3907 = vsel %vm2483, %v3905, %v3906
    %v3908 = vrot.slane %v3893, 2
    %v3909 = vsel %vm2483, %v3906, %v3908
    %3910 = vrot.lane.b32.xlu0 %v3902, 124
    %v3911 = vpop.permute.xlu0 %3910
    %3912 = vrot.lane.b32.xlu0 %v3904, 124
    %v3913 = vpop.permute.xlu0 %3912
    %3914 = vrot.lane.b32.xlu0 %v3907, 124
    %v3915 = vpop.permute.xlu0 %3914
    %3916 = vrot.lane.b32.xlu0 %v3909, 124
    %v3917 = vpop.permute.xlu0 %3916
    %v3922 = vadd.f32 %v3602, %v3911
    %v3923 = vadd.f32 %v3603, %v3913
    %v3924 = vadd.f32 %v3604, %v3915
    %v3925 = vadd.f32 %v3605, %v3917
    %s3926 = sld [smem:[#allocation2 + $0xa4]]
    %v3927 = vstv %s3926
    %v3928 = vmul.f32 %v3927, %v46
    %v3929 = vmul.f32 %v3927, %v47
    %v3930 = vmul.f32 %v3927, %v48
    %v3931 = vmul.f32 %v3927, %v49
    %v3932 = vmul.f32 %v3927, %v50
    %v3933 = vmul.f32 %v3927, %v51
    %v3940 = vrot.slane %v3928, 2
    %v3941 = vrot.slane %v3929, 2
    %v3942 = vsel %vm2483, %v3940, %v3941
    %v3943 = vrot.slane %v3930, 2
    %v3944 = vsel %vm2483, %v3941, %v3943
    %v3945 = vrot.slane %v3931, 2
    %v3946 = vrot.slane %v3932, 2
    %v3947 = vsel %vm2483, %v3945, %v3946
    %v3948 = vrot.slane %v3933, 2
    %v3949 = vsel %vm2483, %v3946, %v3948
    %3950 = vrot.lane.b32.xlu0 %v3942, 124
    %v3951 = vpop.permute.xlu0 %3950
    %3952 = vrot.lane.b32.xlu0 %v3944, 124
    %v3953 = vpop.permute.xlu0 %3952
    %3954 = vrot.lane.b32.xlu0 %v3947, 124
    %v3955 = vpop.permute.xlu0 %3954
    %3956 = vrot.lane.b32.xlu0 %v3949, 124
    %v3957 = vpop.permute.xlu0 %3956
    %v3962 = vadd.f32 %v3642, %v3951
    %v3963 = vadd.f32 %v3643, %v3953
    %v3964 = vadd.f32 %v3644, %v3955
    %v3965 = vadd.f32 %v3645, %v3957
    %s3966 = sld [smem:[#allocation2 + $0xbd]]
    %v3967 = vstv %s3966
    %v3968 = vmul.f32 %v3967, %v46
    %v3969 = vmul.f32 %v3967, %v47
    %v3970 = vmul.f32 %v3967, %v48
    %v3971 = vmul.f32 %v3967, %v49
    %v3972 = vmul.f32 %v3967, %v50
    %v3973 = vmul.f32 %v3967, %v51
    %v3980 = vrot.slane %v3968, 2
    %v3981 = vrot.slane %v3969, 2
    %v3982 = vsel %vm2483, %v3980, %v3981
    %v3983 = vrot.slane %v3970, 2
    %v3984 = vsel %vm2483, %v3981, %v3983
    %v3985 = vrot.slane %v3971, 2
    %v3986 = vrot.slane %v3972, 2
    %v3987 = vsel %vm2483, %v3985, %v3986
    %v3988 = vrot.slane %v3973, 2
    %v3989 = vsel %vm2483, %v3986, %v3988
    %3990 = vrot.lane.b32.xlu0 %v3982, 124
    %v3991 = vpop.permute.xlu0 %3990
    %3992 = vrot.lane.b32.xlu0 %v3984, 124
    %v3993 = vpop.permute.xlu0 %3992
    %3994 = vrot.lane.b32.xlu0 %v3987, 124
    %v3995 = vpop.permute.xlu0 %3994
    %3996 = vrot.lane.b32.xlu0 %v3989, 124
    %v3997 = vpop.permute.xlu0 %3996
    %v4002 = vadd.f32 %v3682, %v3991
    %v4003 = vadd.f32 %v3683, %v3993
    %v4004 = vadd.f32 %v3684, %v3995
    %v4005 = vadd.f32 %v3685, %v3997
    %s4006 = sld [smem:[#allocation2 + $0xf]]
    %v4007 = vstv %s4006
    %v4008 = vmul.f32 %v4007, %v46
    %v4009 = vmul.f32 %v4007, %v47
    %v4010 = vmul.f32 %v4007, %v48
    %v4011 = vmul.f32 %v4007, %v49
    %v4012 = vmul.f32 %v4007, %v50
    %v4013 = vmul.f32 %v4007, %v51
    %vm4020 = vcmask 1044480
    %v4021 = vrot.slane %v4008, 3
    %v4022 = vrot.slane %v4009, 3
    %v4023 = vsel %vm4020, %v4021, %v4022
    %v4024 = vrot.slane %v4010, 3
    %v4025 = vsel %vm4020, %v4022, %v4024
    %v4026 = vrot.slane %v4011, 3
    %v4027 = vrot.slane %v4012, 3
    %v4028 = vsel %vm4020, %v4026, %v4027
    %v4029 = vrot.slane %v4013, 3
    %v4030 = vsel %vm4020, %v4027, %v4029
    %v4035 = vadd.f32 %v3722, %v4023
    %v4036 = vadd.f32 %v3723, %v4025
    %v4037 = vadd.f32 %v3724, %v4028
    %v4038 = vadd.f32 %v3725, %v4030
    %s4039 = sld [smem:[#allocation2 + $0x28]]
    %v4040 = vstv %s4039
    %v4041 = vmul.f32 %v4040, %v46
    %v4042 = vmul.f32 %v4040, %v47
    %v4043 = vmul.f32 %v4040, %v48
    %v4044 = vmul.f32 %v4040, %v49
    %v4045 = vmul.f32 %v4040, %v50
    %v4046 = vmul.f32 %v4040, %v51
    %v4053 = vrot.slane %v4041, 3
    %v4054 = vrot.slane %v4042, 3
    %v4055 = vsel %vm4020, %v4053, %v4054
    %v4056 = vrot.slane %v4043, 3
    %v4057 = vsel %vm4020, %v4054, %v4056
    %v4058 = vrot.slane %v4044, 3
    %v4059 = vrot.slane %v4045, 3
    %v4060 = vsel %vm4020, %v4058, %v4059
    %v4061 = vrot.slane %v4046, 3
    %v4062 = vsel %vm4020, %v4059, %v4061
    %v4067 = vadd.f32 %v3762, %v4055
    %v4068 = vadd.f32 %v3763, %v4057
    %v4069 = vadd.f32 %v3764, %v4060
    %v4070 = vadd.f32 %v3765, %v4062
    %s4071 = sld [smem:[#allocation2 + $0x41]]
    %v4072 = vstv %s4071
    %v4073 = vmul.f32 %v4072, %v46
    %v4074 = vmul.f32 %v4072, %v47
    %v4075 = vmul.f32 %v4072, %v48
    %v4076 = vmul.f32 %v4072, %v49
    %v4077 = vmul.f32 %v4072, %v50
    %v4078 = vmul.f32 %v4072, %v51
    %v4085 = vrot.slane %v4073, 3
    %v4086 = vrot.slane %v4074, 3
    %v4087 = vsel %vm4020, %v4085, %v4086
    %v4088 = vrot.slane %v4075, 3
    %v4089 = vsel %vm4020, %v4086, %v4088
    %v4090 = vrot.slane %v4076, 3
    %v4091 = vrot.slane %v4077, 3
    %v4092 = vsel %vm4020, %v4090, %v4091
    %v4093 = vrot.slane %v4078, 3
    %v4094 = vsel %vm4020, %v4091, %v4093
    %v4099 = vadd.f32 %v3802, %v4087
    %v4100 = vadd.f32 %v3803, %v4089
    %v4101 = vadd.f32 %v3804, %v4092
    %v4102 = vadd.f32 %v3805, %v4094
    %s4103 = sld [smem:[#allocation2 + $0x5a]]
    %v4104 = vstv %s4103
    %v4105 = vmul.f32 %v4104, %v46
    %v4106 = vmul.f32 %v4104, %v47
    %v4107 = vmul.f32 %v4104, %v48
    %v4108 = vmul.f32 %v4104, %v49
    %v4109 = vmul.f32 %v4104, %v50
    %v4110 = vmul.f32 %v4104, %v51
    %v4117 = vrot.slane %v4105, 3
    %v4118 = vrot.slane %v4106, 3
    %v4119 = vsel %vm4020, %v4117, %v4118
    %v4120 = vrot.slane %v4107, 3
    %v4121 = vsel %vm4020, %v4118, %v4120
    %v4122 = vrot.slane %v4108, 3
    %v4123 = vrot.slane %v4109, 3
    %v4124 = vsel %vm4020, %v4122, %v4123
    %v4125 = vrot.slane %v4110, 3
    %v4126 = vsel %vm4020, %v4123, %v4125
    %v4131 = vadd.f32 %v3842, %v4119
    %v4132 = vadd.f32 %v3843, %v4121
    %v4133 = vadd.f32 %v3844, %v4124
    %v4134 = vadd.f32 %v3845, %v4126
    %s4135 = sld [smem:[#allocation2 + $0x73]]
    %v4136 = vstv %s4135
    %v4137 = vmul.f32 %v4136, %v46
    %v4138 = vmul.f32 %v4136, %v47
    %v4139 = vmul.f32 %v4136, %v48
    %v4140 = vmul.f32 %v4136, %v49
    %v4141 = vmul.f32 %v4136, %v50
    %v4142 = vmul.f32 %v4136, %v51
    %v4149 = vrot.slane %v4137, 3
    %v4150 = vrot.slane %v4138, 3
    %v4151 = vsel %vm4020, %v4149, %v4150
    %v4152 = vrot.slane %v4139, 3
    %v4153 = vsel %vm4020, %v4150, %v4152
    %v4154 = vrot.slane %v4140, 3
    %v4155 = vrot.slane %v4141, 3
    %v4156 = vsel %vm4020, %v4154, %v4155
    %v4157 = vrot.slane %v4142, 3
    %v4158 = vsel %vm4020, %v4155, %v4157
    %v4163 = vadd.f32 %v3882, %v4151
    %v4164 = vadd.f32 %v3883, %v4153
    %v4165 = vadd.f32 %v3884, %v4156
    %v4166 = vadd.f32 %v3885, %v4158
    %s4167 = sld [smem:[#allocation2 + $0x8c]]
    %v4168 = vstv %s4167
    %v4169 = vmul.f32 %v4168, %v46
    %v4170 = vmul.f32 %v4168, %v47
    %v4171 = vmul.f32 %v4168, %v48
    %v4172 = vmul.f32 %v4168, %v49
    %v4173 = vmul.f32 %v4168, %v50
    %v4174 = vmul.f32 %v4168, %v51
    %v4181 = vrot.slane %v4169, 3
    %v4182 = vrot.slane %v4170, 3
    %v4183 = vsel %vm4020, %v4181, %v4182
    %v4184 = vrot.slane %v4171, 3
    %v4185 = vsel %vm4020, %v4182, %v4184
    %v4186 = vrot.slane %v4172, 3
    %v4187 = vrot.slane %v4173, 3
    %v4188 = vsel %vm4020, %v4186, %v4187
    %v4189 = vrot.slane %v4174, 3
    %v4190 = vsel %vm4020, %v4187, %v4189
    %v4195 = vadd.f32 %v3922, %v4183
    %v4196 = vadd.f32 %v3923, %v4185
    %v4197 = vadd.f32 %v3924, %v4188
    %v4198 = vadd.f32 %v3925, %v4190
    %s4199 = sld [smem:[#allocation2 + $0xa5]]
    %v4200 = vstv %s4199
    %v4201 = vmul.f32 %v4200, %v46
    %v4202 = vmul.f32 %v4200, %v47
    %v4203 = vmul.f32 %v4200, %v48
    %v4204 = vmul.f32 %v4200, %v49
    %v4205 = vmul.f32 %v4200, %v50
    %v4206 = vmul.f32 %v4200, %v51
    %v4213 = vrot.slane %v4201, 3
    %v4214 = vrot.slane %v4202, 3
    %v4215 = vsel %vm4020, %v4213, %v4214
    %v4216 = vrot.slane %v4203, 3
    %v4217 = vsel %vm4020, %v4214, %v4216
    %v4218 = vrot.slane %v4204, 3
    %v4219 = vrot.slane %v4205, 3
    %v4220 = vsel %vm4020, %v4218, %v4219
    %v4221 = vrot.slane %v4206, 3
    %v4222 = vsel %vm4020, %v4219, %v4221
    %v4227 = vadd.f32 %v3962, %v4215
    %v4228 = vadd.f32 %v3963, %v4217
    %v4229 = vadd.f32 %v3964, %v4220
    %v4230 = vadd.f32 %v3965, %v4222
    %s4231 = sld [smem:[#allocation2 + $0xbe]]
    %v4232 = vstv %s4231
    %v4233 = vmul.f32 %v4232, %v46
    %v4234 = vmul.f32 %v4232, %v47
    %v4235 = vmul.f32 %v4232, %v48
    %v4236 = vmul.f32 %v4232, %v49
    %v4237 = vmul.f32 %v4232, %v50
    %v4238 = vmul.f32 %v4232, %v51
    %v4245 = vrot.slane %v4233, 3
    %v4246 = vrot.slane %v4234, 3
    %v4247 = vsel %vm4020, %v4245, %v4246
    %v4248 = vrot.slane %v4235, 3
    %v4249 = vsel %vm4020, %v4246, %v4248
    %v4250 = vrot.slane %v4236, 3
    %v4251 = vrot.slane %v4237, 3
    %v4252 = vsel %vm4020, %v4250, %v4251
    %v4253 = vrot.slane %v4238, 3
    %v4254 = vsel %vm4020, %v4251, %v4253
    %v4259 = vadd.f32 %v4002, %v4247
    %v4260 = vadd.f32 %v4003, %v4249
    %v4261 = vadd.f32 %v4004, %v4252
    %v4262 = vadd.f32 %v4005, %v4254
    %s4263 = sld [smem:[#allocation2 + $0x10]]
    %v4264 = vstv %s4263
    %v4265 = vmul.f32 %v4264, %v46
    %v4266 = vmul.f32 %v4264, %v47
    %v4267 = vmul.f32 %v4264, %v48
    %v4268 = vmul.f32 %v4264, %v49
    %v4269 = vmul.f32 %v4264, %v50
    %v4270 = vmul.f32 %v4264, %v51
    %v4277 = vrot.slane %v4265, 3
    %v4278 = vrot.slane %v4266, 3
    %v4279 = vsel %vm4020, %v4277, %v4278
    %v4280 = vrot.slane %v4267, 3
    %v4281 = vsel %vm4020, %v4278, %v4280
    %v4282 = vrot.slane %v4268, 3
    %v4283 = vrot.slane %v4269, 3
    %v4284 = vsel %vm4020, %v4282, %v4283
    %v4285 = vrot.slane %v4270, 3
    %v4286 = vsel %vm4020, %v4283, %v4285
    %4287 = vrot.lane.b32.xlu0 %v4279, 127
    %v4288 = vpop.permute.xlu0 %4287
    %4289 = vrot.lane.b32.xlu0 %v4281, 127
    %v4290 = vpop.permute.xlu0 %4289
    %4291 = vrot.lane.b32.xlu0 %v4284, 127
    %v4292 = vpop.permute.xlu0 %4291
    %4293 = vrot.lane.b32.xlu0 %v4286, 127
    %v4294 = vpop.permute.xlu0 %4293
    %v4299 = vadd.f32 %v4035, %v4288
    %v4300 = vadd.f32 %v4036, %v4290
    %v4301 = vadd.f32 %v4037, %v4292
    %v4302 = vadd.f32 %v4038, %v4294
    %s4303 = sld [smem:[#allocation2 + $0x29]]
    %v4304 = vstv %s4303
    %v4305 = vmul.f32 %v4304, %v46
    %v4306 = vmul.f32 %v4304, %v47
    %v4307 = vmul.f32 %v4304, %v48
    %v4308 = vmul.f32 %v4304, %v49
    %v4309 = vmul.f32 %v4304, %v50
    %v4310 = vmul.f32 %v4304, %v51
    %v4317 = vrot.slane %v4305, 3
    %v4318 = vrot.slane %v4306, 3
    %v4319 = vsel %vm4020, %v4317, %v4318
    %v4320 = vrot.slane %v4307, 3
    %v4321 = vsel %vm4020, %v4318, %v4320
    %v4322 = vrot.slane %v4308, 3
    %v4323 = vrot.slane %v4309, 3
    %v4324 = vsel %vm4020, %v4322, %v4323
    %v4325 = vrot.slane %v4310, 3
    %v4326 = vsel %vm4020, %v4323, %v4325
    %4327 = vrot.lane.b32.xlu0 %v4319, 127
    %v4328 = vpop.permute.xlu0 %4327
    %4329 = vrot.lane.b32.xlu0 %v4321, 127
    %v4330 = vpop.permute.xlu0 %4329
    %4331 = vrot.lane.b32.xlu0 %v4324, 127
    %v4332 = vpop.permute.xlu0 %4331
    %4333 = vrot.lane.b32.xlu0 %v4326, 127
    %v4334 = vpop.permute.xlu0 %4333
    %v4339 = vadd.f32 %v4067, %v4328
    %v4340 = vadd.f32 %v4068, %v4330
    %v4341 = vadd.f32 %v4069, %v4332
    %v4342 = vadd.f32 %v4070, %v4334
    %s4343 = sld [smem:[#allocation2 + $0x42]]
    %v4344 = vstv %s4343
    %v4345 = vmul.f32 %v4344, %v46
    %v4346 = vmul.f32 %v4344, %v47
    %v4347 = vmul.f32 %v4344, %v48
    %v4348 = vmul.f32 %v4344, %v49
    %v4349 = vmul.f32 %v4344, %v50
    %v4350 = vmul.f32 %v4344, %v51
    %v4357 = vrot.slane %v4345, 3
    %v4358 = vrot.slane %v4346, 3
    %v4359 = vsel %vm4020, %v4357, %v4358
    %v4360 = vrot.slane %v4347, 3
    %v4361 = vsel %vm4020, %v4358, %v4360
    %v4362 = vrot.slane %v4348, 3
    %v4363 = vrot.slane %v4349, 3
    %v4364 = vsel %vm4020, %v4362, %v4363
    %v4365 = vrot.slane %v4350, 3
    %v4366 = vsel %vm4020, %v4363, %v4365
    %4367 = vrot.lane.b32.xlu0 %v4359, 127
    %v4368 = vpop.permute.xlu0 %4367
    %4369 = vrot.lane.b32.xlu0 %v4361, 127
    %v4370 = vpop.permute.xlu0 %4369
    %4371 = vrot.lane.b32.xlu0 %v4364, 127
    %v4372 = vpop.permute.xlu0 %4371
    %4373 = vrot.lane.b32.xlu0 %v4366, 127
    %v4374 = vpop.permute.xlu0 %4373
    %v4379 = vadd.f32 %v4099, %v4368
    %v4380 = vadd.f32 %v4100, %v4370
    %v4381 = vadd.f32 %v4101, %v4372
    %v4382 = vadd.f32 %v4102, %v4374
    %s4383 = sld [smem:[#allocation2 + $0x5b]]
    %v4384 = vstv %s4383
    %v4385 = vmul.f32 %v4384, %v46
    %v4386 = vmul.f32 %v4384, %v47
    %v4387 = vmul.f32 %v4384, %v48
    %v4388 = vmul.f32 %v4384, %v49
    %v4389 = vmul.f32 %v4384, %v50
    %v4390 = vmul.f32 %v4384, %v51
    %v4397 = vrot.slane %v4385, 3
    %v4398 = vrot.slane %v4386, 3
    %v4399 = vsel %vm4020, %v4397, %v4398
    %v4400 = vrot.slane %v4387, 3
    %v4401 = vsel %vm4020, %v4398, %v4400
    %v4402 = vrot.slane %v4388, 3
    %v4403 = vrot.slane %v4389, 3
    %v4404 = vsel %vm4020, %v4402, %v4403
    %v4405 = vrot.slane %v4390, 3
    %v4406 = vsel %vm4020, %v4403, %v4405
    %4407 = vrot.lane.b32.xlu0 %v4399, 127
    %v4408 = vpop.permute.xlu0 %4407
    %4409 = vrot.lane.b32.xlu0 %v4401, 127
    %v4410 = vpop.permute.xlu0 %4409
    %4411 = vrot.lane.b32.xlu0 %v4404, 127
    %v4412 = vpop.permute.xlu0 %4411
    %4413 = vrot.lane.b32.xlu0 %v4406, 127
    %v4414 = vpop.permute.xlu0 %4413
    %v4419 = vadd.f32 %v4131, %v4408
    %v4420 = vadd.f32 %v4132, %v4410
    %v4421 = vadd.f32 %v4133, %v4412
    %v4422 = vadd.f32 %v4134, %v4414
    %s4423 = sld [smem:[#allocation2 + $0x74]]
    %v4424 = vstv %s4423
    %v4425 = vmul.f32 %v4424, %v46
    %v4426 = vmul.f32 %v4424, %v47
    %v4427 = vmul.f32 %v4424, %v48
    %v4428 = vmul.f32 %v4424, %v49
    %v4429 = vmul.f32 %v4424, %v50
    %v4430 = vmul.f32 %v4424, %v51
    %v4437 = vrot.slane %v4425, 3
    %v4438 = vrot.slane %v4426, 3
    %v4439 = vsel %vm4020, %v4437, %v4438
    %v4440 = vrot.slane %v4427, 3
    %v4441 = vsel %vm4020, %v4438, %v4440
    %v4442 = vrot.slane %v4428, 3
    %v4443 = vrot.slane %v4429, 3
    %v4444 = vsel %vm4020, %v4442, %v4443
    %v4445 = vrot.slane %v4430, 3
    %v4446 = vsel %vm4020, %v4443, %v4445
    %4447 = vrot.lane.b32.xlu0 %v4439, 127
    %v4448 = vpop.permute.xlu0 %4447
    %4449 = vrot.lane.b32.xlu0 %v4441, 127
    %v4450 = vpop.permute.xlu0 %4449
    %4451 = vrot.lane.b32.xlu0 %v4444, 127
    %v4452 = vpop.permute.xlu0 %4451
    %4453 = vrot.lane.b32.xlu0 %v4446, 127
    %v4454 = vpop.permute.xlu0 %4453
    %v4459 = vadd.f32 %v4163, %v4448
    %v4460 = vadd.f32 %v4164, %v4450
    %v4461 = vadd.f32 %v4165, %v4452
    %v4462 = vadd.f32 %v4166, %v4454
    %s4463 = sld [smem:[#allocation2 + $0x8d]]
    %v4464 = vstv %s4463
    %v4465 = vmul.f32 %v4464, %v46
    %v4466 = vmul.f32 %v4464, %v47
    %v4467 = vmul.f32 %v4464, %v48
    %v4468 = vmul.f32 %v4464, %v49
    %v4469 = vmul.f32 %v4464, %v50
    %v4470 = vmul.f32 %v4464, %v51
    %v4477 = vrot.slane %v4465, 3
    %v4478 = vrot.slane %v4466, 3
    %v4479 = vsel %vm4020, %v4477, %v4478
    %v4480 = vrot.slane %v4467, 3
    %v4481 = vsel %vm4020, %v4478, %v4480
    %v4482 = vrot.slane %v4468, 3
    %v4483 = vrot.slane %v4469, 3
    %v4484 = vsel %vm4020, %v4482, %v4483
    %v4485 = vrot.slane %v4470, 3
    %v4486 = vsel %vm4020, %v4483, %v4485
    %4487 = vrot.lane.b32.xlu0 %v4479, 127
    %v4488 = vpop.permute.xlu0 %4487
    %4489 = vrot.lane.b32.xlu0 %v4481, 127
    %v4490 = vpop.permute.xlu0 %4489
    %4491 = vrot.lane.b32.xlu0 %v4484, 127
    %v4492 = vpop.permute.xlu0 %4491
    %4493 = vrot.lane.b32.xlu0 %v4486, 127
    %v4494 = vpop.permute.xlu0 %4493
    %v4499 = vadd.f32 %v4195, %v4488
    %v4500 = vadd.f32 %v4196, %v4490
    %v4501 = vadd.f32 %v4197, %v4492
    %v4502 = vadd.f32 %v4198, %v4494
    %s4503 = sld [smem:[#allocation2 + $0xa6]]
    %v4504 = vstv %s4503
    %v4505 = vmul.f32 %v4504, %v46
    %v4506 = vmul.f32 %v4504, %v47
    %v4507 = vmul.f32 %v4504, %v48
    %v4508 = vmul.f32 %v4504, %v49
    %v4509 = vmul.f32 %v4504, %v50
    %v4510 = vmul.f32 %v4504, %v51
    %v4517 = vrot.slane %v4505, 3
    %v4518 = vrot.slane %v4506, 3
    %v4519 = vsel %vm4020, %v4517, %v4518
    %v4520 = vrot.slane %v4507, 3
    %v4521 = vsel %vm4020, %v4518, %v4520
    %v4522 = vrot.slane %v4508, 3
    %v4523 = vrot.slane %v4509, 3
    %v4524 = vsel %vm4020, %v4522, %v4523
    %v4525 = vrot.slane %v4510, 3
    %v4526 = vsel %vm4020, %v4523, %v4525
    %4527 = vrot.lane.b32.xlu0 %v4519, 127
    %v4528 = vpop.permute.xlu0 %4527
    %4529 = vrot.lane.b32.xlu0 %v4521, 127
    %v4530 = vpop.permute.xlu0 %4529
    %4531 = vrot.lane.b32.xlu0 %v4524, 127
    %v4532 = vpop.permute.xlu0 %4531
    %4533 = vrot.lane.b32.xlu0 %v4526, 127
    %v4534 = vpop.permute.xlu0 %4533
    %v4539 = vadd.f32 %v4227, %v4528
    %v4540 = vadd.f32 %v4228, %v4530
    %v4541 = vadd.f32 %v4229, %v4532
    %v4542 = vadd.f32 %v4230, %v4534
    %s4543 = sld [smem:[#allocation2 + $0xbf]]
    %v4544 = vstv %s4543
    %v4545 = vmul.f32 %v4544, %v46
    %v4546 = vmul.f32 %v4544, %v47
    %v4547 = vmul.f32 %v4544, %v48
    %v4548 = vmul.f32 %v4544, %v49
    %v4549 = vmul.f32 %v4544, %v50
    %v4550 = vmul.f32 %v4544, %v51
    %v4557 = vrot.slane %v4545, 3
    %v4558 = vrot.slane %v4546, 3
    %v4559 = vsel %vm4020, %v4557, %v4558
    %v4560 = vrot.slane %v4547, 3
    %v4561 = vsel %vm4020, %v4558, %v4560
    %v4562 = vrot.slane %v4548, 3
    %v4563 = vrot.slane %v4549, 3
    %v4564 = vsel %vm4020, %v4562, %v4563
    %v4565 = vrot.slane %v4550, 3
    %v4566 = vsel %vm4020, %v4563, %v4565
    %4567 = vrot.lane.b32.xlu0 %v4559, 127
    %v4568 = vpop.permute.xlu0 %4567
    %4569 = vrot.lane.b32.xlu0 %v4561, 127
    %v4570 = vpop.permute.xlu0 %4569
    %4571 = vrot.lane.b32.xlu0 %v4564, 127
    %v4572 = vpop.permute.xlu0 %4571
    %4573 = vrot.lane.b32.xlu0 %v4566, 127
    %v4574 = vpop.permute.xlu0 %4573
    %v4579 = vadd.f32 %v4259, %v4568
    %v4580 = vadd.f32 %v4260, %v4570
    %v4581 = vadd.f32 %v4261, %v4572
    %v4582 = vadd.f32 %v4262, %v4574
    %s4583 = sld [smem:[#allocation2 + $0x11]]
    %v4584 = vstv %s4583
    %v4585 = vmul.f32 %v4584, %v46
    %v4586 = vmul.f32 %v4584, %v47
    %v4587 = vmul.f32 %v4584, %v48
    %v4588 = vmul.f32 %v4584, %v49
    %v4589 = vmul.f32 %v4584, %v50
    %v4590 = vmul.f32 %v4584, %v51
    %v4597 = vrot.slane %v4585, 3
    %v4598 = vrot.slane %v4586, 3
    %v4599 = vsel %vm4020, %v4597, %v4598
    %v4600 = vrot.slane %v4587, 3
    %v4601 = vsel %vm4020, %v4598, %v4600
    %v4602 = vrot.slane %v4588, 3
    %v4603 = vrot.slane %v4589, 3
    %v4604 = vsel %vm4020, %v4602, %v4603
    %v4605 = vrot.slane %v4590, 3
    %v4606 = vsel %vm4020, %v4603, %v4605
    %4607 = vrot.lane.b32.xlu0 %v4599, 126
    %v4608 = vpop.permute.xlu0 %4607
    %4609 = vrot.lane.b32.xlu0 %v4601, 126
    %v4610 = vpop.permute.xlu0 %4609
    %4611 = vrot.lane.b32.xlu0 %v4604, 126
    %v4612 = vpop.permute.xlu0 %4611
    %4613 = vrot.lane.b32.xlu0 %v4606, 126
    %v4614 = vpop.permute.xlu0 %4613
    %v4619 = vadd.f32 %v4299, %v4608
    %v4620 = vadd.f32 %v4300, %v4610
    %v4621 = vadd.f32 %v4301, %v4612
    %v4622 = vadd.f32 %v4302, %v4614
    %s4623 = sld [smem:[#allocation2 + $0x2a]]
    %v4624 = vstv %s4623
    %v4625 = vmul.f32 %v4624, %v46
    %v4626 = vmul.f32 %v4624, %v47
    %v4627 = vmul.f32 %v4624, %v48
    %v4628 = vmul.f32 %v4624, %v49
    %v4629 = vmul.f32 %v4624, %v50
    %v4630 = vmul.f32 %v4624, %v51
    %v4637 = vrot.slane %v4625, 3
    %v4638 = vrot.slane %v4626, 3
    %v4639 = vsel %vm4020, %v4637, %v4638
    %v4640 = vrot.slane %v4627, 3
    %v4641 = vsel %vm4020, %v4638, %v4640
    %v4642 = vrot.slane %v4628, 3
    %v4643 = vrot.slane %v4629, 3
    %v4644 = vsel %vm4020, %v4642, %v4643
    %v4645 = vrot.slane %v4630, 3
    %v4646 = vsel %vm4020, %v4643, %v4645
    %4647 = vrot.lane.b32.xlu0 %v4639, 126
    %v4648 = vpop.permute.xlu0 %4647
    %4649 = vrot.lane.b32.xlu0 %v4641, 126
    %v4650 = vpop.permute.xlu0 %4649
    %4651 = vrot.lane.b32.xlu0 %v4644, 126
    %v4652 = vpop.permute.xlu0 %4651
    %4653 = vrot.lane.b32.xlu0 %v4646, 126
    %v4654 = vpop.permute.xlu0 %4653
    %v4659 = vadd.f32 %v4339, %v4648
    %v4660 = vadd.f32 %v4340, %v4650
    %v4661 = vadd.f32 %v4341, %v4652
    %v4662 = vadd.f32 %v4342, %v4654
    %s4663 = sld [smem:[#allocation2 + $0x43]]
    %v4664 = vstv %s4663
    %v4665 = vmul.f32 %v4664, %v46
    %v4666 = vmul.f32 %v4664, %v47
    %v4667 = vmul.f32 %v4664, %v48
    %v4668 = vmul.f32 %v4664, %v49
    %v4669 = vmul.f32 %v4664, %v50
    %v4670 = vmul.f32 %v4664, %v51
    %v4677 = vrot.slane %v4665, 3
    %v4678 = vrot.slane %v4666, 3
    %v4679 = vsel %vm4020, %v4677, %v4678
    %v4680 = vrot.slane %v4667, 3
    %v4681 = vsel %vm4020, %v4678, %v4680
    %v4682 = vrot.slane %v4668, 3
    %v4683 = vrot.slane %v4669, 3
    %v4684 = vsel %vm4020, %v4682, %v4683
    %v4685 = vrot.slane %v4670, 3
    %v4686 = vsel %vm4020, %v4683, %v4685
    %4687 = vrot.lane.b32.xlu0 %v4679, 126
    %v4688 = vpop.permute.xlu0 %4687
    %4689 = vrot.lane.b32.xlu0 %v4681, 126
    %v4690 = vpop.permute.xlu0 %4689
    %4691 = vrot.lane.b32.xlu0 %v4684, 126
    %v4692 = vpop.permute.xlu0 %4691
    %4693 = vrot.lane.b32.xlu0 %v4686, 126
    %v4694 = vpop.permute.xlu0 %4693
    %v4699 = vadd.f32 %v4379, %v4688
    %v4700 = vadd.f32 %v4380, %v4690
    %v4701 = vadd.f32 %v4381, %v4692
    %v4702 = vadd.f32 %v4382, %v4694
    %s4703 = sld [smem:[#allocation2 + $0x5c]]
    %v4704 = vstv %s4703
    %v4705 = vmul.f32 %v4704, %v46
    %v4706 = vmul.f32 %v4704, %v47
    %v4707 = vmul.f32 %v4704, %v48
    %v4708 = vmul.f32 %v4704, %v49
    %v4709 = vmul.f32 %v4704, %v50
    %v4710 = vmul.f32 %v4704, %v51
    %v4717 = vrot.slane %v4705, 3
    %v4718 = vrot.slane %v4706, 3
    %v4719 = vsel %vm4020, %v4717, %v4718
    %v4720 = vrot.slane %v4707, 3
    %v4721 = vsel %vm4020, %v4718, %v4720
    %v4722 = vrot.slane %v4708, 3
    %v4723 = vrot.slane %v4709, 3
    %v4724 = vsel %vm4020, %v4722, %v4723
    %v4725 = vrot.slane %v4710, 3
    %v4726 = vsel %vm4020, %v4723, %v4725
    %4727 = vrot.lane.b32.xlu0 %v4719, 126
    %v4728 = vpop.permute.xlu0 %4727
    %4729 = vrot.lane.b32.xlu0 %v4721, 126
    %v4730 = vpop.permute.xlu0 %4729
    %4731 = vrot.lane.b32.xlu0 %v4724, 126
    %v4732 = vpop.permute.xlu0 %4731
    %4733 = vrot.lane.b32.xlu0 %v4726, 126
    %v4734 = vpop.permute.xlu0 %4733
    %v4739 = vadd.f32 %v4419, %v4728
    %v4740 = vadd.f32 %v4420, %v4730
    %v4741 = vadd.f32 %v4421, %v4732
    %v4742 = vadd.f32 %v4422, %v4734
    %s4743 = sld [smem:[#allocation2 + $0x75]]
    %v4744 = vstv %s4743
    %v4745 = vmul.f32 %v4744, %v46
    %v4746 = vmul.f32 %v4744, %v47
    %v4747 = vmul.f32 %v4744, %v48
    %v4748 = vmul.f32 %v4744, %v49
    %v4749 = vmul.f32 %v4744, %v50
    %v4750 = vmul.f32 %v4744, %v51
    %v4757 = vrot.slane %v4745, 3
    %v4758 = vrot.slane %v4746, 3
    %v4759 = vsel %vm4020, %v4757, %v4758
    %v4760 = vrot.slane %v4747, 3
    %v4761 = vsel %vm4020, %v4758, %v4760
    %v4762 = vrot.slane %v4748, 3
    %v4763 = vrot.slane %v4749, 3
    %v4764 = vsel %vm4020, %v4762, %v4763
    %v4765 = vrot.slane %v4750, 3
    %v4766 = vsel %vm4020, %v4763, %v4765
    %4767 = vrot.lane.b32.xlu0 %v4759, 126
    %v4768 = vpop.permute.xlu0 %4767
    %4769 = vrot.lane.b32.xlu0 %v4761, 126
    %v4770 = vpop.permute.xlu0 %4769
    %4771 = vrot.lane.b32.xlu0 %v4764, 126
    %v4772 = vpop.permute.xlu0 %4771
    %4773 = vrot.lane.b32.xlu0 %v4766, 126
    %v4774 = vpop.permute.xlu0 %4773
    %v4779 = vadd.f32 %v4459, %v4768
    %v4780 = vadd.f32 %v4460, %v4770
    %v4781 = vadd.f32 %v4461, %v4772
    %v4782 = vadd.f32 %v4462, %v4774
    %s4783 = sld [smem:[#allocation2 + $0x8e]]
    %v4784 = vstv %s4783
    %v4785 = vmul.f32 %v4784, %v46
    %v4786 = vmul.f32 %v4784, %v47
    %v4787 = vmul.f32 %v4784, %v48
    %v4788 = vmul.f32 %v4784, %v49
    %v4789 = vmul.f32 %v4784, %v50
    %v4790 = vmul.f32 %v4784, %v51
    %v4797 = vrot.slane %v4785, 3
    %v4798 = vrot.slane %v4786, 3
    %v4799 = vsel %vm4020, %v4797, %v4798
    %v4800 = vrot.slane %v4787, 3
    %v4801 = vsel %vm4020, %v4798, %v4800
    %v4802 = vrot.slane %v4788, 3
    %v4803 = vrot.slane %v4789, 3
    %v4804 = vsel %vm4020, %v4802, %v4803
    %v4805 = vrot.slane %v4790, 3
    %v4806 = vsel %vm4020, %v4803, %v4805
    %4807 = vrot.lane.b32.xlu0 %v4799, 126
    %v4808 = vpop.permute.xlu0 %4807
    %4809 = vrot.lane.b32.xlu0 %v4801, 126
    %v4810 = vpop.permute.xlu0 %4809
    %4811 = vrot.lane.b32.xlu0 %v4804, 126
    %v4812 = vpop.permute.xlu0 %4811
    %4813 = vrot.lane.b32.xlu0 %v4806, 126
    %v4814 = vpop.permute.xlu0 %4813
    %v4819 = vadd.f32 %v4499, %v4808
    %v4820 = vadd.f32 %v4500, %v4810
    %v4821 = vadd.f32 %v4501, %v4812
    %v4822 = vadd.f32 %v4502, %v4814
    %s4823 = sld [smem:[#allocation2 + $0xa7]]
    %v4824 = vstv %s4823
    %v4825 = vmul.f32 %v4824, %v46
    %v4826 = vmul.f32 %v4824, %v47
    %v4827 = vmul.f32 %v4824, %v48
    %v4828 = vmul.f32 %v4824, %v49
    %v4829 = vmul.f32 %v4824, %v50
    %v4830 = vmul.f32 %v4824, %v51
    %v4837 = vrot.slane %v4825, 3
    %v4838 = vrot.slane %v4826, 3
    %v4839 = vsel %vm4020, %v4837, %v4838
    %v4840 = vrot.slane %v4827, 3
    %v4841 = vsel %vm4020, %v4838, %v4840
    %v4842 = vrot.slane %v4828, 3
    %v4843 = vrot.slane %v4829, 3
    %v4844 = vsel %vm4020, %v4842, %v4843
    %v4845 = vrot.slane %v4830, 3
    %v4846 = vsel %vm4020, %v4843, %v4845
    %4847 = vrot.lane.b32.xlu0 %v4839, 126
    %v4848 = vpop.permute.xlu0 %4847
    %4849 = vrot.lane.b32.xlu0 %v4841, 126
    %v4850 = vpop.permute.xlu0 %4849
    %4851 = vrot.lane.b32.xlu0 %v4844, 126
    %v4852 = vpop.permute.xlu0 %4851
    %4853 = vrot.lane.b32.xlu0 %v4846, 126
    %v4854 = vpop.permute.xlu0 %4853
    %v4859 = vadd.f32 %v4539, %v4848
    %v4860 = vadd.f32 %v4540, %v4850
    %v4861 = vadd.f32 %v4541, %v4852
    %v4862 = vadd.f32 %v4542, %v4854
    %s4863 = sld [smem:[#allocation2 + $0xc0]]
    %v4864 = vstv %s4863
    %v4865 = vmul.f32 %v4864, %v46
    %v4866 = vmul.f32 %v4864, %v47
    %v4867 = vmul.f32 %v4864, %v48
    %v4868 = vmul.f32 %v4864, %v49
    %v4869 = vmul.f32 %v4864, %v50
    %v4870 = vmul.f32 %v4864, %v51
    %v4877 = vrot.slane %v4865, 3
    %v4878 = vrot.slane %v4866, 3
    %v4879 = vsel %vm4020, %v4877, %v4878
    %v4880 = vrot.slane %v4867, 3
    %v4881 = vsel %vm4020, %v4878, %v4880
    %v4882 = vrot.slane %v4868, 3
    %v4883 = vrot.slane %v4869, 3
    %v4884 = vsel %vm4020, %v4882, %v4883
    %v4885 = vrot.slane %v4870, 3
    %v4886 = vsel %vm4020, %v4883, %v4885
    %4887 = vrot.lane.b32.xlu0 %v4879, 126
    %v4888 = vpop.permute.xlu0 %4887
    %4889 = vrot.lane.b32.xlu0 %v4881, 126
    %v4890 = vpop.permute.xlu0 %4889
    %4891 = vrot.lane.b32.xlu0 %v4884, 126
    %v4892 = vpop.permute.xlu0 %4891
    %4893 = vrot.lane.b32.xlu0 %v4886, 126
    %v4894 = vpop.permute.xlu0 %4893
    %v4899 = vadd.f32 %v4579, %v4888
    %v4900 = vadd.f32 %v4580, %v4890
    %v4901 = vadd.f32 %v4581, %v4892
    %v4902 = vadd.f32 %v4582, %v4894
    %s4903 = sld [smem:[#allocation2 + $0x12]]
    %v4904 = vstv %s4903
    %v4905 = vmul.f32 %v4904, %v46
    %v4906 = vmul.f32 %v4904, %v47
    %v4907 = vmul.f32 %v4904, %v48
    %v4908 = vmul.f32 %v4904, %v49
    %v4909 = vmul.f32 %v4904, %v50
    %v4910 = vmul.f32 %v4904, %v51
    %v4917 = vrot.slane %v4905, 3
    %v4918 = vrot.slane %v4906, 3
    %v4919 = vsel %vm4020, %v4917, %v4918
    %v4920 = vrot.slane %v4907, 3
    %v4921 = vsel %vm4020, %v4918, %v4920
    %v4922 = vrot.slane %v4908, 3
    %v4923 = vrot.slane %v4909, 3
    %v4924 = vsel %vm4020, %v4922, %v4923
    %v4925 = vrot.slane %v4910, 3
    %v4926 = vsel %vm4020, %v4923, %v4925
    %4927 = vrot.lane.b32.xlu0 %v4919, 125
    %v4928 = vpop.permute.xlu0 %4927
    %4929 = vrot.lane.b32.xlu0 %v4921, 125
    %v4930 = vpop.permute.xlu0 %4929
    %4931 = vrot.lane.b32.xlu0 %v4924, 125
    %v4932 = vpop.permute.xlu0 %4931
    %4933 = vrot.lane.b32.xlu0 %v4926, 125
    %v4934 = vpop.permute.xlu0 %4933
    %v4939 = vadd.f32 %v4619, %v4928
    %v4940 = vadd.f32 %v4620, %v4930
    %v4941 = vadd.f32 %v4621, %v4932
    %v4942 = vadd.f32 %v4622, %v4934
    %s4943 = sld [smem:[#allocation2 + $0x2b]]
    %v4944 = vstv %s4943
    %v4945 = vmul.f32 %v4944, %v46
    %v4946 = vmul.f32 %v4944, %v47
    %v4947 = vmul.f32 %v4944, %v48
    %v4948 = vmul.f32 %v4944, %v49
    %v4949 = vmul.f32 %v4944, %v50
    %v4950 = vmul.f32 %v4944, %v51
    %v4957 = vrot.slane %v4945, 3
    %v4958 = vrot.slane %v4946, 3
    %v4959 = vsel %vm4020, %v4957, %v4958
    %v4960 = vrot.slane %v4947, 3
    %v4961 = vsel %vm4020, %v4958, %v4960
    %v4962 = vrot.slane %v4948, 3
    %v4963 = vrot.slane %v4949, 3
    %v4964 = vsel %vm4020, %v4962, %v4963
    %v4965 = vrot.slane %v4950, 3
    %v4966 = vsel %vm4020, %v4963, %v4965
    %4967 = vrot.lane.b32.xlu0 %v4959, 125
    %v4968 = vpop.permute.xlu0 %4967
    %4969 = vrot.lane.b32.xlu0 %v4961, 125
    %v4970 = vpop.permute.xlu0 %4969
    %4971 = vrot.lane.b32.xlu0 %v4964, 125
    %v4972 = vpop.permute.xlu0 %4971
    %4973 = vrot.lane.b32.xlu0 %v4966, 125
    %v4974 = vpop.permute.xlu0 %4973
    %v4979 = vadd.f32 %v4659, %v4968
    %v4980 = vadd.f32 %v4660, %v4970
    %v4981 = vadd.f32 %v4661, %v4972
    %v4982 = vadd.f32 %v4662, %v4974
    %s4983 = sld [smem:[#allocation2 + $0x44]]
    %v4984 = vstv %s4983
    %v4985 = vmul.f32 %v4984, %v46
    %v4986 = vmul.f32 %v4984, %v47
    %v4987 = vmul.f32 %v4984, %v48
    %v4988 = vmul.f32 %v4984, %v49
    %v4989 = vmul.f32 %v4984, %v50
    %v4990 = vmul.f32 %v4984, %v51
    %v4997 = vrot.slane %v4985, 3
    %v4998 = vrot.slane %v4986, 3
    %v4999 = vsel %vm4020, %v4997, %v4998
    %v5000 = vrot.slane %v4987, 3
    %v5001 = vsel %vm4020, %v4998, %v5000
    %v5002 = vrot.slane %v4988, 3
    %v5003 = vrot.slane %v4989, 3
    %v5004 = vsel %vm4020, %v5002, %v5003
    %v5005 = vrot.slane %v4990, 3
    %v5006 = vsel %vm4020, %v5003, %v5005
    %5007 = vrot.lane.b32.xlu0 %v4999, 125
    %v5008 = vpop.permute.xlu0 %5007
    %5009 = vrot.lane.b32.xlu0 %v5001, 125
    %v5010 = vpop.permute.xlu0 %5009
    %5011 = vrot.lane.b32.xlu0 %v5004, 125
    %v5012 = vpop.permute.xlu0 %5011
    %5013 = vrot.lane.b32.xlu0 %v5006, 125
    %v5014 = vpop.permute.xlu0 %5013
    %v5019 = vadd.f32 %v4699, %v5008
    %v5020 = vadd.f32 %v4700, %v5010
    %v5021 = vadd.f32 %v4701, %v5012
    %v5022 = vadd.f32 %v4702, %v5014
    %s5023 = sld [smem:[#allocation2 + $0x5d]]
    %v5024 = vstv %s5023
    %v5025 = vmul.f32 %v5024, %v46
    %v5026 = vmul.f32 %v5024, %v47
    %v5027 = vmul.f32 %v5024, %v48
    %v5028 = vmul.f32 %v5024, %v49
    %v5029 = vmul.f32 %v5024, %v50
    %v5030 = vmul.f32 %v5024, %v51
    %v5037 = vrot.slane %v5025, 3
    %v5038 = vrot.slane %v5026, 3
    %v5039 = vsel %vm4020, %v5037, %v5038
    %v5040 = vrot.slane %v5027, 3
    %v5041 = vsel %vm4020, %v5038, %v5040
    %v5042 = vrot.slane %v5028, 3
    %v5043 = vrot.slane %v5029, 3
    %v5044 = vsel %vm4020, %v5042, %v5043
    %v5045 = vrot.slane %v5030, 3
    %v5046 = vsel %vm4020, %v5043, %v5045
    %5047 = vrot.lane.b32.xlu0 %v5039, 125
    %v5048 = vpop.permute.xlu0 %5047
    %5049 = vrot.lane.b32.xlu0 %v5041, 125
    %v5050 = vpop.permute.xlu0 %5049
    %5051 = vrot.lane.b32.xlu0 %v5044, 125
    %v5052 = vpop.permute.xlu0 %5051
    %5053 = vrot.lane.b32.xlu0 %v5046, 125
    %v5054 = vpop.permute.xlu0 %5053
    %v5059 = vadd.f32 %v4739, %v5048
    %v5060 = vadd.f32 %v4740, %v5050
    %v5061 = vadd.f32 %v4741, %v5052
    %v5062 = vadd.f32 %v4742, %v5054
    %s5063 = sld [smem:[#allocation2 + $0x76]]
    %v5064 = vstv %s5063
    %v5065 = vmul.f32 %v5064, %v46
    %v5066 = vmul.f32 %v5064, %v47
    %v5067 = vmul.f32 %v5064, %v48
    %v5068 = vmul.f32 %v5064, %v49
    %v5069 = vmul.f32 %v5064, %v50
    %v5070 = vmul.f32 %v5064, %v51
    %v5077 = vrot.slane %v5065, 3
    %v5078 = vrot.slane %v5066, 3
    %v5079 = vsel %vm4020, %v5077, %v5078
    %v5080 = vrot.slane %v5067, 3
    %v5081 = vsel %vm4020, %v5078, %v5080
    %v5082 = vrot.slane %v5068, 3
    %v5083 = vrot.slane %v5069, 3
    %v5084 = vsel %vm4020, %v5082, %v5083
    %v5085 = vrot.slane %v5070, 3
    %v5086 = vsel %vm4020, %v5083, %v5085
    %5087 = vrot.lane.b32.xlu0 %v5079, 125
    %v5088 = vpop.permute.xlu0 %5087
    %5089 = vrot.lane.b32.xlu0 %v5081, 125
    %v5090 = vpop.permute.xlu0 %5089
    %5091 = vrot.lane.b32.xlu0 %v5084, 125
    %v5092 = vpop.permute.xlu0 %5091
    %5093 = vrot.lane.b32.xlu0 %v5086, 125
    %v5094 = vpop.permute.xlu0 %5093
    %v5099 = vadd.f32 %v4779, %v5088
    %v5100 = vadd.f32 %v4780, %v5090
    %v5101 = vadd.f32 %v4781, %v5092
    %v5102 = vadd.f32 %v4782, %v5094
    %s5103 = sld [smem:[#allocation2 + $0x8f]]
    %v5104 = vstv %s5103
    %v5105 = vmul.f32 %v5104, %v46
    %v5106 = vmul.f32 %v5104, %v47
    %v5107 = vmul.f32 %v5104, %v48
    %v5108 = vmul.f32 %v5104, %v49
    %v5109 = vmul.f32 %v5104, %v50
    %v5110 = vmul.f32 %v5104, %v51
    %v5117 = vrot.slane %v5105, 3
    %v5118 = vrot.slane %v5106, 3
    %v5119 = vsel %vm4020, %v5117, %v5118
    %v5120 = vrot.slane %v5107, 3
    %v5121 = vsel %vm4020, %v5118, %v5120
    %v5122 = vrot.slane %v5108, 3
    %v5123 = vrot.slane %v5109, 3
    %v5124 = vsel %vm4020, %v5122, %v5123
    %v5125 = vrot.slane %v5110, 3
    %v5126 = vsel %vm4020, %v5123, %v5125
    %5127 = vrot.lane.b32.xlu0 %v5119, 125
    %v5128 = vpop.permute.xlu0 %5127
    %5129 = vrot.lane.b32.xlu0 %v5121, 125
    %v5130 = vpop.permute.xlu0 %5129
    %5131 = vrot.lane.b32.xlu0 %v5124, 125
    %v5132 = vpop.permute.xlu0 %5131
    %5133 = vrot.lane.b32.xlu0 %v5126, 125
    %v5134 = vpop.permute.xlu0 %5133
    %v5139 = vadd.f32 %v4819, %v5128
    %v5140 = vadd.f32 %v4820, %v5130
    %v5141 = vadd.f32 %v4821, %v5132
    %v5142 = vadd.f32 %v4822, %v5134
    %s5143 = sld [smem:[#allocation2 + $0xa8]]
    %v5144 = vstv %s5143
    %v5145 = vmul.f32 %v5144, %v46
    %v5146 = vmul.f32 %v5144, %v47
    %v5147 = vmul.f32 %v5144, %v48
    %v5148 = vmul.f32 %v5144, %v49
    %v5149 = vmul.f32 %v5144, %v50
    %v5150 = vmul.f32 %v5144, %v51
    %v5157 = vrot.slane %v5145, 3
    %v5158 = vrot.slane %v5146, 3
    %v5159 = vsel %vm4020, %v5157, %v5158
    %v5160 = vrot.slane %v5147, 3
    %v5161 = vsel %vm4020, %v5158, %v5160
    %v5162 = vrot.slane %v5148, 3
    %v5163 = vrot.slane %v5149, 3
    %v5164 = vsel %vm4020, %v5162, %v5163
    %v5165 = vrot.slane %v5150, 3
    %v5166 = vsel %vm4020, %v5163, %v5165
    %5167 = vrot.lane.b32.xlu0 %v5159, 125
    %v5168 = vpop.permute.xlu0 %5167
    %5169 = vrot.lane.b32.xlu0 %v5161, 125
    %v5170 = vpop.permute.xlu0 %5169
    %5171 = vrot.lane.b32.xlu0 %v5164, 125
    %v5172 = vpop.permute.xlu0 %5171
    %5173 = vrot.lane.b32.xlu0 %v5166, 125
    %v5174 = vpop.permute.xlu0 %5173
    %v5179 = vadd.f32 %v4859, %v5168
    %v5180 = vadd.f32 %v4860, %v5170
    %v5181 = vadd.f32 %v4861, %v5172
    %v5182 = vadd.f32 %v4862, %v5174
    %s5183 = sld [smem:[#allocation2 + $0xc1]]
    %v5184 = vstv %s5183
    %v5185 = vmul.f32 %v5184, %v46
    %v5186 = vmul.f32 %v5184, %v47
    %v5187 = vmul.f32 %v5184, %v48
    %v5188 = vmul.f32 %v5184, %v49
    %v5189 = vmul.f32 %v5184, %v50
    %v5190 = vmul.f32 %v5184, %v51
    %v5197 = vrot.slane %v5185, 3
    %v5198 = vrot.slane %v5186, 3
    %v5199 = vsel %vm4020, %v5197, %v5198
    %v5200 = vrot.slane %v5187, 3
    %v5201 = vsel %vm4020, %v5198, %v5200
    %v5202 = vrot.slane %v5188, 3
    %v5203 = vrot.slane %v5189, 3
    %v5204 = vsel %vm4020, %v5202, %v5203
    %v5205 = vrot.slane %v5190, 3
    %v5206 = vsel %vm4020, %v5203, %v5205
    %5207 = vrot.lane.b32.xlu0 %v5199, 125
    %v5208 = vpop.permute.xlu0 %5207
    %5209 = vrot.lane.b32.xlu0 %v5201, 125
    %v5210 = vpop.permute.xlu0 %5209
    %5211 = vrot.lane.b32.xlu0 %v5204, 125
    %v5212 = vpop.permute.xlu0 %5211
    %5213 = vrot.lane.b32.xlu0 %v5206, 125
    %v5214 = vpop.permute.xlu0 %5213
    %v5219 = vadd.f32 %v4899, %v5208
    %v5220 = vadd.f32 %v4900, %v5210
    %v5221 = vadd.f32 %v4901, %v5212
    %v5222 = vadd.f32 %v4902, %v5214
    %s5223 = sld [smem:[#allocation2 + $0x13]]
    %v5224 = vstv %s5223
    %v5225 = vmul.f32 %v5224, %v46
    %v5226 = vmul.f32 %v5224, %v47
    %v5227 = vmul.f32 %v5224, %v48
    %v5228 = vmul.f32 %v5224, %v49
    %v5229 = vmul.f32 %v5224, %v50
    %v5230 = vmul.f32 %v5224, %v51
    %v5237 = vrot.slane %v5225, 3
    %v5238 = vrot.slane %v5226, 3
    %v5239 = vsel %vm4020, %v5237, %v5238
    %v5240 = vrot.slane %v5227, 3
    %v5241 = vsel %vm4020, %v5238, %v5240
    %v5242 = vrot.slane %v5228, 3
    %v5243 = vrot.slane %v5229, 3
    %v5244 = vsel %vm4020, %v5242, %v5243
    %v5245 = vrot.slane %v5230, 3
    %v5246 = vsel %vm4020, %v5243, %v5245
    %5247 = vrot.lane.b32.xlu0 %v5239, 124
    %v5248 = vpop.permute.xlu0 %5247
    %5249 = vrot.lane.b32.xlu0 %v5241, 124
    %v5250 = vpop.permute.xlu0 %5249
    %5251 = vrot.lane.b32.xlu0 %v5244, 124
    %v5252 = vpop.permute.xlu0 %5251
    %5253 = vrot.lane.b32.xlu0 %v5246, 124
    %v5254 = vpop.permute.xlu0 %5253
    %v5259 = vadd.f32 %v4939, %v5248
    %v5260 = vadd.f32 %v4940, %v5250
    %v5261 = vadd.f32 %v4941, %v5252
    %v5262 = vadd.f32 %v4942, %v5254
    %s5263 = sld [smem:[#allocation2 + $0x2c]]
    %v5264 = vstv %s5263
    %v5265 = vmul.f32 %v5264, %v46
    %v5266 = vmul.f32 %v5264, %v47
    %v5267 = vmul.f32 %v5264, %v48
    %v5268 = vmul.f32 %v5264, %v49
    %v5269 = vmul.f32 %v5264, %v50
    %v5270 = vmul.f32 %v5264, %v51
    %v5277 = vrot.slane %v5265, 3
    %v5278 = vrot.slane %v5266, 3
    %v5279 = vsel %vm4020, %v5277, %v5278
    %v5280 = vrot.slane %v5267, 3
    %v5281 = vsel %vm4020, %v5278, %v5280
    %v5282 = vrot.slane %v5268, 3
    %v5283 = vrot.slane %v5269, 3
    %v5284 = vsel %vm4020, %v5282, %v5283
    %v5285 = vrot.slane %v5270, 3
    %v5286 = vsel %vm4020, %v5283, %v5285
    %5287 = vrot.lane.b32.xlu0 %v5279, 124
    %v5288 = vpop.permute.xlu0 %5287
    %5289 = vrot.lane.b32.xlu0 %v5281, 124
    %v5290 = vpop.permute.xlu0 %5289
    %5291 = vrot.lane.b32.xlu0 %v5284, 124
    %v5292 = vpop.permute.xlu0 %5291
    %5293 = vrot.lane.b32.xlu0 %v5286, 124
    %v5294 = vpop.permute.xlu0 %5293
    %v5299 = vadd.f32 %v4979, %v5288
    %v5300 = vadd.f32 %v4980, %v5290
    %v5301 = vadd.f32 %v4981, %v5292
    %v5302 = vadd.f32 %v4982, %v5294
    %s5303 = sld [smem:[#allocation2 + $0x45]]
    %v5304 = vstv %s5303
    %v5305 = vmul.f32 %v5304, %v46
    %v5306 = vmul.f32 %v5304, %v47
    %v5307 = vmul.f32 %v5304, %v48
    %v5308 = vmul.f32 %v5304, %v49
    %v5309 = vmul.f32 %v5304, %v50
    %v5310 = vmul.f32 %v5304, %v51
    %v5317 = vrot.slane %v5305, 3
    %v5318 = vrot.slane %v5306, 3
    %v5319 = vsel %vm4020, %v5317, %v5318
    %v5320 = vrot.slane %v5307, 3
    %v5321 = vsel %vm4020, %v5318, %v5320
    %v5322 = vrot.slane %v5308, 3
    %v5323 = vrot.slane %v5309, 3
    %v5324 = vsel %vm4020, %v5322, %v5323
    %v5325 = vrot.slane %v5310, 3
    %v5326 = vsel %vm4020, %v5323, %v5325
    %5327 = vrot.lane.b32.xlu0 %v5319, 124
    %v5328 = vpop.permute.xlu0 %5327
    %5329 = vrot.lane.b32.xlu0 %v5321, 124
    %v5330 = vpop.permute.xlu0 %5329
    %5331 = vrot.lane.b32.xlu0 %v5324, 124
    %v5332 = vpop.permute.xlu0 %5331
    %5333 = vrot.lane.b32.xlu0 %v5326, 124
    %v5334 = vpop.permute.xlu0 %5333
    %v5339 = vadd.f32 %v5019, %v5328
    %v5340 = vadd.f32 %v5020, %v5330
    %v5341 = vadd.f32 %v5021, %v5332
    %v5342 = vadd.f32 %v5022, %v5334
    %s5343 = sld [smem:[#allocation2 + $0x5e]]
    %v5344 = vstv %s5343
    %v5345 = vmul.f32 %v5344, %v46
    %v5346 = vmul.f32 %v5344, %v47
    %v5347 = vmul.f32 %v5344, %v48
    %v5348 = vmul.f32 %v5344, %v49
    %v5349 = vmul.f32 %v5344, %v50
    %v5350 = vmul.f32 %v5344, %v51
    %v5357 = vrot.slane %v5345, 3
    %v5358 = vrot.slane %v5346, 3
    %v5359 = vsel %vm4020, %v5357, %v5358
    %v5360 = vrot.slane %v5347, 3
    %v5361 = vsel %vm4020, %v5358, %v5360
    %v5362 = vrot.slane %v5348, 3
    %v5363 = vrot.slane %v5349, 3
    %v5364 = vsel %vm4020, %v5362, %v5363
    %v5365 = vrot.slane %v5350, 3
    %v5366 = vsel %vm4020, %v5363, %v5365
    %5367 = vrot.lane.b32.xlu0 %v5359, 124
    %v5368 = vpop.permute.xlu0 %5367
    %5369 = vrot.lane.b32.xlu0 %v5361, 124
    %v5370 = vpop.permute.xlu0 %5369
    %5371 = vrot.lane.b32.xlu0 %v5364, 124
    %v5372 = vpop.permute.xlu0 %5371
    %5373 = vrot.lane.b32.xlu0 %v5366, 124
    %v5374 = vpop.permute.xlu0 %5373
    %v5379 = vadd.f32 %v5059, %v5368
    %v5380 = vadd.f32 %v5060, %v5370
    %v5381 = vadd.f32 %v5061, %v5372
    %v5382 = vadd.f32 %v5062, %v5374
    %s5383 = sld [smem:[#allocation2 + $0x77]]
    %v5384 = vstv %s5383
    %v5385 = vmul.f32 %v5384, %v46
    %v5386 = vmul.f32 %v5384, %v47
    %v5387 = vmul.f32 %v5384, %v48
    %v5388 = vmul.f32 %v5384, %v49
    %v5389 = vmul.f32 %v5384, %v50
    %v5390 = vmul.f32 %v5384, %v51
    %v5397 = vrot.slane %v5385, 3
    %v5398 = vrot.slane %v5386, 3
    %v5399 = vsel %vm4020, %v5397, %v5398
    %v5400 = vrot.slane %v5387, 3
    %v5401 = vsel %vm4020, %v5398, %v5400
    %v5402 = vrot.slane %v5388, 3
    %v5403 = vrot.slane %v5389, 3
    %v5404 = vsel %vm4020, %v5402, %v5403
    %v5405 = vrot.slane %v5390, 3
    %v5406 = vsel %vm4020, %v5403, %v5405
    %5407 = vrot.lane.b32.xlu0 %v5399, 124
    %v5408 = vpop.permute.xlu0 %5407
    %5409 = vrot.lane.b32.xlu0 %v5401, 124
    %v5410 = vpop.permute.xlu0 %5409
    %5411 = vrot.lane.b32.xlu0 %v5404, 124
    %v5412 = vpop.permute.xlu0 %5411
    %5413 = vrot.lane.b32.xlu0 %v5406, 124
    %v5414 = vpop.permute.xlu0 %5413
    %v5419 = vadd.f32 %v5099, %v5408
    %v5420 = vadd.f32 %v5100, %v5410
    %v5421 = vadd.f32 %v5101, %v5412
    %v5422 = vadd.f32 %v5102, %v5414
    %s5423 = sld [smem:[#allocation2 + $0x90]]
    %v5424 = vstv %s5423
    %v5425 = vmul.f32 %v5424, %v46
    %v5426 = vmul.f32 %v5424, %v47
    %v5427 = vmul.f32 %v5424, %v48
    %v5428 = vmul.f32 %v5424, %v49
    %v5429 = vmul.f32 %v5424, %v50
    %v5430 = vmul.f32 %v5424, %v51
    %v5437 = vrot.slane %v5425, 3
    %v5438 = vrot.slane %v5426, 3
    %v5439 = vsel %vm4020, %v5437, %v5438
    %v5440 = vrot.slane %v5427, 3
    %v5441 = vsel %vm4020, %v5438, %v5440
    %v5442 = vrot.slane %v5428, 3
    %v5443 = vrot.slane %v5429, 3
    %v5444 = vsel %vm4020, %v5442, %v5443
    %v5445 = vrot.slane %v5430, 3
    %v5446 = vsel %vm4020, %v5443, %v5445
    %5447 = vrot.lane.b32.xlu0 %v5439, 124
    %v5448 = vpop.permute.xlu0 %5447
    %5449 = vrot.lane.b32.xlu0 %v5441, 124
    %v5450 = vpop.permute.xlu0 %5449
    %5451 = vrot.lane.b32.xlu0 %v5444, 124
    %v5452 = vpop.permute.xlu0 %5451
    %5453 = vrot.lane.b32.xlu0 %v5446, 124
    %v5454 = vpop.permute.xlu0 %5453
    %v5459 = vadd.f32 %v5139, %v5448
    %v5460 = vadd.f32 %v5140, %v5450
    %v5461 = vadd.f32 %v5141, %v5452
    %v5462 = vadd.f32 %v5142, %v5454
    %s5463 = sld [smem:[#allocation2 + $0xa9]]
    %v5464 = vstv %s5463
    %v5465 = vmul.f32 %v5464, %v46
    %v5466 = vmul.f32 %v5464, %v47
    %v5467 = vmul.f32 %v5464, %v48
    %v5468 = vmul.f32 %v5464, %v49
    %v5469 = vmul.f32 %v5464, %v50
    %v5470 = vmul.f32 %v5464, %v51
    %v5477 = vrot.slane %v5465, 3
    %v5478 = vrot.slane %v5466, 3
    %v5479 = vsel %vm4020, %v5477, %v5478
    %v5480 = vrot.slane %v5467, 3
    %v5481 = vsel %vm4020, %v5478, %v5480
    %v5482 = vrot.slane %v5468, 3
    %v5483 = vrot.slane %v5469, 3
    %v5484 = vsel %vm4020, %v5482, %v5483
    %v5485 = vrot.slane %v5470, 3
    %v5486 = vsel %vm4020, %v5483, %v5485
    %5487 = vrot.lane.b32.xlu0 %v5479, 124
    %v5488 = vpop.permute.xlu0 %5487
    %5489 = vrot.lane.b32.xlu0 %v5481, 124
    %v5490 = vpop.permute.xlu0 %5489
    %5491 = vrot.lane.b32.xlu0 %v5484, 124
    %v5492 = vpop.permute.xlu0 %5491
    %5493 = vrot.lane.b32.xlu0 %v5486, 124
    %v5494 = vpop.permute.xlu0 %5493
    %v5499 = vadd.f32 %v5179, %v5488
    %v5500 = vadd.f32 %v5180, %v5490
    %v5501 = vadd.f32 %v5181, %v5492
    %v5502 = vadd.f32 %v5182, %v5494
    %s5503 = sld [smem:[#allocation2 + $0xc2]]
    %v5504 = vstv %s5503
    %v5505 = vmul.f32 %v5504, %v46
    %v5506 = vmul.f32 %v5504, %v47
    %v5507 = vmul.f32 %v5504, %v48
    %v5508 = vmul.f32 %v5504, %v49
    %v5509 = vmul.f32 %v5504, %v50
    %v5510 = vmul.f32 %v5504, %v51
    %v5517 = vrot.slane %v5505, 3
    %v5518 = vrot.slane %v5506, 3
    %v5519 = vsel %vm4020, %v5517, %v5518
    %v5520 = vrot.slane %v5507, 3
    %v5521 = vsel %vm4020, %v5518, %v5520
    %v5522 = vrot.slane %v5508, 3
    %v5523 = vrot.slane %v5509, 3
    %v5524 = vsel %vm4020, %v5522, %v5523
    %v5525 = vrot.slane %v5510, 3
    %v5526 = vsel %vm4020, %v5523, %v5525
    %5527 = vrot.lane.b32.xlu0 %v5519, 124
    %v5528 = vpop.permute.xlu0 %5527
    %5529 = vrot.lane.b32.xlu0 %v5521, 124
    %v5530 = vpop.permute.xlu0 %5529
    %5531 = vrot.lane.b32.xlu0 %v5524, 124
    %v5532 = vpop.permute.xlu0 %5531
    %5533 = vrot.lane.b32.xlu0 %v5526, 124
    %v5534 = vpop.permute.xlu0 %5533
    %v5539 = vadd.f32 %v5219, %v5528
    %v5540 = vadd.f32 %v5220, %v5530
    %v5541 = vadd.f32 %v5221, %v5532
    %v5542 = vadd.f32 %v5222, %v5534
    %s5543 = sld [smem:[#allocation2 + $0x14]]
    %v5544 = vstv %s5543
    %v5545 = vmul.f32 %v5544, %v46
    %v5546 = vmul.f32 %v5544, %v47
    %v5547 = vmul.f32 %v5544, %v48
    %v5548 = vmul.f32 %v5544, %v49
    %v5549 = vmul.f32 %v5544, %v50
    %v5550 = vmul.f32 %v5544, %v51
    %vm5557 = vcmask 1043456
    %v5558 = vrot.slane %v5545, 4
    %v5559 = vrot.slane %v5546, 4
    %v5560 = vsel %vm5557, %v5558, %v5559
    %v5561 = vrot.slane %v5547, 4
    %v5562 = vsel %vm5557, %v5559, %v5561
    %v5563 = vrot.slane %v5548, 4
    %v5564 = vrot.slane %v5549, 4
    %v5565 = vsel %vm5557, %v5563, %v5564
    %v5566 = vrot.slane %v5550, 4
    %v5567 = vsel %vm5557, %v5564, %v5566
    %v5572 = vadd.f32 %v5259, %v5560
    %v5573 = vadd.f32 %v5260, %v5562
    %v5574 = vadd.f32 %v5261, %v5565
    %v5575 = vadd.f32 %v5262, %v5567
    %s5576 = sld [smem:[#allocation2 + $0x2d]]
    %v5577 = vstv %s5576
    %v5578 = vmul.f32 %v5577, %v46
    %v5579 = vmul.f32 %v5577, %v47
    %v5580 = vmul.f32 %v5577, %v48
    %v5581 = vmul.f32 %v5577, %v49
    %v5582 = vmul.f32 %v5577, %v50
    %v5583 = vmul.f32 %v5577, %v51
    %v5590 = vrot.slane %v5578, 4
    %v5591 = vrot.slane %v5579, 4
    %v5592 = vsel %vm5557, %v5590, %v5591
    %v5593 = vrot.slane %v5580, 4
    %v5594 = vsel %vm5557, %v5591, %v5593
    %v5595 = vrot.slane %v5581, 4
    %v5596 = vrot.slane %v5582, 4
    %v5597 = vsel %vm5557, %v5595, %v5596
    %v5598 = vrot.slane %v5583, 4
    %v5599 = vsel %vm5557, %v5596, %v5598
    %v5604 = vadd.f32 %v5299, %v5592
    %v5605 = vadd.f32 %v5300, %v5594
    %v5606 = vadd.f32 %v5301, %v5597
    %v5607 = vadd.f32 %v5302, %v5599
    %s5608 = sld [smem:[#allocation2 + $0x46]]
    %v5609 = vstv %s5608
    %v5610 = vmul.f32 %v5609, %v46
    %v5611 = vmul.f32 %v5609, %v47
    %v5612 = vmul.f32 %v5609, %v48
    %v5613 = vmul.f32 %v5609, %v49
    %v5614 = vmul.f32 %v5609, %v50
    %v5615 = vmul.f32 %v5609, %v51
    %v5622 = vrot.slane %v5610, 4
    %v5623 = vrot.slane %v5611, 4
    %v5624 = vsel %vm5557, %v5622, %v5623
    %v5625 = vrot.slane %v5612, 4
    %v5626 = vsel %vm5557, %v5623, %v5625
    %v5627 = vrot.slane %v5613, 4
    %v5628 = vrot.slane %v5614, 4
    %v5629 = vsel %vm5557, %v5627, %v5628
    %v5630 = vrot.slane %v5615, 4
    %v5631 = vsel %vm5557, %v5628, %v5630
    %v5636 = vadd.f32 %v5339, %v5624
    %v5637 = vadd.f32 %v5340, %v5626
    %v5638 = vadd.f32 %v5341, %v5629
    %v5639 = vadd.f32 %v5342, %v5631
    %s5640 = sld [smem:[#allocation2 + $0x5f]]
    %v5641 = vstv %s5640
    %v5642 = vmul.f32 %v5641, %v46
    %v5643 = vmul.f32 %v5641, %v47
    %v5644 = vmul.f32 %v5641, %v48
    %v5645 = vmul.f32 %v5641, %v49
    %v5646 = vmul.f32 %v5641, %v50
    %v5647 = vmul.f32 %v5641, %v51
    %v5654 = vrot.slane %v5642, 4
    %v5655 = vrot.slane %v5643, 4
    %v5656 = vsel %vm5557, %v5654, %v5655
    %v5657 = vrot.slane %v5644, 4
    %v5658 = vsel %vm5557, %v5655, %v5657
    %v5659 = vrot.slane %v5645, 4
    %v5660 = vrot.slane %v5646, 4
    %v5661 = vsel %vm5557, %v5659, %v5660
    %v5662 = vrot.slane %v5647, 4
    %v5663 = vsel %vm5557, %v5660, %v5662
    %v5668 = vadd.f32 %v5379, %v5656
    %v5669 = vadd.f32 %v5380, %v5658
    %v5670 = vadd.f32 %v5381, %v5661
    %v5671 = vadd.f32 %v5382, %v5663
    %s5672 = sld [smem:[#allocation2 + $0x78]]
    %v5673 = vstv %s5672
    %v5674 = vmul.f32 %v5673, %v46
    %v5675 = vmul.f32 %v5673, %v47
    %v5676 = vmul.f32 %v5673, %v48
    %v5677 = vmul.f32 %v5673, %v49
    %v5678 = vmul.f32 %v5673, %v50
    %v5679 = vmul.f32 %v5673, %v51
    %v5686 = vrot.slane %v5674, 4
    %v5687 = vrot.slane %v5675, 4
    %v5688 = vsel %vm5557, %v5686, %v5687
    %v5689 = vrot.slane %v5676, 4
    %v5690 = vsel %vm5557, %v5687, %v5689
    %v5691 = vrot.slane %v5677, 4
    %v5692 = vrot.slane %v5678, 4
    %v5693 = vsel %vm5557, %v5691, %v5692
    %v5694 = vrot.slane %v5679, 4
    %v5695 = vsel %vm5557, %v5692, %v5694
    %v5700 = vadd.f32 %v5419, %v5688
    %v5701 = vadd.f32 %v5420, %v5690
    %v5702 = vadd.f32 %v5421, %v5693
    %v5703 = vadd.f32 %v5422, %v5695
    %s5704 = sld [smem:[#allocation2 + $0x91]]
    %v5705 = vstv %s5704
    %v5706 = vmul.f32 %v5705, %v46
    %v5707 = vmul.f32 %v5705, %v47
    %v5708 = vmul.f32 %v5705, %v48
    %v5709 = vmul.f32 %v5705, %v49
    %v5710 = vmul.f32 %v5705, %v50
    %v5711 = vmul.f32 %v5705, %v51
    %v5718 = vrot.slane %v5706, 4
    %v5719 = vrot.slane %v5707, 4
    %v5720 = vsel %vm5557, %v5718, %v5719
    %v5721 = vrot.slane %v5708, 4
    %v5722 = vsel %vm5557, %v5719, %v5721
    %v5723 = vrot.slane %v5709, 4
    %v5724 = vrot.slane %v5710, 4
    %v5725 = vsel %vm5557, %v5723, %v5724
    %v5726 = vrot.slane %v5711, 4
    %v5727 = vsel %vm5557, %v5724, %v5726
    %v5732 = vadd.f32 %v5459, %v5720
    %v5733 = vadd.f32 %v5460, %v5722
    %v5734 = vadd.f32 %v5461, %v5725
    %v5735 = vadd.f32 %v5462, %v5727
    %s5736 = sld [smem:[#allocation2 + $0xaa]]
    %v5737 = vstv %s5736
    %v5738 = vmul.f32 %v5737, %v46
    %v5739 = vmul.f32 %v5737, %v47
    %v5740 = vmul.f32 %v5737, %v48
    %v5741 = vmul.f32 %v5737, %v49
    %v5742 = vmul.f32 %v5737, %v50
    %v5743 = vmul.f32 %v5737, %v51
    %v5750 = vrot.slane %v5738, 4
    %v5751 = vrot.slane %v5739, 4
    %v5752 = vsel %vm5557, %v5750, %v5751
    %v5753 = vrot.slane %v5740, 4
    %v5754 = vsel %vm5557, %v5751, %v5753
    %v5755 = vrot.slane %v5741, 4
    %v5756 = vrot.slane %v5742, 4
    %v5757 = vsel %vm5557, %v5755, %v5756
    %v5758 = vrot.slane %v5743, 4
    %v5759 = vsel %vm5557, %v5756, %v5758
    %v5764 = vadd.f32 %v5499, %v5752
    %v5765 = vadd.f32 %v5500, %v5754
    %v5766 = vadd.f32 %v5501, %v5757
    %v5767 = vadd.f32 %v5502, %v5759
    %s5768 = sld [smem:[#allocation2 + $0xc3]]
    %v5769 = vstv %s5768
    %v5770 = vmul.f32 %v5769, %v46
    %v5771 = vmul.f32 %v5769, %v47
    %v5772 = vmul.f32 %v5769, %v48
    %v5773 = vmul.f32 %v5769, %v49
    %v5774 = vmul.f32 %v5769, %v50
    %v5775 = vmul.f32 %v5769, %v51
    %v5782 = vrot.slane %v5770, 4
    %v5783 = vrot.slane %v5771, 4
    %v5784 = vsel %vm5557, %v5782, %v5783
    %v5785 = vrot.slane %v5772, 4
    %v5786 = vsel %vm5557, %v5783, %v5785
    %v5787 = vrot.slane %v5773, 4
    %v5788 = vrot.slane %v5774, 4
    %v5789 = vsel %vm5557, %v5787, %v5788
    %v5790 = vrot.slane %v5775, 4
    %v5791 = vsel %vm5557, %v5788, %v5790
    %v5796 = vadd.f32 %v5539, %v5784
    %v5797 = vadd.f32 %v5540, %v5786
    %v5798 = vadd.f32 %v5541, %v5789
    %v5799 = vadd.f32 %v5542, %v5791
    %s5800 = sld [smem:[#allocation2 + $0x15]]
    %v5801 = vstv %s5800
    %v5802 = vmul.f32 %v5801, %v46
    %v5803 = vmul.f32 %v5801, %v47
    %v5804 = vmul.f32 %v5801, %v48
    %v5805 = vmul.f32 %v5801, %v49
    %v5806 = vmul.f32 %v5801, %v50
    %v5807 = vmul.f32 %v5801, %v51
    %v5814 = vrot.slane %v5802, 4
    %v5815 = vrot.slane %v5803, 4
    %v5816 = vsel %vm5557, %v5814, %v5815
    %v5817 = vrot.slane %v5804, 4
    %v5818 = vsel %vm5557, %v5815, %v5817
    %v5819 = vrot.slane %v5805, 4
    %v5820 = vrot.slane %v5806, 4
    %v5821 = vsel %vm5557, %v5819, %v5820
    %v5822 = vrot.slane %v5807, 4
    %v5823 = vsel %vm5557, %v5820, %v5822
    %5824 = vrot.lane.b32.xlu0 %v5816, 127
    %v5825 = vpop.permute.xlu0 %5824
    %5826 = vrot.lane.b32.xlu0 %v5818, 127
    %v5827 = vpop.permute.xlu0 %5826
    %5828 = vrot.lane.b32.xlu0 %v5821, 127
    %v5829 = vpop.permute.xlu0 %5828
    %5830 = vrot.lane.b32.xlu0 %v5823, 127
    %v5831 = vpop.permute.xlu0 %5830
    %v5836 = vadd.f32 %v5572, %v5825
    %v5837 = vadd.f32 %v5573, %v5827
    %v5838 = vadd.f32 %v5574, %v5829
    %v5839 = vadd.f32 %v5575, %v5831
    %s5840 = sld [smem:[#allocation2 + $0x2e]]
    %v5841 = vstv %s5840
    %v5842 = vmul.f32 %v5841, %v46
    %v5843 = vmul.f32 %v5841, %v47
    %v5844 = vmul.f32 %v5841, %v48
    %v5845 = vmul.f32 %v5841, %v49
    %v5846 = vmul.f32 %v5841, %v50
    %v5847 = vmul.f32 %v5841, %v51
    %v5854 = vrot.slane %v5842, 4
    %v5855 = vrot.slane %v5843, 4
    %v5856 = vsel %vm5557, %v5854, %v5855
    %v5857 = vrot.slane %v5844, 4
    %v5858 = vsel %vm5557, %v5855, %v5857
    %v5859 = vrot.slane %v5845, 4
    %v5860 = vrot.slane %v5846, 4
    %v5861 = vsel %vm5557, %v5859, %v5860
    %v5862 = vrot.slane %v5847, 4
    %v5863 = vsel %vm5557, %v5860, %v5862
    %5864 = vrot.lane.b32.xlu0 %v5856, 127
    %v5865 = vpop.permute.xlu0 %5864
    %5866 = vrot.lane.b32.xlu0 %v5858, 127
    %v5867 = vpop.permute.xlu0 %5866
    %5868 = vrot.lane.b32.xlu0 %v5861, 127
    %v5869 = vpop.permute.xlu0 %5868
    %5870 = vrot.lane.b32.xlu0 %v5863, 127
    %v5871 = vpop.permute.xlu0 %5870
    %v5876 = vadd.f32 %v5604, %v5865
    %v5877 = vadd.f32 %v5605, %v5867
    %v5878 = vadd.f32 %v5606, %v5869
    %v5879 = vadd.f32 %v5607, %v5871
    %s5880 = sld [smem:[#allocation2 + $0x47]]
    %v5881 = vstv %s5880
    %v5882 = vmul.f32 %v5881, %v46
    %v5883 = vmul.f32 %v5881, %v47
    %v5884 = vmul.f32 %v5881, %v48
    %v5885 = vmul.f32 %v5881, %v49
    %v5886 = vmul.f32 %v5881, %v50
    %v5887 = vmul.f32 %v5881, %v51
    %v5894 = vrot.slane %v5882, 4
    %v5895 = vrot.slane %v5883, 4
    %v5896 = vsel %vm5557, %v5894, %v5895
    %v5897 = vrot.slane %v5884, 4
    %v5898 = vsel %vm5557, %v5895, %v5897
    %v5899 = vrot.slane %v5885, 4
    %v5900 = vrot.slane %v5886, 4
    %v5901 = vsel %vm5557, %v5899, %v5900
    %v5902 = vrot.slane %v5887, 4
    %v5903 = vsel %vm5557, %v5900, %v5902
    %5904 = vrot.lane.b32.xlu0 %v5896, 127
    %v5905 = vpop.permute.xlu0 %5904
    %5906 = vrot.lane.b32.xlu0 %v5898, 127
    %v5907 = vpop.permute.xlu0 %5906
    %5908 = vrot.lane.b32.xlu0 %v5901, 127
    %v5909 = vpop.permute.xlu0 %5908
    %5910 = vrot.lane.b32.xlu0 %v5903, 127
    %v5911 = vpop.permute.xlu0 %5910
    %v5916 = vadd.f32 %v5636, %v5905
    %v5917 = vadd.f32 %v5637, %v5907
    %v5918 = vadd.f32 %v5638, %v5909
    %v5919 = vadd.f32 %v5639, %v5911
    %s5920 = sld [smem:[#allocation2 + $0x60]]
    %v5921 = vstv %s5920
    %v5922 = vmul.f32 %v5921, %v46
    %v5923 = vmul.f32 %v5921, %v47
    %v5924 = vmul.f32 %v5921, %v48
    %v5925 = vmul.f32 %v5921, %v49
    %v5926 = vmul.f32 %v5921, %v50
    %v5927 = vmul.f32 %v5921, %v51
    %v5934 = vrot.slane %v5922, 4
    %v5935 = vrot.slane %v5923, 4
    %v5936 = vsel %vm5557, %v5934, %v5935
    %v5937 = vrot.slane %v5924, 4
    %v5938 = vsel %vm5557, %v5935, %v5937
    %v5939 = vrot.slane %v5925, 4
    %v5940 = vrot.slane %v5926, 4
    %v5941 = vsel %vm5557, %v5939, %v5940
    %v5942 = vrot.slane %v5927, 4
    %v5943 = vsel %vm5557, %v5940, %v5942
    %5944 = vrot.lane.b32.xlu0 %v5936, 127
    %v5945 = vpop.permute.xlu0 %5944
    %5946 = vrot.lane.b32.xlu0 %v5938, 127
    %v5947 = vpop.permute.xlu0 %5946
    %5948 = vrot.lane.b32.xlu0 %v5941, 127
    %v5949 = vpop.permute.xlu0 %5948
    %5950 = vrot.lane.b32.xlu0 %v5943, 127
    %v5951 = vpop.permute.xlu0 %5950
    %v5956 = vadd.f32 %v5668, %v5945
    %v5957 = vadd.f32 %v5669, %v5947
    %v5958 = vadd.f32 %v5670, %v5949
    %v5959 = vadd.f32 %v5671, %v5951
    %s5960 = sld [smem:[#allocation2 + $0x79]]
    %v5961 = vstv %s5960
    %v5962 = vmul.f32 %v5961, %v46
    %v5963 = vmul.f32 %v5961, %v47
    %v5964 = vmul.f32 %v5961, %v48
    %v5965 = vmul.f32 %v5961, %v49
    %v5966 = vmul.f32 %v5961, %v50
    %v5967 = vmul.f32 %v5961, %v51
    %v5974 = vrot.slane %v5962, 4
    %v5975 = vrot.slane %v5963, 4
    %v5976 = vsel %vm5557, %v5974, %v5975
    %v5977 = vrot.slane %v5964, 4
    %v5978 = vsel %vm5557, %v5975, %v5977
    %v5979 = vrot.slane %v5965, 4
    %v5980 = vrot.slane %v5966, 4
    %v5981 = vsel %vm5557, %v5979, %v5980
    %v5982 = vrot.slane %v5967, 4
    %v5983 = vsel %vm5557, %v5980, %v5982
    %5984 = vrot.lane.b32.xlu0 %v5976, 127
    %v5985 = vpop.permute.xlu0 %5984
    %5986 = vrot.lane.b32.xlu0 %v5978, 127
    %v5987 = vpop.permute.xlu0 %5986
    %5988 = vrot.lane.b32.xlu0 %v5981, 127
    %v5989 = vpop.permute.xlu0 %5988
    %5990 = vrot.lane.b32.xlu0 %v5983, 127
    %v5991 = vpop.permute.xlu0 %5990
    %v5996 = vadd.f32 %v5700, %v5985
    %v5997 = vadd.f32 %v5701, %v5987
    %v5998 = vadd.f32 %v5702, %v5989
    %v5999 = vadd.f32 %v5703, %v5991
    %s6000 = sld [smem:[#allocation2 + $0x92]]
    %v6001 = vstv %s6000
    %v6002 = vmul.f32 %v6001, %v46
    %v6003 = vmul.f32 %v6001, %v47
    %v6004 = vmul.f32 %v6001, %v48
    %v6005 = vmul.f32 %v6001, %v49
    %v6006 = vmul.f32 %v6001, %v50
    %v6007 = vmul.f32 %v6001, %v51
    %v6014 = vrot.slane %v6002, 4
    %v6015 = vrot.slane %v6003, 4
    %v6016 = vsel %vm5557, %v6014, %v6015
    %v6017 = vrot.slane %v6004, 4
    %v6018 = vsel %vm5557, %v6015, %v6017
    %v6019 = vrot.slane %v6005, 4
    %v6020 = vrot.slane %v6006, 4
    %v6021 = vsel %vm5557, %v6019, %v6020
    %v6022 = vrot.slane %v6007, 4
    %v6023 = vsel %vm5557, %v6020, %v6022
    %6024 = vrot.lane.b32.xlu0 %v6016, 127
    %v6025 = vpop.permute.xlu0 %6024
    %6026 = vrot.lane.b32.xlu0 %v6018, 127
    %v6027 = vpop.permute.xlu0 %6026
    %6028 = vrot.lane.b32.xlu0 %v6021, 127
    %v6029 = vpop.permute.xlu0 %6028
    %6030 = vrot.lane.b32.xlu0 %v6023, 127
    %v6031 = vpop.permute.xlu0 %6030
    %v6036 = vadd.f32 %v5732, %v6025
    %v6037 = vadd.f32 %v5733, %v6027
    %v6038 = vadd.f32 %v5734, %v6029
    %v6039 = vadd.f32 %v5735, %v6031
    %s6040 = sld [smem:[#allocation2 + $0xab]]
    %v6041 = vstv %s6040
    %v6042 = vmul.f32 %v6041, %v46
    %v6043 = vmul.f32 %v6041, %v47
    %v6044 = vmul.f32 %v6041, %v48
    %v6045 = vmul.f32 %v6041, %v49
    %v6046 = vmul.f32 %v6041, %v50
    %v6047 = vmul.f32 %v6041, %v51
    %v6054 = vrot.slane %v6042, 4
    %v6055 = vrot.slane %v6043, 4
    %v6056 = vsel %vm5557, %v6054, %v6055
    %v6057 = vrot.slane %v6044, 4
    %v6058 = vsel %vm5557, %v6055, %v6057
    %v6059 = vrot.slane %v6045, 4
    %v6060 = vrot.slane %v6046, 4
    %v6061 = vsel %vm5557, %v6059, %v6060
    %v6062 = vrot.slane %v6047, 4
    %v6063 = vsel %vm5557, %v6060, %v6062
    %6064 = vrot.lane.b32.xlu0 %v6056, 127
    %v6065 = vpop.permute.xlu0 %6064
    %6066 = vrot.lane.b32.xlu0 %v6058, 127
    %v6067 = vpop.permute.xlu0 %6066
    %6068 = vrot.lane.b32.xlu0 %v6061, 127
    %v6069 = vpop.permute.xlu0 %6068
    %6070 = vrot.lane.b32.xlu0 %v6063, 127
    %v6071 = vpop.permute.xlu0 %6070
    %v6076 = vadd.f32 %v5764, %v6065
    %v6077 = vadd.f32 %v5765, %v6067
    %v6078 = vadd.f32 %v5766, %v6069
    %v6079 = vadd.f32 %v5767, %v6071
    %s6080 = sld [smem:[#allocation2 + $0xc4]]
    %v6081 = vstv %s6080
    %v6082 = vmul.f32 %v6081, %v46
    %v6083 = vmul.f32 %v6081, %v47
    %v6084 = vmul.f32 %v6081, %v48
    %v6085 = vmul.f32 %v6081, %v49
    %v6086 = vmul.f32 %v6081, %v50
    %v6087 = vmul.f32 %v6081, %v51
    %v6094 = vrot.slane %v6082, 4
    %v6095 = vrot.slane %v6083, 4
    %v6096 = vsel %vm5557, %v6094, %v6095
    %v6097 = vrot.slane %v6084, 4
    %v6098 = vsel %vm5557, %v6095, %v6097
    %v6099 = vrot.slane %v6085, 4
    %v6100 = vrot.slane %v6086, 4
    %v6101 = vsel %vm5557, %v6099, %v6100
    %v6102 = vrot.slane %v6087, 4
    %v6103 = vsel %vm5557, %v6100, %v6102
    %6104 = vrot.lane.b32.xlu0 %v6096, 127
    %v6105 = vpop.permute.xlu0 %6104
    %6106 = vrot.lane.b32.xlu0 %v6098, 127
    %v6107 = vpop.permute.xlu0 %6106
    %6108 = vrot.lane.b32.xlu0 %v6101, 127
    %v6109 = vpop.permute.xlu0 %6108
    %6110 = vrot.lane.b32.xlu0 %v6103, 127
    %v6111 = vpop.permute.xlu0 %6110
    %v6116 = vadd.f32 %v5796, %v6105
    %v6117 = vadd.f32 %v5797, %v6107
    %v6118 = vadd.f32 %v5798, %v6109
    %v6119 = vadd.f32 %v5799, %v6111
    %s6120 = sld [smem:[#allocation2 + $0x16]]
    %v6121 = vstv %s6120
    %v6122 = vmul.f32 %v6121, %v46
    %v6123 = vmul.f32 %v6121, %v47
    %v6124 = vmul.f32 %v6121, %v48
    %v6125 = vmul.f32 %v6121, %v49
    %v6126 = vmul.f32 %v6121, %v50
    %v6127 = vmul.f32 %v6121, %v51
    %v6134 = vrot.slane %v6122, 4
    %v6135 = vrot.slane %v6123, 4
    %v6136 = vsel %vm5557, %v6134, %v6135
    %v6137 = vrot.slane %v6124, 4
    %v6138 = vsel %vm5557, %v6135, %v6137
    %v6139 = vrot.slane %v6125, 4
    %v6140 = vrot.slane %v6126, 4
    %v6141 = vsel %vm5557, %v6139, %v6140
    %v6142 = vrot.slane %v6127, 4
    %v6143 = vsel %vm5557, %v6140, %v6142
    %6144 = vrot.lane.b32.xlu0 %v6136, 126
    %v6145 = vpop.permute.xlu0 %6144
    %6146 = vrot.lane.b32.xlu0 %v6138, 126
    %v6147 = vpop.permute.xlu0 %6146
    %6148 = vrot.lane.b32.xlu0 %v6141, 126
    %v6149 = vpop.permute.xlu0 %6148
    %6150 = vrot.lane.b32.xlu0 %v6143, 126
    %v6151 = vpop.permute.xlu0 %6150
    %v6156 = vadd.f32 %v5836, %v6145
    %v6157 = vadd.f32 %v5837, %v6147
    %v6158 = vadd.f32 %v5838, %v6149
    %v6159 = vadd.f32 %v5839, %v6151
    %s6160 = sld [smem:[#allocation2 + $0x2f]]
    %v6161 = vstv %s6160
    %v6162 = vmul.f32 %v6161, %v46
    %v6163 = vmul.f32 %v6161, %v47
    %v6164 = vmul.f32 %v6161, %v48
    %v6165 = vmul.f32 %v6161, %v49
    %v6166 = vmul.f32 %v6161, %v50
    %v6167 = vmul.f32 %v6161, %v51
    %v6174 = vrot.slane %v6162, 4
    %v6175 = vrot.slane %v6163, 4
    %v6176 = vsel %vm5557, %v6174, %v6175
    %v6177 = vrot.slane %v6164, 4
    %v6178 = vsel %vm5557, %v6175, %v6177
    %v6179 = vrot.slane %v6165, 4
    %v6180 = vrot.slane %v6166, 4
    %v6181 = vsel %vm5557, %v6179, %v6180
    %v6182 = vrot.slane %v6167, 4
    %v6183 = vsel %vm5557, %v6180, %v6182
    %6184 = vrot.lane.b32.xlu0 %v6176, 126
    %v6185 = vpop.permute.xlu0 %6184
    %6186 = vrot.lane.b32.xlu0 %v6178, 126
    %v6187 = vpop.permute.xlu0 %6186
    %6188 = vrot.lane.b32.xlu0 %v6181, 126
    %v6189 = vpop.permute.xlu0 %6188
    %6190 = vrot.lane.b32.xlu0 %v6183, 126
    %v6191 = vpop.permute.xlu0 %6190
    %v6196 = vadd.f32 %v5876, %v6185
    %v6197 = vadd.f32 %v5877, %v6187
    %v6198 = vadd.f32 %v5878, %v6189
    %v6199 = vadd.f32 %v5879, %v6191
    %s6200 = sld [smem:[#allocation2 + $0x48]]
    %v6201 = vstv %s6200
    %v6202 = vmul.f32 %v6201, %v46
    %v6203 = vmul.f32 %v6201, %v47
    %v6204 = vmul.f32 %v6201, %v48
    %v6205 = vmul.f32 %v6201, %v49
    %v6206 = vmul.f32 %v6201, %v50
    %v6207 = vmul.f32 %v6201, %v51
    %v6214 = vrot.slane %v6202, 4
    %v6215 = vrot.slane %v6203, 4
    %v6216 = vsel %vm5557, %v6214, %v6215
    %v6217 = vrot.slane %v6204, 4
    %v6218 = vsel %vm5557, %v6215, %v6217
    %v6219 = vrot.slane %v6205, 4
    %v6220 = vrot.slane %v6206, 4
    %v6221 = vsel %vm5557, %v6219, %v6220
    %v6222 = vrot.slane %v6207, 4
    %v6223 = vsel %vm5557, %v6220, %v6222
    %6224 = vrot.lane.b32.xlu0 %v6216, 126
    %v6225 = vpop.permute.xlu0 %6224
    %6226 = vrot.lane.b32.xlu0 %v6218, 126
    %v6227 = vpop.permute.xlu0 %6226
    %6228 = vrot.lane.b32.xlu0 %v6221, 126
    %v6229 = vpop.permute.xlu0 %6228
    %6230 = vrot.lane.b32.xlu0 %v6223, 126
    %v6231 = vpop.permute.xlu0 %6230
    %v6236 = vadd.f32 %v5916, %v6225
    %v6237 = vadd.f32 %v5917, %v6227
    %v6238 = vadd.f32 %v5918, %v6229
    %v6239 = vadd.f32 %v5919, %v6231
    %s6240 = sld [smem:[#allocation2 + $0x61]]
    %v6241 = vstv %s6240
    %v6242 = vmul.f32 %v6241, %v46
    %v6243 = vmul.f32 %v6241, %v47
    %v6244 = vmul.f32 %v6241, %v48
    %v6245 = vmul.f32 %v6241, %v49
    %v6246 = vmul.f32 %v6241, %v50
    %v6247 = vmul.f32 %v6241, %v51
    %v6254 = vrot.slane %v6242, 4
    %v6255 = vrot.slane %v6243, 4
    %v6256 = vsel %vm5557, %v6254, %v6255
    %v6257 = vrot.slane %v6244, 4
    %v6258 = vsel %vm5557, %v6255, %v6257
    %v6259 = vrot.slane %v6245, 4
    %v6260 = vrot.slane %v6246, 4
    %v6261 = vsel %vm5557, %v6259, %v6260
    %v6262 = vrot.slane %v6247, 4
    %v6263 = vsel %vm5557, %v6260, %v6262
    %6264 = vrot.lane.b32.xlu0 %v6256, 126
    %v6265 = vpop.permute.xlu0 %6264
    %6266 = vrot.lane.b32.xlu0 %v6258, 126
    %v6267 = vpop.permute.xlu0 %6266
    %6268 = vrot.lane.b32.xlu0 %v6261, 126
    %v6269 = vpop.permute.xlu0 %6268
    %6270 = vrot.lane.b32.xlu0 %v6263, 126
    %v6271 = vpop.permute.xlu0 %6270
    %v6276 = vadd.f32 %v5956, %v6265
    %v6277 = vadd.f32 %v5957, %v6267
    %v6278 = vadd.f32 %v5958, %v6269
    %v6279 = vadd.f32 %v5959, %v6271
    %s6280 = sld [smem:[#allocation2 + $0x7a]]
    %v6281 = vstv %s6280
    %v6282 = vmul.f32 %v6281, %v46
    %v6283 = vmul.f32 %v6281, %v47
    %v6284 = vmul.f32 %v6281, %v48
    %v6285 = vmul.f32 %v6281, %v49
    %v6286 = vmul.f32 %v6281, %v50
    %v6287 = vmul.f32 %v6281, %v51
    %v6294 = vrot.slane %v6282, 4
    %v6295 = vrot.slane %v6283, 4
    %v6296 = vsel %vm5557, %v6294, %v6295
    %v6297 = vrot.slane %v6284, 4
    %v6298 = vsel %vm5557, %v6295, %v6297
    %v6299 = vrot.slane %v6285, 4
    %v6300 = vrot.slane %v6286, 4
    %v6301 = vsel %vm5557, %v6299, %v6300
    %v6302 = vrot.slane %v6287, 4
    %v6303 = vsel %vm5557, %v6300, %v6302
    %6304 = vrot.lane.b32.xlu0 %v6296, 126
    %v6305 = vpop.permute.xlu0 %6304
    %6306 = vrot.lane.b32.xlu0 %v6298, 126
    %v6307 = vpop.permute.xlu0 %6306
    %6308 = vrot.lane.b32.xlu0 %v6301, 126
    %v6309 = vpop.permute.xlu0 %6308
    %6310 = vrot.lane.b32.xlu0 %v6303, 126
    %v6311 = vpop.permute.xlu0 %6310
    %v6316 = vadd.f32 %v5996, %v6305
    %v6317 = vadd.f32 %v5997, %v6307
    %v6318 = vadd.f32 %v5998, %v6309
    %v6319 = vadd.f32 %v5999, %v6311
    %s6320 = sld [smem:[#allocation2 + $0x93]]
    %v6321 = vstv %s6320
    %v6322 = vmul.f32 %v6321, %v46
    %v6323 = vmul.f32 %v6321, %v47
    %v6324 = vmul.f32 %v6321, %v48
    %v6325 = vmul.f32 %v6321, %v49
    %v6326 = vmul.f32 %v6321, %v50
    %v6327 = vmul.f32 %v6321, %v51
    %v6334 = vrot.slane %v6322, 4
    %v6335 = vrot.slane %v6323, 4
    %v6336 = vsel %vm5557, %v6334, %v6335
    %v6337 = vrot.slane %v6324, 4
    %v6338 = vsel %vm5557, %v6335, %v6337
    %v6339 = vrot.slane %v6325, 4
    %v6340 = vrot.slane %v6326, 4
    %v6341 = vsel %vm5557, %v6339, %v6340
    %v6342 = vrot.slane %v6327, 4
    %v6343 = vsel %vm5557, %v6340, %v6342
    %6344 = vrot.lane.b32.xlu0 %v6336, 126
    %v6345 = vpop.permute.xlu0 %6344
    %6346 = vrot.lane.b32.xlu0 %v6338, 126
    %v6347 = vpop.permute.xlu0 %6346
    %6348 = vrot.lane.b32.xlu0 %v6341, 126
    %v6349 = vpop.permute.xlu0 %6348
    %6350 = vrot.lane.b32.xlu0 %v6343, 126
    %v6351 = vpop.permute.xlu0 %6350
    %v6356 = vadd.f32 %v6036, %v6345
    %v6357 = vadd.f32 %v6037, %v6347
    %v6358 = vadd.f32 %v6038, %v6349
    %v6359 = vadd.f32 %v6039, %v6351
    %s6360 = sld [smem:[#allocation2 + $0xac]]
    %v6361 = vstv %s6360
    %v6362 = vmul.f32 %v6361, %v46
    %v6363 = vmul.f32 %v6361, %v47
    %v6364 = vmul.f32 %v6361, %v48
    %v6365 = vmul.f32 %v6361, %v49
    %v6366 = vmul.f32 %v6361, %v50
    %v6367 = vmul.f32 %v6361, %v51
    %v6374 = vrot.slane %v6362, 4
    %v6375 = vrot.slane %v6363, 4
    %v6376 = vsel %vm5557, %v6374, %v6375
    %v6377 = vrot.slane %v6364, 4
    %v6378 = vsel %vm5557, %v6375, %v6377
    %v6379 = vrot.slane %v6365, 4
    %v6380 = vrot.slane %v6366, 4
    %v6381 = vsel %vm5557, %v6379, %v6380
    %v6382 = vrot.slane %v6367, 4
    %v6383 = vsel %vm5557, %v6380, %v6382
    %6384 = vrot.lane.b32.xlu0 %v6376, 126
    %v6385 = vpop.permute.xlu0 %6384
    %6386 = vrot.lane.b32.xlu0 %v6378, 126
    %v6387 = vpop.permute.xlu0 %6386
    %6388 = vrot.lane.b32.xlu0 %v6381, 126
    %v6389 = vpop.permute.xlu0 %6388
    %6390 = vrot.lane.b32.xlu0 %v6383, 126
    %v6391 = vpop.permute.xlu0 %6390
    %v6396 = vadd.f32 %v6076, %v6385
    %v6397 = vadd.f32 %v6077, %v6387
    %v6398 = vadd.f32 %v6078, %v6389
    %v6399 = vadd.f32 %v6079, %v6391
    %s6400 = sld [smem:[#allocation2 + $0xc5]]
    %v6401 = vstv %s6400
    %v6402 = vmul.f32 %v6401, %v46
    %v6403 = vmul.f32 %v6401, %v47
    %v6404 = vmul.f32 %v6401, %v48
    %v6405 = vmul.f32 %v6401, %v49
    %v6406 = vmul.f32 %v6401, %v50
    %v6407 = vmul.f32 %v6401, %v51
    %v6414 = vrot.slane %v6402, 4
    %v6415 = vrot.slane %v6403, 4
    %v6416 = vsel %vm5557, %v6414, %v6415
    %v6417 = vrot.slane %v6404, 4
    %v6418 = vsel %vm5557, %v6415, %v6417
    %v6419 = vrot.slane %v6405, 4
    %v6420 = vrot.slane %v6406, 4
    %v6421 = vsel %vm5557, %v6419, %v6420
    %v6422 = vrot.slane %v6407, 4
    %v6423 = vsel %vm5557, %v6420, %v6422
    %6424 = vrot.lane.b32.xlu0 %v6416, 126
    %v6425 = vpop.permute.xlu0 %6424
    %6426 = vrot.lane.b32.xlu0 %v6418, 126
    %v6427 = vpop.permute.xlu0 %6426
    %6428 = vrot.lane.b32.xlu0 %v6421, 126
    %v6429 = vpop.permute.xlu0 %6428
    %6430 = vrot.lane.b32.xlu0 %v6423, 126
    %v6431 = vpop.permute.xlu0 %6430
    %v6436 = vadd.f32 %v6116, %v6425
    %v6437 = vadd.f32 %v6117, %v6427
    %v6438 = vadd.f32 %v6118, %v6429
    %v6439 = vadd.f32 %v6119, %v6431
    %s6440 = sld [smem:[#allocation2 + $0x17]]
    %v6441 = vstv %s6440
    %v6442 = vmul.f32 %v6441, %v46
    %v6443 = vmul.f32 %v6441, %v47
    %v6444 = vmul.f32 %v6441, %v48
    %v6445 = vmul.f32 %v6441, %v49
    %v6446 = vmul.f32 %v6441, %v50
    %v6447 = vmul.f32 %v6441, %v51
    %v6454 = vrot.slane %v6442, 4
    %v6455 = vrot.slane %v6443, 4
    %v6456 = vsel %vm5557, %v6454, %v6455
    %v6457 = vrot.slane %v6444, 4
    %v6458 = vsel %vm5557, %v6455, %v6457
    %v6459 = vrot.slane %v6445, 4
    %v6460 = vrot.slane %v6446, 4
    %v6461 = vsel %vm5557, %v6459, %v6460
    %v6462 = vrot.slane %v6447, 4
    %v6463 = vsel %vm5557, %v6460, %v6462
    %6464 = vrot.lane.b32.xlu0 %v6456, 125
    %v6465 = vpop.permute.xlu0 %6464
    %6466 = vrot.lane.b32.xlu0 %v6458, 125
    %v6467 = vpop.permute.xlu0 %6466
    %6468 = vrot.lane.b32.xlu0 %v6461, 125
    %v6469 = vpop.permute.xlu0 %6468
    %6470 = vrot.lane.b32.xlu0 %v6463, 125
    %v6471 = vpop.permute.xlu0 %6470
    %v6476 = vadd.f32 %v6156, %v6465
    %v6477 = vadd.f32 %v6157, %v6467
    %v6478 = vadd.f32 %v6158, %v6469
    %v6479 = vadd.f32 %v6159, %v6471
    %s6480 = sld [smem:[#allocation2 + $0x30]]
    %v6481 = vstv %s6480
    %v6482 = vmul.f32 %v6481, %v46
    %v6483 = vmul.f32 %v6481, %v47
    %v6484 = vmul.f32 %v6481, %v48
    %v6485 = vmul.f32 %v6481, %v49
    %v6486 = vmul.f32 %v6481, %v50
    %v6487 = vmul.f32 %v6481, %v51
    %v6494 = vrot.slane %v6482, 4
    %v6495 = vrot.slane %v6483, 4
    %v6496 = vsel %vm5557, %v6494, %v6495
    %v6497 = vrot.slane %v6484, 4
    %v6498 = vsel %vm5557, %v6495, %v6497
    %v6499 = vrot.slane %v6485, 4
    %v6500 = vrot.slane %v6486, 4
    %v6501 = vsel %vm5557, %v6499, %v6500
    %v6502 = vrot.slane %v6487, 4
    %v6503 = vsel %vm5557, %v6500, %v6502
    %6504 = vrot.lane.b32.xlu0 %v6496, 125
    %v6505 = vpop.permute.xlu0 %6504
    %6506 = vrot.lane.b32.xlu0 %v6498, 125
    %v6507 = vpop.permute.xlu0 %6506
    %6508 = vrot.lane.b32.xlu0 %v6501, 125
    %v6509 = vpop.permute.xlu0 %6508
    %6510 = vrot.lane.b32.xlu0 %v6503, 125
    %v6511 = vpop.permute.xlu0 %6510
    %v6516 = vadd.f32 %v6196, %v6505
    %v6517 = vadd.f32 %v6197, %v6507
    %v6518 = vadd.f32 %v6198, %v6509
    %v6519 = vadd.f32 %v6199, %v6511
    %s6520 = sld [smem:[#allocation2 + $0x49]]
    %v6521 = vstv %s6520
    %v6522 = vmul.f32 %v6521, %v46
    %v6523 = vmul.f32 %v6521, %v47
    %v6524 = vmul.f32 %v6521, %v48
    %v6525 = vmul.f32 %v6521, %v49
    %v6526 = vmul.f32 %v6521, %v50
    %v6527 = vmul.f32 %v6521, %v51
    %v6534 = vrot.slane %v6522, 4
    %v6535 = vrot.slane %v6523, 4
    %v6536 = vsel %vm5557, %v6534, %v6535
    %v6537 = vrot.slane %v6524, 4
    %v6538 = vsel %vm5557, %v6535, %v6537
    %v6539 = vrot.slane %v6525, 4
    %v6540 = vrot.slane %v6526, 4
    %v6541 = vsel %vm5557, %v6539, %v6540
    %v6542 = vrot.slane %v6527, 4
    %v6543 = vsel %vm5557, %v6540, %v6542
    %6544 = vrot.lane.b32.xlu0 %v6536, 125
    %v6545 = vpop.permute.xlu0 %6544
    %6546 = vrot.lane.b32.xlu0 %v6538, 125
    %v6547 = vpop.permute.xlu0 %6546
    %6548 = vrot.lane.b32.xlu0 %v6541, 125
    %v6549 = vpop.permute.xlu0 %6548
    %6550 = vrot.lane.b32.xlu0 %v6543, 125
    %v6551 = vpop.permute.xlu0 %6550
    %v6556 = vadd.f32 %v6236, %v6545
    %v6557 = vadd.f32 %v6237, %v6547
    %v6558 = vadd.f32 %v6238, %v6549
    %v6559 = vadd.f32 %v6239, %v6551
    %s6560 = sld [smem:[#allocation2 + $0x62]]
    %v6561 = vstv %s6560
    %v6562 = vmul.f32 %v6561, %v46
    %v6563 = vmul.f32 %v6561, %v47
    %v6564 = vmul.f32 %v6561, %v48
    %v6565 = vmul.f32 %v6561, %v49
    %v6566 = vmul.f32 %v6561, %v50
    %v6567 = vmul.f32 %v6561, %v51
    %v6574 = vrot.slane %v6562, 4
    %v6575 = vrot.slane %v6563, 4
    %v6576 = vsel %vm5557, %v6574, %v6575
    %v6577 = vrot.slane %v6564, 4
    %v6578 = vsel %vm5557, %v6575, %v6577
    %v6579 = vrot.slane %v6565, 4
    %v6580 = vrot.slane %v6566, 4
    %v6581 = vsel %vm5557, %v6579, %v6580
    %v6582 = vrot.slane %v6567, 4
    %v6583 = vsel %vm5557, %v6580, %v6582
    %6584 = vrot.lane.b32.xlu0 %v6576, 125
    %v6585 = vpop.permute.xlu0 %6584
    %6586 = vrot.lane.b32.xlu0 %v6578, 125
    %v6587 = vpop.permute.xlu0 %6586
    %6588 = vrot.lane.b32.xlu0 %v6581, 125
    %v6589 = vpop.permute.xlu0 %6588
    %6590 = vrot.lane.b32.xlu0 %v6583, 125
    %v6591 = vpop.permute.xlu0 %6590
    %v6596 = vadd.f32 %v6276, %v6585
    %v6597 = vadd.f32 %v6277, %v6587
    %v6598 = vadd.f32 %v6278, %v6589
    %v6599 = vadd.f32 %v6279, %v6591
    %s6600 = sld [smem:[#allocation2 + $0x7b]]
    %v6601 = vstv %s6600
    %v6602 = vmul.f32 %v6601, %v46
    %v6603 = vmul.f32 %v6601, %v47
    %v6604 = vmul.f32 %v6601, %v48
    %v6605 = vmul.f32 %v6601, %v49
    %v6606 = vmul.f32 %v6601, %v50
    %v6607 = vmul.f32 %v6601, %v51
    %v6614 = vrot.slane %v6602, 4
    %v6615 = vrot.slane %v6603, 4
    %v6616 = vsel %vm5557, %v6614, %v6615
    %v6617 = vrot.slane %v6604, 4
    %v6618 = vsel %vm5557, %v6615, %v6617
    %v6619 = vrot.slane %v6605, 4
    %v6620 = vrot.slane %v6606, 4
    %v6621 = vsel %vm5557, %v6619, %v6620
    %v6622 = vrot.slane %v6607, 4
    %v6623 = vsel %vm5557, %v6620, %v6622
    %6624 = vrot.lane.b32.xlu0 %v6616, 125
    %v6625 = vpop.permute.xlu0 %6624
    %6626 = vrot.lane.b32.xlu0 %v6618, 125
    %v6627 = vpop.permute.xlu0 %6626
    %6628 = vrot.lane.b32.xlu0 %v6621, 125
    %v6629 = vpop.permute.xlu0 %6628
    %6630 = vrot.lane.b32.xlu0 %v6623, 125
    %v6631 = vpop.permute.xlu0 %6630
    %v6636 = vadd.f32 %v6316, %v6625
    %v6637 = vadd.f32 %v6317, %v6627
    %v6638 = vadd.f32 %v6318, %v6629
    %v6639 = vadd.f32 %v6319, %v6631
    %s6640 = sld [smem:[#allocation2 + $0x94]]
    %v6641 = vstv %s6640
    %v6642 = vmul.f32 %v6641, %v46
    %v6643 = vmul.f32 %v6641, %v47
    %v6644 = vmul.f32 %v6641, %v48
    %v6645 = vmul.f32 %v6641, %v49
    %v6646 = vmul.f32 %v6641, %v50
    %v6647 = vmul.f32 %v6641, %v51
    %v6654 = vrot.slane %v6642, 4
    %v6655 = vrot.slane %v6643, 4
    %v6656 = vsel %vm5557, %v6654, %v6655
    %v6657 = vrot.slane %v6644, 4
    %v6658 = vsel %vm5557, %v6655, %v6657
    %v6659 = vrot.slane %v6645, 4
    %v6660 = vrot.slane %v6646, 4
    %v6661 = vsel %vm5557, %v6659, %v6660
    %v6662 = vrot.slane %v6647, 4
    %v6663 = vsel %vm5557, %v6660, %v6662
    %6664 = vrot.lane.b32.xlu0 %v6656, 125
    %v6665 = vpop.permute.xlu0 %6664
    %6666 = vrot.lane.b32.xlu0 %v6658, 125
    %v6667 = vpop.permute.xlu0 %6666
    %6668 = vrot.lane.b32.xlu0 %v6661, 125
    %v6669 = vpop.permute.xlu0 %6668
    %6670 = vrot.lane.b32.xlu0 %v6663, 125
    %v6671 = vpop.permute.xlu0 %6670
    %v6676 = vadd.f32 %v6356, %v6665
    %v6677 = vadd.f32 %v6357, %v6667
    %v6678 = vadd.f32 %v6358, %v6669
    %v6679 = vadd.f32 %v6359, %v6671
    %s6680 = sld [smem:[#allocation2 + $0xad]]
    %v6681 = vstv %s6680
    %v6682 = vmul.f32 %v6681, %v46
    %v6683 = vmul.f32 %v6681, %v47
    %v6684 = vmul.f32 %v6681, %v48
    %v6685 = vmul.f32 %v6681, %v49
    %v6686 = vmul.f32 %v6681, %v50
    %v6687 = vmul.f32 %v6681, %v51
    %v6694 = vrot.slane %v6682, 4
    %v6695 = vrot.slane %v6683, 4
    %v6696 = vsel %vm5557, %v6694, %v6695
    %v6697 = vrot.slane %v6684, 4
    %v6698 = vsel %vm5557, %v6695, %v6697
    %v6699 = vrot.slane %v6685, 4
    %v6700 = vrot.slane %v6686, 4
    %v6701 = vsel %vm5557, %v6699, %v6700
    %v6702 = vrot.slane %v6687, 4
    %v6703 = vsel %vm5557, %v6700, %v6702
    %6704 = vrot.lane.b32.xlu0 %v6696, 125
    %v6705 = vpop.permute.xlu0 %6704
    %6706 = vrot.lane.b32.xlu0 %v6698, 125
    %v6707 = vpop.permute.xlu0 %6706
    %6708 = vrot.lane.b32.xlu0 %v6701, 125
    %v6709 = vpop.permute.xlu0 %6708
    %6710 = vrot.lane.b32.xlu0 %v6703, 125
    %v6711 = vpop.permute.xlu0 %6710
    %v6716 = vadd.f32 %v6396, %v6705
    %v6717 = vadd.f32 %v6397, %v6707
    %v6718 = vadd.f32 %v6398, %v6709
    %v6719 = vadd.f32 %v6399, %v6711
    %s6720 = sld [smem:[#allocation2 + $0xc6]]
    %v6721 = vstv %s6720
    %v6722 = vmul.f32 %v6721, %v46
    %v6723 = vmul.f32 %v6721, %v47
    %v6724 = vmul.f32 %v6721, %v48
    %v6725 = vmul.f32 %v6721, %v49
    %v6726 = vmul.f32 %v6721, %v50
    %v6727 = vmul.f32 %v6721, %v51
    %v6734 = vrot.slane %v6722, 4
    %v6735 = vrot.slane %v6723, 4
    %v6736 = vsel %vm5557, %v6734, %v6735
    %v6737 = vrot.slane %v6724, 4
    %v6738 = vsel %vm5557, %v6735, %v6737
    %v6739 = vrot.slane %v6725, 4
    %v6740 = vrot.slane %v6726, 4
    %v6741 = vsel %vm5557, %v6739, %v6740
    %v6742 = vrot.slane %v6727, 4
    %v6743 = vsel %vm5557, %v6740, %v6742
    %6744 = vrot.lane.b32.xlu0 %v6736, 125
    %v6745 = vpop.permute.xlu0 %6744
    %6746 = vrot.lane.b32.xlu0 %v6738, 125
    %v6747 = vpop.permute.xlu0 %6746
    %6748 = vrot.lane.b32.xlu0 %v6741, 125
    %v6749 = vpop.permute.xlu0 %6748
    %6750 = vrot.lane.b32.xlu0 %v6743, 125
    %v6751 = vpop.permute.xlu0 %6750
    %v6756 = vadd.f32 %v6436, %v6745
    %v6757 = vadd.f32 %v6437, %v6747
    %v6758 = vadd.f32 %v6438, %v6749
    %v6759 = vadd.f32 %v6439, %v6751
    %s6760 = sld [smem:[#allocation2 + $0x18]]
    %v6761 = vstv %s6760
    %v6762 = vmul.f32 %v6761, %v46
    %v6763 = vmul.f32 %v6761, %v47
    %v6764 = vmul.f32 %v6761, %v48
    %v6765 = vmul.f32 %v6761, %v49
    %v6766 = vmul.f32 %v6761, %v50
    %v6767 = vmul.f32 %v6761, %v51
    %v6774 = vrot.slane %v6762, 4
    %v6775 = vrot.slane %v6763, 4
    %v6776 = vsel %vm5557, %v6774, %v6775
    %v6777 = vrot.slane %v6764, 4
    %v6778 = vsel %vm5557, %v6775, %v6777
    %v6779 = vrot.slane %v6765, 4
    %v6780 = vrot.slane %v6766, 4
    %v6781 = vsel %vm5557, %v6779, %v6780
    %v6782 = vrot.slane %v6767, 4
    %v6783 = vsel %vm5557, %v6780, %v6782
    %6784 = vrot.lane.b32.xlu0 %v6776, 124
    %v6785 = vpop.permute.xlu0 %6784
    %6786 = vrot.lane.b32.xlu0 %v6778, 124
    %v6787 = vpop.permute.xlu0 %6786
    %6788 = vrot.lane.b32.xlu0 %v6781, 124
    %v6789 = vpop.permute.xlu0 %6788
    %6790 = vrot.lane.b32.xlu0 %v6783, 124
    %v6791 = vpop.permute.xlu0 %6790
    %v6796 = vadd.f32 %v6476, %v6785
    %v6797 = vadd.f32 %v6477, %v6787
    %v6798 = vadd.f32 %v6478, %v6789
    %v6799 = vadd.f32 %v6479, %v6791
    %s6800 = sld [smem:[#allocation2 + $0x31]]
    %v6801 = vstv %s6800
    %v6802 = vmul.f32 %v6801, %v46
    %v6803 = vmul.f32 %v6801, %v47
    %v6804 = vmul.f32 %v6801, %v48
    %v6805 = vmul.f32 %v6801, %v49
    %v6806 = vmul.f32 %v6801, %v50
    %v6807 = vmul.f32 %v6801, %v51
    %v6814 = vrot.slane %v6802, 4
    %v6815 = vrot.slane %v6803, 4
    %v6816 = vsel %vm5557, %v6814, %v6815
    %v6817 = vrot.slane %v6804, 4
    %v6818 = vsel %vm5557, %v6815, %v6817
    %v6819 = vrot.slane %v6805, 4
    %v6820 = vrot.slane %v6806, 4
    %v6821 = vsel %vm5557, %v6819, %v6820
    %v6822 = vrot.slane %v6807, 4
    %v6823 = vsel %vm5557, %v6820, %v6822
    %6824 = vrot.lane.b32.xlu0 %v6816, 124
    %v6825 = vpop.permute.xlu0 %6824
    %6826 = vrot.lane.b32.xlu0 %v6818, 124
    %v6827 = vpop.permute.xlu0 %6826
    %6828 = vrot.lane.b32.xlu0 %v6821, 124
    %v6829 = vpop.permute.xlu0 %6828
    %6830 = vrot.lane.b32.xlu0 %v6823, 124
    %v6831 = vpop.permute.xlu0 %6830
    %v6836 = vadd.f32 %v6516, %v6825
    %v6837 = vadd.f32 %v6517, %v6827
    %v6838 = vadd.f32 %v6518, %v6829
    %v6839 = vadd.f32 %v6519, %v6831
    %s6840 = sld [smem:[#allocation2 + $0x4a]]
    %v6841 = vstv %s6840
    %v6842 = vmul.f32 %v6841, %v46
    %v6843 = vmul.f32 %v6841, %v47
    %v6844 = vmul.f32 %v6841, %v48
    %v6845 = vmul.f32 %v6841, %v49
    %v6846 = vmul.f32 %v6841, %v50
    %v6847 = vmul.f32 %v6841, %v51
    %v6854 = vrot.slane %v6842, 4
    %v6855 = vrot.slane %v6843, 4
    %v6856 = vsel %vm5557, %v6854, %v6855
    %v6857 = vrot.slane %v6844, 4
    %v6858 = vsel %vm5557, %v6855, %v6857
    %v6859 = vrot.slane %v6845, 4
    %v6860 = vrot.slane %v6846, 4
    %v6861 = vsel %vm5557, %v6859, %v6860
    %v6862 = vrot.slane %v6847, 4
    %v6863 = vsel %vm5557, %v6860, %v6862
    %6864 = vrot.lane.b32.xlu0 %v6856, 124
    %v6865 = vpop.permute.xlu0 %6864
    %6866 = vrot.lane.b32.xlu0 %v6858, 124
    %v6867 = vpop.permute.xlu0 %6866
    %6868 = vrot.lane.b32.xlu0 %v6861, 124
    %v6869 = vpop.permute.xlu0 %6868
    %6870 = vrot.lane.b32.xlu0 %v6863, 124
    %v6871 = vpop.permute.xlu0 %6870
    %v6876 = vadd.f32 %v6556, %v6865
    %v6877 = vadd.f32 %v6557, %v6867
    %v6878 = vadd.f32 %v6558, %v6869
    %v6879 = vadd.f32 %v6559, %v6871
    %s6880 = sld [smem:[#allocation2 + $0x63]]
    %v6881 = vstv %s6880
    %v6882 = vmul.f32 %v6881, %v46
    %v6883 = vmul.f32 %v6881, %v47
    %v6884 = vmul.f32 %v6881, %v48
    %v6885 = vmul.f32 %v6881, %v49
    %v6886 = vmul.f32 %v6881, %v50
    %v6887 = vmul.f32 %v6881, %v51
    %v6894 = vrot.slane %v6882, 4
    %v6895 = vrot.slane %v6883, 4
    %v6896 = vsel %vm5557, %v6894, %v6895
    %v6897 = vrot.slane %v6884, 4
    %v6898 = vsel %vm5557, %v6895, %v6897
    %v6899 = vrot.slane %v6885, 4
    %v6900 = vrot.slane %v6886, 4
    %v6901 = vsel %vm5557, %v6899, %v6900
    %v6902 = vrot.slane %v6887, 4
    %v6903 = vsel %vm5557, %v6900, %v6902
    %6904 = vrot.lane.b32.xlu0 %v6896, 124
    %v6905 = vpop.permute.xlu0 %6904
    %6906 = vrot.lane.b32.xlu0 %v6898, 124
    %v6907 = vpop.permute.xlu0 %6906
    %6908 = vrot.lane.b32.xlu0 %v6901, 124
    %v6909 = vpop.permute.xlu0 %6908
    %6910 = vrot.lane.b32.xlu0 %v6903, 124
    %v6911 = vpop.permute.xlu0 %6910
    %v6916 = vadd.f32 %v6596, %v6905
    %v6917 = vadd.f32 %v6597, %v6907
    %v6918 = vadd.f32 %v6598, %v6909
    %v6919 = vadd.f32 %v6599, %v6911
    %s6920 = sld [smem:[#allocation2 + $0x7c]]
    %v6921 = vstv %s6920
    %v6922 = vmul.f32 %v6921, %v46
    %v6923 = vmul.f32 %v6921, %v47
    %v6924 = vmul.f32 %v6921, %v48
    %v6925 = vmul.f32 %v6921, %v49
    %v6926 = vmul.f32 %v6921, %v50
    %v6927 = vmul.f32 %v6921, %v51
    %v6934 = vrot.slane %v6922, 4
    %v6935 = vrot.slane %v6923, 4
    %v6936 = vsel %vm5557, %v6934, %v6935
    %v6937 = vrot.slane %v6924, 4
    %v6938 = vsel %vm5557, %v6935, %v6937
    %v6939 = vrot.slane %v6925, 4
    %v6940 = vrot.slane %v6926, 4
    %v6941 = vsel %vm5557, %v6939, %v6940
    %v6942 = vrot.slane %v6927, 4
    %v6943 = vsel %vm5557, %v6940, %v6942
    %6944 = vrot.lane.b32.xlu0 %v6936, 124
    %v6945 = vpop.permute.xlu0 %6944
    %6946 = vrot.lane.b32.xlu0 %v6938, 124
    %v6947 = vpop.permute.xlu0 %6946
    %6948 = vrot.lane.b32.xlu0 %v6941, 124
    %v6949 = vpop.permute.xlu0 %6948
    %6950 = vrot.lane.b32.xlu0 %v6943, 124
    %v6951 = vpop.permute.xlu0 %6950
    %v6956 = vadd.f32 %v6636, %v6945
    %v6957 = vadd.f32 %v6637, %v6947
    %v6958 = vadd.f32 %v6638, %v6949
    %v6959 = vadd.f32 %v6639, %v6951
    %s6960 = sld [smem:[#allocation2 + $0x95]]
    %v6961 = vstv %s6960
    %v6962 = vmul.f32 %v6961, %v46
    %v6963 = vmul.f32 %v6961, %v47
    %v6964 = vmul.f32 %v6961, %v48
    %v6965 = vmul.f32 %v6961, %v49
    %v6966 = vmul.f32 %v6961, %v50
    %v6967 = vmul.f32 %v6961, %v51
    %v6974 = vrot.slane %v6962, 4
    %v6975 = vrot.slane %v6963, 4
    %v6976 = vsel %vm5557, %v6974, %v6975
    %v6977 = vrot.slane %v6964, 4
    %v6978 = vsel %vm5557, %v6975, %v6977
    %v6979 = vrot.slane %v6965, 4
    %v6980 = vrot.slane %v6966, 4
    %v6981 = vsel %vm5557, %v6979, %v6980
    %v6982 = vrot.slane %v6967, 4
    %v6983 = vsel %vm5557, %v6980, %v6982
    %6984 = vrot.lane.b32.xlu0 %v6976, 124
    %v6985 = vpop.permute.xlu0 %6984
    %6986 = vrot.lane.b32.xlu0 %v6978, 124
    %v6987 = vpop.permute.xlu0 %6986
    %6988 = vrot.lane.b32.xlu0 %v6981, 124
    %v6989 = vpop.permute.xlu0 %6988
    %6990 = vrot.lane.b32.xlu0 %v6983, 124
    %v6991 = vpop.permute.xlu0 %6990
    %v6996 = vadd.f32 %v6676, %v6985
    %v6997 = vadd.f32 %v6677, %v6987
    %v6998 = vadd.f32 %v6678, %v6989
    %v6999 = vadd.f32 %v6679, %v6991
    %s7000 = sld [smem:[#allocation2 + $0xae]]
    %v7001 = vstv %s7000
    %v7002 = vmul.f32 %v7001, %v46
    %v7003 = vmul.f32 %v7001, %v47
    %v7004 = vmul.f32 %v7001, %v48
    %v7005 = vmul.f32 %v7001, %v49
    %v7006 = vmul.f32 %v7001, %v50
    %v7007 = vmul.f32 %v7001, %v51
    %v7014 = vrot.slane %v7002, 4
    %v7015 = vrot.slane %v7003, 4
    %v7016 = vsel %vm5557, %v7014, %v7015
    %v7017 = vrot.slane %v7004, 4
    %v7018 = vsel %vm5557, %v7015, %v7017
    %v7019 = vrot.slane %v7005, 4
    %v7020 = vrot.slane %v7006, 4
    %v7021 = vsel %vm5557, %v7019, %v7020
    %v7022 = vrot.slane %v7007, 4
    %v7023 = vsel %vm5557, %v7020, %v7022
    %7024 = vrot.lane.b32.xlu0 %v7016, 124
    %v7025 = vpop.permute.xlu0 %7024
    %7026 = vrot.lane.b32.xlu0 %v7018, 124
    %v7027 = vpop.permute.xlu0 %7026
    %7028 = vrot.lane.b32.xlu0 %v7021, 124
    %v7029 = vpop.permute.xlu0 %7028
    %7030 = vrot.lane.b32.xlu0 %v7023, 124
    %v7031 = vpop.permute.xlu0 %7030
    %v7036 = vadd.f32 %v6716, %v7025
    %v7037 = vadd.f32 %v6717, %v7027
    %v7038 = vadd.f32 %v6718, %v7029
    %v7039 = vadd.f32 %v6719, %v7031
    %s7040 = sld [smem:[#allocation2 + $0xc7]]
    %v7041 = vstv %s7040
    %v7042 = vmul.f32 %v7041, %v46
    %v7043 = vmul.f32 %v7041, %v47
    %v7044 = vmul.f32 %v7041, %v48
    %v7045 = vmul.f32 %v7041, %v49
    %v7046 = vmul.f32 %v7041, %v50
    %v7047 = vmul.f32 %v7041, %v51
    %v7054 = vrot.slane %v7042, 4
    %v7055 = vrot.slane %v7043, 4
    %v7056 = vsel %vm5557, %v7054, %v7055
    %v7057 = vrot.slane %v7044, 4
    %v7058 = vsel %vm5557, %v7055, %v7057
    %v7059 = vrot.slane %v7045, 4
    %v7060 = vrot.slane %v7046, 4
    %v7061 = vsel %vm5557, %v7059, %v7060
    %v7062 = vrot.slane %v7047, 4
    %v7063 = vsel %vm5557, %v7060, %v7062
    %7064 = vrot.lane.b32.xlu0 %v7056, 124
    %v7065 = vpop.permute.xlu0 %7064
    %7066 = vrot.lane.b32.xlu0 %v7058, 124
    %v7067 = vpop.permute.xlu0 %7066
    %7068 = vrot.lane.b32.xlu0 %v7061, 124
    %v7069 = vpop.permute.xlu0 %7068
    %7070 = vrot.lane.b32.xlu0 %v7063, 124
    %v7071 = vpop.permute.xlu0 %7070
    %v7076 = vadd.f32 %v6756, %v7065
    %v7077 = vadd.f32 %v6757, %v7067
    %v7078 = vadd.f32 %v6758, %v7069
    %v7079 = vadd.f32 %v6759, %v7071
    %v7080 = vld [vmem:[%s4] sm:$0x1]
    %s7081 = sld [smem:[#allocation5]]
    %v7082 = vstv %s7081
    %v7083 = vadd.f32 %v6796, %v7082
    %v7084 = vadd.f32 %v6797, %v7082
    %v7085 = vadd.f32 %v6798, %v7082
    %v7086 = vadd.f32 %v6799, %v7082
    %v7087 = vmax.f32 %v7083, 0.0
    %v7088 = vmax.f32 %v7084, 0.0
    %v7089 = vmax.f32 %v7085, 0.0
    %v7090 = vmax.f32 %v7086, 0.0
    %vm7091 = vcmask 130048
    %v7092 = vsel %vm7091, %v7087, 0.0
    %7093 = vadd.xlane.f32.xlu0 %v7092
    %v7094 = vpop.xlane.xlu0 %7093
    %v7095 = vsel %vm7091, %v7088, 0.0
    %7096 = vadd.xlane.f32.xlu0 %v7095
    %v7097 = vpop.xlane.xlu0 %7096
    %v7098 = vsel %vm7091, %v7089, 0.0
    %7099 = vadd.xlane.f32.xlu0 %v7098
    %v7100 = vpop.xlane.xlu0 %7099
    %v7101 = vsel %vm7091, %v7090, 0.0
    %7102 = vadd.xlane.f32.xlu0 %v7101
    %v7103 = vpop.xlane.xlu0 %7102
    %v7108 = vlaneseq
    %v7109 = vand.u32 %v7108, 127
    %v7110 = vlaneseq
    %v7111 = vshrl.u32 %v7110, 7
    %v7112 = vsub.s32 %v7109, %v7111
    %v7113 = vrot.slane %v7094, %v7112
    %v7114 = vadd.s32 %v7109, 4294967288
    %v7115 = vlaneseq
    %v7116 = vshrl.u32 %v7115, 7
    %v7117 = vsub.s32 %v7114, %v7116
    %v7118 = vrot.slane %v7097, %v7117
    %vm7119 = vcmask 130112
    %v7120 = vsel %vm7119, %v7118, %v7113
    %v7121 = vlaneseq
    %v7122 = vshrl.u32 %v7121, 7
    %v7123 = vsub.s32 %v7109, %v7122
    %v7124 = vrot.slane %v7100, %v7123
    %v7125 = vlaneseq
    %v7126 = vshrl.u32 %v7125, 7
    %v7127 = vsub.s32 %v7114, %v7126
    %v7128 = vrot.slane %v7103, %v7127
    %v7129 = vsel %vm7119, %v7128, %v7124
    %vm7130 = vcmask 1041409
    %v7131 = vsel %vm7130, %v7129, %v7120
    %vm7133 = vcmask 123904
    %v7134 = vsel %vm7133, %v7131, 0.0
    %7135 = vadd.xlane.f32.xlu0 %v7134
    %v7136 = vpop.xlane.xlu0 %7135
    %v7137 = vmul.f32 %v7136, 0.00390625
    %v7138 = vld [vmem:[%s3] sm:$0x1]
    %v7139 = vlaneseq
    %v7140 = vshrl.u32 %v7139, 7
    %v7141 = vsub.s32 0, %v7140
    %v7142 = vrot.slane %v7138, %v7141
    %v7143 = vmul.f32 %v7137, %v7142
    %v7145 = vlaneseq
    %v7146 = vshrl.u32 %v7145, 7
    %v7147 = vsub.s32 0, %v7146
    %v7148 = vrot.slane %v7080, %v7147
    %v7150 = vadd.f32 %v7148, %v7143
    %s7151 = sld [smem:[#allocation5 + $0x1]]
    %v7152 = vstv %s7151
    %v7153 = vadd.f32 %v6836, %v7152
    %v7154 = vadd.f32 %v6837, %v7152
    %v7155 = vadd.f32 %v6838, %v7152
    %v7156 = vadd.f32 %v6839, %v7152
    %v7157 = vmax.f32 %v7153, 0.0
    %v7158 = vmax.f32 %v7154, 0.0
    %v7159 = vmax.f32 %v7155, 0.0
    %v7160 = vmax.f32 %v7156, 0.0
    %v7161 = vsel %vm7091, %v7157, 0.0
    %7162 = vadd.xlane.f32.xlu0 %v7161
    %v7163 = vpop.xlane.xlu0 %7162
    %v7164 = vsel %vm7091, %v7158, 0.0
    %7165 = vadd.xlane.f32.xlu0 %v7164
    %v7166 = vpop.xlane.xlu0 %7165
    %v7167 = vsel %vm7091, %v7159, 0.0
    %7168 = vadd.xlane.f32.xlu0 %v7167
    %v7169 = vpop.xlane.xlu0 %7168
    %v7170 = vsel %vm7091, %v7160, 0.0
    %7171 = vadd.xlane.f32.xlu0 %v7170
    %v7172 = vpop.xlane.xlu0 %7171
    %v7177 = vlaneseq
    %v7178 = vshrl.u32 %v7177, 7
    %v7179 = vsub.s32 %v7109, %v7178
    %v7180 = vrot.slane %v7163, %v7179
    %v7181 = vlaneseq
    %v7182 = vshrl.u32 %v7181, 7
    %v7183 = vsub.s32 %v7114, %v7182
    %v7184 = vrot.slane %v7166, %v7183
    %v7185 = vsel %vm7119, %v7184, %v7180
    %v7186 = vlaneseq
    %v7187 = vshrl.u32 %v7186, 7
    %v7188 = vsub.s32 %v7109, %v7187
    %v7189 = vrot.slane %v7169, %v7188
    %v7190 = vlaneseq
    %v7191 = vshrl.u32 %v7190, 7
    %v7192 = vsub.s32 %v7114, %v7191
    %v7193 = vrot.slane %v7172, %v7192
    %v7194 = vsel %vm7119, %v7193, %v7189
    %v7195 = vsel %vm7130, %v7194, %v7185
    %v7197 = vsel %vm7133, %v7195, 0.0
    %7198 = vadd.xlane.f32.xlu0 %v7197
    %v7199 = vpop.xlane.xlu0 %7198
    %v7200 = vmul.f32 %v7199, 0.00390625
    %v7201 = vld [vmem:[%s3 + $0x1] sm:$0x1]
    %v7202 = vlaneseq
    %v7203 = vshrl.u32 %v7202, 7
    %v7204 = vsub.s32 0, %v7203
    %v7205 = vrot.slane %v7201, %v7204
    %v7206 = vmul.f32 %v7200, %v7205
    %v7207 = vadd.f32 %v7150, %v7206
    %s7208 = sld [smem:[#allocation5 + $0x2]]
    %v7209 = vstv %s7208
    %v7210 = vadd.f32 %v6876, %v7209
    %v7211 = vadd.f32 %v6877, %v7209
    %v7212 = vadd.f32 %v6878, %v7209
    %v7213 = vadd.f32 %v6879, %v7209
    %v7214 = vmax.f32 %v7210, 0.0
    %v7215 = vmax.f32 %v7211, 0.0
    %v7216 = vmax.f32 %v7212, 0.0
    %v7217 = vmax.f32 %v7213, 0.0
    %v7218 = vsel %vm7091, %v7214, 0.0
    %7219 = vadd.xlane.f32.xlu0 %v7218
    %v7220 = vpop.xlane.xlu0 %7219
    %v7221 = vsel %vm7091, %v7215, 0.0
    %7222 = vadd.xlane.f32.xlu0 %v7221
    %v7223 = vpop.xlane.xlu0 %7222
    %v7224 = vsel %vm7091, %v7216, 0.0
    %7225 = vadd.xlane.f32.xlu0 %v7224
    %v7226 = vpop.xlane.xlu0 %7225
    %v7227 = vsel %vm7091, %v7217, 0.0
    %7228 = vadd.xlane.f32.xlu0 %v7227
    %v7229 = vpop.xlane.xlu0 %7228
    %v7234 = vlaneseq
    %v7235 = vshrl.u32 %v7234, 7
    %v7236 = vsub.s32 %v7109, %v7235
    %v7237 = vrot.slane %v7220, %v7236
    %v7238 = vlaneseq
    %v7239 = vshrl.u32 %v7238, 7
    %v7240 = vsub.s32 %v7114, %v7239
    %v7241 = vrot.slane %v7223, %v7240
    %v7242 = vsel %vm7119, %v7241, %v7237
    %v7243 = vlaneseq
    %v7244 = vshrl.u32 %v7243, 7
    %v7245 = vsub.s32 %v7109, %v7244
    %v7246 = vrot.slane %v7226, %v7245
    %v7247 = vlaneseq
    %v7248 = vshrl.u32 %v7247, 7
    %v7249 = vsub.s32 %v7114, %v7248
    %v7250 = vrot.slane %v7229, %v7249
    %v7251 = vsel %vm7119, %v7250, %v7246
    %v7252 = vsel %vm7130, %v7251, %v7242
    %v7254 = vsel %vm7133, %v7252, 0.0
    %7255 = vadd.xlane.f32.xlu0 %v7254
    %v7256 = vpop.xlane.xlu0 %7255
    %v7257 = vmul.f32 %v7256, 0.00390625
    %v7258 = vld [vmem:[%s3 + $0x2] sm:$0x1]
    %v7259 = vlaneseq
    %v7260 = vshrl.u32 %v7259, 7
    %v7261 = vsub.s32 0, %v7260
    %v7262 = vrot.slane %v7258, %v7261
    %v7263 = vmul.f32 %v7257, %v7262
    %v7264 = vadd.f32 %v7207, %v7263
    %s7265 = sld [smem:[#allocation5 + $0x3]]
    %v7266 = vstv %s7265
    %v7267 = vadd.f32 %v6916, %v7266
    %v7268 = vadd.f32 %v6917, %v7266
    %v7269 = vadd.f32 %v6918, %v7266
    %v7270 = vadd.f32 %v6919, %v7266
    %v7271 = vmax.f32 %v7267, 0.0
    %v7272 = vmax.f32 %v7268, 0.0
    %v7273 = vmax.f32 %v7269, 0.0
    %v7274 = vmax.f32 %v7270, 0.0
    %v7275 = vsel %vm7091, %v7271, 0.0
    %7276 = vadd.xlane.f32.xlu0 %v7275
    %v7277 = vpop.xlane.xlu0 %7276
    %v7278 = vsel %vm7091, %v7272, 0.0
    %7279 = vadd.xlane.f32.xlu0 %v7278
    %v7280 = vpop.xlane.xlu0 %7279
    %v7281 = vsel %vm7091, %v7273, 0.0
    %7282 = vadd.xlane.f32.xlu0 %v7281
    %v7283 = vpop.xlane.xlu0 %7282
    %v7284 = vsel %vm7091, %v7274, 0.0
    %7285 = vadd.xlane.f32.xlu0 %v7284
    %v7286 = vpop.xlane.xlu0 %7285
    %v7291 = vlaneseq
    %v7292 = vshrl.u32 %v7291, 7
    %v7293 = vsub.s32 %v7109, %v7292
    %v7294 = vrot.slane %v7277, %v7293
    %v7295 = vlaneseq
    %v7296 = vshrl.u32 %v7295, 7
    %v7297 = vsub.s32 %v7114, %v7296
    %v7298 = vrot.slane %v7280, %v7297
    %v7299 = vsel %vm7119, %v7298, %v7294
    %v7300 = vlaneseq
    %v7301 = vshrl.u32 %v7300, 7
    %v7302 = vsub.s32 %v7109, %v7301
    %v7303 = vrot.slane %v7283, %v7302
    %v7304 = vlaneseq
    %v7305 = vshrl.u32 %v7304, 7
    %v7306 = vsub.s32 %v7114, %v7305
    %v7307 = vrot.slane %v7286, %v7306
    %v7308 = vsel %vm7119, %v7307, %v7303
    %v7309 = vsel %vm7130, %v7308, %v7299
    %v7311 = vsel %vm7133, %v7309, 0.0
    %7312 = vadd.xlane.f32.xlu0 %v7311
    %v7313 = vpop.xlane.xlu0 %7312
    %v7314 = vmul.f32 %v7313, 0.00390625
    %v7315 = vld [vmem:[%s3 + $0x3] sm:$0x1]
    %v7316 = vlaneseq
    %v7317 = vshrl.u32 %v7316, 7
    %v7318 = vsub.s32 0, %v7317
    %v7319 = vrot.slane %v7315, %v7318
    %v7320 = vmul.f32 %v7314, %v7319
    %v7321 = vadd.f32 %v7264, %v7320
    %s7322 = sld [smem:[#allocation5 + $0x4]]
    %v7323 = vstv %s7322
    %v7324 = vadd.f32 %v6956, %v7323
    %v7325 = vadd.f32 %v6957, %v7323
    %v7326 = vadd.f32 %v6958, %v7323
    %v7327 = vadd.f32 %v6959, %v7323
    %v7328 = vmax.f32 %v7324, 0.0
    %v7329 = vmax.f32 %v7325, 0.0
    %v7330 = vmax.f32 %v7326, 0.0
    %v7331 = vmax.f32 %v7327, 0.0
    %v7332 = vsel %vm7091, %v7328, 0.0
    %7333 = vadd.xlane.f32.xlu0 %v7332
    %v7334 = vpop.xlane.xlu0 %7333
    %v7335 = vsel %vm7091, %v7329, 0.0
    %7336 = vadd.xlane.f32.xlu0 %v7335
    %v7337 = vpop.xlane.xlu0 %7336
    %v7338 = vsel %vm7091, %v7330, 0.0
    %7339 = vadd.xlane.f32.xlu0 %v7338
    %v7340 = vpop.xlane.xlu0 %7339
    %v7341 = vsel %vm7091, %v7331, 0.0
    %7342 = vadd.xlane.f32.xlu0 %v7341
    %v7343 = vpop.xlane.xlu0 %7342
    %v7348 = vlaneseq
    %v7349 = vshrl.u32 %v7348, 7
    %v7350 = vsub.s32 %v7109, %v7349
    %v7351 = vrot.slane %v7334, %v7350
    %v7352 = vlaneseq
    %v7353 = vshrl.u32 %v7352, 7
    %v7354 = vsub.s32 %v7114, %v7353
    %v7355 = vrot.slane %v7337, %v7354
    %v7356 = vsel %vm7119, %v7355, %v7351
    %v7357 = vlaneseq
    %v7358 = vshrl.u32 %v7357, 7
    %v7359 = vsub.s32 %v7109, %v7358
    %v7360 = vrot.slane %v7340, %v7359
    %v7361 = vlaneseq
    %v7362 = vshrl.u32 %v7361, 7
    %v7363 = vsub.s32 %v7114, %v7362
    %v7364 = vrot.slane %v7343, %v7363
    %v7365 = vsel %vm7119, %v7364, %v7360
    %v7366 = vsel %vm7130, %v7365, %v7356
    %v7368 = vsel %vm7133, %v7366, 0.0
    %7369 = vadd.xlane.f32.xlu0 %v7368
    %v7370 = vpop.xlane.xlu0 %7369
    %v7371 = vmul.f32 %v7370, 0.00390625
    %v7372 = vld [vmem:[%s3 + $0x4] sm:$0x1]
    %v7373 = vlaneseq
    %v7374 = vshrl.u32 %v7373, 7
    %v7375 = vsub.s32 0, %v7374
    %v7376 = vrot.slane %v7372, %v7375
    %v7377 = vmul.f32 %v7371, %v7376
    %v7378 = vadd.f32 %v7321, %v7377
    %s7379 = sld [smem:[#allocation5 + $0x5]]
    %v7380 = vstv %s7379
    %v7381 = vadd.f32 %v6996, %v7380
    %v7382 = vadd.f32 %v6997, %v7380
    %v7383 = vadd.f32 %v6998, %v7380
    %v7384 = vadd.f32 %v6999, %v7380
    %v7385 = vmax.f32 %v7381, 0.0
    %v7386 = vmax.f32 %v7382, 0.0
    %v7387 = vmax.f32 %v7383, 0.0
    %v7388 = vmax.f32 %v7384, 0.0
    %v7389 = vsel %vm7091, %v7385, 0.0
    %7390 = vadd.xlane.f32.xlu0 %v7389
    %v7391 = vpop.xlane.xlu0 %7390
    %v7392 = vsel %vm7091, %v7386, 0.0
    %7393 = vadd.xlane.f32.xlu0 %v7392
    %v7394 = vpop.xlane.xlu0 %7393
    %v7395 = vsel %vm7091, %v7387, 0.0
    %7396 = vadd.xlane.f32.xlu0 %v7395
    %v7397 = vpop.xlane.xlu0 %7396
    %v7398 = vsel %vm7091, %v7388, 0.0
    %7399 = vadd.xlane.f32.xlu0 %v7398
    %v7400 = vpop.xlane.xlu0 %7399
    %v7405 = vlaneseq
    %v7406 = vshrl.u32 %v7405, 7
    %v7407 = vsub.s32 %v7109, %v7406
    %v7408 = vrot.slane %v7391, %v7407
    %v7409 = vlaneseq
    %v7410 = vshrl.u32 %v7409, 7
    %v7411 = vsub.s32 %v7114, %v7410
    %v7412 = vrot.slane %v7394, %v7411
    %v7413 = vsel %vm7119, %v7412, %v7408
    %v7414 = vlaneseq
    %v7415 = vshrl.u32 %v7414, 7
    %v7416 = vsub.s32 %v7109, %v7415
    %v7417 = vrot.slane %v7397, %v7416
    %v7418 = vlaneseq
    %v7419 = vshrl.u32 %v7418, 7
    %v7420 = vsub.s32 %v7114, %v7419
    %v7421 = vrot.slane %v7400, %v7420
    %v7422 = vsel %vm7119, %v7421, %v7417
    %v7423 = vsel %vm7130, %v7422, %v7413
    %v7425 = vsel %vm7133, %v7423, 0.0
    %7426 = vadd.xlane.f32.xlu0 %v7425
    %v7427 = vpop.xlane.xlu0 %7426
    %v7428 = vmul.f32 %v7427, 0.00390625
    %v7429 = vld [vmem:[%s3 + $0x5] sm:$0x1]
    %v7430 = vlaneseq
    %v7431 = vshrl.u32 %v7430, 7
    %v7432 = vsub.s32 0, %v7431
    %v7433 = vrot.slane %v7429, %v7432
    %v7434 = vmul.f32 %v7428, %v7433
    %v7435 = vadd.f32 %v7378, %v7434
    %s7436 = sld [smem:[#allocation5 + $0x6]]
    %v7437 = vstv %s7436
    %v7438 = vadd.f32 %v7036, %v7437
    %v7439 = vadd.f32 %v7037, %v7437
    %v7440 = vadd.f32 %v7038, %v7437
    %v7441 = vadd.f32 %v7039, %v7437
    %v7442 = vmax.f32 %v7438, 0.0
    %v7443 = vmax.f32 %v7439, 0.0
    %v7444 = vmax.f32 %v7440, 0.0
    %v7445 = vmax.f32 %v7441, 0.0
    %v7446 = vsel %vm7091, %v7442, 0.0
    %7447 = vadd.xlane.f32.xlu0 %v7446
    %v7448 = vpop.xlane.xlu0 %7447
    %v7449 = vsel %vm7091, %v7443, 0.0
    %7450 = vadd.xlane.f32.xlu0 %v7449
    %v7451 = vpop.xlane.xlu0 %7450
    %v7452 = vsel %vm7091, %v7444, 0.0
    %7453 = vadd.xlane.f32.xlu0 %v7452
    %v7454 = vpop.xlane.xlu0 %7453
    %v7455 = vsel %vm7091, %v7445, 0.0
    %7456 = vadd.xlane.f32.xlu0 %v7455
    %v7457 = vpop.xlane.xlu0 %7456
    %v7462 = vlaneseq
    %v7463 = vshrl.u32 %v7462, 7
    %v7464 = vsub.s32 %v7109, %v7463
    %v7465 = vrot.slane %v7448, %v7464
    %v7466 = vlaneseq
    %v7467 = vshrl.u32 %v7466, 7
    %v7468 = vsub.s32 %v7114, %v7467
    %v7469 = vrot.slane %v7451, %v7468
    %v7470 = vsel %vm7119, %v7469, %v7465
    %v7471 = vlaneseq
    %v7472 = vshrl.u32 %v7471, 7
    %v7473 = vsub.s32 %v7109, %v7472
    %v7474 = vrot.slane %v7454, %v7473
    %v7475 = vlaneseq
    %v7476 = vshrl.u32 %v7475, 7
    %v7477 = vsub.s32 %v7114, %v7476
    %v7478 = vrot.slane %v7457, %v7477
    %v7479 = vsel %vm7119, %v7478, %v7474
    %v7480 = vsel %vm7130, %v7479, %v7470
    %v7482 = vsel %vm7133, %v7480, 0.0
    %7483 = vadd.xlane.f32.xlu0 %v7482
    %v7484 = vpop.xlane.xlu0 %7483
    %v7485 = vmul.f32 %v7484, 0.00390625
    %v7486 = vld [vmem:[%s3 + $0x6] sm:$0x1]
    %v7487 = vlaneseq
    %v7488 = vshrl.u32 %v7487, 7
    %v7489 = vsub.s32 0, %v7488
    %v7490 = vrot.slane %v7486, %v7489
    %v7491 = vmul.f32 %v7485, %v7490
    %v7492 = vadd.f32 %v7435, %v7491
    %s7493 = sld [smem:[#allocation5 + $0x7]]
    %v7494 = vstv %s7493
    %v7495 = vadd.f32 %v7076, %v7494
    %v7496 = vadd.f32 %v7077, %v7494
    %v7497 = vadd.f32 %v7078, %v7494
    %v7498 = vadd.f32 %v7079, %v7494
    %v7499 = vmax.f32 %v7495, 0.0
    %v7500 = vmax.f32 %v7496, 0.0
    %v7501 = vmax.f32 %v7497, 0.0
    %v7502 = vmax.f32 %v7498, 0.0
    %v7503 = vsel %vm7091, %v7499, 0.0
    %7504 = vadd.xlane.f32.xlu0 %v7503
    %v7505 = vpop.xlane.xlu0 %7504
    %v7506 = vsel %vm7091, %v7500, 0.0
    %7507 = vadd.xlane.f32.xlu0 %v7506
    %v7508 = vpop.xlane.xlu0 %7507
    %v7509 = vsel %vm7091, %v7501, 0.0
    %7510 = vadd.xlane.f32.xlu0 %v7509
    %v7511 = vpop.xlane.xlu0 %7510
    %v7512 = vsel %vm7091, %v7502, 0.0
    %7513 = vadd.xlane.f32.xlu0 %v7512
    %v7514 = vpop.xlane.xlu0 %7513
    %v7519 = vlaneseq
    %v7520 = vshrl.u32 %v7519, 7
    %v7521 = vsub.s32 %v7109, %v7520
    %v7522 = vrot.slane %v7505, %v7521
    %v7523 = vlaneseq
    %v7524 = vshrl.u32 %v7523, 7
    %v7525 = vsub.s32 %v7114, %v7524
    %v7526 = vrot.slane %v7508, %v7525
    %v7527 = vsel %vm7119, %v7526, %v7522
    %v7528 = vlaneseq
    %v7529 = vshrl.u32 %v7528, 7
    %v7530 = vsub.s32 %v7109, %v7529
    %v7531 = vrot.slane %v7511, %v7530
    %v7532 = vlaneseq
    %v7533 = vshrl.u32 %v7532, 7
    %v7534 = vsub.s32 %v7114, %v7533
    %v7535 = vrot.slane %v7514, %v7534
    %v7536 = vsel %vm7119, %v7535, %v7531
    %v7537 = vsel %vm7130, %v7536, %v7527
    %v7539 = vsel %vm7133, %v7537, 0.0
    %7540 = vadd.xlane.f32.xlu0 %v7539
    %v7541 = vpop.xlane.xlu0 %7540
    %v7542 = vmul.f32 %v7541, 0.00390625
    %v7543 = vld [vmem:[%s3 + $0x7] sm:$0x1]
    %v7544 = vlaneseq
    %v7545 = vshrl.u32 %v7544, 7
    %v7546 = vsub.s32 0, %v7545
    %v7547 = vrot.slane %v7543, %v7546
    %v7548 = vmul.f32 %v7542, %v7547
    %v7549 = vadd.f32 %v7492, %v7548
    %vm7550 = vcmask 74752
    %7551 = vst.msk [vmem:[#allocation7] sm:$0x3] %vm7550, %v7549
    // Predicated region
    $region30: #{simple_conv_forward.1} parent=1 // pred_check
      _
    $region31: #{simple_conv_forward.1} parent=1 // pred_check_branch
      %7553 = sbr.rel (0) target = $region33
    $region32: #{simple_conv_forward.1} parent=1 // pred_region
      %s7555 = ssub.s32 32, 32
      %7556 = vsyncadd [#allocation3], %s7555
      %s7558 = sshll.u32 [#allocation7], 4
      %s7559 = int_to_ptr.vmem [resolvable:$true] %s7558
      %7561 = dma.vmem_to_hbm [thread:$0]  %s7559, 32, %s5, [#allocation3]
    $region33: #{simple_conv_forward.1} parent=1 // pred_fallthru
      _
    // Predicated region
    $region34: #{simple_conv_forward.1} parent=1 // pred_check
      _
    $region35: #{simple_conv_forward.1} parent=1 // pred_check_branch
      %7563 = sbr.rel (0) target = $region37
    $region36: #{simple_conv_forward.1} parent=1 // pred_region
      %7564 = dma.done [#allocation3], 32
    $region37: #{simple_conv_forward.1} parent=1 // pred_fallthru
      _
    %7565 = vsyncpa [#allocation3], 1
    %7566 = vsyncpa [#allocation4], 1
    %7567 = vsyncpa [#allocation6], 1

</llo_original>
